<compile_context>
chip_gen: v5e
topology: v5e:2x2
jax: 0.10.0
libtpu: 0.0.40
codegen_flags: <defaults>
</compile_context>

<pallas_src>
import functools

import jax
import jax.numpy as jnp
from jax.experimental import pallas as pl
from jax.experimental.pallas import tpu as pltpu


# ----------------------------- Pallas kernels ------------------------------

def _dense_kernel(x_ref, w_ref, b_ref, o_ref, *, activation):
    """o = act(x @ w + b); x:(M,K) w:(K,N) b:(1,N) o:(M,N)."""
    y = jnp.dot(x_ref[...], w_ref[...], preferred_element_type=jnp.float32)
    y = y + b_ref[...]
    if activation == "relu":
        y = jnp.maximum(y, 0.0)
    elif activation == "sigmoid":
        y = 1.0 / (1.0 + jnp.exp(-y))
    o_ref[...] = y.astype(o_ref.dtype)


def _mlp2_kernel(x_ref, w1_ref, b1_ref, w2_ref, b2_ref, o_ref, *, final_activation):
    """o = act2(relu(x @ w1 + b1) @ w2 + b2). Both weights stay in VMEM."""
    h = jnp.dot(x_ref[...], w1_ref[...], preferred_element_type=jnp.float32)
    h = jnp.maximum(h + b1_ref[...], 0.0)
    y = jnp.dot(h, w2_ref[...], preferred_element_type=jnp.float32) + b2_ref[...]
    if final_activation == "sigmoid":
        y = 1.0 / (1.0 + jnp.exp(-y))
    o_ref[...] = y.astype(o_ref.dtype)


def _vmem_specs(n):
    return [pl.BlockSpec(memory_space=pltpu.MemorySpace.VMEM) for _ in range(n)]


def _dense(x, w_mat, b_row, activation):
    m, _ = x.shape
    n = w_mat.shape[1]
    return pl.pallas_call(
        functools.partial(_dense_kernel, activation=activation),
        out_shape=jax.ShapeDtypeStruct((m, n), jnp.float32),
        in_specs=_vmem_specs(3),
        out_specs=pl.BlockSpec(memory_space=pltpu.MemorySpace.VMEM),
    )(x, w_mat, b_row)


def _mlp2(x, w1, b1, w2, b2, final_activation):
    """w1/w2 are PyTorch-layout (out, in); biases are (out,)."""
    m = x.shape[0]
    n = w2.shape[0]
    return pl.pallas_call(
        functools.partial(_mlp2_kernel, final_activation=final_activation),
        out_shape=jax.ShapeDtypeStruct((m, n), jnp.float32),
        in_specs=_vmem_specs(5),
        out_specs=pl.BlockSpec(memory_space=pltpu.MemorySpace.VMEM),
    )(x, w1.T, b1.reshape(1, -1), w2.T, b2.reshape(1, -1))


# ------------------------- Conv1d (stride == kernel) ------------------------

def _conv1d_relu_as_matmul(x, w, b, stride, padding):
    """Conv1d + ReLU where stride == kernel_size (non-overlapping windows).

    x: (B, C, L), w: (O, C, K) PyTorch layout, b: (O,).  Returns (B, O, L_out).
    """
    batch, in_c, length = x.shape
    out_c, w_in_c, k = w.shape
    assert w_in_c == in_c and stride == k, "requires stride == kernel_size"

    xp = jnp.pad(x, ((0, 0), (0, 0), (padding, padding)))
    l_out = (length + 2 * padding - k) // stride + 1
    xp = xp[:, :, : l_out * k]
    # (B, C, L_out, K) -> (B, L_out, C, K) -> (B*L_out, C*K)
    patches = xp.reshape(batch, in_c, l_out, k).transpose(0, 2, 1, 3)
    patches = patches.reshape(batch * l_out, in_c * k)
    w_mat = w.reshape(out_c, in_c * k).T                     # (C*K, O)
    y = _dense(patches, w_mat, b.reshape(1, out_c), activation="relu")
    return y.reshape(batch, l_out, out_c).transpose(0, 2, 1)  # (B, O, L_out)


# ------------------------------ Model plumbing ------------------------------

def discriminator_config(num_channels, temp_dim, out_dim=1):
    conv1_out = num_channels * 3
    conv_final_out = 10
    if temp_dim == 1201:
        pad1 = 20 + temp_dim % 3 // 2
        pad2 = 5
        post_conv_dim = 28 * conv_final_out
    else:
        pad1 = temp_dim % 3 // 2
        pad2 = 1
        post_conv_dim = 45 * conv_final_out
    n_tail = min(100, temp_dim)
    focus_hidden = 800
    return dict(
        num_channels=num_channels, temp_dim=temp_dim, out_dim=out_dim,
        conv1_out=conv1_out, conv_final_out=conv_final_out,
        pad1=pad1, pad2=pad2, post_conv_dim=post_conv_dim,
        n_tail=n_tail, focus_hidden=focus_hidden,
        combined=post_conv_dim + focus_hidden,
    )


def init_params(key, cfg):
    keys = jax.random.split(key, 14)

    def lin(kw, kb, out_dim, in_dim):
        s = float(in_dim) ** -0.5
        w = jax.random.uniform(kw, (out_dim, in_dim), jnp.float32, -s, s)
        b = jax.random.uniform(kb, (out_dim,), jnp.float32, -s, s)
        return w, b

    def conv(kw, kb, out_c, in_c, k):
        s = float(in_c * k) ** -0.5
        w = jax.random.uniform(kw, (out_c, in_c, k), jnp.float32, -s, s)
        b = jax.random.uniform(kb, (out_c,), jnp.float32, -s, s)
        return w, b

    c = cfg["num_channels"]
    p = {}
    p["conv1_w"], p["conv1_b"] = conv(keys[0], keys[1], cfg["conv1_out"], c, 3)
    p["conv2_w"], p["conv2_b"] = conv(keys[2], keys[3], cfg["conv1_out"], cfg["conv1_out"], 3)
    p["conv3_w"], p["conv3_b"] = conv(keys[4], keys[5], cfg["conv_final_out"], cfg["conv1_out"], 5)
    p["focus_w1"], p["focus_b1"] = lin(keys[6], keys[7], cfg["focus_hidden"], c * cfg["n_tail"])
    p["focus_w2"], p["focus_b2"] = lin(keys[8], keys[9], cfg["focus_hidden"], cfg["focus_hidden"])
    p["lin_w1"], p["lin_b1"] = lin(keys[10], keys[11], cfg["combined"], cfg["combined"])
    p["lin_w2"], p["lin_b2"] = lin(keys[12], keys[13], cfg["out_dim"], cfg["combined"])
    return p


def basic_discriminator_forward(x, params, cfg):
    batch, chans, _ = x.shape
    n_tail = cfg["n_tail"]

    # Tail branch: flatten last n_tail steps -> two fused linears (no final act).
    x_tail = x[:, :, -n_tail:].reshape(batch, chans * n_tail)
    tail_embed = _mlp2(x_tail, params["focus_w1"], params["focus_b1"],
                       params["focus_w2"], params["focus_b2"],
                       final_activation="none")

    # Conv branch: three stride==kernel Conv1d+ReLU layers as patch matmuls.
    h = _conv1d_relu_as_matmul(x, params["conv1_w"], params["conv1_b"], 3, cfg["pad1"])
    h = _conv1d_relu_as_matmul(h, params["conv2_w"], params["conv2_b"], 3, cfg["pad2"])
    h = _conv1d_relu_as_matmul(h, params["conv3_w"], params["conv3_b"], 5, 1)
    conv_flat = h.reshape(batch, cfg["post_conv_dim"])

    combined = jnp.concatenate([conv_flat, tail_embed], axis=1)
    return _mlp2(combined, params["lin_w1"], params["lin_b1"],
                 params["lin_w2"], params["lin_b2"],
                 final_activation="sigmoid")


# --------------------------- Pure-JAX reference -----------------------------

def reference_forward(x, params, cfg):
    def conv1d(inp, w, b, stride, padding):
        y = jax.lax.conv_general_dilated(
            inp, w, window_strides=(stride,), padding=[(padding, padding)],
            dimension_numbers=("NCH", "OIH", "NCH"))
        return y + b[None, :, None]

    batch, chans, _ = x.shape
    n_tail = cfg["n_tail"]
    x_tail = x[:, :, -n_tail:].reshape(batch, chans * n_tail)
    t = jnp.maximum(x_tail @ params["focus_w1"].T + params["focus_b1"], 0.0)
    tail_embed = t @ params["focus_w2"].T + params["focus_b2"]

    h = jnp.maximum(conv1d(x, params["conv1_w"], params["conv1_b"], 3, cfg["pad1"]), 0.0)
    h = jnp.maximum(conv1d(h, params["conv2_w"], params["conv2_b"], 3, cfg["pad2"]), 0.0)
    h = jnp.maximum(conv1d(h, params["conv3_w"], params["conv3_b"], 5, 1), 0.0)
    conv_flat = h.reshape(batch, cfg["post_conv_dim"])

    z = jnp.concatenate([conv_flat, tail_embed], axis=1)
    z = jnp.maximum(z @ params["lin_w1"].T + params["lin_b1"], 0.0)
    z = z @ params["lin_w2"].T + params["lin_b2"]
    return 1.0 / (1.0 + jnp.exp(-z))


# ---------------------------------- Main ------------------------------------

if __name__ == "__main__":
    batch, num_channels, temp_dim, out_dim = 2, 4, 2000, 1
    cfg = discriminator_config(num_channels, temp_dim, out_dim)

    key = jax.random.PRNGKey(0)
    kx, kp = jax.random.split(key)
    params = init_params(kp, cfg)
    x = jax.random.normal(kx, (batch, num_channels, temp_dim), dtype=jnp.float32)

    fwd = jax.jit(lambda xx, pp: basic_discriminator_forward(xx, pp, cfg))
    out = jax.block_until_ready(fwd(x, params))

    ref = jax.block_until_ready(reference_forward(x, params, cfg))

    assert out.shape == (batch, out_dim), out.shape
    assert jnp.all(jnp.isfinite(out))
    assert jnp.allclose(out, ref, rtol=2e-2, atol=2e-2), (out, ref)

    print("KERNEL_OK")
</pallas_src>

<mosaic_0001>
module attributes {stable_mosaic.version = 11 : i64} {
  func.func @_dense_kernel(%arg0: memref<1334x12xf32, #tpu.memory_space<vmem>>, %arg1: memref<12x12xf32, #tpu.memory_space<vmem>>, %arg2: memref<1x12xf32, #tpu.memory_space<vmem>>, %arg3: memref<1334x12xf32, #tpu.memory_space<vmem>>) attributes {dimension_semantics = [], scalar_prefetch = 0 : i64, scratch_operands = 0 : i64, tpu.core_type = #tpu.core_type<tc>} {
    %c0 = arith.constant 0 : index
    %c0_0 = arith.constant 0 : index
    %0 = vector.load %arg0[%c0, %c0_0] : memref<1334x12xf32, #tpu.memory_space<vmem>>, vector<1334x12xf32>
    %c0_1 = arith.constant 0 : index
    %c0_2 = arith.constant 0 : index
    %1 = vector.load %arg1[%c0_1, %c0_2] : memref<12x12xf32, #tpu.memory_space<vmem>>, vector<12x12xf32>
    %cst = arith.constant dense<0.000000e+00> : vector<1334x12xf32>
    %2 = tpu.matmul %0, %1, %cst {dimension_numbers = #tpu.dot_dimension_numbers<[1], [0], [0], [1], [0, 0, 1, 1], [], []>} : vector<1334x12xf32>, vector<12x12xf32>, vector<1334x12xf32> -> vector<1334x12xf32>
    %c0_3 = arith.constant 0 : index
    %c0_4 = arith.constant 0 : index
    %3 = vector.load %arg2[%c0_3, %c0_4] : memref<1x12xf32, #tpu.memory_space<vmem>>, vector<1x12xf32>
    %4 = vector.broadcast %3 : vector<1x12xf32> to vector<1334x12xf32>
    %5 = arith.addf %2, %4 : vector<1334x12xf32>
    %cst_5 = arith.constant 0.000000e+00 : f32
    %6 = vector.broadcast %cst_5 : f32 to vector<1334x12xf32>
    %7 = arith.maximumf %5, %6 : vector<1334x12xf32>
    %c0_6 = arith.constant 0 : index
    %c0_7 = arith.constant 0 : index
    %8 = vector.load %arg3[%c0_6, %c0_7] : memref<1334x12xf32, #tpu.memory_space<vmem>>, vector<1334x12xf32>
    tpu.vector_store %arg3[%c0_6, %c0_7], %7 {strides = array<i32>} : memref<1334x12xf32, #tpu.memory_space<vmem>>, vector<1334x12xf32>,
    return
  }
}

module attributes {stable_mosaic.version = 11 : i64} {
  func.func @_dense_kernel(%arg0: memref<446x36xf32, #tpu.memory_space<vmem>>, %arg1: memref<36x12xf32, #tpu.memory_space<vmem>>, %arg2: memref<1x12xf32, #tpu.memory_space<vmem>>, %arg3: memref<446x12xf32, #tpu.memory_space<vmem>>) attributes {dimension_semantics = [], scalar_prefetch = 0 : i64, scratch_operands = 0 : i64, tpu.core_type = #tpu.core_type<tc>} {
    %c0 = arith.constant 0 : index
    %c0_0 = arith.constant 0 : index
    %0 = vector.load %arg0[%c0, %c0_0] : memref<446x36xf32, #tpu.memory_space<vmem>>, vector<446x36xf32>
    %c0_1 = arith.constant 0 : index
    %c0_2 = arith.constant 0 : index
    %1 = vector.load %arg1[%c0_1, %c0_2] : memref<36x12xf32, #tpu.memory_space<vmem>>, vector<36x12xf32>
    %cst = arith.constant dense<0.000000e+00> : vector<446x12xf32>
    %2 = tpu.matmul %0, %1, %cst {dimension_numbers = #tpu.dot_dimension_numbers<[1], [0], [0], [1], [0, 0, 1, 1], [], []>} : vector<446x36xf32>, vector<36x12xf32>, vector<446x12xf32> -> vector<446x12xf32>
    %c0_3 = arith.constant 0 : index
    %c0_4 = arith.constant 0 : index
    %3 = vector.load %arg2[%c0_3, %c0_4] : memref<1x12xf32, #tpu.memory_space<vmem>>, vector<1x12xf32>
    %4 = vector.broadcast %3 : vector<1x12xf32> to vector<446x12xf32>
    %5 = arith.addf %2, %4 : vector<446x12xf32>
    %cst_5 = arith.constant 0.000000e+00 : f32
    %6 = vector.broadcast %cst_5 : f32 to vector<446x12xf32>
    %7 = arith.maximumf %5, %6 : vector<446x12xf32>
    %c0_6 = arith.constant 0 : index
    %c0_7 = arith.constant 0 : index
    %8 = vector.load %arg3[%c0_6, %c0_7] : memref<446x12xf32, #tpu.memory_space<vmem>>, vector<446x12xf32>
    tpu.vector_store %arg3[%c0_6, %c0_7], %7 {strides = array<i32>} : memref<446x12xf32, #tpu.memory_space<vmem>>, vector<446x12xf32>,
    return
  }
}

module attributes {stable_mosaic.version = 11 : i64} {
  func.func @_dense_kernel(%arg0: memref<90x60xf32, #tpu.memory_space<vmem>>, %arg1: memref<60x10xf32, #tpu.memory_space<vmem>>, %arg2: memref<1x10xf32, #tpu.memory_space<vmem>>, %arg3: memref<90x10xf32, #tpu.memory_space<vmem>>) attributes {dimension_semantics = [], scalar_prefetch = 0 : i64, scratch_operands = 0 : i64, tpu.core_type = #tpu.core_type<tc>} {
    %c0 = arith.constant 0 : index
    %c0_0 = arith.constant 0 : index
    %0 = vector.load %arg0[%c0, %c0_0] : memref<90x60xf32, #tpu.memory_space<vmem>>, vector<90x60xf32>
    %c0_1 = arith.constant 0 : index
    %c0_2 = arith.constant 0 : index
    %1 = vector.load %arg1[%c0_1, %c0_2] : memref<60x10xf32, #tpu.memory_space<vmem>>, vector<60x10xf32>
    %cst = arith.constant dense<0.000000e+00> : vector<90x10xf32>
    %2 = tpu.matmul %0, %1, %cst {dimension_numbers = #tpu.dot_dimension_numbers<[1], [0], [0], [1], [0, 0, 1, 1], [], []>} : vector<90x60xf32>, vector<60x10xf32>, vector<90x10xf32> -> vector<90x10xf32>
    %c0_3 = arith.constant 0 : index
    %c0_4 = arith.constant 0 : index
    %3 = vector.load %arg2[%c0_3, %c0_4] : memref<1x10xf32, #tpu.memory_space<vmem>>, vector<1x10xf32>
    %4 = vector.broadcast %3 : vector<1x10xf32> to vector<90x10xf32>
    %5 = arith.addf %2, %4 : vector<90x10xf32>
    %cst_5 = arith.constant 0.000000e+00 : f32
    %6 = vector.broadcast %cst_5 : f32 to vector<90x10xf32>
    %7 = arith.maximumf %5, %6 : vector<90x10xf32>
    %c0_6 = arith.constant 0 : index
    %c0_7 = arith.constant 0 : index
    %8 = vector.load %arg3[%c0_6, %c0_7] : memref<90x10xf32, #tpu.memory_space<vmem>>, vector<90x10xf32>
    tpu.vector_store %arg3[%c0_6, %c0_7], %7 {strides = array<i32>} : memref<90x10xf32, #tpu.memory_space<vmem>>, vector<90x10xf32>,
    return
  }
}

module attributes {stable_mosaic.version = 11 : i64} {
  func.func @_mlp2_kernel(%arg0: memref<2x400xf32, #tpu.memory_space<vmem>>, %arg1: memref<400x800xf32, #tpu.memory_space<vmem>>, %arg2: memref<1x800xf32, #tpu.memory_space<vmem>>, %arg3: memref<800x800xf32, #tpu.memory_space<vmem>>, %arg4: memref<1x800xf32, #tpu.memory_space<vmem>>, %arg5: memref<2x800xf32, #tpu.memory_space<vmem>>) attributes {dimension_semantics = [], scalar_prefetch = 0 : i64, scratch_operands = 0 : i64, tpu.core_type = #tpu.core_type<tc>} {
    %c0 = arith.constant 0 : index
    %c0_0 = arith.constant 0 : index
    %0 = vector.load %arg0[%c0, %c0_0] : memref<2x400xf32, #tpu.memory_space<vmem>>, vector<2x400xf32>
    %c0_1 = arith.constant 0 : index
    %c0_2 = arith.constant 0 : index
    %1 = vector.load %arg1[%c0_1, %c0_2] : memref<400x800xf32, #tpu.memory_space<vmem>>, vector<400x800xf32>
    %cst = arith.constant dense<0.000000e+00> : vector<2x800xf32>
    %2 = tpu.matmul %0, %1, %cst {dimension_numbers = #tpu.dot_dimension_numbers<[1], [0], [0], [1], [0, 0, 1, 1], [], []>} : vector<2x400xf32>, vector<400x800xf32>, vector<2x800xf32> -> vector<2x800xf32>
    %c0_3 = arith.constant 0 : index
    %c0_4 = arith.constant 0 : index
    %3 = vector.load %arg2[%c0_3, %c0_4] : memref<1x800xf32, #tpu.memory_space<vmem>>, vector<1x800xf32>
    %4 = vector.broadcast %3 : vector<1x800xf32> to vector<2x800xf32>
    %5 = arith.addf %2, %4 : vector<2x800xf32>
    %cst_5 = arith.constant 0.000000e+00 : f32
    %6 = vector.broadcast %cst_5 : f32 to vector<2x800xf32>
    %7 = arith.maximumf %5, %6 : vector<2x800xf32>
    %c0_6 = arith.constant 0 : index
    %c0_7 = arith.constant 0 : index
    %8 = vector.load %arg3[%c0_6, %c0_7] : memref<800x800xf32, #tpu.memory_space<vmem>>, vector<800x800xf32>
    %cst_8 = arith.constant dense<0.000000e+00> : vector<2x800xf32>
    %9 = tpu.matmul %7, %8, %cst_8 {dimension_numbers = #tpu.dot_dimension_numbers<[1], [0], [0], [1], [0, 0, 1, 1], [], []>} : vector<2x800xf32>, vector<800x800xf32>, vector<2x800xf32> -> vector<2x800xf32>
    %c0_9 = arith.constant 0 : index
    %c0_10 = arith.constant 0 : index
    %10 = vector.load %arg4[%c0_9, %c0_10] : memref<1x800xf32, #tpu.memory_space<vmem>>, vector<1x800xf32>
    %11 = vector.broadcast %10 : vector<1x800xf32> to vector<2x800xf32>
    %12 = arith.addf %9, %11 : vector<2x800xf32>
    %c0_11 = arith.constant 0 : index
    %c0_12 = arith.constant 0 : index
    %13 = vector.load %arg5[%c0_11, %c0_12] : memref<2x800xf32, #tpu.memory_space<vmem>>, vector<2x800xf32>
    tpu.vector_store %arg5[%c0_11, %c0_12], %12 {strides = array<i32>} : memref<2x800xf32, #tpu.memory_space<vmem>>, vector<2x800xf32>,
    return
  }
}

module attributes {stable_mosaic.version = 11 : i64} {
  func.func @_mlp2_kernel(%arg0: memref<2x1250xf32, #tpu.memory_space<vmem>>, %arg1: memref<1250x1250xf32, #tpu.memory_space<vmem>>, %arg2: memref<1x1250xf32, #tpu.memory_space<vmem>>, %arg3: memref<1250x1xf32, #tpu.memory_space<vmem>>, %arg4: memref<1x1xf32, #tpu.memory_space<vmem>>, %arg5: memref<2x1xf32, #tpu.memory_space<vmem>>) attributes {dimension_semantics = [], scalar_prefetch = 0 : i64, scratch_operands = 0 : i64, tpu.core_type = #tpu.core_type<tc>} {
    %c0 = arith.constant 0 : index
    %c0_0 = arith.constant 0 : index
    %0 = vector.load %arg0[%c0, %c0_0] : memref<2x1250xf32, #tpu.memory_space<vmem>>, vector<2x1250xf32>
    %c0_1 = arith.constant 0 : index
    %c0_2 = arith.constant 0 : index
    %1 = vector.load %arg1[%c0_1, %c0_2] : memref<1250x1250xf32, #tpu.memory_space<vmem>>, vector<1250x1250xf32>
    %cst = arith.constant dense<0.000000e+00> : vector<2x1250xf32>
    %2 = tpu.matmul %0, %1, %cst {dimension_numbers = #tpu.dot_dimension_numbers<[1], [0], [0], [1], [0, 0, 1, 1], [], []>} : vector<2x1250xf32>, vector<1250x1250xf32>, vector<2x1250xf32> -> vector<2x1250xf32>
    %c0_3 = arith.constant 0 : index
    %c0_4 = arith.constant 0 : index
    %3 = vector.load %arg2[%c0_3, %c0_4] : memref<1x1250xf32, #tpu.memory_space<vmem>>, vector<1x1250xf32>
    %4 = vector.broadcast %3 : vector<1x1250xf32> to vector<2x1250xf32>
    %5 = arith.addf %2, %4 : vector<2x1250xf32>
    %cst_5 = arith.constant 0.000000e+00 : f32
    %6 = vector.broadcast %cst_5 : f32 to vector<2x1250xf32>
    %7 = arith.maximumf %5, %6 : vector<2x1250xf32>
    %c0_6 = arith.constant 0 : index
    %c0_7 = arith.constant 0 : index
    %8 = vector.load %arg3[%c0_6, %c0_7] : memref<1250x1xf32, #tpu.memory_space<vmem>>, vector<1250x1xf32>
    %cst_8 = arith.constant dense<0.000000e+00> : vector<2x1xf32>
    %9 = tpu.matmul %7, %8, %cst_8 {dimension_numbers = #tpu.dot_dimension_numbers<[1], [0], [0], [1], [0, 0, 1, 1], [], []>} : vector<2x1250xf32>, vector<1250x1xf32>, vector<2x1xf32> -> vector<2x1xf32>
    %c0_9 = arith.constant 0 : index
    %c0_10 = arith.constant 0 : index
    %10 = vector.load %arg4[%c0_9, %c0_10] : memref<1x1xf32, #tpu.memory_space<vmem>>, vector<1x1xf32>
    %11 = vector.broadcast %10 : vector<1x1xf32> to vector<2x1xf32>
    %12 = arith.addf %9, %11 : vector<2x1xf32>
    %cst_11 = arith.constant 0.000000e+00 : f32
    %13 = vector.broadcast %cst_11 : f32 to vector<2x1xf32>
    %14 = arith.subf %13, %12 : vector<2x1xf32>
    %15 = math.exp %14 : vector<2x1xf32>
    %cst_12 = arith.constant 1.000000e+00 : f32
    %16 = vector.broadcast %cst_12 : f32 to vector<2x1xf32>
    %17 = arith.addf %16, %15 : vector<2x1xf32>
    %cst_13 = arith.constant 1.000000e+00 : f32
    %18 = vector.broadcast %cst_13 : f32 to vector<2x1xf32>
    %19 = arith.divf %18, %17 : vector<2x1xf32>
    %c0_14 = arith.constant 0 : index
    %c0_15 = arith.constant 0 : index
    %20 = vector.load %arg5[%c0_14, %c0_15] : memref<2x1xf32, #tpu.memory_space<vmem>>, vector<2x1xf32>
    tpu.vector_store %arg5[%c0_14, %c0_15], %19 {strides = array<i32>} : memref<2x1xf32, #tpu.memory_space<vmem>>, vector<2x1xf32>,
    return
  }
}

</mosaic_0001>

<llo_original>
// kernel: _lambda_.6
$region0: #{_lambda_.6}
  #allocation0 [shape = 'u32[]', space=smem, size = 0x4, offset = 0x4, fixed_abs, tag = 'smem constant byte address 0x4 - core index']
  #allocation1 [shape = 'u32[72,128]{1,0:T(1,128)}', space=vmem, size = 0x9000, scoped, tag = 'internal scratch']
  %s0 = inlined_call_operand.vmem [shape: f32[1334,12], index: 0, kind: input, shape index: {}]
  %s1 = inlined_call_operand.vmem [shape: f32[12,12], index: 1, kind: input, shape index: {}]
  %s2 = inlined_call_operand.vmem [shape: f32[1,12], index: 2, kind: input, shape index: {}]
  %s3 = inlined_call_operand.vmem [shape: f32[1334,12], index: 3, kind: output, shape index: {}]
  %s4 = sld [smem:[#allocation0]]
  $region22: #{_lambda_.6} parent=0
    _
  %s6 = ssub.s32 1, %s4
  %s7 = scalar_select 0, %s6, %s4
  // Predicated region
  $region2: #{_lambda_.6} parent=0 // pred_check
    _
  $region3: #{_lambda_.6} parent=0 // pred_check_branch
    %9 = sbr.rel (0) target = $region5
  $region4: #{_lambda_.6} parent=0 // pred_region
    _
  $region5: #{_lambda_.6} parent=0 // pred_fallthru
    _
  // Predicated region
  $region6: #{_lambda_.6} parent=0 // pred_check
    _
  $region7: #{_lambda_.6} parent=0 // pred_check_branch
    %11 = sbr.rel (0) target = $region9
  $region8: #{_lambda_.6} parent=0 // pred_region
    _
  $region9: #{_lambda_.6} parent=0 // pred_fallthru
    _
  // Predicated region
  $region10: #{_lambda_.6} parent=0 // pred_check
    _
  $region11: #{_lambda_.6} parent=0 // pred_check_branch
    %13 = sbr.rel (0) target = $region13
  $region12: #{_lambda_.6} parent=0 // pred_region
    _
  $region13: #{_lambda_.6} parent=0 // pred_fallthru
    _
  %v14 = vld [vmem:[%s0] sm:$0xff]
  %v15 = vld [vmem:[%s0 + $0x8] sm:$0xff]
  %v16 = vld [vmem:[%s0 + $0x10] sm:$0xff]
  %v17 = vld [vmem:[%s0 + $0x18] sm:$0xff]
  %v18 = vld [vmem:[%s0 + $0x20] sm:$0xff]
  %v19 = vld [vmem:[%s0 + $0x28] sm:$0xff]
  %v20 = vld [vmem:[%s0 + $0x30] sm:$0xff]
  %v21 = vld [vmem:[%s0 + $0x38] sm:$0xff]
  %v22 = vld [vmem:[%s0 + $0x40] sm:$0xff]
  %v23 = vld [vmem:[%s0 + $0x48] sm:$0xff]
  %v24 = vld [vmem:[%s0 + $0x50] sm:$0xff]
  %v25 = vld [vmem:[%s0 + $0x58] sm:$0xff]
  %v26 = vld [vmem:[%s0 + $0x60] sm:$0xff]
  %v27 = vld [vmem:[%s0 + $0x68] sm:$0xff]
  %v28 = vld [vmem:[%s0 + $0x70] sm:$0xff]
  %v29 = vld [vmem:[%s0 + $0x78] sm:$0xff]
  %v30 = vld [vmem:[%s0 + $0x80] sm:$0xff]
  %v31 = vld [vmem:[%s0 + $0x88] sm:$0xff]
  %v32 = vld [vmem:[%s0 + $0x90] sm:$0xff]
  %v33 = vld [vmem:[%s0 + $0x98] sm:$0xff]
  %v34 = vld [vmem:[%s0 + $0xa0] sm:$0xff]
  %v35 = vld [vmem:[%s0 + $0xa8] sm:$0xff]
  %v36 = vld [vmem:[%s0 + $0xb0] sm:$0xff]
  %v37 = vld [vmem:[%s0 + $0xb8] sm:$0xff]
  %v38 = vld [vmem:[%s0 + $0xc0] sm:$0xff]
  %v39 = vld [vmem:[%s0 + $0xc8] sm:$0xff]
  %v40 = vld [vmem:[%s0 + $0xd0] sm:$0xff]
  %v41 = vld [vmem:[%s0 + $0xd8] sm:$0xff]
  %v42 = vld [vmem:[%s0 + $0xe0] sm:$0xff]
  %v43 = vld [vmem:[%s0 + $0xe8] sm:$0xff]
  %v44 = vld [vmem:[%s0 + $0xf0] sm:$0xff]
  %v45 = vld [vmem:[%s0 + $0xf8] sm:$0xff]
  %v46 = vld [vmem:[%s0 + $0x100] sm:$0xff]
  %v47 = vld [vmem:[%s0 + $0x108] sm:$0xff]
  %v48 = vld [vmem:[%s0 + $0x110] sm:$0xff]
  %v49 = vld [vmem:[%s0 + $0x118] sm:$0xff]
  %v50 = vld [vmem:[%s0 + $0x120] sm:$0xff]
  %v51 = vld [vmem:[%s0 + $0x128] sm:$0xff]
  %v52 = vld [vmem:[%s0 + $0x130] sm:$0xff]
  %v53 = vld [vmem:[%s0 + $0x138] sm:$0xff]
  %v54 = vld [vmem:[%s0 + $0x140] sm:$0xff]
  %v55 = vld [vmem:[%s0 + $0x148] sm:$0xff]
  %v56 = vld [vmem:[%s0 + $0x150] sm:$0xff]
  %v57 = vld [vmem:[%s0 + $0x158] sm:$0xff]
  %v58 = vld [vmem:[%s0 + $0x160] sm:$0xff]
  %v59 = vld [vmem:[%s0 + $0x168] sm:$0xff]
  %v60 = vld [vmem:[%s0 + $0x170] sm:$0xff]
  %v61 = vld [vmem:[%s0 + $0x178] sm:$0xff]
  %v62 = vld [vmem:[%s0 + $0x180] sm:$0xff]
  %v63 = vld [vmem:[%s0 + $0x188] sm:$0xff]
  %v64 = vld [vmem:[%s0 + $0x190] sm:$0xff]
  %v65 = vld [vmem:[%s0 + $0x198] sm:$0xff]
  %v66 = vld [vmem:[%s0 + $0x1a0] sm:$0xff]
  %v67 = vld [vmem:[%s0 + $0x1a8] sm:$0xff]
  %v68 = vld [vmem:[%s0 + $0x1b0] sm:$0xff]
  %v69 = vld [vmem:[%s0 + $0x1b8] sm:$0xff]
  %v70 = vld [vmem:[%s0 + $0x1c0] sm:$0xff]
  %v71 = vld [vmem:[%s0 + $0x1c8] sm:$0xff]
  %v72 = vld [vmem:[%s0 + $0x1d0] sm:$0xff]
  %v73 = vld [vmem:[%s0 + $0x1d8] sm:$0xff]
  %v74 = vld [vmem:[%s0 + $0x1e0] sm:$0xff]
  %v75 = vld [vmem:[%s0 + $0x1e8] sm:$0xff]
  %v76 = vld [vmem:[%s0 + $0x1f0] sm:$0xff]
  %v77 = vld [vmem:[%s0 + $0x1f8] sm:$0xff]
  %v78 = vld [vmem:[%s0 + $0x200] sm:$0xff]
  %v79 = vld [vmem:[%s0 + $0x208] sm:$0xff]
  %v80 = vld [vmem:[%s0 + $0x210] sm:$0xff]
  %v81 = vld [vmem:[%s0 + $0x218] sm:$0xff]
  %v82 = vld [vmem:[%s0 + $0x220] sm:$0xff]
  %v83 = vld [vmem:[%s0 + $0x228] sm:$0xff]
  %v84 = vld [vmem:[%s0 + $0x230] sm:$0xff]
  %v85 = vld [vmem:[%s0 + $0x238] sm:$0xff]
  %v86 = vld [vmem:[%s0 + $0x240] sm:$0xff]
  %v87 = vld [vmem:[%s0 + $0x248] sm:$0xff]
  %v88 = vld [vmem:[%s0 + $0x250] sm:$0xff]
  %v89 = vld [vmem:[%s0 + $0x258] sm:$0xff]
  %v90 = vld [vmem:[%s0 + $0x260] sm:$0xff]
  %v91 = vld [vmem:[%s0 + $0x268] sm:$0xff]
  %v92 = vld [vmem:[%s0 + $0x270] sm:$0xff]
  %v93 = vld [vmem:[%s0 + $0x278] sm:$0xff]
  %v94 = vld [vmem:[%s0 + $0x280] sm:$0xff]
  %v95 = vld [vmem:[%s0 + $0x288] sm:$0xff]
  %v96 = vld [vmem:[%s0 + $0x290] sm:$0xff]
  %v97 = vld [vmem:[%s0 + $0x298] sm:$0xff]
  %v98 = vld [vmem:[%s0 + $0x2a0] sm:$0xff]
  %v99 = vld [vmem:[%s0 + $0x2a8] sm:$0xff]
  %v100 = vld [vmem:[%s0 + $0x2b0] sm:$0xff]
  %v101 = vld [vmem:[%s0 + $0x2b8] sm:$0xff]
  %v102 = vld [vmem:[%s0 + $0x2c0] sm:$0xff]
  %v103 = vld [vmem:[%s0 + $0x2c8] sm:$0xff]
  %v104 = vld [vmem:[%s0 + $0x2d0] sm:$0xff]
  %v105 = vld [vmem:[%s0 + $0x2d8] sm:$0xff]
  %v106 = vld [vmem:[%s0 + $0x2e0] sm:$0xff]
  %v107 = vld [vmem:[%s0 + $0x2e8] sm:$0xff]
  %v108 = vld [vmem:[%s0 + $0x2f0] sm:$0xff]
  %v109 = vld [vmem:[%s0 + $0x2f8] sm:$0xff]
  %v110 = vld [vmem:[%s0 + $0x300] sm:$0xff]
  %v111 = vld [vmem:[%s0 + $0x308] sm:$0xff]
  %v112 = vld [vmem:[%s0 + $0x310] sm:$0xff]
  %v113 = vld [vmem:[%s0 + $0x318] sm:$0xff]
  %v114 = vld [vmem:[%s0 + $0x320] sm:$0xff]
  %v115 = vld [vmem:[%s0 + $0x328] sm:$0xff]
  %v116 = vld [vmem:[%s0 + $0x330] sm:$0xff]
  %v117 = vld [vmem:[%s0 + $0x338] sm:$0xff]
  %v118 = vld [vmem:[%s0 + $0x340] sm:$0xff]
  %v119 = vld [vmem:[%s0 + $0x348] sm:$0xff]
  %v120 = vld [vmem:[%s0 + $0x350] sm:$0xff]
  %v121 = vld [vmem:[%s0 + $0x358] sm:$0xff]
  %v122 = vld [vmem:[%s0 + $0x360] sm:$0xff]
  %v123 = vld [vmem:[%s0 + $0x368] sm:$0xff]
  %v124 = vld [vmem:[%s0 + $0x370] sm:$0xff]
  %v125 = vld [vmem:[%s0 + $0x378] sm:$0xff]
  %v126 = vld [vmem:[%s0 + $0x380] sm:$0xff]
  %v127 = vld [vmem:[%s0 + $0x388] sm:$0xff]
  %v128 = vld [vmem:[%s0 + $0x390] sm:$0xff]
  %v129 = vld [vmem:[%s0 + $0x398] sm:$0xff]
  %v130 = vld [vmem:[%s0 + $0x3a0] sm:$0xff]
  %v131 = vld [vmem:[%s0 + $0x3a8] sm:$0xff]
  %v132 = vld [vmem:[%s0 + $0x3b0] sm:$0xff]
  %v133 = vld [vmem:[%s0 + $0x3b8] sm:$0xff]
  %v134 = vld [vmem:[%s0 + $0x3c0] sm:$0xff]
  %v135 = vld [vmem:[%s0 + $0x3c8] sm:$0xff]
  %v136 = vld [vmem:[%s0 + $0x3d0] sm:$0xff]
  %v137 = vld [vmem:[%s0 + $0x3d8] sm:$0xff]
  %v138 = vld [vmem:[%s0 + $0x3e0] sm:$0xff]
  %v139 = vld [vmem:[%s0 + $0x3e8] sm:$0xff]
  %v140 = vld [vmem:[%s0 + $0x3f0] sm:$0xff]
  %v141 = vld [vmem:[%s0 + $0x3f8] sm:$0xff]
  %v142 = vld [vmem:[%s0 + $0x400] sm:$0xff]
  %v143 = vld [vmem:[%s0 + $0x408] sm:$0xff]
  %v144 = vld [vmem:[%s0 + $0x410] sm:$0xff]
  %v145 = vld [vmem:[%s0 + $0x418] sm:$0xff]
  %v146 = vld [vmem:[%s0 + $0x420] sm:$0xff]
  %v147 = vld [vmem:[%s0 + $0x428] sm:$0xff]
  %v148 = vld [vmem:[%s0 + $0x430] sm:$0xff]
  %v149 = vld [vmem:[%s0 + $0x438] sm:$0xff]
  %v150 = vld [vmem:[%s0 + $0x440] sm:$0xff]
  %v151 = vld [vmem:[%s0 + $0x448] sm:$0xff]
  %v152 = vld [vmem:[%s0 + $0x450] sm:$0xff]
  %v153 = vld [vmem:[%s0 + $0x458] sm:$0xff]
  %v154 = vld [vmem:[%s0 + $0x460] sm:$0xff]
  %v155 = vld [vmem:[%s0 + $0x468] sm:$0xff]
  %v156 = vld [vmem:[%s0 + $0x470] sm:$0xff]
  %v157 = vld [vmem:[%s0 + $0x478] sm:$0xff]
  %v158 = vld [vmem:[%s0 + $0x480] sm:$0xff]
  %v159 = vld [vmem:[%s0 + $0x488] sm:$0xff]
  %v160 = vld [vmem:[%s0 + $0x490] sm:$0xff]
  %v161 = vld [vmem:[%s0 + $0x498] sm:$0xff]
  %v162 = vld [vmem:[%s0 + $0x4a0] sm:$0xff]
  %v163 = vld [vmem:[%s0 + $0x4a8] sm:$0xff]
  %v164 = vld [vmem:[%s0 + $0x4b0] sm:$0xff]
  %v165 = vld [vmem:[%s0 + $0x4b8] sm:$0xff]
  %v166 = vld [vmem:[%s0 + $0x4c0] sm:$0xff]
  %v167 = vld [vmem:[%s0 + $0x4c8] sm:$0xff]
  %v168 = vld [vmem:[%s0 + $0x4d0] sm:$0xff]
  %v169 = vld [vmem:[%s0 + $0x4d8] sm:$0xff]
  %v170 = vld [vmem:[%s0 + $0x4e0] sm:$0xff]
  %v171 = vld [vmem:[%s0 + $0x4e8] sm:$0xff]
  %v172 = vld [vmem:[%s0 + $0x4f0] sm:$0xff]
  %v173 = vld [vmem:[%s0 + $0x4f8] sm:$0xff]
  %v174 = vld [vmem:[%s0 + $0x500] sm:$0xff]
  %v175 = vld [vmem:[%s0 + $0x508] sm:$0xff]
  %v176 = vld [vmem:[%s0 + $0x510] sm:$0xff]
  %v177 = vld [vmem:[%s0 + $0x518] sm:$0xff]
  %v178 = vld [vmem:[%s0 + $0x520] sm:$0xff]
  %v179 = vld [vmem:[%s0 + $0x528] sm:$0xff]
  %v180 = vld [vmem:[%s0 + $0x530] sm:$0x3f]
  %v181 = vld [vmem:[%s1] sm:$0xff]
  %v182 = vld [vmem:[%s1 + $0x8] sm:$0xf]
  %v183 = vld [vmem:[%s2] sm:$0x1]
  %v185 = vperm.slane %v183, 0
  %vm187 = vcmask 97280
  %v189 = vsel %vm187, %v14, 0
  %v192 = vsel %vm187, %v15, 0
  %v195 = vsel %vm187, %v16, 0
  %v198 = vsel %vm187, %v17, 0
  %v201 = vsel %vm187, %v18, 0
  %v204 = vsel %vm187, %v19, 0
  %v207 = vsel %vm187, %v20, 0
  %v210 = vsel %vm187, %v21, 0
  %v213 = vsel %vm187, %v22, 0
  %v216 = vsel %vm187, %v23, 0
  %v219 = vsel %vm187, %v24, 0
  %v222 = vsel %vm187, %v25, 0
  %v225 = vsel %vm187, %v26, 0
  %v228 = vsel %vm187, %v27, 0
  %v231 = vsel %vm187, %v28, 0
  %v234 = vsel %vm187, %v29, 0
  %v237 = vsel %vm187, %v30, 0
  %v240 = vsel %vm187, %v31, 0
  %v243 = vsel %vm187, %v32, 0
  %v246 = vsel %vm187, %v33, 0
  %v249 = vsel %vm187, %v34, 0
  %v252 = vsel %vm187, %v35, 0
  %v255 = vsel %vm187, %v36, 0
  %v258 = vsel %vm187, %v37, 0
  %v261 = vsel %vm187, %v38, 0
  %v264 = vsel %vm187, %v39, 0
  %v267 = vsel %vm187, %v40, 0
  %v270 = vsel %vm187, %v41, 0
  %v273 = vsel %vm187, %v42, 0
  %v276 = vsel %vm187, %v43, 0
  %v279 = vsel %vm187, %v44, 0
  %v282 = vsel %vm187, %v45, 0
  %v285 = vsel %vm187, %v46, 0
  %v288 = vsel %vm187, %v47, 0
  %v291 = vsel %vm187, %v48, 0
  %v294 = vsel %vm187, %v49, 0
  %v297 = vsel %vm187, %v50, 0
  %v300 = vsel %vm187, %v51, 0
  %v303 = vsel %vm187, %v52, 0
  %v306 = vsel %vm187, %v53, 0
  %v309 = vsel %vm187, %v54, 0
  %v312 = vsel %vm187, %v55, 0
  %v315 = vsel %vm187, %v56, 0
  %v318 = vsel %vm187, %v57, 0
  %v321 = vsel %vm187, %v58, 0
  %v324 = vsel %vm187, %v59, 0
  %v327 = vsel %vm187, %v60, 0
  %v330 = vsel %vm187, %v61, 0
  %v333 = vsel %vm187, %v62, 0
  %v336 = vsel %vm187, %v63, 0
  %v339 = vsel %vm187, %v64, 0
  %v342 = vsel %vm187, %v65, 0
  %v345 = vsel %vm187, %v66, 0
  %v348 = vsel %vm187, %v67, 0
  %v351 = vsel %vm187, %v68, 0
  %v354 = vsel %vm187, %v69, 0
  %v357 = vsel %vm187, %v70, 0
  %v360 = vsel %vm187, %v71, 0
  %v363 = vsel %vm187, %v72, 0
  %v366 = vsel %vm187, %v73, 0
  %v369 = vsel %vm187, %v74, 0
  %v372 = vsel %vm187, %v75, 0
  %v375 = vsel %vm187, %v76, 0
  %v378 = vsel %vm187, %v77, 0
  %v381 = vsel %vm187, %v78, 0
  %v384 = vsel %vm187, %v79, 0
  %v387 = vsel %vm187, %v80, 0
  %v390 = vsel %vm187, %v81, 0
  %v393 = vsel %vm187, %v82, 0
  %v396 = vsel %vm187, %v83, 0
  %v399 = vsel %vm187, %v84, 0
  %v402 = vsel %vm187, %v85, 0
  %v405 = vsel %vm187, %v86, 0
  %v408 = vsel %vm187, %v87, 0
  %v411 = vsel %vm187, %v88, 0
  %v414 = vsel %vm187, %v89, 0
  %v417 = vsel %vm187, %v90, 0
  %v420 = vsel %vm187, %v91, 0
  %v423 = vsel %vm187, %v92, 0
  %v426 = vsel %vm187, %v93, 0
  %v429 = vsel %vm187, %v94, 0
  %v432 = vsel %vm187, %v95, 0
  %v435 = vsel %vm187, %v96, 0
  %v438 = vsel %vm187, %v97, 0
  %v441 = vsel %vm187, %v98, 0
  %v444 = vsel %vm187, %v99, 0
  %v447 = vsel %vm187, %v100, 0
  %v450 = vsel %vm187, %v101, 0
  %v453 = vsel %vm187, %v102, 0
  %v456 = vsel %vm187, %v103, 0
  %v459 = vsel %vm187, %v104, 0
  %v462 = vsel %vm187, %v105, 0
  %v465 = vsel %vm187, %v106, 0
  %v468 = vsel %vm187, %v107, 0
  %v471 = vsel %vm187, %v108, 0
  %v474 = vsel %vm187, %v109, 0
  %v477 = vsel %vm187, %v110, 0
  %v480 = vsel %vm187, %v111, 0
  %v483 = vsel %vm187, %v112, 0
  %v486 = vsel %vm187, %v113, 0
  %v489 = vsel %vm187, %v114, 0
  %v492 = vsel %vm187, %v115, 0
  %v495 = vsel %vm187, %v116, 0
  %v498 = vsel %vm187, %v117, 0
  %v501 = vsel %vm187, %v118, 0
  %v504 = vsel %vm187, %v119, 0
  %v507 = vsel %vm187, %v120, 0
  %v510 = vsel %vm187, %v121, 0
  %v513 = vsel %vm187, %v122, 0
  %v516 = vsel %vm187, %v123, 0
  %v519 = vsel %vm187, %v124, 0
  %v522 = vsel %vm187, %v125, 0
  %v525 = vsel %vm187, %v126, 0
  %v528 = vsel %vm187, %v127, 0
  %v531 = vsel %vm187, %v128, 0
  %v534 = vsel %vm187, %v129, 0
  %v537 = vsel %vm187, %v130, 0
  %v540 = vsel %vm187, %v131, 0
  %v543 = vsel %vm187, %v132, 0
  %v546 = vsel %vm187, %v133, 0
  %v549 = vsel %vm187, %v134, 0
  %v552 = vsel %vm187, %v135, 0
  %v555 = vsel %vm187, %v136, 0
  %v558 = vsel %vm187, %v137, 0
  %v561 = vsel %vm187, %v138, 0
  %v564 = vsel %vm187, %v139, 0
  %v567 = vsel %vm187, %v140, 0
  %v570 = vsel %vm187, %v141, 0
  %v573 = vsel %vm187, %v142, 0
  %v576 = vsel %vm187, %v143, 0
  %v579 = vsel %vm187, %v144, 0
  %v582 = vsel %vm187, %v145, 0
  %v585 = vsel %vm187, %v146, 0
  %v588 = vsel %vm187, %v147, 0
  %v591 = vsel %vm187, %v148, 0
  %v594 = vsel %vm187, %v149, 0
  %v597 = vsel %vm187, %v150, 0
  %v600 = vsel %vm187, %v151, 0
  %v603 = vsel %vm187, %v152, 0
  %v606 = vsel %vm187, %v153, 0
  %v609 = vsel %vm187, %v154, 0
  %v612 = vsel %vm187, %v155, 0
  %v615 = vsel %vm187, %v156, 0
  %v618 = vsel %vm187, %v157, 0
  %v621 = vsel %vm187, %v158, 0
  %v624 = vsel %vm187, %v159, 0
  %v627 = vsel %vm187, %v160, 0
  %v630 = vsel %vm187, %v161, 0
  %v633 = vsel %vm187, %v162, 0
  %v636 = vsel %vm187, %v163, 0
  %v639 = vsel %vm187, %v164, 0
  %v642 = vsel %vm187, %v165, 0
  %v645 = vsel %vm187, %v166, 0
  %v648 = vsel %vm187, %v167, 0
  %v651 = vsel %vm187, %v168, 0
  %v654 = vsel %vm187, %v169, 0
  %v657 = vsel %vm187, %v170, 0
  %v660 = vsel %vm187, %v171, 0
  %v663 = vsel %vm187, %v172, 0
  %v666 = vsel %vm187, %v173, 0
  %v669 = vsel %vm187, %v174, 0
  %v672 = vsel %vm187, %v175, 0
  %v675 = vsel %vm187, %v176, 0
  %v678 = vsel %vm187, %v177, 0
  %v681 = vsel %vm187, %v178, 0
  %v684 = vsel %vm187, %v179, 0
  %v687 = vsel %vm187, %v180, 0
  %vm689 = vcmask 1043456
  %v691 = vsel %vm689, %v182, 0
  %693 = vmatpush.msra.mxu0 0.0
  %694 = vmatpush.msra.mxu0 0.0
  %695 = vmatpush.msra.mxu0 0.0
  %696 = vmatpush.msra.mxu0 0.0
  %697 = vmatpush.msra.mxu0 0.0
  %698 = vmatpush.msra.mxu0 0.0
  %699 = vmatpush.msra.mxu0 0.0
  %700 = vmatpush.msra.mxu0 0.0
  %701 = vmatpush.msra.mxu0 0.0
  %702 = vmatpush.msra.mxu0 0.0
  %703 = vmatpush.msra.mxu0 0.0
  %704 = vmatpush.msra.mxu0 0.0
  %705 = vmatpush.msra.mxu0 0.0
  %706 = vmatpush.msra.mxu0 0.0
  %707 = vmatpush.msra.mxu0 %v691
  %708 = vmatpush.msra.mxu0 %v181
  %709 = vmatmul.f32.gmra.mxu0 %v189
  %v710 = vpop.f32.mrf.mxu0
  %v711 = vadd.f32 %v185, %v710
  %712 = vmatmul.f32.gmra.mxu0 %v192
  %v713 = vpop.f32.mrf.mxu0
  %v714 = vadd.f32 %v185, %v713
  %715 = vmatmul.f32.gmra.mxu0 %v195
  %v716 = vpop.f32.mrf.mxu0
  %v717 = vadd.f32 %v185, %v716
  %718 = vmatmul.f32.gmra.mxu0 %v198
  %v719 = vpop.f32.mrf.mxu0
  %v720 = vadd.f32 %v185, %v719
  %721 = vmatmul.f32.gmra.mxu0 %v201
  %v722 = vpop.f32.mrf.mxu0
  %v723 = vadd.f32 %v185, %v722
  %724 = vmatmul.f32.gmra.mxu0 %v204
  %v725 = vpop.f32.mrf.mxu0
  %v726 = vadd.f32 %v185, %v725
  %727 = vmatmul.f32.gmra.mxu0 %v207
  %v728 = vpop.f32.mrf.mxu0
  %v729 = vadd.f32 %v185, %v728
  %730 = vmatmul.f32.gmra.mxu0 %v210
  %v731 = vpop.f32.mrf.mxu0
  %v732 = vadd.f32 %v185, %v731
  %733 = vmatmul.f32.gmra.mxu0 %v213
  %v734 = vpop.f32.mrf.mxu0
  %v735 = vadd.f32 %v185, %v734
  %736 = vmatmul.f32.gmra.mxu0 %v216
  %v737 = vpop.f32.mrf.mxu0
  %v738 = vadd.f32 %v185, %v737
  %739 = vmatmul.f32.gmra.mxu0 %v219
  %v740 = vpop.f32.mrf.mxu0
  %v741 = vadd.f32 %v185, %v740
  %742 = vmatmul.f32.gmra.mxu0 %v222
  %v743 = vpop.f32.mrf.mxu0
  %v744 = vadd.f32 %v185, %v743
  %745 = vmatmul.f32.gmra.mxu0 %v225
  %v746 = vpop.f32.mrf.mxu0
  %v747 = vadd.f32 %v185, %v746
  %748 = vmatmul.f32.gmra.mxu0 %v228
  %v749 = vpop.f32.mrf.mxu0
  %v750 = vadd.f32 %v185, %v749
  %751 = vmatmul.f32.gmra.mxu0 %v231
  %v752 = vpop.f32.mrf.mxu0
  %v753 = vadd.f32 %v185, %v752
  %754 = vmatmul.f32.gmra.mxu0 %v234
  %v755 = vpop.f32.mrf.mxu0
  %v756 = vadd.f32 %v185, %v755
  %757 = vmatmul.f32.gmra.mxu0 %v237
  %v758 = vpop.f32.mrf.mxu0
  %v759 = vadd.f32 %v185, %v758
  %760 = vmatmul.f32.gmra.mxu0 %v240
  %v761 = vpop.f32.mrf.mxu0
  %v762 = vadd.f32 %v185, %v761
  %763 = vmatmul.f32.gmra.mxu0 %v243
  %v764 = vpop.f32.mrf.mxu0
  %v765 = vadd.f32 %v185, %v764
  %766 = vmatmul.f32.gmra.mxu0 %v246
  %v767 = vpop.f32.mrf.mxu0
  %v768 = vadd.f32 %v185, %v767
  %769 = vmatmul.f32.gmra.mxu0 %v249
  %v770 = vpop.f32.mrf.mxu0
  %v771 = vadd.f32 %v185, %v770
  %772 = vmatmul.f32.gmra.mxu0 %v252
  %v773 = vpop.f32.mrf.mxu0
  %v774 = vadd.f32 %v185, %v773
  %775 = vmatmul.f32.gmra.mxu0 %v255
  %v776 = vpop.f32.mrf.mxu0
  %v777 = vadd.f32 %v185, %v776
  %778 = vmatmul.f32.gmra.mxu0 %v258
  %v779 = vpop.f32.mrf.mxu0
  %v780 = vadd.f32 %v185, %v779
  %781 = vmatmul.f32.gmra.mxu0 %v261
  %v782 = vpop.f32.mrf.mxu0
  %v783 = vadd.f32 %v185, %v782
  %784 = vmatmul.f32.gmra.mxu0 %v264
  %v785 = vpop.f32.mrf.mxu0
  %v786 = vadd.f32 %v185, %v785
  %787 = vmatmul.f32.gmra.mxu0 %v267
  %v788 = vpop.f32.mrf.mxu0
  %v789 = vadd.f32 %v185, %v788
  %790 = vmatmul.f32.gmra.mxu0 %v270
  %v791 = vpop.f32.mrf.mxu0
  %v792 = vadd.f32 %v185, %v791
  %793 = vmatmul.f32.gmra.mxu0 %v273
  %v794 = vpop.f32.mrf.mxu0
  %v795 = vadd.f32 %v185, %v794
  %796 = vmatmul.f32.gmra.mxu0 %v276
  %v797 = vpop.f32.mrf.mxu0
  %v798 = vadd.f32 %v185, %v797
  %799 = vmatmul.f32.gmra.mxu0 %v279
  %v800 = vpop.f32.mrf.mxu0
  %v801 = vadd.f32 %v185, %v800
  %802 = vmatmul.f32.gmra.mxu0 %v282
  %v803 = vpop.f32.mrf.mxu0
  %v804 = vadd.f32 %v185, %v803
  %805 = vmatmul.f32.gmra.mxu0 %v285
  %v806 = vpop.f32.mrf.mxu0
  %v807 = vadd.f32 %v185, %v806
  %808 = vmatmul.f32.gmra.mxu0 %v288
  %v809 = vpop.f32.mrf.mxu0
  %v810 = vadd.f32 %v185, %v809
  %811 = vmatmul.f32.gmra.mxu0 %v291
  %v812 = vpop.f32.mrf.mxu0
  %v813 = vadd.f32 %v185, %v812
  %814 = vmatmul.f32.gmra.mxu0 %v294
  %v815 = vpop.f32.mrf.mxu0
  %v816 = vadd.f32 %v185, %v815
  %817 = vmatmul.f32.gmra.mxu0 %v297
  %v818 = vpop.f32.mrf.mxu0
  %v819 = vadd.f32 %v185, %v818
  %820 = vmatmul.f32.gmra.mxu0 %v300
  %v821 = vpop.f32.mrf.mxu0
  %v822 = vadd.f32 %v185, %v821
  %823 = vmatmul.f32.gmra.mxu0 %v303
  %v824 = vpop.f32.mrf.mxu0
  %v825 = vadd.f32 %v185, %v824
  %826 = vmatmul.f32.gmra.mxu0 %v306
  %v827 = vpop.f32.mrf.mxu0
  %v828 = vadd.f32 %v185, %v827
  %829 = vmatmul.f32.gmra.mxu0 %v309
  %v830 = vpop.f32.mrf.mxu0
  %v831 = vadd.f32 %v185, %v830
  %832 = vmatmul.f32.gmra.mxu0 %v312
  %v833 = vpop.f32.mrf.mxu0
  %v834 = vadd.f32 %v185, %v833
  %835 = vmatmul.f32.gmra.mxu0 %v315
  %v836 = vpop.f32.mrf.mxu0
  %v837 = vadd.f32 %v185, %v836
  %838 = vmatmul.f32.gmra.mxu0 %v318
  %v839 = vpop.f32.mrf.mxu0
  %v840 = vadd.f32 %v185, %v839
  %841 = vmatmul.f32.gmra.mxu0 %v321
  %v842 = vpop.f32.mrf.mxu0
  %v843 = vadd.f32 %v185, %v842
  %844 = vmatmul.f32.gmra.mxu0 %v324
  %v845 = vpop.f32.mrf.mxu0
  %v846 = vadd.f32 %v185, %v845
  %847 = vmatmul.f32.gmra.mxu0 %v327
  %v848 = vpop.f32.mrf.mxu0
  %v849 = vadd.f32 %v185, %v848
  %850 = vmatmul.f32.gmra.mxu0 %v330
  %v851 = vpop.f32.mrf.mxu0
  %v852 = vadd.f32 %v185, %v851
  %853 = vmatmul.f32.gmra.mxu0 %v333
  %v854 = vpop.f32.mrf.mxu0
  %v855 = vadd.f32 %v185, %v854
  %856 = vmatmul.f32.gmra.mxu0 %v336
  %v857 = vpop.f32.mrf.mxu0
  %v858 = vadd.f32 %v185, %v857
  %859 = vmatmul.f32.gmra.mxu0 %v339
  %v860 = vpop.f32.mrf.mxu0
  %v861 = vadd.f32 %v185, %v860
  %862 = vmatmul.f32.gmra.mxu0 %v342
  %v863 = vpop.f32.mrf.mxu0
  %v864 = vadd.f32 %v185, %v863
  %865 = vmatmul.f32.gmra.mxu0 %v345
  %v866 = vpop.f32.mrf.mxu0
  %v867 = vadd.f32 %v185, %v866
  %868 = vmatmul.f32.gmra.mxu0 %v348
  %v869 = vpop.f32.mrf.mxu0
  %v870 = vadd.f32 %v185, %v869
  %871 = vmatmul.f32.gmra.mxu0 %v351
  %v872 = vpop.f32.mrf.mxu0
  %v873 = vadd.f32 %v185, %v872
  %874 = vmatmul.f32.gmra.mxu0 %v354
  %v875 = vpop.f32.mrf.mxu0
  %v876 = vadd.f32 %v185, %v875
  %877 = vmatmul.f32.gmra.mxu0 %v357
  %v878 = vpop.f32.mrf.mxu0
  %v879 = vadd.f32 %v185, %v878
  %880 = vmatmul.f32.gmra.mxu0 %v360
  %v881 = vpop.f32.mrf.mxu0
  %v882 = vadd.f32 %v185, %v881
  %883 = vmatmul.f32.gmra.mxu0 %v363
  %v884 = vpop.f32.mrf.mxu0
  %v885 = vadd.f32 %v185, %v884
  %886 = vmatmul.f32.gmra.mxu0 %v366
  %v887 = vpop.f32.mrf.mxu0
  %v888 = vadd.f32 %v185, %v887
  %889 = vmatmul.f32.gmra.mxu0 %v369
  %v890 = vpop.f32.mrf.mxu0
  %v891 = vadd.f32 %v185, %v890
  %892 = vmatmul.f32.gmra.mxu0 %v372
  %v893 = vpop.f32.mrf.mxu0
  %v894 = vadd.f32 %v185, %v893
  %895 = vmatmul.f32.gmra.mxu0 %v375
  %v896 = vpop.f32.mrf.mxu0
  %v897 = vadd.f32 %v185, %v896
  %898 = vmatmul.f32.gmra.mxu0 %v378
  %v899 = vpop.f32.mrf.mxu0
  %v900 = vadd.f32 %v185, %v899
  %901 = vmatmul.f32.gmra.mxu0 %v381
  %v902 = vpop.f32.mrf.mxu0
  %v903 = vadd.f32 %v185, %v902
  %904 = vmatmul.f32.gmra.mxu0 %v384
  %v905 = vpop.f32.mrf.mxu0
  %v906 = vadd.f32 %v185, %v905
  %907 = vmatmul.f32.gmra.mxu0 %v387
  %v908 = vpop.f32.mrf.mxu0
  %v909 = vadd.f32 %v185, %v908
  %910 = vmatmul.f32.gmra.mxu0 %v390
  %v911 = vpop.f32.mrf.mxu0
  %v912 = vadd.f32 %v185, %v911
  %913 = vmatmul.f32.gmra.mxu0 %v393
  %v914 = vpop.f32.mrf.mxu0
  %v915 = vadd.f32 %v185, %v914
  %916 = vmatmul.f32.gmra.mxu0 %v396
  %v917 = vpop.f32.mrf.mxu0
  %v918 = vadd.f32 %v185, %v917
  %919 = vmatmul.f32.gmra.mxu0 %v399
  %v920 = vpop.f32.mrf.mxu0
  %v921 = vadd.f32 %v185, %v920
  %922 = vmatmul.f32.gmra.mxu0 %v402
  %v923 = vpop.f32.mrf.mxu0
  %v924 = vadd.f32 %v185, %v923
  %925 = vmatmul.f32.gmra.mxu0 %v405
  %v926 = vpop.f32.mrf.mxu0
  %v927 = vadd.f32 %v185, %v926
  %928 = vmatmul.f32.gmra.mxu0 %v408
  %v929 = vpop.f32.mrf.mxu0
  %v930 = vadd.f32 %v185, %v929
  %931 = vmatmul.f32.gmra.mxu0 %v411
  %v932 = vpop.f32.mrf.mxu0
  %v933 = vadd.f32 %v185, %v932
  %934 = vmatmul.f32.gmra.mxu0 %v414
  %v935 = vpop.f32.mrf.mxu0
  %v936 = vadd.f32 %v185, %v935
  %937 = vmatmul.f32.gmra.mxu0 %v417
  %v938 = vpop.f32.mrf.mxu0
  %v939 = vadd.f32 %v185, %v938
  %940 = vmatmul.f32.gmra.mxu0 %v420
  %v941 = vpop.f32.mrf.mxu0
  %v942 = vadd.f32 %v185, %v941
  %943 = vmatmul.f32.gmra.mxu0 %v423
  %v944 = vpop.f32.mrf.mxu0
  %v945 = vadd.f32 %v185, %v944
  %946 = vmatmul.f32.gmra.mxu0 %v426
  %v947 = vpop.f32.mrf.mxu0
  %v948 = vadd.f32 %v185, %v947
  %949 = vmatmul.f32.gmra.mxu0 %v429
  %v950 = vpop.f32.mrf.mxu0
  %v951 = vadd.f32 %v185, %v950
  %952 = vmatmul.f32.gmra.mxu0 %v432
  %v953 = vpop.f32.mrf.mxu0
  %v954 = vadd.f32 %v185, %v953
  %955 = vmatmul.f32.gmra.mxu0 %v435
  %v956 = vpop.f32.mrf.mxu0
  %v957 = vadd.f32 %v185, %v956
  %958 = vmatmul.f32.gmra.mxu0 %v438
  %v959 = vpop.f32.mrf.mxu0
  %v960 = vadd.f32 %v185, %v959
  %961 = vmatmul.f32.gmra.mxu0 %v441
  %v962 = vpop.f32.mrf.mxu0
  %v963 = vadd.f32 %v185, %v962
  %964 = vmatmul.f32.gmra.mxu0 %v444
  %v965 = vpop.f32.mrf.mxu0
  %v966 = vadd.f32 %v185, %v965
  %967 = vmatmul.f32.gmra.mxu0 %v447
  %v968 = vpop.f32.mrf.mxu0
  %v969 = vadd.f32 %v185, %v968
  %970 = vmatmul.f32.gmra.mxu0 %v450
  %v971 = vpop.f32.mrf.mxu0
  %v972 = vadd.f32 %v185, %v971
  %973 = vmatmul.f32.gmra.mxu0 %v453
  %v974 = vpop.f32.mrf.mxu0
  %v975 = vadd.f32 %v185, %v974
  %976 = vmatmul.f32.gmra.mxu0 %v456
  %v977 = vpop.f32.mrf.mxu0
  %v978 = vadd.f32 %v185, %v977
  %979 = vmatmul.f32.gmra.mxu0 %v459
  %v980 = vpop.f32.mrf.mxu0
  %v981 = vadd.f32 %v185, %v980
  %982 = vmatmul.f32.gmra.mxu0 %v462
  %v983 = vpop.f32.mrf.mxu0
  %v984 = vadd.f32 %v185, %v983
  %985 = vmatmul.f32.gmra.mxu0 %v465
  %v986 = vpop.f32.mrf.mxu0
  %v987 = vadd.f32 %v185, %v986
  %988 = vmatmul.f32.gmra.mxu0 %v468
  %v989 = vpop.f32.mrf.mxu0
  %v990 = vadd.f32 %v185, %v989
  %991 = vmatmul.f32.gmra.mxu0 %v471
  %v992 = vpop.f32.mrf.mxu0
  %v993 = vadd.f32 %v185, %v992
  %994 = vmatmul.f32.gmra.mxu0 %v474
  %v995 = vpop.f32.mrf.mxu0
  %v996 = vadd.f32 %v185, %v995
  %997 = vmatmul.f32.gmra.mxu0 %v477
  %v998 = vpop.f32.mrf.mxu0
  %v999 = vadd.f32 %v185, %v998
  %1000 = vmatmul.f32.gmra.mxu0 %v480
  %v1001 = vpop.f32.mrf.mxu0
  %v1002 = vadd.f32 %v185, %v1001
  %1003 = vmatmul.f32.gmra.mxu0 %v483
  %v1004 = vpop.f32.mrf.mxu0
  %v1005 = vadd.f32 %v185, %v1004
  %1006 = vmatmul.f32.gmra.mxu0 %v486
  %v1007 = vpop.f32.mrf.mxu0
  %v1008 = vadd.f32 %v185, %v1007
  %1009 = vmatmul.f32.gmra.mxu0 %v489
  %v1010 = vpop.f32.mrf.mxu0
  %v1011 = vadd.f32 %v185, %v1010
  %1012 = vmatmul.f32.gmra.mxu0 %v492
  %v1013 = vpop.f32.mrf.mxu0
  %v1014 = vadd.f32 %v185, %v1013
  %1015 = vmatmul.f32.gmra.mxu0 %v495
  %v1016 = vpop.f32.mrf.mxu0
  %v1017 = vadd.f32 %v185, %v1016
  %1018 = vmatmul.f32.gmra.mxu0 %v498
  %v1019 = vpop.f32.mrf.mxu0
  %v1020 = vadd.f32 %v185, %v1019
  %1021 = vmatmul.f32.gmra.mxu0 %v501
  %v1022 = vpop.f32.mrf.mxu0
  %v1023 = vadd.f32 %v185, %v1022
  %1024 = vmatmul.f32.gmra.mxu0 %v504
  %v1025 = vpop.f32.mrf.mxu0
  %v1026 = vadd.f32 %v185, %v1025
  %1027 = vmatmul.f32.gmra.mxu0 %v507
  %v1028 = vpop.f32.mrf.mxu0
  %v1029 = vadd.f32 %v185, %v1028
  %1030 = vmatmul.f32.gmra.mxu0 %v510
  %v1031 = vpop.f32.mrf.mxu0
  %v1032 = vadd.f32 %v185, %v1031
  %1033 = vmatmul.f32.gmra.mxu0 %v513
  %v1034 = vpop.f32.mrf.mxu0
  %v1035 = vadd.f32 %v185, %v1034
  %1036 = vmatmul.f32.gmra.mxu0 %v516
  %v1037 = vpop.f32.mrf.mxu0
  %v1038 = vadd.f32 %v185, %v1037
  %1039 = vmatmul.f32.gmra.mxu0 %v519
  %v1040 = vpop.f32.mrf.mxu0
  %v1041 = vadd.f32 %v185, %v1040
  %1042 = vmatmul.f32.gmra.mxu0 %v522
  %v1043 = vpop.f32.mrf.mxu0
  %v1044 = vadd.f32 %v185, %v1043
  %1045 = vmatmul.f32.gmra.mxu0 %v525
  %v1046 = vpop.f32.mrf.mxu0
  %v1047 = vadd.f32 %v185, %v1046
  %1048 = vmatmul.f32.gmra.mxu0 %v528
  %v1049 = vpop.f32.mrf.mxu0
  %v1050 = vadd.f32 %v185, %v1049
  %1051 = vmatmul.f32.gmra.mxu0 %v531
  %v1052 = vpop.f32.mrf.mxu0
  %v1053 = vadd.f32 %v185, %v1052
  %1054 = vmatmul.f32.gmra.mxu0 %v534
  %v1055 = vpop.f32.mrf.mxu0
  %v1056 = vadd.f32 %v185, %v1055
  %1057 = vmatmul.f32.gmra.mxu0 %v537
  %v1058 = vpop.f32.mrf.mxu0
  %v1059 = vadd.f32 %v185, %v1058
  %1060 = vmatmul.f32.gmra.mxu0 %v540
  %v1061 = vpop.f32.mrf.mxu0
  %v1062 = vadd.f32 %v185, %v1061
  %1063 = vmatmul.f32.gmra.mxu0 %v543
  %v1064 = vpop.f32.mrf.mxu0
  %v1065 = vadd.f32 %v185, %v1064
  %1066 = vmatmul.f32.gmra.mxu0 %v546
  %v1067 = vpop.f32.mrf.mxu0
  %v1068 = vadd.f32 %v185, %v1067
  %1069 = vmatmul.f32.gmra.mxu0 %v549
  %v1070 = vpop.f32.mrf.mxu0
  %v1071 = vadd.f32 %v185, %v1070
  %1072 = vmatmul.f32.gmra.mxu0 %v552
  %v1073 = vpop.f32.mrf.mxu0
  %v1074 = vadd.f32 %v185, %v1073
  %1075 = vmatmul.f32.gmra.mxu0 %v555
  %v1076 = vpop.f32.mrf.mxu0
  %v1077 = vadd.f32 %v185, %v1076
  %1078 = vmatmul.f32.gmra.mxu0 %v558
  %v1079 = vpop.f32.mrf.mxu0
  %v1080 = vadd.f32 %v185, %v1079
  %1081 = vmatmul.f32.gmra.mxu0 %v561
  %v1082 = vpop.f32.mrf.mxu0
  %v1083 = vadd.f32 %v185, %v1082
  %1084 = vmatmul.f32.gmra.mxu0 %v564
  %v1085 = vpop.f32.mrf.mxu0
  %v1086 = vadd.f32 %v185, %v1085
  %1087 = vmatmul.f32.gmra.mxu0 %v567
  %v1088 = vpop.f32.mrf.mxu0
  %v1089 = vadd.f32 %v185, %v1088
  %1090 = vmatmul.f32.gmra.mxu0 %v570
  %v1091 = vpop.f32.mrf.mxu0
  %v1092 = vadd.f32 %v185, %v1091
  %1093 = vmatmul.f32.gmra.mxu0 %v573
  %v1094 = vpop.f32.mrf.mxu0
  %v1095 = vadd.f32 %v185, %v1094
  %1096 = vmatmul.f32.gmra.mxu0 %v576
  %v1097 = vpop.f32.mrf.mxu0
  %v1098 = vadd.f32 %v185, %v1097
  %1099 = vmatmul.f32.gmra.mxu0 %v579
  %v1100 = vpop.f32.mrf.mxu0
  %v1101 = vadd.f32 %v185, %v1100
  %1102 = vmatmul.f32.gmra.mxu0 %v582
  %v1103 = vpop.f32.mrf.mxu0
  %v1104 = vadd.f32 %v185, %v1103
  %1105 = vmatmul.f32.gmra.mxu0 %v585
  %v1106 = vpop.f32.mrf.mxu0
  %v1107 = vadd.f32 %v185, %v1106
  %1108 = vmatmul.f32.gmra.mxu0 %v588
  %v1109 = vpop.f32.mrf.mxu0
  %v1110 = vadd.f32 %v185, %v1109
  %1111 = vmatmul.f32.gmra.mxu0 %v591
  %v1112 = vpop.f32.mrf.mxu0
  %v1113 = vadd.f32 %v185, %v1112
  %1114 = vmatmul.f32.gmra.mxu0 %v594
  %v1115 = vpop.f32.mrf.mxu0
  %v1116 = vadd.f32 %v185, %v1115
  %1117 = vmatmul.f32.gmra.mxu0 %v597
  %v1118 = vpop.f32.mrf.mxu0
  %v1119 = vadd.f32 %v185, %v1118
  %1120 = vmatmul.f32.gmra.mxu0 %v600
  %v1121 = vpop.f32.mrf.mxu0
  %v1122 = vadd.f32 %v185, %v1121
  %1123 = vmatmul.f32.gmra.mxu0 %v603
  %v1124 = vpop.f32.mrf.mxu0
  %v1125 = vadd.f32 %v185, %v1124
  %1126 = vmatmul.f32.gmra.mxu0 %v606
  %v1127 = vpop.f32.mrf.mxu0
  %v1128 = vadd.f32 %v185, %v1127
  %1129 = vmatmul.f32.gmra.mxu0 %v609
  %v1130 = vpop.f32.mrf.mxu0
  %v1131 = vadd.f32 %v185, %v1130
  %1132 = vmatmul.f32.gmra.mxu0 %v612
  %v1133 = vpop.f32.mrf.mxu0
  %v1134 = vadd.f32 %v185, %v1133
  %1135 = vmatmul.f32.gmra.mxu0 %v615
  %v1136 = vpop.f32.mrf.mxu0
  %v1137 = vadd.f32 %v185, %v1136
  %1138 = vmatmul.f32.gmra.mxu0 %v618
  %v1139 = vpop.f32.mrf.mxu0
  %v1140 = vadd.f32 %v185, %v1139
  %1141 = vmatmul.f32.gmra.mxu0 %v621
  %v1142 = vpop.f32.mrf.mxu0
  %v1143 = vadd.f32 %v185, %v1142
  %1144 = vmatmul.f32.gmra.mxu0 %v624
  %v1145 = vpop.f32.mrf.mxu0
  %v1146 = vadd.f32 %v185, %v1145
  %1147 = vmatmul.f32.gmra.mxu0 %v627
  %v1148 = vpop.f32.mrf.mxu0
  %v1149 = vadd.f32 %v185, %v1148
  %1150 = vmatmul.f32.gmra.mxu0 %v630
  %v1151 = vpop.f32.mrf.mxu0
  %v1152 = vadd.f32 %v185, %v1151
  %1153 = vmatmul.f32.gmra.mxu0 %v633
  %v1154 = vpop.f32.mrf.mxu0
  %v1155 = vadd.f32 %v185, %v1154
  %1156 = vmatmul.f32.gmra.mxu0 %v636
  %v1157 = vpop.f32.mrf.mxu0
  %v1158 = vadd.f32 %v185, %v1157
  %1159 = vmatmul.f32.gmra.mxu0 %v639
  %v1160 = vpop.f32.mrf.mxu0
  %v1161 = vadd.f32 %v185, %v1160
  %1162 = vmatmul.f32.gmra.mxu0 %v642
  %v1163 = vpop.f32.mrf.mxu0
  %v1164 = vadd.f32 %v185, %v1163
  %1165 = vmatmul.f32.gmra.mxu0 %v645
  %v1166 = vpop.f32.mrf.mxu0
  %v1167 = vadd.f32 %v185, %v1166
  %1168 = vmatmul.f32.gmra.mxu0 %v648
  %v1169 = vpop.f32.mrf.mxu0
  %v1170 = vadd.f32 %v185, %v1169
  %1171 = vmatmul.f32.gmra.mxu0 %v651
  %v1172 = vpop.f32.mrf.mxu0
  %v1173 = vadd.f32 %v185, %v1172
  %1174 = vmatmul.f32.gmra.mxu0 %v654
  %v1175 = vpop.f32.mrf.mxu0
  %v1176 = vadd.f32 %v185, %v1175
  %1177 = vmatmul.f32.gmra.mxu0 %v657
  %v1178 = vpop.f32.mrf.mxu0
  %v1179 = vadd.f32 %v185, %v1178
  %1180 = vmatmul.f32.gmra.mxu0 %v660
  %v1181 = vpop.f32.mrf.mxu0
  %v1182 = vadd.f32 %v185, %v1181
  %1183 = vmatmul.f32.gmra.mxu0 %v663
  %v1184 = vpop.f32.mrf.mxu0
  %v1185 = vadd.f32 %v185, %v1184
  %1186 = vmatmul.f32.gmra.mxu0 %v666
  %v1187 = vpop.f32.mrf.mxu0
  %v1188 = vadd.f32 %v185, %v1187
  %1189 = vmatmul.f32.gmra.mxu0 %v669
  %v1190 = vpop.f32.mrf.mxu0
  %v1191 = vadd.f32 %v185, %v1190
  %1192 = vmatmul.f32.gmra.mxu0 %v672
  %v1193 = vpop.f32.mrf.mxu0
  %v1194 = vadd.f32 %v185, %v1193
  %1195 = vmatmul.f32.gmra.mxu0 %v675
  %v1196 = vpop.f32.mrf.mxu0
  %v1197 = vadd.f32 %v185, %v1196
  %1198 = vmatmul.f32.gmra.mxu0 %v678
  %v1199 = vpop.f32.mrf.mxu0
  %v1200 = vadd.f32 %v185, %v1199
  %1201 = vmatmul.f32.gmra.mxu0 %v681
  %v1202 = vpop.f32.mrf.mxu0
  %v1203 = vadd.f32 %v185, %v1202
  %1204 = vmatmul.f32.gmra.mxu0 %v684
  %v1205 = vpop.f32.mrf.mxu0
  %v1206 = vadd.f32 %v185, %v1205
  %1207 = vmatmul.f32.gmra.mxu0 %v687
  %v1208 = vpop.f32.mrf.mxu0
  %v1209 = vadd.f32 %v185, %v1208
  %1210 = vdwg.mxu0
  %v1211 = vmax.f32 %v711, 0.0
  %v1212 = vmax.f32 %v714, 0.0
  %v1213 = vmax.f32 %v717, 0.0
  %v1214 = vmax.f32 %v720, 0.0
  %v1215 = vmax.f32 %v723, 0.0
  %v1216 = vmax.f32 %v726, 0.0
  %v1217 = vmax.f32 %v729, 0.0
  %v1218 = vmax.f32 %v732, 0.0
  %v1219 = vmax.f32 %v735, 0.0
  %v1220 = vmax.f32 %v738, 0.0
  %v1221 = vmax.f32 %v741, 0.0
  %v1222 = vmax.f32 %v744, 0.0
  %v1223 = vmax.f32 %v747, 0.0
  %v1224 = vmax.f32 %v750, 0.0
  %v1225 = vmax.f32 %v753, 0.0
  %v1226 = vmax.f32 %v756, 0.0
  %v1227 = vmax.f32 %v759, 0.0
  %v1228 = vmax.f32 %v762, 0.0
  %v1229 = vmax.f32 %v765, 0.0
  %v1230 = vmax.f32 %v768, 0.0
  %v1231 = vmax.f32 %v771, 0.0
  %v1232 = vmax.f32 %v774, 0.0
  %v1233 = vmax.f32 %v777, 0.0
  %v1234 = vmax.f32 %v780, 0.0
  %v1235 = vmax.f32 %v783, 0.0
  %v1236 = vmax.f32 %v786, 0.0
  %v1237 = vmax.f32 %v789, 0.0
  %v1238 = vmax.f32 %v792, 0.0
  %v1239 = vmax.f32 %v795, 0.0
  %v1240 = vmax.f32 %v798, 0.0
  %v1241 = vmax.f32 %v801, 0.0
  %v1242 = vmax.f32 %v804, 0.0
  %v1243 = vmax.f32 %v807, 0.0
  %v1244 = vmax.f32 %v810, 0.0
  %v1245 = vmax.f32 %v813, 0.0
  %v1246 = vmax.f32 %v816, 0.0
  %v1247 = vmax.f32 %v819, 0.0
  %v1248 = vmax.f32 %v822, 0.0
  %v1249 = vmax.f32 %v825, 0.0
  %v1250 = vmax.f32 %v828, 0.0
  %v1251 = vmax.f32 %v831, 0.0
  %v1252 = vmax.f32 %v834, 0.0
  %v1253 = vmax.f32 %v837, 0.0
  %v1254 = vmax.f32 %v840, 0.0
  %v1255 = vmax.f32 %v843, 0.0
  %v1256 = vmax.f32 %v846, 0.0
  %v1257 = vmax.f32 %v849, 0.0
  %v1258 = vmax.f32 %v852, 0.0
  %v1259 = vmax.f32 %v855, 0.0
  %v1260 = vmax.f32 %v858, 0.0
  %v1261 = vmax.f32 %v861, 0.0
  %v1262 = vmax.f32 %v864, 0.0
  %v1263 = vmax.f32 %v867, 0.0
  %v1264 = vmax.f32 %v870, 0.0
  %v1265 = vmax.f32 %v873, 0.0
  %v1266 = vmax.f32 %v876, 0.0
  %v1267 = vmax.f32 %v879, 0.0
  %v1268 = vmax.f32 %v882, 0.0
  %v1269 = vmax.f32 %v885, 0.0
  %v1270 = vmax.f32 %v888, 0.0
  %v1271 = vmax.f32 %v891, 0.0
  %v1272 = vmax.f32 %v894, 0.0
  %v1273 = vmax.f32 %v897, 0.0
  %v1274 = vmax.f32 %v900, 0.0
  %v1275 = vmax.f32 %v903, 0.0
  %v1276 = vmax.f32 %v906, 0.0
  %v1277 = vmax.f32 %v909, 0.0
  %v1278 = vmax.f32 %v912, 0.0
  %v1279 = vmax.f32 %v915, 0.0
  %v1280 = vmax.f32 %v918, 0.0
  %v1281 = vmax.f32 %v921, 0.0
  %v1282 = vmax.f32 %v924, 0.0
  %v1283 = vmax.f32 %v927, 0.0
  %v1284 = vmax.f32 %v930, 0.0
  %v1285 = vmax.f32 %v933, 0.0
  %v1286 = vmax.f32 %v936, 0.0
  %v1287 = vmax.f32 %v939, 0.0
  %v1288 = vmax.f32 %v942, 0.0
  %v1289 = vmax.f32 %v945, 0.0
  %v1290 = vmax.f32 %v948, 0.0
  %v1291 = vmax.f32 %v951, 0.0
  %v1292 = vmax.f32 %v954, 0.0
  %v1293 = vmax.f32 %v957, 0.0
  %v1294 = vmax.f32 %v960, 0.0
  %v1295 = vmax.f32 %v963, 0.0
  %v1296 = vmax.f32 %v966, 0.0
  %v1297 = vmax.f32 %v969, 0.0
  %v1298 = vmax.f32 %v972, 0.0
  %v1299 = vmax.f32 %v975, 0.0
  %v1300 = vmax.f32 %v978, 0.0
  %v1301 = vmax.f32 %v981, 0.0
  %v1302 = vmax.f32 %v984, 0.0
  %v1303 = vmax.f32 %v987, 0.0
  %v1304 = vmax.f32 %v990, 0.0
  %v1305 = vmax.f32 %v993, 0.0
  %v1306 = vmax.f32 %v996, 0.0
  %v1307 = vmax.f32 %v999, 0.0
  %v1308 = vmax.f32 %v1002, 0.0
  %v1309 = vmax.f32 %v1005, 0.0
  %v1310 = vmax.f32 %v1008, 0.0
  %v1311 = vmax.f32 %v1011, 0.0
  %v1312 = vmax.f32 %v1014, 0.0
  %v1313 = vmax.f32 %v1017, 0.0
  %v1314 = vmax.f32 %v1020, 0.0
  %v1315 = vmax.f32 %v1023, 0.0
  %v1316 = vmax.f32 %v1026, 0.0
  %v1317 = vmax.f32 %v1029, 0.0
  %v1318 = vmax.f32 %v1032, 0.0
  %v1319 = vmax.f32 %v1035, 0.0
  %v1320 = vmax.f32 %v1038, 0.0
  %v1321 = vmax.f32 %v1041, 0.0
  %v1322 = vmax.f32 %v1044, 0.0
  %v1323 = vmax.f32 %v1047, 0.0
  %v1324 = vmax.f32 %v1050, 0.0
  %v1325 = vmax.f32 %v1053, 0.0
  %v1326 = vmax.f32 %v1056, 0.0
  %v1327 = vmax.f32 %v1059, 0.0
  %v1328 = vmax.f32 %v1062, 0.0
  %v1329 = vmax.f32 %v1065, 0.0
  %v1330 = vmax.f32 %v1068, 0.0
  %v1331 = vmax.f32 %v1071, 0.0
  %v1332 = vmax.f32 %v1074, 0.0
  %v1333 = vmax.f32 %v1077, 0.0
  %v1334 = vmax.f32 %v1080, 0.0
  %v1335 = vmax.f32 %v1083, 0.0
  %v1336 = vmax.f32 %v1086, 0.0
  %v1337 = vmax.f32 %v1089, 0.0
  %v1338 = vmax.f32 %v1092, 0.0
  %v1339 = vmax.f32 %v1095, 0.0
  %v1340 = vmax.f32 %v1098, 0.0
  %v1341 = vmax.f32 %v1101, 0.0
  %v1342 = vmax.f32 %v1104, 0.0
  %v1343 = vmax.f32 %v1107, 0.0
  %v1344 = vmax.f32 %v1110, 0.0
  %v1345 = vmax.f32 %v1113, 0.0
  %v1346 = vmax.f32 %v1116, 0.0
  %v1347 = vmax.f32 %v1119, 0.0
  %v1348 = vmax.f32 %v1122, 0.0
  %v1349 = vmax.f32 %v1125, 0.0
  %v1350 = vmax.f32 %v1128, 0.0
  %v1351 = vmax.f32 %v1131, 0.0
  %v1352 = vmax.f32 %v1134, 0.0
  %v1353 = vmax.f32 %v1137, 0.0
  %v1354 = vmax.f32 %v1140, 0.0
  %v1355 = vmax.f32 %v1143, 0.0
  %v1356 = vmax.f32 %v1146, 0.0
  %v1357 = vmax.f32 %v1149, 0.0
  %v1358 = vmax.f32 %v1152, 0.0
  %v1359 = vmax.f32 %v1155, 0.0
  %v1360 = vmax.f32 %v1158, 0.0
  %v1361 = vmax.f32 %v1161, 0.0
  %v1362 = vmax.f32 %v1164, 0.0
  %v1363 = vmax.f32 %v1167, 0.0
  %v1364 = vmax.f32 %v1170, 0.0
  %v1365 = vmax.f32 %v1173, 0.0
  %v1366 = vmax.f32 %v1176, 0.0
  %v1367 = vmax.f32 %v1179, 0.0
  %v1368 = vmax.f32 %v1182, 0.0
  %v1369 = vmax.f32 %v1185, 0.0
  %v1370 = vmax.f32 %v1188, 0.0
  %v1371 = vmax.f32 %v1191, 0.0
  %v1372 = vmax.f32 %v1194, 0.0
  %v1373 = vmax.f32 %v1197, 0.0
  %v1374 = vmax.f32 %v1200, 0.0
  %v1375 = vmax.f32 %v1203, 0.0
  %v1376 = vmax.f32 %v1206, 0.0
  %v1377 = vmax.f32 %v1209, 0.0
  %1378 = vst.msk [vmem:[%s3] sm:$0xff] %vm187, %v1211
  %1379 = vst.msk [vmem:[%s3 + $0x8] sm:$0xff] %vm187, %v1212
  %1380 = vst.msk [vmem:[%s3 + $0x10] sm:$0xff] %vm187, %v1213
  %1381 = vst.msk [vmem:[%s3 + $0x18] sm:$0xff] %vm187, %v1214
  %1382 = vst.msk [vmem:[%s3 + $0x20] sm:$0xff] %vm187, %v1215
  %1383 = vst.msk [vmem:[%s3 + $0x28] sm:$0xff] %vm187, %v1216
  %1384 = vst.msk [vmem:[%s3 + $0x30] sm:$0xff] %vm187, %v1217
  %1385 = vst.msk [vmem:[%s3 + $0x38] sm:$0xff] %vm187, %v1218
  %1386 = vst.msk [vmem:[%s3 + $0x40] sm:$0xff] %vm187, %v1219
  %1387 = vst.msk [vmem:[%s3 + $0x48] sm:$0xff] %vm187, %v1220
  %1388 = vst.msk [vmem:[%s3 + $0x50] sm:$0xff] %vm187, %v1221
  %1389 = vst.msk [vmem:[%s3 + $0x58] sm:$0xff] %vm187, %v1222
  %1390 = vst.msk [vmem:[%s3 + $0x60] sm:$0xff] %vm187, %v1223
  %1391 = vst.msk [vmem:[%s3 + $0x68] sm:$0xff] %vm187, %v1224
  %1392 = vst.msk [vmem:[%s3 + $0x70] sm:$0xff] %vm187, %v1225
  %1393 = vst.msk [vmem:[%s3 + $0x78] sm:$0xff] %vm187, %v1226
  %1394 = vst.msk [vmem:[%s3 + $0x80] sm:$0xff] %vm187, %v1227
  %1395 = vst.msk [vmem:[%s3 + $0x88] sm:$0xff] %vm187, %v1228
  %1396 = vst.msk [vmem:[%s3 + $0x90] sm:$0xff] %vm187, %v1229
  %1397 = vst.msk [vmem:[%s3 + $0x98] sm:$0xff] %vm187, %v1230
  %1398 = vst.msk [vmem:[%s3 + $0xa0] sm:$0xff] %vm187, %v1231
  %1399 = vst.msk [vmem:[%s3 + $0xa8] sm:$0xff] %vm187, %v1232
  %1400 = vst.msk [vmem:[%s3 + $0xb0] sm:$0xff] %vm187, %v1233
  %1401 = vst.msk [vmem:[%s3 + $0xb8] sm:$0xff] %vm187, %v1234
  %1402 = vst.msk [vmem:[%s3 + $0xc0] sm:$0xff] %vm187, %v1235
  %1403 = vst.msk [vmem:[%s3 + $0xc8] sm:$0xff] %vm187, %v1236
  %1404 = vst.msk [vmem:[%s3 + $0xd0] sm:$0xff] %vm187, %v1237
  %1405 = vst.msk [vmem:[%s3 + $0xd8] sm:$0xff] %vm187, %v1238
  %1406 = vst.msk [vmem:[%s3 + $0xe0] sm:$0xff] %vm187, %v1239
  %1407 = vst.msk [vmem:[%s3 + $0xe8] sm:$0xff] %vm187, %v1240
  %1408 = vst.msk [vmem:[%s3 + $0xf0] sm:$0xff] %vm187, %v1241
  %1409 = vst.msk [vmem:[%s3 + $0xf8] sm:$0xff] %vm187, %v1242
  %1410 = vst.msk [vmem:[%s3 + $0x100] sm:$0xff] %vm187, %v1243
  %1411 = vst.msk [vmem:[%s3 + $0x108] sm:$0xff] %vm187, %v1244
  %1412 = vst.msk [vmem:[%s3 + $0x110] sm:$0xff] %vm187, %v1245
  %1413 = vst.msk [vmem:[%s3 + $0x118] sm:$0xff] %vm187, %v1246
  %1414 = vst.msk [vmem:[%s3 + $0x120] sm:$0xff] %vm187, %v1247
  %1415 = vst.msk [vmem:[%s3 + $0x128] sm:$0xff] %vm187, %v1248
  %1416 = vst.msk [vmem:[%s3 + $0x130] sm:$0xff] %vm187, %v1249
  %1417 = vst.msk [vmem:[%s3 + $0x138] sm:$0xff] %vm187, %v1250
  %1418 = vst.msk [vmem:[%s3 + $0x140] sm:$0xff] %vm187, %v1251
  %1419 = vst.msk [vmem:[%s3 + $0x148] sm:$0xff] %vm187, %v1252
  %1420 = vst.msk [vmem:[%s3 + $0x150] sm:$0xff] %vm187, %v1253
  %1421 = vst.msk [vmem:[%s3 + $0x158] sm:$0xff] %vm187, %v1254
  %1422 = vst.msk [vmem:[%s3 + $0x160] sm:$0xff] %vm187, %v1255
  %1423 = vst.msk [vmem:[%s3 + $0x168] sm:$0xff] %vm187, %v1256
  %1424 = vst.msk [vmem:[%s3 + $0x170] sm:$0xff] %vm187, %v1257
  %1425 = vst.msk [vmem:[%s3 + $0x178] sm:$0xff] %vm187, %v1258
  %1426 = vst.msk [vmem:[%s3 + $0x180] sm:$0xff] %vm187, %v1259
  %1427 = vst.msk [vmem:[%s3 + $0x188] sm:$0xff] %vm187, %v1260
  %1428 = vst.msk [vmem:[%s3 + $0x190] sm:$0xff] %vm187, %v1261
  %1429 = vst.msk [vmem:[%s3 + $0x198] sm:$0xff] %vm187, %v1262
  %1430 = vst.msk [vmem:[%s3 + $0x1a0] sm:$0xff] %vm187, %v1263
  %1431 = vst.msk [vmem:[%s3 + $0x1a8] sm:$0xff] %vm187, %v1264
  %1432 = vst.msk [vmem:[%s3 + $0x1b0] sm:$0xff] %vm187, %v1265
  %1433 = vst.msk [vmem:[%s3 + $0x1b8] sm:$0xff] %vm187, %v1266
  %1434 = vst.msk [vmem:[%s3 + $0x1c0] sm:$0xff] %vm187, %v1267
  %1435 = vst.msk [vmem:[%s3 + $0x1c8] sm:$0xff] %vm187, %v1268
  %1436 = vst.msk [vmem:[%s3 + $0x1d0] sm:$0xff] %vm187, %v1269
  %1437 = vst.msk [vmem:[%s3 + $0x1d8] sm:$0xff] %vm187, %v1270
  %1438 = vst.msk [vmem:[%s3 + $0x1e0] sm:$0xff] %vm187, %v1271
  %1439 = vst.msk [vmem:[%s3 + $0x1e8] sm:$0xff] %vm187, %v1272
  %1440 = vst.msk [vmem:[%s3 + $0x1f0] sm:$0xff] %vm187, %v1273
  %1441 = vst.msk [vmem:[%s3 + $0x1f8] sm:$0xff] %vm187, %v1274
  %1442 = vst.msk [vmem:[%s3 + $0x200] sm:$0xff] %vm187, %v1275
  %1443 = vst.msk [vmem:[%s3 + $0x208] sm:$0xff] %vm187, %v1276
  %1444 = vst.msk [vmem:[%s3 + $0x210] sm:$0xff] %vm187, %v1277
  %1445 = vst.msk [vmem:[%s3 + $0x218] sm:$0xff] %vm187, %v1278
  %1446 = vst.msk [vmem:[%s3 + $0x220] sm:$0xff] %vm187, %v1279
  %1447 = vst.msk [vmem:[%s3 + $0x228] sm:$0xff] %vm187, %v1280
  %1448 = vst.msk [vmem:[%s3 + $0x230] sm:$0xff] %vm187, %v1281
  %1449 = vst.msk [vmem:[%s3 + $0x238] sm:$0xff] %vm187, %v1282
  %1450 = vst.msk [vmem:[%s3 + $0x240] sm:$0xff] %vm187, %v1283
  %1451 = vst.msk [vmem:[%s3 + $0x248] sm:$0xff] %vm187, %v1284
  %1452 = vst.msk [vmem:[%s3 + $0x250] sm:$0xff] %vm187, %v1285
  %1453 = vst.msk [vmem:[%s3 + $0x258] sm:$0xff] %vm187, %v1286
  %1454 = vst.msk [vmem:[%s3 + $0x260] sm:$0xff] %vm187, %v1287
  %1455 = vst.msk [vmem:[%s3 + $0x268] sm:$0xff] %vm187, %v1288
  %1456 = vst.msk [vmem:[%s3 + $0x270] sm:$0xff] %vm187, %v1289
  %1457 = vst.msk [vmem:[%s3 + $0x278] sm:$0xff] %vm187, %v1290
  %1458 = vst.msk [vmem:[%s3 + $0x280] sm:$0xff] %vm187, %v1291
  %1459 = vst.msk [vmem:[%s3 + $0x288] sm:$0xff] %vm187, %v1292
  %1460 = vst.msk [vmem:[%s3 + $0x290] sm:$0xff] %vm187, %v1293
  %1461 = vst.msk [vmem:[%s3 + $0x298] sm:$0xff] %vm187, %v1294
  %1462 = vst.msk [vmem:[%s3 + $0x2a0] sm:$0xff] %vm187, %v1295
  %1463 = vst.msk [vmem:[%s3 + $0x2a8] sm:$0xff] %vm187, %v1296
  %1464 = vst.msk [vmem:[%s3 + $0x2b0] sm:$0xff] %vm187, %v1297
  %1465 = vst.msk [vmem:[%s3 + $0x2b8] sm:$0xff] %vm187, %v1298
  %1466 = vst.msk [vmem:[%s3 + $0x2c0] sm:$0xff] %vm187, %v1299
  %1467 = vst.msk [vmem:[%s3 + $0x2c8] sm:$0xff] %vm187, %v1300
  %1468 = vst.msk [vmem:[%s3 + $0x2d0] sm:$0xff] %vm187, %v1301
  %1469 = vst.msk [vmem:[%s3 + $0x2d8] sm:$0xff] %vm187, %v1302
  %1470 = vst.msk [vmem:[%s3 + $0x2e0] sm:$0xff] %vm187, %v1303
  %1471 = vst.msk [vmem:[%s3 + $0x2e8] sm:$0xff] %vm187, %v1304
  %1472 = vst.msk [vmem:[%s3 + $0x2f0] sm:$0xff] %vm187, %v1305
  %1473 = vst.msk [vmem:[%s3 + $0x2f8] sm:$0xff] %vm187, %v1306
  %1474 = vst.msk [vmem:[%s3 + $0x300] sm:$0xff] %vm187, %v1307
  %1475 = vst.msk [vmem:[%s3 + $0x308] sm:$0xff] %vm187, %v1308
  %1476 = vst.msk [vmem:[%s3 + $0x310] sm:$0xff] %vm187, %v1309
  %1477 = vst.msk [vmem:[%s3 + $0x318] sm:$0xff] %vm187, %v1310
  %1478 = vst.msk [vmem:[%s3 + $0x320] sm:$0xff] %vm187, %v1311
  %1479 = vst.msk [vmem:[%s3 + $0x328] sm:$0xff] %vm187, %v1312
  %1480 = vst.msk [vmem:[%s3 + $0x330] sm:$0xff] %vm187, %v1313
  %1481 = vst.msk [vmem:[%s3 + $0x338] sm:$0xff] %vm187, %v1314
  %1482 = vst.msk [vmem:[%s3 + $0x340] sm:$0xff] %vm187, %v1315
  %1483 = vst.msk [vmem:[%s3 + $0x348] sm:$0xff] %vm187, %v1316
  %1484 = vst.msk [vmem:[%s3 + $0x350] sm:$0xff] %vm187, %v1317
  %1485 = vst.msk [vmem:[%s3 + $0x358] sm:$0xff] %vm187, %v1318
  %1486 = vst.msk [vmem:[%s3 + $0x360] sm:$0xff] %vm187, %v1319
  %1487 = vst.msk [vmem:[%s3 + $0x368] sm:$0xff] %vm187, %v1320
  %1488 = vst.msk [vmem:[%s3 + $0x370] sm:$0xff] %vm187, %v1321
  %1489 = vst.msk [vmem:[%s3 + $0x378] sm:$0xff] %vm187, %v1322
  %1490 = vst.msk [vmem:[%s3 + $0x380] sm:$0xff] %vm187, %v1323
  %1491 = vst.msk [vmem:[%s3 + $0x388] sm:$0xff] %vm187, %v1324
  %1492 = vst.msk [vmem:[%s3 + $0x390] sm:$0xff] %vm187, %v1325
  %1493 = vst.msk [vmem:[%s3 + $0x398] sm:$0xff] %vm187, %v1326
  %1494 = vst.msk [vmem:[%s3 + $0x3a0] sm:$0xff] %vm187, %v1327
  %1495 = vst.msk [vmem:[%s3 + $0x3a8] sm:$0xff] %vm187, %v1328
  %1496 = vst.msk [vmem:[%s3 + $0x3b0] sm:$0xff] %vm187, %v1329
  %1497 = vst.msk [vmem:[%s3 + $0x3b8] sm:$0xff] %vm187, %v1330
  %1498 = vst.msk [vmem:[%s3 + $0x3c0] sm:$0xff] %vm187, %v1331
  %1499 = vst.msk [vmem:[%s3 + $0x3c8] sm:$0xff] %vm187, %v1332
  %1500 = vst.msk [vmem:[%s3 + $0x3d0] sm:$0xff] %vm187, %v1333
  %1501 = vst.msk [vmem:[%s3 + $0x3d8] sm:$0xff] %vm187, %v1334
  %1502 = vst.msk [vmem:[%s3 + $0x3e0] sm:$0xff] %vm187, %v1335
  %1503 = vst.msk [vmem:[%s3 + $0x3e8] sm:$0xff] %vm187, %v1336
  %1504 = vst.msk [vmem:[%s3 + $0x3f0] sm:$0xff] %vm187, %v1337
  %1505 = vst.msk [vmem:[%s3 + $0x3f8] sm:$0xff] %vm187, %v1338
  %1506 = vst.msk [vmem:[%s3 + $0x400] sm:$0xff] %vm187, %v1339
  %1507 = vst.msk [vmem:[%s3 + $0x408] sm:$0xff] %vm187, %v1340
  %1508 = vst.msk [vmem:[%s3 + $0x410] sm:$0xff] %vm187, %v1341
  %1509 = vst.msk [vmem:[%s3 + $0x418] sm:$0xff] %vm187, %v1342
  %1510 = vst.msk [vmem:[%s3 + $0x420] sm:$0xff] %vm187, %v1343
  %1511 = vst.msk [vmem:[%s3 + $0x428] sm:$0xff] %vm187, %v1344
  %1512 = vst.msk [vmem:[%s3 + $0x430] sm:$0xff] %vm187, %v1345
  %1513 = vst.msk [vmem:[%s3 + $0x438] sm:$0xff] %vm187, %v1346
  %1514 = vst.msk [vmem:[%s3 + $0x440] sm:$0xff] %vm187, %v1347
  %1515 = vst.msk [vmem:[%s3 + $0x448] sm:$0xff] %vm187, %v1348
  %1516 = vst.msk [vmem:[%s3 + $0x450] sm:$0xff] %vm187, %v1349
  %1517 = vst.msk [vmem:[%s3 + $0x458] sm:$0xff] %vm187, %v1350
  %1518 = vst.msk [vmem:[%s3 + $0x460] sm:$0xff] %vm187, %v1351
  %1519 = vst.msk [vmem:[%s3 + $0x468] sm:$0xff] %vm187, %v1352
  %1520 = vst.msk [vmem:[%s3 + $0x470] sm:$0xff] %vm187, %v1353
  %1521 = vst.msk [vmem:[%s3 + $0x478] sm:$0xff] %vm187, %v1354
  %1522 = vst.msk [vmem:[%s3 + $0x480] sm:$0xff] %vm187, %v1355
  %1523 = vst.msk [vmem:[%s3 + $0x488] sm:$0xff] %vm187, %v1356
  %1524 = vst.msk [vmem:[%s3 + $0x490] sm:$0xff] %vm187, %v1357
  %1525 = vst.msk [vmem:[%s3 + $0x498] sm:$0xff] %vm187, %v1358
  %1526 = vst.msk [vmem:[%s3 + $0x4a0] sm:$0xff] %vm187, %v1359
  %1527 = vst.msk [vmem:[%s3 + $0x4a8] sm:$0xff] %vm187, %v1360
  %1528 = vst.msk [vmem:[%s3 + $0x4b0] sm:$0xff] %vm187, %v1361
  %1529 = vst.msk [vmem:[%s3 + $0x4b8] sm:$0xff] %vm187, %v1362
  %1530 = vst.msk [vmem:[%s3 + $0x4c0] sm:$0xff] %vm187, %v1363
  %1531 = vst.msk [vmem:[%s3 + $0x4c8] sm:$0xff] %vm187, %v1364
  %1532 = vst.msk [vmem:[%s3 + $0x4d0] sm:$0xff] %vm187, %v1365
  %1533 = vst.msk [vmem:[%s3 + $0x4d8] sm:$0xff] %vm187, %v1366
  %1534 = vst.msk [vmem:[%s3 + $0x4e0] sm:$0xff] %vm187, %v1367
  %1535 = vst.msk [vmem:[%s3 + $0x4e8] sm:$0xff] %vm187, %v1368
  %1536 = vst.msk [vmem:[%s3 + $0x4f0] sm:$0xff] %vm187, %v1369
  %1537 = vst.msk [vmem:[%s3 + $0x4f8] sm:$0xff] %vm187, %v1370
  %1538 = vst.msk [vmem:[%s3 + $0x500] sm:$0xff] %vm187, %v1371
  %1539 = vst.msk [vmem:[%s3 + $0x508] sm:$0xff] %vm187, %v1372
  %1540 = vst.msk [vmem:[%s3 + $0x510] sm:$0xff] %vm187, %v1373
  %1541 = vst.msk [vmem:[%s3 + $0x518] sm:$0xff] %vm187, %v1374
  %1542 = vst.msk [vmem:[%s3 + $0x520] sm:$0xff] %vm187, %v1375
  %1543 = vst.msk [vmem:[%s3 + $0x528] sm:$0xff] %vm187, %v1376
  %vm1544 = vcmask 95232
  %1545 = vst.msk [vmem:[%s3 + $0x530] sm:$0x3f] %vm1544, %v1377
  // Predicated region
  $region14: #{_lambda_.6} parent=0 // pred_check
    _
  $region15: #{_lambda_.6} parent=0 // pred_check_branch
    %1547 = sbr.rel (0) target = $region17
  $region16: #{_lambda_.6} parent=0 // pred_region
    _
  $region17: #{_lambda_.6} parent=0 // pred_fallthru
    _
  // Predicated region
  $region18: #{_lambda_.6} parent=0 // pred_check
    _
  $region19: #{_lambda_.6} parent=0 // pred_check_branch
    %1549 = sbr.rel (0) target = $region21
  $region20: #{_lambda_.6} parent=0 // pred_region
    _
  $region21: #{_lambda_.6} parent=0 // pred_fallthru
    _

// kernel: _lambda_.7
$region0: #{_lambda_.7}
  #allocation0 [shape = 'u32[]', space=smem, size = 0x4, offset = 0x4, fixed_abs, tag = 'smem constant byte address 0x4 - core index']
  #allocation1 [shape = 'u32[72,128]{1,0:T(1,128)}', space=vmem, size = 0x9000, scoped, tag = 'internal scratch']
  %s0 = inlined_call_operand.vmem [shape: f32[446,36], index: 0, kind: input, shape index: {}]
  %s1 = inlined_call_operand.vmem [shape: f32[36,12], index: 1, kind: input, shape index: {}]
  %s2 = inlined_call_operand.vmem [shape: f32[1,12], index: 2, kind: input, shape index: {}]
  %s3 = inlined_call_operand.vmem [shape: f32[446,12], index: 3, kind: output, shape index: {}]
  %s4 = sld [smem:[#allocation0]]
  $region22: #{_lambda_.7} parent=0
    _
  %s6 = ssub.s32 1, %s4
  %s7 = scalar_select 0, %s6, %s4
  // Predicated region
  $region2: #{_lambda_.7} parent=0 // pred_check
    _
  $region3: #{_lambda_.7} parent=0 // pred_check_branch
    %9 = sbr.rel (0) target = $region5
  $region4: #{_lambda_.7} parent=0 // pred_region
    _
  $region5: #{_lambda_.7} parent=0 // pred_fallthru
    _
  // Predicated region
  $region6: #{_lambda_.7} parent=0 // pred_check
    _
  $region7: #{_lambda_.7} parent=0 // pred_check_branch
    %11 = sbr.rel (0) target = $region9
  $region8: #{_lambda_.7} parent=0 // pred_region
    _
  $region9: #{_lambda_.7} parent=0 // pred_fallthru
    _
  // Predicated region
  $region10: #{_lambda_.7} parent=0 // pred_check
    _
  $region11: #{_lambda_.7} parent=0 // pred_check_branch
    %13 = sbr.rel (0) target = $region13
  $region12: #{_lambda_.7} parent=0 // pred_region
    _
  $region13: #{_lambda_.7} parent=0 // pred_fallthru
    _
  %v14 = vld [vmem:[%s0] sm:$0xff]
  %v15 = vld [vmem:[%s0 + $0x8] sm:$0xff]
  %v16 = vld [vmem:[%s0 + $0x10] sm:$0xff]
  %v17 = vld [vmem:[%s0 + $0x18] sm:$0xff]
  %v18 = vld [vmem:[%s0 + $0x20] sm:$0xff]
  %v19 = vld [vmem:[%s0 + $0x28] sm:$0xff]
  %v20 = vld [vmem:[%s0 + $0x30] sm:$0xff]
  %v21 = vld [vmem:[%s0 + $0x38] sm:$0xff]
  %v22 = vld [vmem:[%s0 + $0x40] sm:$0xff]
  %v23 = vld [vmem:[%s0 + $0x48] sm:$0xff]
  %v24 = vld [vmem:[%s0 + $0x50] sm:$0xff]
  %v25 = vld [vmem:[%s0 + $0x58] sm:$0xff]
  %v26 = vld [vmem:[%s0 + $0x60] sm:$0xff]
  %v27 = vld [vmem:[%s0 + $0x68] sm:$0xff]
  %v28 = vld [vmem:[%s0 + $0x70] sm:$0xff]
  %v29 = vld [vmem:[%s0 + $0x78] sm:$0xff]
  %v30 = vld [vmem:[%s0 + $0x80] sm:$0xff]
  %v31 = vld [vmem:[%s0 + $0x88] sm:$0xff]
  %v32 = vld [vmem:[%s0 + $0x90] sm:$0xff]
  %v33 = vld [vmem:[%s0 + $0x98] sm:$0xff]
  %v34 = vld [vmem:[%s0 + $0xa0] sm:$0xff]
  %v35 = vld [vmem:[%s0 + $0xa8] sm:$0xff]
  %v36 = vld [vmem:[%s0 + $0xb0] sm:$0xff]
  %v37 = vld [vmem:[%s0 + $0xb8] sm:$0xff]
  %v38 = vld [vmem:[%s0 + $0xc0] sm:$0xff]
  %v39 = vld [vmem:[%s0 + $0xc8] sm:$0xff]
  %v40 = vld [vmem:[%s0 + $0xd0] sm:$0xff]
  %v41 = vld [vmem:[%s0 + $0xd8] sm:$0xff]
  %v42 = vld [vmem:[%s0 + $0xe0] sm:$0xff]
  %v43 = vld [vmem:[%s0 + $0xe8] sm:$0xff]
  %v44 = vld [vmem:[%s0 + $0xf0] sm:$0xff]
  %v45 = vld [vmem:[%s0 + $0xf8] sm:$0xff]
  %v46 = vld [vmem:[%s0 + $0x100] sm:$0xff]
  %v47 = vld [vmem:[%s0 + $0x108] sm:$0xff]
  %v48 = vld [vmem:[%s0 + $0x110] sm:$0xff]
  %v49 = vld [vmem:[%s0 + $0x118] sm:$0xff]
  %v50 = vld [vmem:[%s0 + $0x120] sm:$0xff]
  %v51 = vld [vmem:[%s0 + $0x128] sm:$0xff]
  %v52 = vld [vmem:[%s0 + $0x130] sm:$0xff]
  %v53 = vld [vmem:[%s0 + $0x138] sm:$0xff]
  %v54 = vld [vmem:[%s0 + $0x140] sm:$0xff]
  %v55 = vld [vmem:[%s0 + $0x148] sm:$0xff]
  %v56 = vld [vmem:[%s0 + $0x150] sm:$0xff]
  %v57 = vld [vmem:[%s0 + $0x158] sm:$0xff]
  %v58 = vld [vmem:[%s0 + $0x160] sm:$0xff]
  %v59 = vld [vmem:[%s0 + $0x168] sm:$0xff]
  %v60 = vld [vmem:[%s0 + $0x170] sm:$0xff]
  %v61 = vld [vmem:[%s0 + $0x178] sm:$0xff]
  %v62 = vld [vmem:[%s0 + $0x180] sm:$0xff]
  %v63 = vld [vmem:[%s0 + $0x188] sm:$0xff]
  %v64 = vld [vmem:[%s0 + $0x190] sm:$0xff]
  %v65 = vld [vmem:[%s0 + $0x198] sm:$0xff]
  %v66 = vld [vmem:[%s0 + $0x1a0] sm:$0xff]
  %v67 = vld [vmem:[%s0 + $0x1a8] sm:$0xff]
  %v68 = vld [vmem:[%s0 + $0x1b0] sm:$0xff]
  %v69 = vld [vmem:[%s0 + $0x1b8] sm:$0x3f]
  %v70 = vld [vmem:[%s1] sm:$0xff]
  %v71 = vld [vmem:[%s1 + $0x8] sm:$0xff]
  %v72 = vld [vmem:[%s1 + $0x10] sm:$0xff]
  %v73 = vld [vmem:[%s1 + $0x18] sm:$0xff]
  %v74 = vld [vmem:[%s1 + $0x20] sm:$0xf]
  %v75 = vld [vmem:[%s2] sm:$0x1]
  %v77 = vperm.slane %v75, 0
  %vm79 = vcmask 293888
  %v81 = vsel %vm79, %v14, 0
  %v84 = vsel %vm79, %v15, 0
  %v87 = vsel %vm79, %v16, 0
  %v90 = vsel %vm79, %v17, 0
  %v93 = vsel %vm79, %v18, 0
  %v96 = vsel %vm79, %v19, 0
  %v99 = vsel %vm79, %v20, 0
  %v102 = vsel %vm79, %v21, 0
  %v105 = vsel %vm79, %v22, 0
  %v108 = vsel %vm79, %v23, 0
  %v111 = vsel %vm79, %v24, 0
  %v114 = vsel %vm79, %v25, 0
  %v117 = vsel %vm79, %v26, 0
  %v120 = vsel %vm79, %v27, 0
  %v123 = vsel %vm79, %v28, 0
  %v126 = vsel %vm79, %v29, 0
  %v129 = vsel %vm79, %v30, 0
  %v132 = vsel %vm79, %v31, 0
  %v135 = vsel %vm79, %v32, 0
  %v138 = vsel %vm79, %v33, 0
  %v141 = vsel %vm79, %v34, 0
  %v144 = vsel %vm79, %v35, 0
  %v147 = vsel %vm79, %v36, 0
  %v150 = vsel %vm79, %v37, 0
  %v153 = vsel %vm79, %v38, 0
  %v156 = vsel %vm79, %v39, 0
  %v159 = vsel %vm79, %v40, 0
  %v162 = vsel %vm79, %v41, 0
  %v165 = vsel %vm79, %v42, 0
  %v168 = vsel %vm79, %v43, 0
  %v171 = vsel %vm79, %v44, 0
  %v174 = vsel %vm79, %v45, 0
  %v177 = vsel %vm79, %v46, 0
  %v180 = vsel %vm79, %v47, 0
  %v183 = vsel %vm79, %v48, 0
  %v186 = vsel %vm79, %v49, 0
  %v189 = vsel %vm79, %v50, 0
  %v192 = vsel %vm79, %v51, 0
  %v195 = vsel %vm79, %v52, 0
  %v198 = vsel %vm79, %v53, 0
  %v201 = vsel %vm79, %v54, 0
  %v204 = vsel %vm79, %v55, 0
  %v207 = vsel %vm79, %v56, 0
  %v210 = vsel %vm79, %v57, 0
  %v213 = vsel %vm79, %v58, 0
  %v216 = vsel %vm79, %v59, 0
  %v219 = vsel %vm79, %v60, 0
  %v222 = vsel %vm79, %v61, 0
  %v225 = vsel %vm79, %v62, 0
  %v228 = vsel %vm79, %v63, 0
  %v231 = vsel %vm79, %v64, 0
  %v234 = vsel %vm79, %v65, 0
  %v237 = vsel %vm79, %v66, 0
  %v240 = vsel %vm79, %v67, 0
  %v243 = vsel %vm79, %v68, 0
  %v246 = vsel %vm79, %v69, 0
  %vm248 = vcmask 1043456
  %v250 = vsel %vm248, %v74, 0
  %252 = vmatpush.msra.mxu0 0.0
  %253 = vmatpush.msra.mxu0 0.0
  %254 = vmatpush.msra.mxu0 0.0
  %255 = vmatpush.msra.mxu0 0.0
  %256 = vmatpush.msra.mxu0 0.0
  %257 = vmatpush.msra.mxu0 0.0
  %258 = vmatpush.msra.mxu0 0.0
  %259 = vmatpush.msra.mxu0 0.0
  %260 = vmatpush.msra.mxu0 0.0
  %261 = vmatpush.msra.mxu0 0.0
  %262 = vmatpush.msra.mxu0 0.0
  %263 = vmatpush.msra.mxu0 %v250
  %264 = vmatpush.msra.mxu0 %v73
  %265 = vmatpush.msra.mxu0 %v72
  %266 = vmatpush.msra.mxu0 %v71
  %267 = vmatpush.msra.mxu0 %v70
  %268 = vmatmul.f32.gmra.mxu0 %v81
  %v269 = vpop.f32.mrf.mxu0
  %v270 = vadd.f32 %v77, %v269
  %271 = vmatmul.f32.gmra.mxu0 %v84
  %v272 = vpop.f32.mrf.mxu0
  %v273 = vadd.f32 %v77, %v272
  %274 = vmatmul.f32.gmra.mxu0 %v87
  %v275 = vpop.f32.mrf.mxu0
  %v276 = vadd.f32 %v77, %v275
  %277 = vmatmul.f32.gmra.mxu0 %v90
  %v278 = vpop.f32.mrf.mxu0
  %v279 = vadd.f32 %v77, %v278
  %280 = vmatmul.f32.gmra.mxu0 %v93
  %v281 = vpop.f32.mrf.mxu0
  %v282 = vadd.f32 %v77, %v281
  %283 = vmatmul.f32.gmra.mxu0 %v96
  %v284 = vpop.f32.mrf.mxu0
  %v285 = vadd.f32 %v77, %v284
  %286 = vmatmul.f32.gmra.mxu0 %v99
  %v287 = vpop.f32.mrf.mxu0
  %v288 = vadd.f32 %v77, %v287
  %289 = vmatmul.f32.gmra.mxu0 %v102
  %v290 = vpop.f32.mrf.mxu0
  %v291 = vadd.f32 %v77, %v290
  %292 = vmatmul.f32.gmra.mxu0 %v105
  %v293 = vpop.f32.mrf.mxu0
  %v294 = vadd.f32 %v77, %v293
  %295 = vmatmul.f32.gmra.mxu0 %v108
  %v296 = vpop.f32.mrf.mxu0
  %v297 = vadd.f32 %v77, %v296
  %298 = vmatmul.f32.gmra.mxu0 %v111
  %v299 = vpop.f32.mrf.mxu0
  %v300 = vadd.f32 %v77, %v299
  %301 = vmatmul.f32.gmra.mxu0 %v114
  %v302 = vpop.f32.mrf.mxu0
  %v303 = vadd.f32 %v77, %v302
  %304 = vmatmul.f32.gmra.mxu0 %v117
  %v305 = vpop.f32.mrf.mxu0
  %v306 = vadd.f32 %v77, %v305
  %307 = vmatmul.f32.gmra.mxu0 %v120
  %v308 = vpop.f32.mrf.mxu0
  %v309 = vadd.f32 %v77, %v308
  %310 = vmatmul.f32.gmra.mxu0 %v123
  %v311 = vpop.f32.mrf.mxu0
  %v312 = vadd.f32 %v77, %v311
  %313 = vmatmul.f32.gmra.mxu0 %v126
  %v314 = vpop.f32.mrf.mxu0
  %v315 = vadd.f32 %v77, %v314
  %316 = vmatmul.f32.gmra.mxu0 %v129
  %v317 = vpop.f32.mrf.mxu0
  %v318 = vadd.f32 %v77, %v317
  %319 = vmatmul.f32.gmra.mxu0 %v132
  %v320 = vpop.f32.mrf.mxu0
  %v321 = vadd.f32 %v77, %v320
  %322 = vmatmul.f32.gmra.mxu0 %v135
  %v323 = vpop.f32.mrf.mxu0
  %v324 = vadd.f32 %v77, %v323
  %325 = vmatmul.f32.gmra.mxu0 %v138
  %v326 = vpop.f32.mrf.mxu0
  %v327 = vadd.f32 %v77, %v326
  %328 = vmatmul.f32.gmra.mxu0 %v141
  %v329 = vpop.f32.mrf.mxu0
  %v330 = vadd.f32 %v77, %v329
  %331 = vmatmul.f32.gmra.mxu0 %v144
  %v332 = vpop.f32.mrf.mxu0
  %v333 = vadd.f32 %v77, %v332
  %334 = vmatmul.f32.gmra.mxu0 %v147
  %v335 = vpop.f32.mrf.mxu0
  %v336 = vadd.f32 %v77, %v335
  %337 = vmatmul.f32.gmra.mxu0 %v150
  %v338 = vpop.f32.mrf.mxu0
  %v339 = vadd.f32 %v77, %v338
  %340 = vmatmul.f32.gmra.mxu0 %v153
  %v341 = vpop.f32.mrf.mxu0
  %v342 = vadd.f32 %v77, %v341
  %343 = vmatmul.f32.gmra.mxu0 %v156
  %v344 = vpop.f32.mrf.mxu0
  %v345 = vadd.f32 %v77, %v344
  %346 = vmatmul.f32.gmra.mxu0 %v159
  %v347 = vpop.f32.mrf.mxu0
  %v348 = vadd.f32 %v77, %v347
  %349 = vmatmul.f32.gmra.mxu0 %v162
  %v350 = vpop.f32.mrf.mxu0
  %v351 = vadd.f32 %v77, %v350
  %352 = vmatmul.f32.gmra.mxu0 %v165
  %v353 = vpop.f32.mrf.mxu0
  %v354 = vadd.f32 %v77, %v353
  %355 = vmatmul.f32.gmra.mxu0 %v168
  %v356 = vpop.f32.mrf.mxu0
  %v357 = vadd.f32 %v77, %v356
  %358 = vmatmul.f32.gmra.mxu0 %v171
  %v359 = vpop.f32.mrf.mxu0
  %v360 = vadd.f32 %v77, %v359
  %361 = vmatmul.f32.gmra.mxu0 %v174
  %v362 = vpop.f32.mrf.mxu0
  %v363 = vadd.f32 %v77, %v362
  %364 = vmatmul.f32.gmra.mxu0 %v177
  %v365 = vpop.f32.mrf.mxu0
  %v366 = vadd.f32 %v77, %v365
  %367 = vmatmul.f32.gmra.mxu0 %v180
  %v368 = vpop.f32.mrf.mxu0
  %v369 = vadd.f32 %v77, %v368
  %370 = vmatmul.f32.gmra.mxu0 %v183
  %v371 = vpop.f32.mrf.mxu0
  %v372 = vadd.f32 %v77, %v371
  %373 = vmatmul.f32.gmra.mxu0 %v186
  %v374 = vpop.f32.mrf.mxu0
  %v375 = vadd.f32 %v77, %v374
  %376 = vmatmul.f32.gmra.mxu0 %v189
  %v377 = vpop.f32.mrf.mxu0
  %v378 = vadd.f32 %v77, %v377
  %379 = vmatmul.f32.gmra.mxu0 %v192
  %v380 = vpop.f32.mrf.mxu0
  %v381 = vadd.f32 %v77, %v380
  %382 = vmatmul.f32.gmra.mxu0 %v195
  %v383 = vpop.f32.mrf.mxu0
  %v384 = vadd.f32 %v77, %v383
  %385 = vmatmul.f32.gmra.mxu0 %v198
  %v386 = vpop.f32.mrf.mxu0
  %v387 = vadd.f32 %v77, %v386
  %388 = vmatmul.f32.gmra.mxu0 %v201
  %v389 = vpop.f32.mrf.mxu0
  %v390 = vadd.f32 %v77, %v389
  %391 = vmatmul.f32.gmra.mxu0 %v204
  %v392 = vpop.f32.mrf.mxu0
  %v393 = vadd.f32 %v77, %v392
  %394 = vmatmul.f32.gmra.mxu0 %v207
  %v395 = vpop.f32.mrf.mxu0
  %v396 = vadd.f32 %v77, %v395
  %397 = vmatmul.f32.gmra.mxu0 %v210
  %v398 = vpop.f32.mrf.mxu0
  %v399 = vadd.f32 %v77, %v398
  %400 = vmatmul.f32.gmra.mxu0 %v213
  %v401 = vpop.f32.mrf.mxu0
  %v402 = vadd.f32 %v77, %v401
  %403 = vmatmul.f32.gmra.mxu0 %v216
  %v404 = vpop.f32.mrf.mxu0
  %v405 = vadd.f32 %v77, %v404
  %406 = vmatmul.f32.gmra.mxu0 %v219
  %v407 = vpop.f32.mrf.mxu0
  %v408 = vadd.f32 %v77, %v407
  %409 = vmatmul.f32.gmra.mxu0 %v222
  %v410 = vpop.f32.mrf.mxu0
  %v411 = vadd.f32 %v77, %v410
  %412 = vmatmul.f32.gmra.mxu0 %v225
  %v413 = vpop.f32.mrf.mxu0
  %v414 = vadd.f32 %v77, %v413
  %415 = vmatmul.f32.gmra.mxu0 %v228
  %v416 = vpop.f32.mrf.mxu0
  %v417 = vadd.f32 %v77, %v416
  %418 = vmatmul.f32.gmra.mxu0 %v231
  %v419 = vpop.f32.mrf.mxu0
  %v420 = vadd.f32 %v77, %v419
  %421 = vmatmul.f32.gmra.mxu0 %v234
  %v422 = vpop.f32.mrf.mxu0
  %v423 = vadd.f32 %v77, %v422
  %424 = vmatmul.f32.gmra.mxu0 %v237
  %v425 = vpop.f32.mrf.mxu0
  %v426 = vadd.f32 %v77, %v425
  %427 = vmatmul.f32.gmra.mxu0 %v240
  %v428 = vpop.f32.mrf.mxu0
  %v429 = vadd.f32 %v77, %v428
  %430 = vmatmul.f32.gmra.mxu0 %v243
  %v431 = vpop.f32.mrf.mxu0
  %v432 = vadd.f32 %v77, %v431
  %433 = vmatmul.f32.gmra.mxu0 %v246
  %v434 = vpop.f32.mrf.mxu0
  %v435 = vadd.f32 %v77, %v434
  %436 = vdwg.mxu0
  %v437 = vmax.f32 %v270, 0.0
  %v438 = vmax.f32 %v273, 0.0
  %v439 = vmax.f32 %v276, 0.0
  %v440 = vmax.f32 %v279, 0.0
  %v441 = vmax.f32 %v282, 0.0
  %v442 = vmax.f32 %v285, 0.0
  %v443 = vmax.f32 %v288, 0.0
  %v444 = vmax.f32 %v291, 0.0
  %v445 = vmax.f32 %v294, 0.0
  %v446 = vmax.f32 %v297, 0.0
  %v447 = vmax.f32 %v300, 0.0
  %v448 = vmax.f32 %v303, 0.0
  %v449 = vmax.f32 %v306, 0.0
  %v450 = vmax.f32 %v309, 0.0
  %v451 = vmax.f32 %v312, 0.0
  %v452 = vmax.f32 %v315, 0.0
  %v453 = vmax.f32 %v318, 0.0
  %v454 = vmax.f32 %v321, 0.0
  %v455 = vmax.f32 %v324, 0.0
  %v456 = vmax.f32 %v327, 0.0
  %v457 = vmax.f32 %v330, 0.0
  %v458 = vmax.f32 %v333, 0.0
  %v459 = vmax.f32 %v336, 0.0
  %v460 = vmax.f32 %v339, 0.0
  %v461 = vmax.f32 %v342, 0.0
  %v462 = vmax.f32 %v345, 0.0
  %v463 = vmax.f32 %v348, 0.0
  %v464 = vmax.f32 %v351, 0.0
  %v465 = vmax.f32 %v354, 0.0
  %v466 = vmax.f32 %v357, 0.0
  %v467 = vmax.f32 %v360, 0.0
  %v468 = vmax.f32 %v363, 0.0
  %v469 = vmax.f32 %v366, 0.0
  %v470 = vmax.f32 %v369, 0.0
  %v471 = vmax.f32 %v372, 0.0
  %v472 = vmax.f32 %v375, 0.0
  %v473 = vmax.f32 %v378, 0.0
  %v474 = vmax.f32 %v381, 0.0
  %v475 = vmax.f32 %v384, 0.0
  %v476 = vmax.f32 %v387, 0.0
  %v477 = vmax.f32 %v390, 0.0
  %v478 = vmax.f32 %v393, 0.0
  %v479 = vmax.f32 %v396, 0.0
  %v480 = vmax.f32 %v399, 0.0
  %v481 = vmax.f32 %v402, 0.0
  %v482 = vmax.f32 %v405, 0.0
  %v483 = vmax.f32 %v408, 0.0
  %v484 = vmax.f32 %v411, 0.0
  %v485 = vmax.f32 %v414, 0.0
  %v486 = vmax.f32 %v417, 0.0
  %v487 = vmax.f32 %v420, 0.0
  %v488 = vmax.f32 %v423, 0.0
  %v489 = vmax.f32 %v426, 0.0
  %v490 = vmax.f32 %v429, 0.0
  %v491 = vmax.f32 %v432, 0.0
  %v492 = vmax.f32 %v435, 0.0
  %vm493 = vcmask 97280
  %494 = vst.msk [vmem:[%s3] sm:$0xff] %vm493, %v437
  %495 = vst.msk [vmem:[%s3 + $0x8] sm:$0xff] %vm493, %v438
  %496 = vst.msk [vmem:[%s3 + $0x10] sm:$0xff] %vm493, %v439
  %497 = vst.msk [vmem:[%s3 + $0x18] sm:$0xff] %vm493, %v440
  %498 = vst.msk [vmem:[%s3 + $0x20] sm:$0xff] %vm493, %v441
  %499 = vst.msk [vmem:[%s3 + $0x28] sm:$0xff] %vm493, %v442
  %500 = vst.msk [vmem:[%s3 + $0x30] sm:$0xff] %vm493, %v443
  %501 = vst.msk [vmem:[%s3 + $0x38] sm:$0xff] %vm493, %v444
  %502 = vst.msk [vmem:[%s3 + $0x40] sm:$0xff] %vm493, %v445
  %503 = vst.msk [vmem:[%s3 + $0x48] sm:$0xff] %vm493, %v446
  %504 = vst.msk [vmem:[%s3 + $0x50] sm:$0xff] %vm493, %v447
  %505 = vst.msk [vmem:[%s3 + $0x58] sm:$0xff] %vm493, %v448
  %506 = vst.msk [vmem:[%s3 + $0x60] sm:$0xff] %vm493, %v449
  %507 = vst.msk [vmem:[%s3 + $0x68] sm:$0xff] %vm493, %v450
  %508 = vst.msk [vmem:[%s3 + $0x70] sm:$0xff] %vm493, %v451
  %509 = vst.msk [vmem:[%s3 + $0x78] sm:$0xff] %vm493, %v452
  %510 = vst.msk [vmem:[%s3 + $0x80] sm:$0xff] %vm493, %v453
  %511 = vst.msk [vmem:[%s3 + $0x88] sm:$0xff] %vm493, %v454
  %512 = vst.msk [vmem:[%s3 + $0x90] sm:$0xff] %vm493, %v455
  %513 = vst.msk [vmem:[%s3 + $0x98] sm:$0xff] %vm493, %v456
  %514 = vst.msk [vmem:[%s3 + $0xa0] sm:$0xff] %vm493, %v457
  %515 = vst.msk [vmem:[%s3 + $0xa8] sm:$0xff] %vm493, %v458
  %516 = vst.msk [vmem:[%s3 + $0xb0] sm:$0xff] %vm493, %v459
  %517 = vst.msk [vmem:[%s3 + $0xb8] sm:$0xff] %vm493, %v460
  %518 = vst.msk [vmem:[%s3 + $0xc0] sm:$0xff] %vm493, %v461
  %519 = vst.msk [vmem:[%s3 + $0xc8] sm:$0xff] %vm493, %v462
  %520 = vst.msk [vmem:[%s3 + $0xd0] sm:$0xff] %vm493, %v463
  %521 = vst.msk [vmem:[%s3 + $0xd8] sm:$0xff] %vm493, %v464
  %522 = vst.msk [vmem:[%s3 + $0xe0] sm:$0xff] %vm493, %v465
  %523 = vst.msk [vmem:[%s3 + $0xe8] sm:$0xff] %vm493, %v466
  %524 = vst.msk [vmem:[%s3 + $0xf0] sm:$0xff] %vm493, %v467
  %525 = vst.msk [vmem:[%s3 + $0xf8] sm:$0xff] %vm493, %v468
  %526 = vst.msk [vmem:[%s3 + $0x100] sm:$0xff] %vm493, %v469
  %527 = vst.msk [vmem:[%s3 + $0x108] sm:$0xff] %vm493, %v470
  %528 = vst.msk [vmem:[%s3 + $0x110] sm:$0xff] %vm493, %v471
  %529 = vst.msk [vmem:[%s3 + $0x118] sm:$0xff] %vm493, %v472
  %530 = vst.msk [vmem:[%s3 + $0x120] sm:$0xff] %vm493, %v473
  %531 = vst.msk [vmem:[%s3 + $0x128] sm:$0xff] %vm493, %v474
  %532 = vst.msk [vmem:[%s3 + $0x130] sm:$0xff] %vm493, %v475
  %533 = vst.msk [vmem:[%s3 + $0x138] sm:$0xff] %vm493, %v476
  %534 = vst.msk [vmem:[%s3 + $0x140] sm:$0xff] %vm493, %v477
  %535 = vst.msk [vmem:[%s3 + $0x148] sm:$0xff] %vm493, %v478
  %536 = vst.msk [vmem:[%s3 + $0x150] sm:$0xff] %vm493, %v479
  %537 = vst.msk [vmem:[%s3 + $0x158] sm:$0xff] %vm493, %v480
  %538 = vst.msk [vmem:[%s3 + $0x160] sm:$0xff] %vm493, %v481
  %539 = vst.msk [vmem:[%s3 + $0x168] sm:$0xff] %vm493, %v482
  %540 = vst.msk [vmem:[%s3 + $0x170] sm:$0xff] %vm493, %v483
  %541 = vst.msk [vmem:[%s3 + $0x178] sm:$0xff] %vm493, %v484
  %542 = vst.msk [vmem:[%s3 + $0x180] sm:$0xff] %vm493, %v485
  %543 = vst.msk [vmem:[%s3 + $0x188] sm:$0xff] %vm493, %v486
  %544 = vst.msk [vmem:[%s3 + $0x190] sm:$0xff] %vm493, %v487
  %545 = vst.msk [vmem:[%s3 + $0x198] sm:$0xff] %vm493, %v488
  %546 = vst.msk [vmem:[%s3 + $0x1a0] sm:$0xff] %vm493, %v489
  %547 = vst.msk [vmem:[%s3 + $0x1a8] sm:$0xff] %vm493, %v490
  %548 = vst.msk [vmem:[%s3 + $0x1b0] sm:$0xff] %vm493, %v491
  %vm549 = vcmask 95232
  %550 = vst.msk [vmem:[%s3 + $0x1b8] sm:$0x3f] %vm549, %v492
  // Predicated region
  $region14: #{_lambda_.7} parent=0 // pred_check
    _
  $region15: #{_lambda_.7} parent=0 // pred_check_branch
    %552 = sbr.rel (0) target = $region17
  $region16: #{_lambda_.7} parent=0 // pred_region
    _
  $region17: #{_lambda_.7} parent=0 // pred_fallthru
    _
  // Predicated region
  $region18: #{_lambda_.7} parent=0 // pred_check
    _
  $region19: #{_lambda_.7} parent=0 // pred_check_branch
    %554 = sbr.rel (0) target = $region21
  $region20: #{_lambda_.7} parent=0 // pred_region
    _
  $region21: #{_lambda_.7} parent=0 // pred_fallthru
    _

// kernel: _lambda_.8
$region0: #{_lambda_.8}
  #allocation0 [shape = 'u32[]', space=smem, size = 0x4, offset = 0x4, fixed_abs, tag = 'smem constant byte address 0x4 - core index']
  #allocation1 [shape = 'u32[72,128]{1,0:T(1,128)}', space=vmem, size = 0x9000, scoped, tag = 'internal scratch']
  %s0 = inlined_call_operand.vmem [shape: f32[90,60], index: 0, kind: input, shape index: {}]
  %s1 = inlined_call_operand.vmem [shape: f32[60,10], index: 1, kind: input, shape index: {}]
  %s2 = inlined_call_operand.vmem [shape: f32[1,10], index: 2, kind: input, shape index: {}]
  %s3 = inlined_call_operand.vmem [shape: f32[90,10], index: 3, kind: output, shape index: {}]
  %s4 = sld [smem:[#allocation0]]
  $region22: #{_lambda_.8} parent=0
    _
  %s6 = ssub.s32 1, %s4
  %s7 = scalar_select 0, %s6, %s4
  // Predicated region
  $region2: #{_lambda_.8} parent=0 // pred_check
    _
  $region3: #{_lambda_.8} parent=0 // pred_check_branch
    %9 = sbr.rel (0) target = $region5
  $region4: #{_lambda_.8} parent=0 // pred_region
    _
  $region5: #{_lambda_.8} parent=0 // pred_fallthru
    _
  // Predicated region
  $region6: #{_lambda_.8} parent=0 // pred_check
    _
  $region7: #{_lambda_.8} parent=0 // pred_check_branch
    %11 = sbr.rel (0) target = $region9
  $region8: #{_lambda_.8} parent=0 // pred_region
    _
  $region9: #{_lambda_.8} parent=0 // pred_fallthru
    _
  // Predicated region
  $region10: #{_lambda_.8} parent=0 // pred_check
    _
  $region11: #{_lambda_.8} parent=0 // pred_check_branch
    %13 = sbr.rel (0) target = $region13
  $region12: #{_lambda_.8} parent=0 // pred_region
    _
  $region13: #{_lambda_.8} parent=0 // pred_fallthru
    _
  %v14 = vld [vmem:[%s0] sm:$0xff]
  %v15 = vld [vmem:[%s0 + $0x8] sm:$0xff]
  %v16 = vld [vmem:[%s0 + $0x10] sm:$0xff]
  %v17 = vld [vmem:[%s0 + $0x18] sm:$0xff]
  %v18 = vld [vmem:[%s0 + $0x20] sm:$0xff]
  %v19 = vld [vmem:[%s0 + $0x28] sm:$0xff]
  %v20 = vld [vmem:[%s0 + $0x30] sm:$0xff]
  %v21 = vld [vmem:[%s0 + $0x38] sm:$0xff]
  %v22 = vld [vmem:[%s0 + $0x40] sm:$0xff]
  %v23 = vld [vmem:[%s0 + $0x48] sm:$0xff]
  %v24 = vld [vmem:[%s0 + $0x50] sm:$0xff]
  %v25 = vld [vmem:[%s0 + $0x58] sm:$0x3]
  %v26 = vld [vmem:[%s1] sm:$0xff]
  %v27 = vld [vmem:[%s1 + $0x8] sm:$0xff]
  %v28 = vld [vmem:[%s1 + $0x10] sm:$0xff]
  %v29 = vld [vmem:[%s1 + $0x18] sm:$0xff]
  %v30 = vld [vmem:[%s1 + $0x20] sm:$0xff]
  %v31 = vld [vmem:[%s1 + $0x28] sm:$0xff]
  %v32 = vld [vmem:[%s1 + $0x30] sm:$0xff]
  %v33 = vld [vmem:[%s1 + $0x38] sm:$0xf]
  %v34 = vld [vmem:[%s2] sm:$0x1]
  %v36 = vperm.slane %v34, 0
  %vm38 = vcmask 490496
  %v40 = vsel %vm38, %v14, 0
  %v43 = vsel %vm38, %v15, 0
  %v46 = vsel %vm38, %v16, 0
  %v49 = vsel %vm38, %v17, 0
  %v52 = vsel %vm38, %v18, 0
  %v55 = vsel %vm38, %v19, 0
  %v58 = vsel %vm38, %v20, 0
  %v61 = vsel %vm38, %v21, 0
  %v64 = vsel %vm38, %v22, 0
  %v67 = vsel %vm38, %v23, 0
  %v70 = vsel %vm38, %v24, 0
  %v73 = vsel %vm38, %v25, 0
  %vm75 = vcmask 1043456
  %v77 = vsel %vm75, %v33, 0
  %79 = vmatpush.msra.mxu0 0.0
  %80 = vmatpush.msra.mxu0 0.0
  %81 = vmatpush.msra.mxu0 0.0
  %82 = vmatpush.msra.mxu0 0.0
  %83 = vmatpush.msra.mxu0 0.0
  %84 = vmatpush.msra.mxu0 0.0
  %85 = vmatpush.msra.mxu0 0.0
  %86 = vmatpush.msra.mxu0 0.0
  %87 = vmatpush.msra.mxu0 %v77
  %88 = vmatpush.msra.mxu0 %v32
  %89 = vmatpush.msra.mxu0 %v31
  %90 = vmatpush.msra.mxu0 %v30
  %91 = vmatpush.msra.mxu0 %v29
  %92 = vmatpush.msra.mxu0 %v28
  %93 = vmatpush.msra.mxu0 %v27
  %94 = vmatpush.msra.mxu0 %v26
  %95 = vmatmul.f32.gmra.mxu0 %v40
  %v96 = vpop.f32.mrf.mxu0
  %v97 = vadd.f32 %v36, %v96
  %98 = vmatmul.f32.gmra.mxu0 %v43
  %v99 = vpop.f32.mrf.mxu0
  %v100 = vadd.f32 %v36, %v99
  %101 = vmatmul.f32.gmra.mxu0 %v46
  %v102 = vpop.f32.mrf.mxu0
  %v103 = vadd.f32 %v36, %v102
  %104 = vmatmul.f32.gmra.mxu0 %v49
  %v105 = vpop.f32.mrf.mxu0
  %v106 = vadd.f32 %v36, %v105
  %107 = vmatmul.f32.gmra.mxu0 %v52
  %v108 = vpop.f32.mrf.mxu0
  %v109 = vadd.f32 %v36, %v108
  %110 = vmatmul.f32.gmra.mxu0 %v55
  %v111 = vpop.f32.mrf.mxu0
  %v112 = vadd.f32 %v36, %v111
  %113 = vmatmul.f32.gmra.mxu0 %v58
  %v114 = vpop.f32.mrf.mxu0
  %v115 = vadd.f32 %v36, %v114
  %116 = vmatmul.f32.gmra.mxu0 %v61
  %v117 = vpop.f32.mrf.mxu0
  %v118 = vadd.f32 %v36, %v117
  %119 = vmatmul.f32.gmra.mxu0 %v64
  %v120 = vpop.f32.mrf.mxu0
  %v121 = vadd.f32 %v36, %v120
  %122 = vmatmul.f32.gmra.mxu0 %v67
  %v123 = vpop.f32.mrf.mxu0
  %v124 = vadd.f32 %v36, %v123
  %125 = vmatmul.f32.gmra.mxu0 %v70
  %v126 = vpop.f32.mrf.mxu0
  %v127 = vadd.f32 %v36, %v126
  %128 = vmatmul.f32.gmra.mxu0 %v73
  %v129 = vpop.f32.mrf.mxu0
  %v130 = vadd.f32 %v36, %v129
  %131 = vdwg.mxu0
  %v132 = vmax.f32 %v97, 0.0
  %v133 = vmax.f32 %v100, 0.0
  %v134 = vmax.f32 %v103, 0.0
  %v135 = vmax.f32 %v106, 0.0
  %v136 = vmax.f32 %v109, 0.0
  %v137 = vmax.f32 %v112, 0.0
  %v138 = vmax.f32 %v115, 0.0
  %v139 = vmax.f32 %v118, 0.0
  %v140 = vmax.f32 %v121, 0.0
  %v141 = vmax.f32 %v124, 0.0
  %v142 = vmax.f32 %v127, 0.0
  %v143 = vmax.f32 %v130, 0.0
  %vm144 = vcmask 80896
  %145 = vst.msk [vmem:[%s3] sm:$0xff] %vm144, %v132
  %146 = vst.msk [vmem:[%s3 + $0x8] sm:$0xff] %vm144, %v133
  %147 = vst.msk [vmem:[%s3 + $0x10] sm:$0xff] %vm144, %v134
  %148 = vst.msk [vmem:[%s3 + $0x18] sm:$0xff] %vm144, %v135
  %149 = vst.msk [vmem:[%s3 + $0x20] sm:$0xff] %vm144, %v136
  %150 = vst.msk [vmem:[%s3 + $0x28] sm:$0xff] %vm144, %v137
  %151 = vst.msk [vmem:[%s3 + $0x30] sm:$0xff] %vm144, %v138
  %152 = vst.msk [vmem:[%s3 + $0x38] sm:$0xff] %vm144, %v139
  %153 = vst.msk [vmem:[%s3 + $0x40] sm:$0xff] %vm144, %v140
  %154 = vst.msk [vmem:[%s3 + $0x48] sm:$0xff] %vm144, %v141
  %155 = vst.msk [vmem:[%s3 + $0x50] sm:$0xff] %vm144, %v142
  %vm156 = vcmask 74752
  %157 = vst.msk [vmem:[%s3 + $0x58] sm:$0x3] %vm156, %v143
  // Predicated region
  $region14: #{_lambda_.8} parent=0 // pred_check
    _
  $region15: #{_lambda_.8} parent=0 // pred_check_branch
    %159 = sbr.rel (0) target = $region17
  $region16: #{_lambda_.8} parent=0 // pred_region
    _
  $region17: #{_lambda_.8} parent=0 // pred_fallthru
    _
  // Predicated region
  $region18: #{_lambda_.8} parent=0 // pred_check
    _
  $region19: #{_lambda_.8} parent=0 // pred_check_branch
    %161 = sbr.rel (0) target = $region21
  $region20: #{_lambda_.8} parent=0 // pred_region
    _
  $region21: #{_lambda_.8} parent=0 // pred_fallthru
    _

// kernel: _lambda_.5
$region0: #{_lambda_.5}
  #allocation0 [shape = 'u32[]', space=smem, size = 0x4, offset = 0x4, fixed_abs, tag = 'smem constant byte address 0x4 - core index']
  #allocation1 [shape = 'u32[72,128]{1,0:T(1,128)}', space=vmem, size = 0x9000, scoped, tag = 'internal scratch']
  %s0 = inlined_call_operand.vmem [shape: f32[2,400], index: 0, kind: input, shape index: {}]
  %s1 = inlined_call_operand.vmem [shape: f32[400,800], index: 1, kind: input, shape index: {}]
  %s2 = inlined_call_operand.vmem [shape: f32[1,800], index: 2, kind: input, shape index: {}]
  %s3 = inlined_call_operand.vmem [shape: f32[800,800], index: 3, kind: input, shape index: {}]
  %s4 = inlined_call_operand.vmem [shape: f32[1,800], index: 4, kind: input, shape index: {}]
  %s5 = inlined_call_operand.vmem [shape: f32[2,800], index: 5, kind: output, shape index: {}]
  %s6 = sld [smem:[#allocation0]]
  $region30: #{_lambda_.5} parent=0
    _
  %s8 = ssub.s32 1, %s6
  %s9 = scalar_select 0, %s8, %s6
  // Predicated region
  $region2: #{_lambda_.5} parent=0 // pred_check
    _
  $region3: #{_lambda_.5} parent=0 // pred_check_branch
    %11 = sbr.rel (0) target = $region5
  $region4: #{_lambda_.5} parent=0 // pred_region
    _
  $region5: #{_lambda_.5} parent=0 // pred_fallthru
    _
  // Predicated region
  $region6: #{_lambda_.5} parent=0 // pred_check
    _
  $region7: #{_lambda_.5} parent=0 // pred_check_branch
    %13 = sbr.rel (0) target = $region9
  $region8: #{_lambda_.5} parent=0 // pred_region
    _
  $region9: #{_lambda_.5} parent=0 // pred_fallthru
    _
  // Predicated region
  $region10: #{_lambda_.5} parent=0 // pred_check
    _
  $region11: #{_lambda_.5} parent=0 // pred_check_branch
    %15 = sbr.rel (0) target = $region13
  $region12: #{_lambda_.5} parent=0 // pred_region
    _
  $region13: #{_lambda_.5} parent=0 // pred_fallthru
    _
  // Predicated region
  $region14: #{_lambda_.5} parent=0 // pred_check
    _
  $region15: #{_lambda_.5} parent=0 // pred_check_branch
    %17 = sbr.rel (0) target = $region17
  $region16: #{_lambda_.5} parent=0 // pred_region
    _
  $region17: #{_lambda_.5} parent=0 // pred_fallthru
    _
  // Predicated region
  $region18: #{_lambda_.5} parent=0 // pred_check
    _
  $region19: #{_lambda_.5} parent=0 // pred_check_branch
    %19 = sbr.rel (0) target = $region21
  $region20: #{_lambda_.5} parent=0 // pred_region
    _
  $region21: #{_lambda_.5} parent=0 // pred_fallthru
    _
  %v20 = vld [vmem:[%s0] sm:$0xff]
  %v21 = vld [vmem:[%s1] sm:$0xff]
  %v22 = vld [vmem:[%s1 + $0x8] sm:$0xff]
  %v23 = vld [vmem:[%s1 + $0x10] sm:$0xff]
  %v24 = vld [vmem:[%s1 + $0x18] sm:$0xff]
  %v25 = vld [vmem:[%s1 + $0x20] sm:$0xff]
  %v26 = vld [vmem:[%s1 + $0x28] sm:$0xff]
  %v27 = vld [vmem:[%s1 + $0x30] sm:$0xff]
  %v28 = vld [vmem:[%s1 + $0x38] sm:$0xff]
  %v29 = vld [vmem:[%s1 + $0x40] sm:$0xff]
  %v30 = vld [vmem:[%s1 + $0x48] sm:$0xff]
  %v31 = vld [vmem:[%s1 + $0x50] sm:$0xff]
  %v32 = vld [vmem:[%s1 + $0x58] sm:$0xff]
  %v33 = vld [vmem:[%s1 + $0x60] sm:$0xff]
  %v34 = vld [vmem:[%s1 + $0x68] sm:$0xff]
  %v35 = vld [vmem:[%s1 + $0x70] sm:$0xff]
  %v36 = vld [vmem:[%s1 + $0x78] sm:$0xff]
  %v37 = vld [vmem:[%s1 + $0x80] sm:$0xff]
  %v38 = vld [vmem:[%s1 + $0x88] sm:$0xff]
  %v39 = vld [vmem:[%s1 + $0x90] sm:$0xff]
  %v40 = vld [vmem:[%s1 + $0x98] sm:$0xff]
  %v41 = vld [vmem:[%s1 + $0xa0] sm:$0xff]
  %v42 = vld [vmem:[%s1 + $0xa8] sm:$0xff]
  %v43 = vld [vmem:[%s1 + $0xb0] sm:$0xff]
  %v44 = vld [vmem:[%s1 + $0xb8] sm:$0xff]
  %v45 = vld [vmem:[%s1 + $0xc0] sm:$0xff]
  %v46 = vld [vmem:[%s1 + $0xc8] sm:$0xff]
  %v47 = vld [vmem:[%s1 + $0xd0] sm:$0xff]
  %v48 = vld [vmem:[%s1 + $0xd8] sm:$0xff]
  %v49 = vld [vmem:[%s1 + $0xe0] sm:$0xff]
  %v50 = vld [vmem:[%s1 + $0xe8] sm:$0xff]
  %v51 = vld [vmem:[%s1 + $0xf0] sm:$0xff]
  %v52 = vld [vmem:[%s1 + $0xf8] sm:$0xff]
  %v53 = vld [vmem:[%s1 + $0x100] sm:$0xff]
  %v54 = vld [vmem:[%s1 + $0x108] sm:$0xff]
  %v55 = vld [vmem:[%s1 + $0x110] sm:$0xff]
  %v56 = vld [vmem:[%s1 + $0x118] sm:$0xff]
  %v57 = vld [vmem:[%s1 + $0x120] sm:$0xff]
  %v58 = vld [vmem:[%s1 + $0x128] sm:$0xff]
  %v59 = vld [vmem:[%s1 + $0x130] sm:$0xff]
  %v60 = vld [vmem:[%s1 + $0x138] sm:$0xff]
  %v61 = vld [vmem:[%s1 + $0x140] sm:$0xff]
  %v62 = vld [vmem:[%s1 + $0x148] sm:$0xff]
  %v63 = vld [vmem:[%s1 + $0x150] sm:$0xff]
  %v64 = vld [vmem:[%s1 + $0x158] sm:$0xff]
  %v65 = vld [vmem:[%s1 + $0x160] sm:$0xff]
  %v66 = vld [vmem:[%s1 + $0x168] sm:$0xff]
  %v67 = vld [vmem:[%s1 + $0x170] sm:$0xff]
  %v68 = vld [vmem:[%s1 + $0x178] sm:$0xff]
  %v69 = vld [vmem:[%s1 + $0x180] sm:$0xff]
  %v70 = vld [vmem:[%s1 + $0x188] sm:$0xff]
  %v71 = vld [vmem:[%s1 + $0x190] sm:$0xff]
  %v72 = vld [vmem:[%s1 + $0x198] sm:$0xff]
  %v73 = vld [vmem:[%s1 + $0x1a0] sm:$0xff]
  %v74 = vld [vmem:[%s1 + $0x1a8] sm:$0xff]
  %v75 = vld [vmem:[%s1 + $0x1b0] sm:$0xff]
  %v76 = vld [vmem:[%s1 + $0x1b8] sm:$0xff]
  %v77 = vld [vmem:[%s1 + $0x1c0] sm:$0xff]
  %v78 = vld [vmem:[%s1 + $0x1c8] sm:$0xff]
  %v79 = vld [vmem:[%s1 + $0x1d0] sm:$0xff]
  %v80 = vld [vmem:[%s1 + $0x1d8] sm:$0xff]
  %v81 = vld [vmem:[%s1 + $0x1e0] sm:$0xff]
  %v82 = vld [vmem:[%s1 + $0x1e8] sm:$0xff]
  %v83 = vld [vmem:[%s1 + $0x1f0] sm:$0xff]
  %v84 = vld [vmem:[%s1 + $0x1f8] sm:$0xff]
  %v85 = vld [vmem:[%s1 + $0x200] sm:$0xff]
  %v86 = vld [vmem:[%s1 + $0x208] sm:$0xff]
  %v87 = vld [vmem:[%s1 + $0x210] sm:$0xff]
  %v88 = vld [vmem:[%s1 + $0x218] sm:$0xff]
  %v89 = vld [vmem:[%s1 + $0x220] sm:$0xff]
  %v90 = vld [vmem:[%s1 + $0x228] sm:$0xff]
  %v91 = vld [vmem:[%s1 + $0x230] sm:$0xff]
  %v92 = vld [vmem:[%s1 + $0x238] sm:$0xff]
  %v93 = vld [vmem:[%s1 + $0x240] sm:$0xff]
  %v94 = vld [vmem:[%s1 + $0x248] sm:$0xff]
  %v95 = vld [vmem:[%s1 + $0x250] sm:$0xff]
  %v96 = vld [vmem:[%s1 + $0x258] sm:$0xff]
  %v97 = vld [vmem:[%s1 + $0x260] sm:$0xff]
  %v98 = vld [vmem:[%s1 + $0x268] sm:$0xff]
  %v99 = vld [vmem:[%s1 + $0x270] sm:$0xff]
  %v100 = vld [vmem:[%s1 + $0x278] sm:$0xff]
  %v101 = vld [vmem:[%s1 + $0x280] sm:$0xff]
  %v102 = vld [vmem:[%s1 + $0x288] sm:$0xff]
  %v103 = vld [vmem:[%s1 + $0x290] sm:$0xff]
  %v104 = vld [vmem:[%s1 + $0x298] sm:$0xff]
  %v105 = vld [vmem:[%s1 + $0x2a0] sm:$0xff]
  %v106 = vld [vmem:[%s1 + $0x2a8] sm:$0xff]
  %v107 = vld [vmem:[%s1 + $0x2b0] sm:$0xff]
  %v108 = vld [vmem:[%s1 + $0x2b8] sm:$0xff]
  %v109 = vld [vmem:[%s1 + $0x2c0] sm:$0xff]
  %v110 = vld [vmem:[%s1 + $0x2c8] sm:$0xff]
  %v111 = vld [vmem:[%s1 + $0x2d0] sm:$0xff]
  %v112 = vld [vmem:[%s1 + $0x2d8] sm:$0xff]
  %v113 = vld [vmem:[%s1 + $0x2e0] sm:$0xff]
  %v114 = vld [vmem:[%s1 + $0x2e8] sm:$0xff]
  %v115 = vld [vmem:[%s1 + $0x2f0] sm:$0xff]
  %v116 = vld [vmem:[%s1 + $0x2f8] sm:$0xff]
  %v117 = vld [vmem:[%s1 + $0x300] sm:$0xff]
  %v118 = vld [vmem:[%s1 + $0x308] sm:$0xff]
  %v119 = vld [vmem:[%s1 + $0x310] sm:$0xff]
  %v120 = vld [vmem:[%s1 + $0x318] sm:$0xff]
  %v121 = vld [vmem:[%s1 + $0x320] sm:$0xff]
  %v122 = vld [vmem:[%s1 + $0x328] sm:$0xff]
  %v123 = vld [vmem:[%s1 + $0x330] sm:$0xff]
  %v124 = vld [vmem:[%s1 + $0x338] sm:$0xff]
  %v125 = vld [vmem:[%s1 + $0x340] sm:$0xff]
  %v126 = vld [vmem:[%s1 + $0x348] sm:$0xff]
  %v127 = vld [vmem:[%s1 + $0x350] sm:$0xff]
  %v128 = vld [vmem:[%s1 + $0x358] sm:$0xff]
  %v129 = vld [vmem:[%s1 + $0x360] sm:$0xff]
  %v130 = vld [vmem:[%s1 + $0x368] sm:$0xff]
  %v131 = vld [vmem:[%s1 + $0x370] sm:$0xff]
  %v132 = vld [vmem:[%s1 + $0x378] sm:$0xff]
  %v133 = vld [vmem:[%s1 + $0x380] sm:$0xff]
  %v134 = vld [vmem:[%s1 + $0x388] sm:$0xff]
  %v135 = vld [vmem:[%s1 + $0x390] sm:$0xff]
  %v136 = vld [vmem:[%s1 + $0x398] sm:$0xff]
  %v137 = vld [vmem:[%s1 + $0x3a0] sm:$0xff]
  %v138 = vld [vmem:[%s1 + $0x3a8] sm:$0xff]
  %v139 = vld [vmem:[%s1 + $0x3b0] sm:$0xff]
  %v140 = vld [vmem:[%s1 + $0x3b8] sm:$0xff]
  %v141 = vld [vmem:[%s1 + $0x3c0] sm:$0xff]
  %v142 = vld [vmem:[%s1 + $0x3c8] sm:$0xff]
  %v143 = vld [vmem:[%s1 + $0x3d0] sm:$0xff]
  %v144 = vld [vmem:[%s1 + $0x3d8] sm:$0xff]
  %v145 = vld [vmem:[%s1 + $0x3e0] sm:$0xff]
  %v146 = vld [vmem:[%s1 + $0x3e8] sm:$0xff]
  %v147 = vld [vmem:[%s1 + $0x3f0] sm:$0xff]
  %v148 = vld [vmem:[%s1 + $0x3f8] sm:$0xff]
  %v149 = vld [vmem:[%s1 + $0x400] sm:$0xff]
  %v150 = vld [vmem:[%s1 + $0x408] sm:$0xff]
  %v151 = vld [vmem:[%s1 + $0x410] sm:$0xff]
  %v152 = vld [vmem:[%s1 + $0x418] sm:$0xff]
  %v153 = vld [vmem:[%s1 + $0x420] sm:$0xff]
  %v154 = vld [vmem:[%s1 + $0x428] sm:$0xff]
  %v155 = vld [vmem:[%s1 + $0x430] sm:$0xff]
  %v156 = vld [vmem:[%s1 + $0x438] sm:$0xff]
  %v157 = vld [vmem:[%s1 + $0x440] sm:$0xff]
  %v158 = vld [vmem:[%s1 + $0x448] sm:$0xff]
  %v159 = vld [vmem:[%s1 + $0x450] sm:$0xff]
  %v160 = vld [vmem:[%s1 + $0x458] sm:$0xff]
  %v161 = vld [vmem:[%s1 + $0x460] sm:$0xff]
  %v162 = vld [vmem:[%s1 + $0x468] sm:$0xff]
  %v163 = vld [vmem:[%s1 + $0x470] sm:$0xff]
  %v164 = vld [vmem:[%s1 + $0x478] sm:$0xff]
  %v165 = vld [vmem:[%s1 + $0x480] sm:$0xff]
  %v166 = vld [vmem:[%s1 + $0x488] sm:$0xff]
  %v167 = vld [vmem:[%s1 + $0x490] sm:$0xff]
  %v168 = vld [vmem:[%s1 + $0x498] sm:$0xff]
  %v169 = vld [vmem:[%s1 + $0x4a0] sm:$0xff]
  %v170 = vld [vmem:[%s1 + $0x4a8] sm:$0xff]
  %v171 = vld [vmem:[%s1 + $0x4b0] sm:$0xff]
  %v172 = vld [vmem:[%s1 + $0x4b8] sm:$0xff]
  %v173 = vld [vmem:[%s1 + $0x4c0] sm:$0xff]
  %v174 = vld [vmem:[%s1 + $0x4c8] sm:$0xff]
  %v175 = vld [vmem:[%s1 + $0x4d0] sm:$0xff]
  %v176 = vld [vmem:[%s1 + $0x4d8] sm:$0xff]
  %v177 = vld [vmem:[%s1 + $0x4e0] sm:$0xff]
  %v178 = vld [vmem:[%s1 + $0x4e8] sm:$0xff]
  %v179 = vld [vmem:[%s1 + $0x4f0] sm:$0xff]
  %v180 = vld [vmem:[%s1 + $0x4f8] sm:$0xff]
  %v181 = vld [vmem:[%s1 + $0x500] sm:$0xff]
  %v182 = vld [vmem:[%s1 + $0x508] sm:$0xff]
  %v183 = vld [vmem:[%s1 + $0x510] sm:$0xff]
  %v184 = vld [vmem:[%s1 + $0x518] sm:$0xff]
  %v185 = vld [vmem:[%s1 + $0x520] sm:$0xff]
  %v186 = vld [vmem:[%s1 + $0x528] sm:$0xff]
  %v187 = vld [vmem:[%s1 + $0x530] sm:$0xff]
  %v188 = vld [vmem:[%s1 + $0x538] sm:$0xff]
  %v189 = vld [vmem:[%s1 + $0x540] sm:$0xff]
  %v190 = vld [vmem:[%s1 + $0x548] sm:$0xff]
  %v191 = vld [vmem:[%s1 + $0x550] sm:$0xff]
  %v192 = vld [vmem:[%s1 + $0x558] sm:$0xff]
  %v193 = vld [vmem:[%s1 + $0x560] sm:$0xff]
  %v194 = vld [vmem:[%s1 + $0x568] sm:$0xff]
  %v195 = vld [vmem:[%s1 + $0x570] sm:$0xff]
  %v196 = vld [vmem:[%s1 + $0x578] sm:$0xff]
  %v197 = vld [vmem:[%s1 + $0x580] sm:$0xff]
  %v198 = vld [vmem:[%s1 + $0x588] sm:$0xff]
  %v199 = vld [vmem:[%s1 + $0x590] sm:$0xff]
  %v200 = vld [vmem:[%s1 + $0x598] sm:$0xff]
  %v201 = vld [vmem:[%s1 + $0x5a0] sm:$0xff]
  %v202 = vld [vmem:[%s1 + $0x5a8] sm:$0xff]
  %v203 = vld [vmem:[%s1 + $0x5b0] sm:$0xff]
  %v204 = vld [vmem:[%s1 + $0x5b8] sm:$0xff]
  %v205 = vld [vmem:[%s1 + $0x5c0] sm:$0xff]
  %v206 = vld [vmem:[%s1 + $0x5c8] sm:$0xff]
  %v207 = vld [vmem:[%s1 + $0x5d0] sm:$0xff]
  %v208 = vld [vmem:[%s1 + $0x5d8] sm:$0xff]
  %v209 = vld [vmem:[%s1 + $0x5e0] sm:$0xff]
  %v210 = vld [vmem:[%s1 + $0x5e8] sm:$0xff]
  %v211 = vld [vmem:[%s1 + $0x5f0] sm:$0xff]
  %v212 = vld [vmem:[%s1 + $0x5f8] sm:$0xff]
  %v213 = vld [vmem:[%s1 + $0x600] sm:$0xff]
  %v214 = vld [vmem:[%s1 + $0x608] sm:$0xff]
  %v215 = vld [vmem:[%s1 + $0x610] sm:$0xff]
  %v216 = vld [vmem:[%s1 + $0x618] sm:$0xff]
  %v217 = vld [vmem:[%s1 + $0x620] sm:$0xff]
  %v218 = vld [vmem:[%s1 + $0x628] sm:$0xff]
  %v219 = vld [vmem:[%s1 + $0x630] sm:$0xff]
  %v220 = vld [vmem:[%s1 + $0x638] sm:$0xff]
  %v221 = vld [vmem:[%s1 + $0x640] sm:$0xff]
  %v222 = vld [vmem:[%s1 + $0x648] sm:$0xff]
  %v223 = vld [vmem:[%s1 + $0x650] sm:$0xff]
  %v224 = vld [vmem:[%s1 + $0x658] sm:$0xff]
  %v225 = vld [vmem:[%s1 + $0x660] sm:$0xff]
  %v226 = vld [vmem:[%s1 + $0x668] sm:$0xff]
  %v227 = vld [vmem:[%s1 + $0x670] sm:$0xff]
  %v228 = vld [vmem:[%s1 + $0x678] sm:$0xff]
  %v229 = vld [vmem:[%s1 + $0x680] sm:$0xff]
  %v230 = vld [vmem:[%s1 + $0x688] sm:$0xff]
  %v231 = vld [vmem:[%s1 + $0x690] sm:$0xff]
  %v232 = vld [vmem:[%s1 + $0x698] sm:$0xff]
  %v233 = vld [vmem:[%s1 + $0x6a0] sm:$0xff]
  %v234 = vld [vmem:[%s1 + $0x6a8] sm:$0xff]
  %v235 = vld [vmem:[%s1 + $0x6b0] sm:$0xff]
  %v236 = vld [vmem:[%s1 + $0x6b8] sm:$0xff]
  %v237 = vld [vmem:[%s1 + $0x6c0] sm:$0xff]
  %v238 = vld [vmem:[%s1 + $0x6c8] sm:$0xff]
  %v239 = vld [vmem:[%s1 + $0x6d0] sm:$0xff]
  %v240 = vld [vmem:[%s1 + $0x6d8] sm:$0xff]
  %v241 = vld [vmem:[%s1 + $0x6e0] sm:$0xff]
  %v242 = vld [vmem:[%s1 + $0x6e8] sm:$0xff]
  %v243 = vld [vmem:[%s1 + $0x6f0] sm:$0xff]
  %v244 = vld [vmem:[%s1 + $0x6f8] sm:$0xff]
  %v245 = vld [vmem:[%s1 + $0x700] sm:$0xff]
  %v246 = vld [vmem:[%s1 + $0x708] sm:$0xff]
  %v247 = vld [vmem:[%s1 + $0x710] sm:$0xff]
  %v248 = vld [vmem:[%s1 + $0x718] sm:$0xff]
  %v249 = vld [vmem:[%s1 + $0x720] sm:$0xff]
  %v250 = vld [vmem:[%s1 + $0x728] sm:$0xff]
  %v251 = vld [vmem:[%s1 + $0x730] sm:$0xff]
  %v252 = vld [vmem:[%s1 + $0x738] sm:$0xff]
  %v253 = vld [vmem:[%s1 + $0x740] sm:$0xff]
  %v254 = vld [vmem:[%s1 + $0x748] sm:$0xff]
  %v255 = vld [vmem:[%s1 + $0x750] sm:$0xff]
  %v256 = vld [vmem:[%s1 + $0x758] sm:$0xff]
  %v257 = vld [vmem:[%s1 + $0x760] sm:$0xff]
  %v258 = vld [vmem:[%s1 + $0x768] sm:$0xff]
  %v259 = vld [vmem:[%s1 + $0x770] sm:$0xff]
  %v260 = vld [vmem:[%s1 + $0x778] sm:$0xff]
  %v261 = vld [vmem:[%s1 + $0x780] sm:$0xff]
  %v262 = vld [vmem:[%s1 + $0x788] sm:$0xff]
  %v263 = vld [vmem:[%s1 + $0x790] sm:$0xff]
  %v264 = vld [vmem:[%s1 + $0x798] sm:$0xff]
  %v265 = vld [vmem:[%s1 + $0x7a0] sm:$0xff]
  %v266 = vld [vmem:[%s1 + $0x7a8] sm:$0xff]
  %v267 = vld [vmem:[%s1 + $0x7b0] sm:$0xff]
  %v268 = vld [vmem:[%s1 + $0x7b8] sm:$0xff]
  %v269 = vld [vmem:[%s1 + $0x7c0] sm:$0xff]
  %v270 = vld [vmem:[%s1 + $0x7c8] sm:$0xff]
  %v271 = vld [vmem:[%s1 + $0x7d0] sm:$0xff]
  %v272 = vld [vmem:[%s1 + $0x7d8] sm:$0xff]
  %v273 = vld [vmem:[%s1 + $0x7e0] sm:$0xff]
  %v274 = vld [vmem:[%s1 + $0x7e8] sm:$0xff]
  %v275 = vld [vmem:[%s1 + $0x7f0] sm:$0xff]
  %v276 = vld [vmem:[%s1 + $0x7f8] sm:$0xff]
  %v277 = vld [vmem:[%s1 + $0x800] sm:$0xff]
  %v278 = vld [vmem:[%s1 + $0x808] sm:$0xff]
  %v279 = vld [vmem:[%s1 + $0x810] sm:$0xff]
  %v280 = vld [vmem:[%s1 + $0x818] sm:$0xff]
  %v281 = vld [vmem:[%s1 + $0x820] sm:$0xff]
  %v282 = vld [vmem:[%s1 + $0x828] sm:$0xff]
  %v283 = vld [vmem:[%s1 + $0x830] sm:$0xff]
  %v284 = vld [vmem:[%s1 + $0x838] sm:$0xff]
  %v285 = vld [vmem:[%s1 + $0x840] sm:$0xff]
  %v286 = vld [vmem:[%s1 + $0x848] sm:$0xff]
  %v287 = vld [vmem:[%s1 + $0x850] sm:$0xff]
  %v288 = vld [vmem:[%s1 + $0x858] sm:$0xff]
  %v289 = vld [vmem:[%s1 + $0x860] sm:$0xff]
  %v290 = vld [vmem:[%s1 + $0x868] sm:$0xff]
  %v291 = vld [vmem:[%s1 + $0x870] sm:$0xff]
  %v292 = vld [vmem:[%s1 + $0x878] sm:$0xff]
  %v293 = vld [vmem:[%s1 + $0x880] sm:$0xff]
  %v294 = vld [vmem:[%s1 + $0x888] sm:$0xff]
  %v295 = vld [vmem:[%s1 + $0x890] sm:$0xff]
  %v296 = vld [vmem:[%s1 + $0x898] sm:$0xff]
  %v297 = vld [vmem:[%s1 + $0x8a0] sm:$0xff]
  %v298 = vld [vmem:[%s1 + $0x8a8] sm:$0xff]
  %v299 = vld [vmem:[%s1 + $0x8b0] sm:$0xff]
  %v300 = vld [vmem:[%s1 + $0x8b8] sm:$0xff]
  %v301 = vld [vmem:[%s1 + $0x8c0] sm:$0xff]
  %v302 = vld [vmem:[%s1 + $0x8c8] sm:$0xff]
  %v303 = vld [vmem:[%s1 + $0x8d0] sm:$0xff]
  %v304 = vld [vmem:[%s1 + $0x8d8] sm:$0xff]
  %v305 = vld [vmem:[%s1 + $0x8e0] sm:$0xff]
  %v306 = vld [vmem:[%s1 + $0x8e8] sm:$0xff]
  %v307 = vld [vmem:[%s1 + $0x8f0] sm:$0xff]
  %v308 = vld [vmem:[%s1 + $0x8f8] sm:$0xff]
  %v309 = vld [vmem:[%s1 + $0x900] sm:$0xff]
  %v310 = vld [vmem:[%s1 + $0x908] sm:$0xff]
  %v311 = vld [vmem:[%s1 + $0x910] sm:$0xff]
  %v312 = vld [vmem:[%s1 + $0x918] sm:$0xff]
  %v313 = vld [vmem:[%s1 + $0x920] sm:$0xff]
  %v314 = vld [vmem:[%s1 + $0x928] sm:$0xff]
  %v315 = vld [vmem:[%s1 + $0x930] sm:$0xff]
  %v316 = vld [vmem:[%s1 + $0x938] sm:$0xff]
  %v317 = vld [vmem:[%s1 + $0x940] sm:$0xff]
  %v318 = vld [vmem:[%s1 + $0x948] sm:$0xff]
  %v319 = vld [vmem:[%s1 + $0x950] sm:$0xff]
  %v320 = vld [vmem:[%s1 + $0x958] sm:$0xff]
  %v321 = vld [vmem:[%s1 + $0x960] sm:$0xff]
  %v322 = vld [vmem:[%s1 + $0x968] sm:$0xff]
  %v323 = vld [vmem:[%s1 + $0x970] sm:$0xff]
  %v324 = vld [vmem:[%s1 + $0x978] sm:$0xff]
  %v325 = vld [vmem:[%s1 + $0x980] sm:$0xff]
  %v326 = vld [vmem:[%s1 + $0x988] sm:$0xff]
  %v327 = vld [vmem:[%s1 + $0x990] sm:$0xff]
  %v328 = vld [vmem:[%s1 + $0x998] sm:$0xff]
  %v329 = vld [vmem:[%s1 + $0x9a0] sm:$0xff]
  %v330 = vld [vmem:[%s1 + $0x9a8] sm:$0xff]
  %v331 = vld [vmem:[%s1 + $0x9b0] sm:$0xff]
  %v332 = vld [vmem:[%s1 + $0x9b8] sm:$0xff]
  %v333 = vld [vmem:[%s1 + $0x9c0] sm:$0xff]
  %v334 = vld [vmem:[%s1 + $0x9c8] sm:$0xff]
  %v335 = vld [vmem:[%s1 + $0x9d0] sm:$0xff]
  %v336 = vld [vmem:[%s1 + $0x9d8] sm:$0xff]
  %v337 = vld [vmem:[%s1 + $0x9e0] sm:$0xff]
  %v338 = vld [vmem:[%s1 + $0x9e8] sm:$0xff]
  %v339 = vld [vmem:[%s1 + $0x9f0] sm:$0xff]
  %v340 = vld [vmem:[%s1 + $0x9f8] sm:$0xff]
  %v341 = vld [vmem:[%s1 + $0xa00] sm:$0xff]
  %v342 = vld [vmem:[%s1 + $0xa08] sm:$0xff]
  %v343 = vld [vmem:[%s1 + $0xa10] sm:$0xff]
  %v344 = vld [vmem:[%s1 + $0xa18] sm:$0xff]
  %v345 = vld [vmem:[%s1 + $0xa20] sm:$0xff]
  %v346 = vld [vmem:[%s1 + $0xa28] sm:$0xff]
  %v347 = vld [vmem:[%s1 + $0xa30] sm:$0xff]
  %v348 = vld [vmem:[%s1 + $0xa38] sm:$0xff]
  %v349 = vld [vmem:[%s1 + $0xa40] sm:$0xff]
  %v350 = vld [vmem:[%s1 + $0xa48] sm:$0xff]
  %v351 = vld [vmem:[%s1 + $0xa50] sm:$0xff]
  %v352 = vld [vmem:[%s1 + $0xa58] sm:$0xff]
  %v353 = vld [vmem:[%s1 + $0xa60] sm:$0xff]
  %v354 = vld [vmem:[%s1 + $0xa68] sm:$0xff]
  %v355 = vld [vmem:[%s1 + $0xa70] sm:$0xff]
  %v356 = vld [vmem:[%s1 + $0xa78] sm:$0xff]
  %v357 = vld [vmem:[%s1 + $0xa80] sm:$0xff]
  %v358 = vld [vmem:[%s1 + $0xa88] sm:$0xff]
  %v359 = vld [vmem:[%s1 + $0xa90] sm:$0xff]
  %v360 = vld [vmem:[%s1 + $0xa98] sm:$0xff]
  %v361 = vld [vmem:[%s1 + $0xaa0] sm:$0xff]
  %v362 = vld [vmem:[%s1 + $0xaa8] sm:$0xff]
  %v363 = vld [vmem:[%s1 + $0xab0] sm:$0xff]
  %v364 = vld [vmem:[%s1 + $0xab8] sm:$0xff]
  %v365 = vld [vmem:[%s1 + $0xac0] sm:$0xff]
  %v366 = vld [vmem:[%s1 + $0xac8] sm:$0xff]
  %v367 = vld [vmem:[%s1 + $0xad0] sm:$0xff]
  %v368 = vld [vmem:[%s1 + $0xad8] sm:$0xff]
  %v369 = vld [vmem:[%s1 + $0xae0] sm:$0xff]
  %v370 = vld [vmem:[%s1 + $0xae8] sm:$0xff]
  %v371 = vld [vmem:[%s2] sm:$0x7f]
  %v373 = vperm.slane %v371, 0
  %v374 = vperm.slane %v371, 1
  %v375 = vperm.slane %v371, 2
  %v376 = vperm.slane %v371, 3
  %v377 = vperm.slane %v371, 4
  %v378 = vperm.slane %v371, 5
  %v379 = vperm.slane %v371, 6
  %388 = vst [vmem:[#allocation1] ss:$4 sm:$0xff] %v20
  %v389 = vld.sshfl [vmem:[#allocation1] sm:$0xff pattern:$0x73625140]
  %v390 = vld.sshfl [vmem:[#allocation1 + $0x8] sm:$0xff pattern:$0x73625140]
  %v391 = vld.sshfl [vmem:[#allocation1 + $0x10] sm:$0xff pattern:$0x73625140]
  %v392 = vld.sshfl [vmem:[#allocation1 + $0x18] sm:$0xff pattern:$0x73625140]
  %vm396 = vcmask 130048
  %v397 = vsel %vm396, %v392, 0
  %399 = vmatpush.msra.mxu0 %v126
  %400 = vmatpush.msra.mxu0 %v119
  %401 = vmatpush.msra.mxu0 %v112
  %402 = vmatpush.msra.mxu0 %v105
  %403 = vmatpush.msra.mxu0 %v98
  %404 = vmatpush.msra.mxu0 %v91
  %405 = vmatpush.msra.mxu0 %v84
  %406 = vmatpush.msra.mxu0 %v77
  %407 = vmatpush.msra.mxu0 %v70
  %408 = vmatpush.msra.mxu0 %v63
  %409 = vmatpush.msra.mxu0 %v56
  %410 = vmatpush.msra.mxu0 %v49
  %411 = vmatpush.msra.mxu0 %v42
  %412 = vmatpush.msra.mxu0 %v35
  %413 = vmatpush.msra.mxu0 %v28
  %414 = vmatpush.msra.mxu0 %v21
  %415 = vmatmul.f32.gmra.mxu0 %v389
  %v416 = vpop.f32.mrf.mxu0
  %v417 = vadd.f32 %v373, %v416
  %418 = vdwg.mxu0
  %419 = vmatpush.msra.mxu0 %v238
  %420 = vmatpush.msra.mxu0 %v231
  %421 = vmatpush.msra.mxu0 %v224
  %422 = vmatpush.msra.mxu0 %v217
  %423 = vmatpush.msra.mxu0 %v210
  %424 = vmatpush.msra.mxu0 %v203
  %425 = vmatpush.msra.mxu0 %v196
  %426 = vmatpush.msra.mxu0 %v189
  %427 = vmatpush.msra.mxu0 %v182
  %428 = vmatpush.msra.mxu0 %v175
  %429 = vmatpush.msra.mxu0 %v168
  %430 = vmatpush.msra.mxu0 %v161
  %431 = vmatpush.msra.mxu0 %v154
  %432 = vmatpush.msra.mxu0 %v147
  %433 = vmatpush.msra.mxu0 %v140
  %434 = vmatpush.msra.mxu0 %v133
  %435 = vmatmul.f32.gmra.mxu0 %v390
  %v436 = vpop.f32.mrf.mxu0
  %v437 = vadd.f32 %v417, %v436
  %438 = vdwg.mxu0
  %439 = vmatpush.msra.mxu0 %v350
  %440 = vmatpush.msra.mxu0 %v343
  %441 = vmatpush.msra.mxu0 %v336
  %442 = vmatpush.msra.mxu0 %v329
  %443 = vmatpush.msra.mxu0 %v322
  %444 = vmatpush.msra.mxu0 %v315
  %445 = vmatpush.msra.mxu0 %v308
  %446 = vmatpush.msra.mxu0 %v301
  %447 = vmatpush.msra.mxu0 %v294
  %448 = vmatpush.msra.mxu0 %v287
  %449 = vmatpush.msra.mxu0 %v280
  %450 = vmatpush.msra.mxu0 %v273
  %451 = vmatpush.msra.mxu0 %v266
  %452 = vmatpush.msra.mxu0 %v259
  %453 = vmatpush.msra.mxu0 %v252
  %454 = vmatpush.msra.mxu0 %v245
  %455 = vmatmul.f32.gmra.mxu0 %v391
  %v456 = vpop.f32.mrf.mxu0
  %v457 = vadd.f32 %v437, %v456
  %458 = vdwg.mxu0
  %459 = vmatpush.msra.mxu0 0.0
  %460 = vmatpush.msra.mxu0 0.0
  %461 = vmatpush.msra.mxu0 0.0
  %462 = vmatpush.msra.mxu0 0.0
  %463 = vmatpush.msra.mxu0 0.0
  %464 = vmatpush.msra.mxu0 0.0
  %465 = vmatpush.msra.mxu0 0.0
  %466 = vmatpush.msra.mxu0 0.0
  %467 = vmatpush.msra.mxu0 0.0
  %468 = vmatpush.msra.mxu0 0.0
  %469 = vmatpush.msra.mxu0 0.0
  %470 = vmatpush.msra.mxu0 0.0
  %471 = vmatpush.msra.mxu0 0.0
  %472 = vmatpush.msra.mxu0 0.0
  %473 = vmatpush.msra.mxu0 %v364
  %474 = vmatpush.msra.mxu0 %v357
  %475 = vmatmul.f32.gmra.mxu0 %v397
  %v476 = vpop.f32.mrf.mxu0
  %v477 = vadd.f32 %v457, %v476
  %478 = vdwg.mxu0
  %479 = vmatpush.msra.mxu0 %v127
  %480 = vmatpush.msra.mxu0 %v120
  %481 = vmatpush.msra.mxu0 %v113
  %482 = vmatpush.msra.mxu0 %v106
  %483 = vmatpush.msra.mxu0 %v99
  %484 = vmatpush.msra.mxu0 %v92
  %485 = vmatpush.msra.mxu0 %v85
  %486 = vmatpush.msra.mxu0 %v78
  %487 = vmatpush.msra.mxu0 %v71
  %488 = vmatpush.msra.mxu0 %v64
  %489 = vmatpush.msra.mxu0 %v57
  %490 = vmatpush.msra.mxu0 %v50
  %491 = vmatpush.msra.mxu0 %v43
  %492 = vmatpush.msra.mxu0 %v36
  %493 = vmatpush.msra.mxu0 %v29
  %494 = vmatpush.msra.mxu0 %v22
  %495 = vmatmul.f32.gmra.mxu0 %v389
  %v496 = vpop.f32.mrf.mxu0
  %v497 = vadd.f32 %v374, %v496
  %498 = vdwg.mxu0
  %499 = vmatpush.msra.mxu0 %v239
  %500 = vmatpush.msra.mxu0 %v232
  %501 = vmatpush.msra.mxu0 %v225
  %502 = vmatpush.msra.mxu0 %v218
  %503 = vmatpush.msra.mxu0 %v211
  %504 = vmatpush.msra.mxu0 %v204
  %505 = vmatpush.msra.mxu0 %v197
  %506 = vmatpush.msra.mxu0 %v190
  %507 = vmatpush.msra.mxu0 %v183
  %508 = vmatpush.msra.mxu0 %v176
  %509 = vmatpush.msra.mxu0 %v169
  %510 = vmatpush.msra.mxu0 %v162
  %511 = vmatpush.msra.mxu0 %v155
  %512 = vmatpush.msra.mxu0 %v148
  %513 = vmatpush.msra.mxu0 %v141
  %514 = vmatpush.msra.mxu0 %v134
  %515 = vmatmul.f32.gmra.mxu0 %v390
  %v516 = vpop.f32.mrf.mxu0
  %v517 = vadd.f32 %v497, %v516
  %518 = vdwg.mxu0
  %519 = vmatpush.msra.mxu0 %v351
  %520 = vmatpush.msra.mxu0 %v344
  %521 = vmatpush.msra.mxu0 %v337
  %522 = vmatpush.msra.mxu0 %v330
  %523 = vmatpush.msra.mxu0 %v323
  %524 = vmatpush.msra.mxu0 %v316
  %525 = vmatpush.msra.mxu0 %v309
  %526 = vmatpush.msra.mxu0 %v302
  %527 = vmatpush.msra.mxu0 %v295
  %528 = vmatpush.msra.mxu0 %v288
  %529 = vmatpush.msra.mxu0 %v281
  %530 = vmatpush.msra.mxu0 %v274
  %531 = vmatpush.msra.mxu0 %v267
  %532 = vmatpush.msra.mxu0 %v260
  %533 = vmatpush.msra.mxu0 %v253
  %534 = vmatpush.msra.mxu0 %v246
  %535 = vmatmul.f32.gmra.mxu0 %v391
  %v536 = vpop.f32.mrf.mxu0
  %v537 = vadd.f32 %v517, %v536
  %538 = vdwg.mxu0
  %539 = vmatpush.msra.mxu0 0.0
  %540 = vmatpush.msra.mxu0 0.0
  %541 = vmatpush.msra.mxu0 0.0
  %542 = vmatpush.msra.mxu0 0.0
  %543 = vmatpush.msra.mxu0 0.0
  %544 = vmatpush.msra.mxu0 0.0
  %545 = vmatpush.msra.mxu0 0.0
  %546 = vmatpush.msra.mxu0 0.0
  %547 = vmatpush.msra.mxu0 0.0
  %548 = vmatpush.msra.mxu0 0.0
  %549 = vmatpush.msra.mxu0 0.0
  %550 = vmatpush.msra.mxu0 0.0
  %551 = vmatpush.msra.mxu0 0.0
  %552 = vmatpush.msra.mxu0 0.0
  %553 = vmatpush.msra.mxu0 %v365
  %554 = vmatpush.msra.mxu0 %v358
  %555 = vmatmul.f32.gmra.mxu0 %v397
  %v556 = vpop.f32.mrf.mxu0
  %v557 = vadd.f32 %v537, %v556
  %558 = vdwg.mxu0
  %559 = vmatpush.msra.mxu0 %v128
  %560 = vmatpush.msra.mxu0 %v121
  %561 = vmatpush.msra.mxu0 %v114
  %562 = vmatpush.msra.mxu0 %v107
  %563 = vmatpush.msra.mxu0 %v100
  %564 = vmatpush.msra.mxu0 %v93
  %565 = vmatpush.msra.mxu0 %v86
  %566 = vmatpush.msra.mxu0 %v79
  %567 = vmatpush.msra.mxu0 %v72
  %568 = vmatpush.msra.mxu0 %v65
  %569 = vmatpush.msra.mxu0 %v58
  %570 = vmatpush.msra.mxu0 %v51
  %571 = vmatpush.msra.mxu0 %v44
  %572 = vmatpush.msra.mxu0 %v37
  %573 = vmatpush.msra.mxu0 %v30
  %574 = vmatpush.msra.mxu0 %v23
  %575 = vmatmul.f32.gmra.mxu0 %v389
  %v576 = vpop.f32.mrf.mxu0
  %v577 = vadd.f32 %v375, %v576
  %578 = vdwg.mxu0
  %579 = vmatpush.msra.mxu0 %v240
  %580 = vmatpush.msra.mxu0 %v233
  %581 = vmatpush.msra.mxu0 %v226
  %582 = vmatpush.msra.mxu0 %v219
  %583 = vmatpush.msra.mxu0 %v212
  %584 = vmatpush.msra.mxu0 %v205
  %585 = vmatpush.msra.mxu0 %v198
  %586 = vmatpush.msra.mxu0 %v191
  %587 = vmatpush.msra.mxu0 %v184
  %588 = vmatpush.msra.mxu0 %v177
  %589 = vmatpush.msra.mxu0 %v170
  %590 = vmatpush.msra.mxu0 %v163
  %591 = vmatpush.msra.mxu0 %v156
  %592 = vmatpush.msra.mxu0 %v149
  %593 = vmatpush.msra.mxu0 %v142
  %594 = vmatpush.msra.mxu0 %v135
  %595 = vmatmul.f32.gmra.mxu0 %v390
  %v596 = vpop.f32.mrf.mxu0
  %v597 = vadd.f32 %v577, %v596
  %598 = vdwg.mxu0
  %599 = vmatpush.msra.mxu0 %v352
  %600 = vmatpush.msra.mxu0 %v345
  %601 = vmatpush.msra.mxu0 %v338
  %602 = vmatpush.msra.mxu0 %v331
  %603 = vmatpush.msra.mxu0 %v324
  %604 = vmatpush.msra.mxu0 %v317
  %605 = vmatpush.msra.mxu0 %v310
  %606 = vmatpush.msra.mxu0 %v303
  %607 = vmatpush.msra.mxu0 %v296
  %608 = vmatpush.msra.mxu0 %v289
  %609 = vmatpush.msra.mxu0 %v282
  %610 = vmatpush.msra.mxu0 %v275
  %611 = vmatpush.msra.mxu0 %v268
  %612 = vmatpush.msra.mxu0 %v261
  %613 = vmatpush.msra.mxu0 %v254
  %614 = vmatpush.msra.mxu0 %v247
  %615 = vmatmul.f32.gmra.mxu0 %v391
  %v616 = vpop.f32.mrf.mxu0
  %v617 = vadd.f32 %v597, %v616
  %618 = vdwg.mxu0
  %619 = vmatpush.msra.mxu0 0.0
  %620 = vmatpush.msra.mxu0 0.0
  %621 = vmatpush.msra.mxu0 0.0
  %622 = vmatpush.msra.mxu0 0.0
  %623 = vmatpush.msra.mxu0 0.0
  %624 = vmatpush.msra.mxu0 0.0
  %625 = vmatpush.msra.mxu0 0.0
  %626 = vmatpush.msra.mxu0 0.0
  %627 = vmatpush.msra.mxu0 0.0
  %628 = vmatpush.msra.mxu0 0.0
  %629 = vmatpush.msra.mxu0 0.0
  %630 = vmatpush.msra.mxu0 0.0
  %631 = vmatpush.msra.mxu0 0.0
  %632 = vmatpush.msra.mxu0 0.0
  %633 = vmatpush.msra.mxu0 %v366
  %634 = vmatpush.msra.mxu0 %v359
  %635 = vmatmul.f32.gmra.mxu0 %v397
  %v636 = vpop.f32.mrf.mxu0
  %v637 = vadd.f32 %v617, %v636
  %638 = vdwg.mxu0
  %639 = vmatpush.msra.mxu0 %v129
  %640 = vmatpush.msra.mxu0 %v122
  %641 = vmatpush.msra.mxu0 %v115
  %642 = vmatpush.msra.mxu0 %v108
  %643 = vmatpush.msra.mxu0 %v101
  %644 = vmatpush.msra.mxu0 %v94
  %645 = vmatpush.msra.mxu0 %v87
  %646 = vmatpush.msra.mxu0 %v80
  %647 = vmatpush.msra.mxu0 %v73
  %648 = vmatpush.msra.mxu0 %v66
  %649 = vmatpush.msra.mxu0 %v59
  %650 = vmatpush.msra.mxu0 %v52
  %651 = vmatpush.msra.mxu0 %v45
  %652 = vmatpush.msra.mxu0 %v38
  %653 = vmatpush.msra.mxu0 %v31
  %654 = vmatpush.msra.mxu0 %v24
  %655 = vmatmul.f32.gmra.mxu0 %v389
  %v656 = vpop.f32.mrf.mxu0
  %v657 = vadd.f32 %v376, %v656
  %658 = vdwg.mxu0
  %659 = vmatpush.msra.mxu0 %v241
  %660 = vmatpush.msra.mxu0 %v234
  %661 = vmatpush.msra.mxu0 %v227
  %662 = vmatpush.msra.mxu0 %v220
  %663 = vmatpush.msra.mxu0 %v213
  %664 = vmatpush.msra.mxu0 %v206
  %665 = vmatpush.msra.mxu0 %v199
  %666 = vmatpush.msra.mxu0 %v192
  %667 = vmatpush.msra.mxu0 %v185
  %668 = vmatpush.msra.mxu0 %v178
  %669 = vmatpush.msra.mxu0 %v171
  %670 = vmatpush.msra.mxu0 %v164
  %671 = vmatpush.msra.mxu0 %v157
  %672 = vmatpush.msra.mxu0 %v150
  %673 = vmatpush.msra.mxu0 %v143
  %674 = vmatpush.msra.mxu0 %v136
  %675 = vmatmul.f32.gmra.mxu0 %v390
  %v676 = vpop.f32.mrf.mxu0
  %v677 = vadd.f32 %v657, %v676
  %678 = vdwg.mxu0
  %679 = vmatpush.msra.mxu0 %v353
  %680 = vmatpush.msra.mxu0 %v346
  %681 = vmatpush.msra.mxu0 %v339
  %682 = vmatpush.msra.mxu0 %v332
  %683 = vmatpush.msra.mxu0 %v325
  %684 = vmatpush.msra.mxu0 %v318
  %685 = vmatpush.msra.mxu0 %v311
  %686 = vmatpush.msra.mxu0 %v304
  %687 = vmatpush.msra.mxu0 %v297
  %688 = vmatpush.msra.mxu0 %v290
  %689 = vmatpush.msra.mxu0 %v283
  %690 = vmatpush.msra.mxu0 %v276
  %691 = vmatpush.msra.mxu0 %v269
  %692 = vmatpush.msra.mxu0 %v262
  %693 = vmatpush.msra.mxu0 %v255
  %694 = vmatpush.msra.mxu0 %v248
  %695 = vmatmul.f32.gmra.mxu0 %v391
  %v696 = vpop.f32.mrf.mxu0
  %v697 = vadd.f32 %v677, %v696
  %698 = vdwg.mxu0
  %699 = vmatpush.msra.mxu0 0.0
  %700 = vmatpush.msra.mxu0 0.0
  %701 = vmatpush.msra.mxu0 0.0
  %702 = vmatpush.msra.mxu0 0.0
  %703 = vmatpush.msra.mxu0 0.0
  %704 = vmatpush.msra.mxu0 0.0
  %705 = vmatpush.msra.mxu0 0.0
  %706 = vmatpush.msra.mxu0 0.0
  %707 = vmatpush.msra.mxu0 0.0
  %708 = vmatpush.msra.mxu0 0.0
  %709 = vmatpush.msra.mxu0 0.0
  %710 = vmatpush.msra.mxu0 0.0
  %711 = vmatpush.msra.mxu0 0.0
  %712 = vmatpush.msra.mxu0 0.0
  %713 = vmatpush.msra.mxu0 %v367
  %714 = vmatpush.msra.mxu0 %v360
  %715 = vmatmul.f32.gmra.mxu0 %v397
  %v716 = vpop.f32.mrf.mxu0
  %v717 = vadd.f32 %v697, %v716
  %718 = vdwg.mxu0
  %719 = vmatpush.msra.mxu0 %v130
  %720 = vmatpush.msra.mxu0 %v123
  %721 = vmatpush.msra.mxu0 %v116
  %722 = vmatpush.msra.mxu0 %v109
  %723 = vmatpush.msra.mxu0 %v102
  %724 = vmatpush.msra.mxu0 %v95
  %725 = vmatpush.msra.mxu0 %v88
  %726 = vmatpush.msra.mxu0 %v81
  %727 = vmatpush.msra.mxu0 %v74
  %728 = vmatpush.msra.mxu0 %v67
  %729 = vmatpush.msra.mxu0 %v60
  %730 = vmatpush.msra.mxu0 %v53
  %731 = vmatpush.msra.mxu0 %v46
  %732 = vmatpush.msra.mxu0 %v39
  %733 = vmatpush.msra.mxu0 %v32
  %734 = vmatpush.msra.mxu0 %v25
  %735 = vmatmul.f32.gmra.mxu0 %v389
  %v736 = vpop.f32.mrf.mxu0
  %v737 = vadd.f32 %v377, %v736
  %738 = vdwg.mxu0
  %739 = vmatpush.msra.mxu0 %v242
  %740 = vmatpush.msra.mxu0 %v235
  %741 = vmatpush.msra.mxu0 %v228
  %742 = vmatpush.msra.mxu0 %v221
  %743 = vmatpush.msra.mxu0 %v214
  %744 = vmatpush.msra.mxu0 %v207
  %745 = vmatpush.msra.mxu0 %v200
  %746 = vmatpush.msra.mxu0 %v193
  %747 = vmatpush.msra.mxu0 %v186
  %748 = vmatpush.msra.mxu0 %v179
  %749 = vmatpush.msra.mxu0 %v172
  %750 = vmatpush.msra.mxu0 %v165
  %751 = vmatpush.msra.mxu0 %v158
  %752 = vmatpush.msra.mxu0 %v151
  %753 = vmatpush.msra.mxu0 %v144
  %754 = vmatpush.msra.mxu0 %v137
  %755 = vmatmul.f32.gmra.mxu0 %v390
  %v756 = vpop.f32.mrf.mxu0
  %v757 = vadd.f32 %v737, %v756
  %758 = vdwg.mxu0
  %759 = vmatpush.msra.mxu0 %v354
  %760 = vmatpush.msra.mxu0 %v347
  %761 = vmatpush.msra.mxu0 %v340
  %762 = vmatpush.msra.mxu0 %v333
  %763 = vmatpush.msra.mxu0 %v326
  %764 = vmatpush.msra.mxu0 %v319
  %765 = vmatpush.msra.mxu0 %v312
  %766 = vmatpush.msra.mxu0 %v305
  %767 = vmatpush.msra.mxu0 %v298
  %768 = vmatpush.msra.mxu0 %v291
  %769 = vmatpush.msra.mxu0 %v284
  %770 = vmatpush.msra.mxu0 %v277
  %771 = vmatpush.msra.mxu0 %v270
  %772 = vmatpush.msra.mxu0 %v263
  %773 = vmatpush.msra.mxu0 %v256
  %774 = vmatpush.msra.mxu0 %v249
  %775 = vmatmul.f32.gmra.mxu0 %v391
  %v776 = vpop.f32.mrf.mxu0
  %v777 = vadd.f32 %v757, %v776
  %778 = vdwg.mxu0
  %779 = vmatpush.msra.mxu0 0.0
  %780 = vmatpush.msra.mxu0 0.0
  %781 = vmatpush.msra.mxu0 0.0
  %782 = vmatpush.msra.mxu0 0.0
  %783 = vmatpush.msra.mxu0 0.0
  %784 = vmatpush.msra.mxu0 0.0
  %785 = vmatpush.msra.mxu0 0.0
  %786 = vmatpush.msra.mxu0 0.0
  %787 = vmatpush.msra.mxu0 0.0
  %788 = vmatpush.msra.mxu0 0.0
  %789 = vmatpush.msra.mxu0 0.0
  %790 = vmatpush.msra.mxu0 0.0
  %791 = vmatpush.msra.mxu0 0.0
  %792 = vmatpush.msra.mxu0 0.0
  %793 = vmatpush.msra.mxu0 %v368
  %794 = vmatpush.msra.mxu0 %v361
  %795 = vmatmul.f32.gmra.mxu0 %v397
  %v796 = vpop.f32.mrf.mxu0
  %v797 = vadd.f32 %v777, %v796
  %798 = vdwg.mxu0
  %799 = vmatpush.msra.mxu0 %v131
  %800 = vmatpush.msra.mxu0 %v124
  %801 = vmatpush.msra.mxu0 %v117
  %802 = vmatpush.msra.mxu0 %v110
  %803 = vmatpush.msra.mxu0 %v103
  %804 = vmatpush.msra.mxu0 %v96
  %805 = vmatpush.msra.mxu0 %v89
  %806 = vmatpush.msra.mxu0 %v82
  %807 = vmatpush.msra.mxu0 %v75
  %808 = vmatpush.msra.mxu0 %v68
  %809 = vmatpush.msra.mxu0 %v61
  %810 = vmatpush.msra.mxu0 %v54
  %811 = vmatpush.msra.mxu0 %v47
  %812 = vmatpush.msra.mxu0 %v40
  %813 = vmatpush.msra.mxu0 %v33
  %814 = vmatpush.msra.mxu0 %v26
  %815 = vmatmul.f32.gmra.mxu0 %v389
  %v816 = vpop.f32.mrf.mxu0
  %v817 = vadd.f32 %v378, %v816
  %818 = vdwg.mxu0
  %819 = vmatpush.msra.mxu0 %v243
  %820 = vmatpush.msra.mxu0 %v236
  %821 = vmatpush.msra.mxu0 %v229
  %822 = vmatpush.msra.mxu0 %v222
  %823 = vmatpush.msra.mxu0 %v215
  %824 = vmatpush.msra.mxu0 %v208
  %825 = vmatpush.msra.mxu0 %v201
  %826 = vmatpush.msra.mxu0 %v194
  %827 = vmatpush.msra.mxu0 %v187
  %828 = vmatpush.msra.mxu0 %v180
  %829 = vmatpush.msra.mxu0 %v173
  %830 = vmatpush.msra.mxu0 %v166
  %831 = vmatpush.msra.mxu0 %v159
  %832 = vmatpush.msra.mxu0 %v152
  %833 = vmatpush.msra.mxu0 %v145
  %834 = vmatpush.msra.mxu0 %v138
  %835 = vmatmul.f32.gmra.mxu0 %v390
  %v836 = vpop.f32.mrf.mxu0
  %v837 = vadd.f32 %v817, %v836
  %838 = vdwg.mxu0
  %839 = vmatpush.msra.mxu0 %v355
  %840 = vmatpush.msra.mxu0 %v348
  %841 = vmatpush.msra.mxu0 %v341
  %842 = vmatpush.msra.mxu0 %v334
  %843 = vmatpush.msra.mxu0 %v327
  %844 = vmatpush.msra.mxu0 %v320
  %845 = vmatpush.msra.mxu0 %v313
  %846 = vmatpush.msra.mxu0 %v306
  %847 = vmatpush.msra.mxu0 %v299
  %848 = vmatpush.msra.mxu0 %v292
  %849 = vmatpush.msra.mxu0 %v285
  %850 = vmatpush.msra.mxu0 %v278
  %851 = vmatpush.msra.mxu0 %v271
  %852 = vmatpush.msra.mxu0 %v264
  %853 = vmatpush.msra.mxu0 %v257
  %854 = vmatpush.msra.mxu0 %v250
  %855 = vmatmul.f32.gmra.mxu0 %v391
  %v856 = vpop.f32.mrf.mxu0
  %v857 = vadd.f32 %v837, %v856
  %858 = vdwg.mxu0
  %859 = vmatpush.msra.mxu0 0.0
  %860 = vmatpush.msra.mxu0 0.0
  %861 = vmatpush.msra.mxu0 0.0
  %862 = vmatpush.msra.mxu0 0.0
  %863 = vmatpush.msra.mxu0 0.0
  %864 = vmatpush.msra.mxu0 0.0
  %865 = vmatpush.msra.mxu0 0.0
  %866 = vmatpush.msra.mxu0 0.0
  %867 = vmatpush.msra.mxu0 0.0
  %868 = vmatpush.msra.mxu0 0.0
  %869 = vmatpush.msra.mxu0 0.0
  %870 = vmatpush.msra.mxu0 0.0
  %871 = vmatpush.msra.mxu0 0.0
  %872 = vmatpush.msra.mxu0 0.0
  %873 = vmatpush.msra.mxu0 %v369
  %874 = vmatpush.msra.mxu0 %v362
  %875 = vmatmul.f32.gmra.mxu0 %v397
  %v876 = vpop.f32.mrf.mxu0
  %v877 = vadd.f32 %v857, %v876
  %878 = vdwg.mxu0
  %879 = vmatpush.msra.mxu0 %v132
  %880 = vmatpush.msra.mxu0 %v125
  %881 = vmatpush.msra.mxu0 %v118
  %882 = vmatpush.msra.mxu0 %v111
  %883 = vmatpush.msra.mxu0 %v104
  %884 = vmatpush.msra.mxu0 %v97
  %885 = vmatpush.msra.mxu0 %v90
  %886 = vmatpush.msra.mxu0 %v83
  %887 = vmatpush.msra.mxu0 %v76
  %888 = vmatpush.msra.mxu0 %v69
  %889 = vmatpush.msra.mxu0 %v62
  %890 = vmatpush.msra.mxu0 %v55
  %891 = vmatpush.msra.mxu0 %v48
  %892 = vmatpush.msra.mxu0 %v41
  %893 = vmatpush.msra.mxu0 %v34
  %894 = vmatpush.msra.mxu0 %v27
  %895 = vmatmul.f32.gmra.mxu0 %v389
  %v896 = vpop.f32.mrf.mxu0
  %v897 = vadd.f32 %v379, %v896
  %898 = vdwg.mxu0
  %899 = vmatpush.msra.mxu0 %v244
  %900 = vmatpush.msra.mxu0 %v237
  %901 = vmatpush.msra.mxu0 %v230
  %902 = vmatpush.msra.mxu0 %v223
  %903 = vmatpush.msra.mxu0 %v216
  %904 = vmatpush.msra.mxu0 %v209
  %905 = vmatpush.msra.mxu0 %v202
  %906 = vmatpush.msra.mxu0 %v195
  %907 = vmatpush.msra.mxu0 %v188
  %908 = vmatpush.msra.mxu0 %v181
  %909 = vmatpush.msra.mxu0 %v174
  %910 = vmatpush.msra.mxu0 %v167
  %911 = vmatpush.msra.mxu0 %v160
  %912 = vmatpush.msra.mxu0 %v153
  %913 = vmatpush.msra.mxu0 %v146
  %914 = vmatpush.msra.mxu0 %v139
  %915 = vmatmul.f32.gmra.mxu0 %v390
  %v916 = vpop.f32.mrf.mxu0
  %v917 = vadd.f32 %v897, %v916
  %918 = vdwg.mxu0
  %919 = vmatpush.msra.mxu0 %v356
  %920 = vmatpush.msra.mxu0 %v349
  %921 = vmatpush.msra.mxu0 %v342
  %922 = vmatpush.msra.mxu0 %v335
  %923 = vmatpush.msra.mxu0 %v328
  %924 = vmatpush.msra.mxu0 %v321
  %925 = vmatpush.msra.mxu0 %v314
  %926 = vmatpush.msra.mxu0 %v307
  %927 = vmatpush.msra.mxu0 %v300
  %928 = vmatpush.msra.mxu0 %v293
  %929 = vmatpush.msra.mxu0 %v286
  %930 = vmatpush.msra.mxu0 %v279
  %931 = vmatpush.msra.mxu0 %v272
  %932 = vmatpush.msra.mxu0 %v265
  %933 = vmatpush.msra.mxu0 %v258
  %934 = vmatpush.msra.mxu0 %v251
  %935 = vmatmul.f32.gmra.mxu0 %v391
  %v936 = vpop.f32.mrf.mxu0
  %v937 = vadd.f32 %v917, %v936
  %938 = vdwg.mxu0
  %939 = vmatpush.msra.mxu0 0.0
  %940 = vmatpush.msra.mxu0 0.0
  %941 = vmatpush.msra.mxu0 0.0
  %942 = vmatpush.msra.mxu0 0.0
  %943 = vmatpush.msra.mxu0 0.0
  %944 = vmatpush.msra.mxu0 0.0
  %945 = vmatpush.msra.mxu0 0.0
  %946 = vmatpush.msra.mxu0 0.0
  %947 = vmatpush.msra.mxu0 0.0
  %948 = vmatpush.msra.mxu0 0.0
  %949 = vmatpush.msra.mxu0 0.0
  %950 = vmatpush.msra.mxu0 0.0
  %951 = vmatpush.msra.mxu0 0.0
  %952 = vmatpush.msra.mxu0 0.0
  %953 = vmatpush.msra.mxu0 %v370
  %954 = vmatpush.msra.mxu0 %v363
  %955 = vmatmul.f32.gmra.mxu0 %v397
  %v956 = vpop.f32.mrf.mxu0
  %v957 = vadd.f32 %v937, %v956
  %958 = vdwg.mxu0
  %v959 = vmax.f32 %v477, 0.0
  %v960 = vmax.f32 %v557, 0.0
  %v961 = vmax.f32 %v637, 0.0
  %v962 = vmax.f32 %v717, 0.0
  %v963 = vmax.f32 %v797, 0.0
  %v964 = vmax.f32 %v877, 0.0
  %v965 = vmax.f32 %v957, 0.0
  %v966 = vld [vmem:[%s3] sm:$0xff]
  %v967 = vld [vmem:[%s3 + $0x8] sm:$0xff]
  %v968 = vld [vmem:[%s3 + $0x10] sm:$0xff]
  %v969 = vld [vmem:[%s3 + $0x18] sm:$0xff]
  %v970 = vld [vmem:[%s3 + $0x20] sm:$0xff]
  %v971 = vld [vmem:[%s3 + $0x28] sm:$0xff]
  %v972 = vld [vmem:[%s3 + $0x30] sm:$0xff]
  %v973 = vld [vmem:[%s3 + $0x38] sm:$0xff]
  %v974 = vld [vmem:[%s3 + $0x40] sm:$0xff]
  %v975 = vld [vmem:[%s3 + $0x48] sm:$0xff]
  %v976 = vld [vmem:[%s3 + $0x50] sm:$0xff]
  %v977 = vld [vmem:[%s3 + $0x58] sm:$0xff]
  %v978 = vld [vmem:[%s3 + $0x60] sm:$0xff]
  %v979 = vld [vmem:[%s3 + $0x68] sm:$0xff]
  %v980 = vld [vmem:[%s3 + $0x70] sm:$0xff]
  %v981 = vld [vmem:[%s3 + $0x78] sm:$0xff]
  %v982 = vld [vmem:[%s3 + $0x80] sm:$0xff]
  %v983 = vld [vmem:[%s3 + $0x88] sm:$0xff]
  %v984 = vld [vmem:[%s3 + $0x90] sm:$0xff]
  %v985 = vld [vmem:[%s3 + $0x98] sm:$0xff]
  %v986 = vld [vmem:[%s3 + $0xa0] sm:$0xff]
  %v987 = vld [vmem:[%s3 + $0xa8] sm:$0xff]
  %v988 = vld [vmem:[%s3 + $0xb0] sm:$0xff]
  %v989 = vld [vmem:[%s3 + $0xb8] sm:$0xff]
  %v990 = vld [vmem:[%s3 + $0xc0] sm:$0xff]
  %v991 = vld [vmem:[%s3 + $0xc8] sm:$0xff]
  %v992 = vld [vmem:[%s3 + $0xd0] sm:$0xff]
  %v993 = vld [vmem:[%s3 + $0xd8] sm:$0xff]
  %v994 = vld [vmem:[%s3 + $0xe0] sm:$0xff]
  %v995 = vld [vmem:[%s3 + $0xe8] sm:$0xff]
  %v996 = vld [vmem:[%s3 + $0xf0] sm:$0xff]
  %v997 = vld [vmem:[%s3 + $0xf8] sm:$0xff]
  %v998 = vld [vmem:[%s3 + $0x100] sm:$0xff]
  %v999 = vld [vmem:[%s3 + $0x108] sm:$0xff]
  %v1000 = vld [vmem:[%s3 + $0x110] sm:$0xff]
  %v1001 = vld [vmem:[%s3 + $0x118] sm:$0xff]
  %v1002 = vld [vmem:[%s3 + $0x120] sm:$0xff]
  %v1003 = vld [vmem:[%s3 + $0x128] sm:$0xff]
  %v1004 = vld [vmem:[%s3 + $0x130] sm:$0xff]
  %v1005 = vld [vmem:[%s3 + $0x138] sm:$0xff]
  %v1006 = vld [vmem:[%s3 + $0x140] sm:$0xff]
  %v1007 = vld [vmem:[%s3 + $0x148] sm:$0xff]
  %v1008 = vld [vmem:[%s3 + $0x150] sm:$0xff]
  %v1009 = vld [vmem:[%s3 + $0x158] sm:$0xff]
  %v1010 = vld [vmem:[%s3 + $0x160] sm:$0xff]
  %v1011 = vld [vmem:[%s3 + $0x168] sm:$0xff]
  %v1012 = vld [vmem:[%s3 + $0x170] sm:$0xff]
  %v1013 = vld [vmem:[%s3 + $0x178] sm:$0xff]
  %v1014 = vld [vmem:[%s3 + $0x180] sm:$0xff]
  %v1015 = vld [vmem:[%s3 + $0x188] sm:$0xff]
  %v1016 = vld [vmem:[%s3 + $0x190] sm:$0xff]
  %v1017 = vld [vmem:[%s3 + $0x198] sm:$0xff]
  %v1018 = vld [vmem:[%s3 + $0x1a0] sm:$0xff]
  %v1019 = vld [vmem:[%s3 + $0x1a8] sm:$0xff]
  %v1020 = vld [vmem:[%s3 + $0x1b0] sm:$0xff]
  %v1021 = vld [vmem:[%s3 + $0x1b8] sm:$0xff]
  %v1022 = vld [vmem:[%s3 + $0x1c0] sm:$0xff]
  %v1023 = vld [vmem:[%s3 + $0x1c8] sm:$0xff]
  %v1024 = vld [vmem:[%s3 + $0x1d0] sm:$0xff]
  %v1025 = vld [vmem:[%s3 + $0x1d8] sm:$0xff]
  %v1026 = vld [vmem:[%s3 + $0x1e0] sm:$0xff]
  %v1027 = vld [vmem:[%s3 + $0x1e8] sm:$0xff]
  %v1028 = vld [vmem:[%s3 + $0x1f0] sm:$0xff]
  %v1029 = vld [vmem:[%s3 + $0x1f8] sm:$0xff]
  %v1030 = vld [vmem:[%s3 + $0x200] sm:$0xff]
  %v1031 = vld [vmem:[%s3 + $0x208] sm:$0xff]
  %v1032 = vld [vmem:[%s3 + $0x210] sm:$0xff]
  %v1033 = vld [vmem:[%s3 + $0x218] sm:$0xff]
  %v1034 = vld [vmem:[%s3 + $0x220] sm:$0xff]
  %v1035 = vld [vmem:[%s3 + $0x228] sm:$0xff]
  %v1036 = vld [vmem:[%s3 + $0x230] sm:$0xff]
  %v1037 = vld [vmem:[%s3 + $0x238] sm:$0xff]
  %v1038 = vld [vmem:[%s3 + $0x240] sm:$0xff]
  %v1039 = vld [vmem:[%s3 + $0x248] sm:$0xff]
  %v1040 = vld [vmem:[%s3 + $0x250] sm:$0xff]
  %v1041 = vld [vmem:[%s3 + $0x258] sm:$0xff]
  %v1042 = vld [vmem:[%s3 + $0x260] sm:$0xff]
  %v1043 = vld [vmem:[%s3 + $0x268] sm:$0xff]
  %v1044 = vld [vmem:[%s3 + $0x270] sm:$0xff]
  %v1045 = vld [vmem:[%s3 + $0x278] sm:$0xff]
  %v1046 = vld [vmem:[%s3 + $0x280] sm:$0xff]
  %v1047 = vld [vmem:[%s3 + $0x288] sm:$0xff]
  %v1048 = vld [vmem:[%s3 + $0x290] sm:$0xff]
  %v1049 = vld [vmem:[%s3 + $0x298] sm:$0xff]
  %v1050 = vld [vmem:[%s3 + $0x2a0] sm:$0xff]
  %v1051 = vld [vmem:[%s3 + $0x2a8] sm:$0xff]
  %v1052 = vld [vmem:[%s3 + $0x2b0] sm:$0xff]
  %v1053 = vld [vmem:[%s3 + $0x2b8] sm:$0xff]
  %v1054 = vld [vmem:[%s3 + $0x2c0] sm:$0xff]
  %v1055 = vld [vmem:[%s3 + $0x2c8] sm:$0xff]
  %v1056 = vld [vmem:[%s3 + $0x2d0] sm:$0xff]
  %v1057 = vld [vmem:[%s3 + $0x2d8] sm:$0xff]
  %v1058 = vld [vmem:[%s3 + $0x2e0] sm:$0xff]
  %v1059 = vld [vmem:[%s3 + $0x2e8] sm:$0xff]
  %v1060 = vld [vmem:[%s3 + $0x2f0] sm:$0xff]
  %v1061 = vld [vmem:[%s3 + $0x2f8] sm:$0xff]
  %v1062 = vld [vmem:[%s3 + $0x300] sm:$0xff]
  %v1063 = vld [vmem:[%s3 + $0x308] sm:$0xff]
  %v1064 = vld [vmem:[%s3 + $0x310] sm:$0xff]
  %v1065 = vld [vmem:[%s3 + $0x318] sm:$0xff]
  %v1066 = vld [vmem:[%s3 + $0x320] sm:$0xff]
  %v1067 = vld [vmem:[%s3 + $0x328] sm:$0xff]
  %v1068 = vld [vmem:[%s3 + $0x330] sm:$0xff]
  %v1069 = vld [vmem:[%s3 + $0x338] sm:$0xff]
  %v1070 = vld [vmem:[%s3 + $0x340] sm:$0xff]
  %v1071 = vld [vmem:[%s3 + $0x348] sm:$0xff]
  %v1072 = vld [vmem:[%s3 + $0x350] sm:$0xff]
  %v1073 = vld [vmem:[%s3 + $0x358] sm:$0xff]
  %v1074 = vld [vmem:[%s3 + $0x360] sm:$0xff]
  %v1075 = vld [vmem:[%s3 + $0x368] sm:$0xff]
  %v1076 = vld [vmem:[%s3 + $0x370] sm:$0xff]
  %v1077 = vld [vmem:[%s3 + $0x378] sm:$0xff]
  %v1078 = vld [vmem:[%s3 + $0x380] sm:$0xff]
  %v1079 = vld [vmem:[%s3 + $0x388] sm:$0xff]
  %v1080 = vld [vmem:[%s3 + $0x390] sm:$0xff]
  %v1081 = vld [vmem:[%s3 + $0x398] sm:$0xff]
  %v1082 = vld [vmem:[%s3 + $0x3a0] sm:$0xff]
  %v1083 = vld [vmem:[%s3 + $0x3a8] sm:$0xff]
  %v1084 = vld [vmem:[%s3 + $0x3b0] sm:$0xff]
  %v1085 = vld [vmem:[%s3 + $0x3b8] sm:$0xff]
  %v1086 = vld [vmem:[%s3 + $0x3c0] sm:$0xff]
  %v1087 = vld [vmem:[%s3 + $0x3c8] sm:$0xff]
  %v1088 = vld [vmem:[%s3 + $0x3d0] sm:$0xff]
  %v1089 = vld [vmem:[%s3 + $0x3d8] sm:$0xff]
  %v1090 = vld [vmem:[%s3 + $0x3e0] sm:$0xff]
  %v1091 = vld [vmem:[%s3 + $0x3e8] sm:$0xff]
  %v1092 = vld [vmem:[%s3 + $0x3f0] sm:$0xff]
  %v1093 = vld [vmem:[%s3 + $0x3f8] sm:$0xff]
  %v1094 = vld [vmem:[%s3 + $0x400] sm:$0xff]
  %v1095 = vld [vmem:[%s3 + $0x408] sm:$0xff]
  %v1096 = vld [vmem:[%s3 + $0x410] sm:$0xff]
  %v1097 = vld [vmem:[%s3 + $0x418] sm:$0xff]
  %v1098 = vld [vmem:[%s3 + $0x420] sm:$0xff]
  %v1099 = vld [vmem:[%s3 + $0x428] sm:$0xff]
  %v1100 = vld [vmem:[%s3 + $0x430] sm:$0xff]
  %v1101 = vld [vmem:[%s3 + $0x438] sm:$0xff]
  %v1102 = vld [vmem:[%s3 + $0x440] sm:$0xff]
  %v1103 = vld [vmem:[%s3 + $0x448] sm:$0xff]
  %v1104 = vld [vmem:[%s3 + $0x450] sm:$0xff]
  %v1105 = vld [vmem:[%s3 + $0x458] sm:$0xff]
  %v1106 = vld [vmem:[%s3 + $0x460] sm:$0xff]
  %v1107 = vld [vmem:[%s3 + $0x468] sm:$0xff]
  %v1108 = vld [vmem:[%s3 + $0x470] sm:$0xff]
  %v1109 = vld [vmem:[%s3 + $0x478] sm:$0xff]
  %v1110 = vld [vmem:[%s3 + $0x480] sm:$0xff]
  %v1111 = vld [vmem:[%s3 + $0x488] sm:$0xff]
  %v1112 = vld [vmem:[%s3 + $0x490] sm:$0xff]
  %v1113 = vld [vmem:[%s3 + $0x498] sm:$0xff]
  %v1114 = vld [vmem:[%s3 + $0x4a0] sm:$0xff]
  %v1115 = vld [vmem:[%s3 + $0x4a8] sm:$0xff]
  %v1116 = vld [vmem:[%s3 + $0x4b0] sm:$0xff]
  %v1117 = vld [vmem:[%s3 + $0x4b8] sm:$0xff]
  %v1118 = vld [vmem:[%s3 + $0x4c0] sm:$0xff]
  %v1119 = vld [vmem:[%s3 + $0x4c8] sm:$0xff]
  %v1120 = vld [vmem:[%s3 + $0x4d0] sm:$0xff]
  %v1121 = vld [vmem:[%s3 + $0x4d8] sm:$0xff]
  %v1122 = vld [vmem:[%s3 + $0x4e0] sm:$0xff]
  %v1123 = vld [vmem:[%s3 + $0x4e8] sm:$0xff]
  %v1124 = vld [vmem:[%s3 + $0x4f0] sm:$0xff]
  %v1125 = vld [vmem:[%s3 + $0x4f8] sm:$0xff]
  %v1126 = vld [vmem:[%s3 + $0x500] sm:$0xff]
  %v1127 = vld [vmem:[%s3 + $0x508] sm:$0xff]
  %v1128 = vld [vmem:[%s3 + $0x510] sm:$0xff]
  %v1129 = vld [vmem:[%s3 + $0x518] sm:$0xff]
  %v1130 = vld [vmem:[%s3 + $0x520] sm:$0xff]
  %v1131 = vld [vmem:[%s3 + $0x528] sm:$0xff]
  %v1132 = vld [vmem:[%s3 + $0x530] sm:$0xff]
  %v1133 = vld [vmem:[%s3 + $0x538] sm:$0xff]
  %v1134 = vld [vmem:[%s3 + $0x540] sm:$0xff]
  %v1135 = vld [vmem:[%s3 + $0x548] sm:$0xff]
  %v1136 = vld [vmem:[%s3 + $0x550] sm:$0xff]
  %v1137 = vld [vmem:[%s3 + $0x558] sm:$0xff]
  %v1138 = vld [vmem:[%s3 + $0x560] sm:$0xff]
  %v1139 = vld [vmem:[%s3 + $0x568] sm:$0xff]
  %v1140 = vld [vmem:[%s3 + $0x570] sm:$0xff]
  %v1141 = vld [vmem:[%s3 + $0x578] sm:$0xff]
  %v1142 = vld [vmem:[%s3 + $0x580] sm:$0xff]
  %v1143 = vld [vmem:[%s3 + $0x588] sm:$0xff]
  %v1144 = vld [vmem:[%s3 + $0x590] sm:$0xff]
  %v1145 = vld [vmem:[%s3 + $0x598] sm:$0xff]
  %v1146 = vld [vmem:[%s3 + $0x5a0] sm:$0xff]
  %v1147 = vld [vmem:[%s3 + $0x5a8] sm:$0xff]
  %v1148 = vld [vmem:[%s3 + $0x5b0] sm:$0xff]
  %v1149 = vld [vmem:[%s3 + $0x5b8] sm:$0xff]
  %v1150 = vld [vmem:[%s3 + $0x5c0] sm:$0xff]
  %v1151 = vld [vmem:[%s3 + $0x5c8] sm:$0xff]
  %v1152 = vld [vmem:[%s3 + $0x5d0] sm:$0xff]
  %v1153 = vld [vmem:[%s3 + $0x5d8] sm:$0xff]
  %v1154 = vld [vmem:[%s3 + $0x5e0] sm:$0xff]
  %v1155 = vld [vmem:[%s3 + $0x5e8] sm:$0xff]
  %v1156 = vld [vmem:[%s3 + $0x5f0] sm:$0xff]
  %v1157 = vld [vmem:[%s3 + $0x5f8] sm:$0xff]
  %v1158 = vld [vmem:[%s3 + $0x600] sm:$0xff]
  %v1159 = vld [vmem:[%s3 + $0x608] sm:$0xff]
  %v1160 = vld [vmem:[%s3 + $0x610] sm:$0xff]
  %v1161 = vld [vmem:[%s3 + $0x618] sm:$0xff]
  %v1162 = vld [vmem:[%s3 + $0x620] sm:$0xff]
  %v1163 = vld [vmem:[%s3 + $0x628] sm:$0xff]
  %v1164 = vld [vmem:[%s3 + $0x630] sm:$0xff]
  %v1165 = vld [vmem:[%s3 + $0x638] sm:$0xff]
  %v1166 = vld [vmem:[%s3 + $0x640] sm:$0xff]
  %v1167 = vld [vmem:[%s3 + $0x648] sm:$0xff]
  %v1168 = vld [vmem:[%s3 + $0x650] sm:$0xff]
  %v1169 = vld [vmem:[%s3 + $0x658] sm:$0xff]
  %v1170 = vld [vmem:[%s3 + $0x660] sm:$0xff]
  %v1171 = vld [vmem:[%s3 + $0x668] sm:$0xff]
  %v1172 = vld [vmem:[%s3 + $0x670] sm:$0xff]
  %v1173 = vld [vmem:[%s3 + $0x678] sm:$0xff]
  %v1174 = vld [vmem:[%s3 + $0x680] sm:$0xff]
  %v1175 = vld [vmem:[%s3 + $0x688] sm:$0xff]
  %v1176 = vld [vmem:[%s3 + $0x690] sm:$0xff]
  %v1177 = vld [vmem:[%s3 + $0x698] sm:$0xff]
  %v1178 = vld [vmem:[%s3 + $0x6a0] sm:$0xff]
  %v1179 = vld [vmem:[%s3 + $0x6a8] sm:$0xff]
  %v1180 = vld [vmem:[%s3 + $0x6b0] sm:$0xff]
  %v1181 = vld [vmem:[%s3 + $0x6b8] sm:$0xff]
  %v1182 = vld [vmem:[%s3 + $0x6c0] sm:$0xff]
  %v1183 = vld [vmem:[%s3 + $0x6c8] sm:$0xff]
  %v1184 = vld [vmem:[%s3 + $0x6d0] sm:$0xff]
  %v1185 = vld [vmem:[%s3 + $0x6d8] sm:$0xff]
  %v1186 = vld [vmem:[%s3 + $0x6e0] sm:$0xff]
  %v1187 = vld [vmem:[%s3 + $0x6e8] sm:$0xff]
  %v1188 = vld [vmem:[%s3 + $0x6f0] sm:$0xff]
  %v1189 = vld [vmem:[%s3 + $0x6f8] sm:$0xff]
  %v1190 = vld [vmem:[%s3 + $0x700] sm:$0xff]
  %v1191 = vld [vmem:[%s3 + $0x708] sm:$0xff]
  %v1192 = vld [vmem:[%s3 + $0x710] sm:$0xff]
  %v1193 = vld [vmem:[%s3 + $0x718] sm:$0xff]
  %v1194 = vld [vmem:[%s3 + $0x720] sm:$0xff]
  %v1195 = vld [vmem:[%s3 + $0x728] sm:$0xff]
  %v1196 = vld [vmem:[%s3 + $0x730] sm:$0xff]
  %v1197 = vld [vmem:[%s3 + $0x738] sm:$0xff]
  %v1198 = vld [vmem:[%s3 + $0x740] sm:$0xff]
  %v1199 = vld [vmem:[%s3 + $0x748] sm:$0xff]
  %v1200 = vld [vmem:[%s3 + $0x750] sm:$0xff]
  %v1201 = vld [vmem:[%s3 + $0x758] sm:$0xff]
  %v1202 = vld [vmem:[%s3 + $0x760] sm:$0xff]
  %v1203 = vld [vmem:[%s3 + $0x768] sm:$0xff]
  %v1204 = vld [vmem:[%s3 + $0x770] sm:$0xff]
  %v1205 = vld [vmem:[%s3 + $0x778] sm:$0xff]
  %v1206 = vld [vmem:[%s3 + $0x780] sm:$0xff]
  %v1207 = vld [vmem:[%s3 + $0x788] sm:$0xff]
  %v1208 = vld [vmem:[%s3 + $0x790] sm:$0xff]
  %v1209 = vld [vmem:[%s3 + $0x798] sm:$0xff]
  %v1210 = vld [vmem:[%s3 + $0x7a0] sm:$0xff]
  %v1211 = vld [vmem:[%s3 + $0x7a8] sm:$0xff]
  %v1212 = vld [vmem:[%s3 + $0x7b0] sm:$0xff]
  %v1213 = vld [vmem:[%s3 + $0x7b8] sm:$0xff]
  %v1214 = vld [vmem:[%s3 + $0x7c0] sm:$0xff]
  %v1215 = vld [vmem:[%s3 + $0x7c8] sm:$0xff]
  %v1216 = vld [vmem:[%s3 + $0x7d0] sm:$0xff]
  %v1217 = vld [vmem:[%s3 + $0x7d8] sm:$0xff]
  %v1218 = vld [vmem:[%s3 + $0x7e0] sm:$0xff]
  %v1219 = vld [vmem:[%s3 + $0x7e8] sm:$0xff]
  %v1220 = vld [vmem:[%s3 + $0x7f0] sm:$0xff]
  %v1221 = vld [vmem:[%s3 + $0x7f8] sm:$0xff]
  %v1222 = vld [vmem:[%s3 + $0x800] sm:$0xff]
  %v1223 = vld [vmem:[%s3 + $0x808] sm:$0xff]
  %v1224 = vld [vmem:[%s3 + $0x810] sm:$0xff]
  %v1225 = vld [vmem:[%s3 + $0x818] sm:$0xff]
  %v1226 = vld [vmem:[%s3 + $0x820] sm:$0xff]
  %v1227 = vld [vmem:[%s3 + $0x828] sm:$0xff]
  %v1228 = vld [vmem:[%s3 + $0x830] sm:$0xff]
  %v1229 = vld [vmem:[%s3 + $0x838] sm:$0xff]
  %v1230 = vld [vmem:[%s3 + $0x840] sm:$0xff]
  %v1231 = vld [vmem:[%s3 + $0x848] sm:$0xff]
  %v1232 = vld [vmem:[%s3 + $0x850] sm:$0xff]
  %v1233 = vld [vmem:[%s3 + $0x858] sm:$0xff]
  %v1234 = vld [vmem:[%s3 + $0x860] sm:$0xff]
  %v1235 = vld [vmem:[%s3 + $0x868] sm:$0xff]
  %v1236 = vld [vmem:[%s3 + $0x870] sm:$0xff]
  %v1237 = vld [vmem:[%s3 + $0x878] sm:$0xff]
  %v1238 = vld [vmem:[%s3 + $0x880] sm:$0xff]
  %v1239 = vld [vmem:[%s3 + $0x888] sm:$0xff]
  %v1240 = vld [vmem:[%s3 + $0x890] sm:$0xff]
  %v1241 = vld [vmem:[%s3 + $0x898] sm:$0xff]
  %v1242 = vld [vmem:[%s3 + $0x8a0] sm:$0xff]
  %v1243 = vld [vmem:[%s3 + $0x8a8] sm:$0xff]
  %v1244 = vld [vmem:[%s3 + $0x8b0] sm:$0xff]
  %v1245 = vld [vmem:[%s3 + $0x8b8] sm:$0xff]
  %v1246 = vld [vmem:[%s3 + $0x8c0] sm:$0xff]
  %v1247 = vld [vmem:[%s3 + $0x8c8] sm:$0xff]
  %v1248 = vld [vmem:[%s3 + $0x8d0] sm:$0xff]
  %v1249 = vld [vmem:[%s3 + $0x8d8] sm:$0xff]
  %v1250 = vld [vmem:[%s3 + $0x8e0] sm:$0xff]
  %v1251 = vld [vmem:[%s3 + $0x8e8] sm:$0xff]
  %v1252 = vld [vmem:[%s3 + $0x8f0] sm:$0xff]
  %v1253 = vld [vmem:[%s3 + $0x8f8] sm:$0xff]
  %v1254 = vld [vmem:[%s3 + $0x900] sm:$0xff]
  %v1255 = vld [vmem:[%s3 + $0x908] sm:$0xff]
  %v1256 = vld [vmem:[%s3 + $0x910] sm:$0xff]
  %v1257 = vld [vmem:[%s3 + $0x918] sm:$0xff]
  %v1258 = vld [vmem:[%s3 + $0x920] sm:$0xff]
  %v1259 = vld [vmem:[%s3 + $0x928] sm:$0xff]
  %v1260 = vld [vmem:[%s3 + $0x930] sm:$0xff]
  %v1261 = vld [vmem:[%s3 + $0x938] sm:$0xff]
  %v1262 = vld [vmem:[%s3 + $0x940] sm:$0xff]
  %v1263 = vld [vmem:[%s3 + $0x948] sm:$0xff]
  %v1264 = vld [vmem:[%s3 + $0x950] sm:$0xff]
  %v1265 = vld [vmem:[%s3 + $0x958] sm:$0xff]
  %v1266 = vld [vmem:[%s3 + $0x960] sm:$0xff]
  %v1267 = vld [vmem:[%s3 + $0x968] sm:$0xff]
  %v1268 = vld [vmem:[%s3 + $0x970] sm:$0xff]
  %v1269 = vld [vmem:[%s3 + $0x978] sm:$0xff]
  %v1270 = vld [vmem:[%s3 + $0x980] sm:$0xff]
  %v1271 = vld [vmem:[%s3 + $0x988] sm:$0xff]
  %v1272 = vld [vmem:[%s3 + $0x990] sm:$0xff]
  %v1273 = vld [vmem:[%s3 + $0x998] sm:$0xff]
  %v1274 = vld [vmem:[%s3 + $0x9a0] sm:$0xff]
  %v1275 = vld [vmem:[%s3 + $0x9a8] sm:$0xff]
  %v1276 = vld [vmem:[%s3 + $0x9b0] sm:$0xff]
  %v1277 = vld [vmem:[%s3 + $0x9b8] sm:$0xff]
  %v1278 = vld [vmem:[%s3 + $0x9c0] sm:$0xff]
  %v1279 = vld [vmem:[%s3 + $0x9c8] sm:$0xff]
  %v1280 = vld [vmem:[%s3 + $0x9d0] sm:$0xff]
  %v1281 = vld [vmem:[%s3 + $0x9d8] sm:$0xff]
  %v1282 = vld [vmem:[%s3 + $0x9e0] sm:$0xff]
  %v1283 = vld [vmem:[%s3 + $0x9e8] sm:$0xff]
  %v1284 = vld [vmem:[%s3 + $0x9f0] sm:$0xff]
  %v1285 = vld [vmem:[%s3 + $0x9f8] sm:$0xff]
  %v1286 = vld [vmem:[%s3 + $0xa00] sm:$0xff]
  %v1287 = vld [vmem:[%s3 + $0xa08] sm:$0xff]
  %v1288 = vld [vmem:[%s3 + $0xa10] sm:$0xff]
  %v1289 = vld [vmem:[%s3 + $0xa18] sm:$0xff]
  %v1290 = vld [vmem:[%s3 + $0xa20] sm:$0xff]
  %v1291 = vld [vmem:[%s3 + $0xa28] sm:$0xff]
  %v1292 = vld [vmem:[%s3 + $0xa30] sm:$0xff]
  %v1293 = vld [vmem:[%s3 + $0xa38] sm:$0xff]
  %v1294 = vld [vmem:[%s3 + $0xa40] sm:$0xff]
  %v1295 = vld [vmem:[%s3 + $0xa48] sm:$0xff]
  %v1296 = vld [vmem:[%s3 + $0xa50] sm:$0xff]
  %v1297 = vld [vmem:[%s3 + $0xa58] sm:$0xff]
  %v1298 = vld [vmem:[%s3 + $0xa60] sm:$0xff]
  %v1299 = vld [vmem:[%s3 + $0xa68] sm:$0xff]
  %v1300 = vld [vmem:[%s3 + $0xa70] sm:$0xff]
  %v1301 = vld [vmem:[%s3 + $0xa78] sm:$0xff]
  %v1302 = vld [vmem:[%s3 + $0xa80] sm:$0xff]
  %v1303 = vld [vmem:[%s3 + $0xa88] sm:$0xff]
  %v1304 = vld [vmem:[%s3 + $0xa90] sm:$0xff]
  %v1305 = vld [vmem:[%s3 + $0xa98] sm:$0xff]
  %v1306 = vld [vmem:[%s3 + $0xaa0] sm:$0xff]
  %v1307 = vld [vmem:[%s3 + $0xaa8] sm:$0xff]
  %v1308 = vld [vmem:[%s3 + $0xab0] sm:$0xff]
  %v1309 = vld [vmem:[%s3 + $0xab8] sm:$0xff]
  %v1310 = vld [vmem:[%s3 + $0xac0] sm:$0xff]
  %v1311 = vld [vmem:[%s3 + $0xac8] sm:$0xff]
  %v1312 = vld [vmem:[%s3 + $0xad0] sm:$0xff]
  %v1313 = vld [vmem:[%s3 + $0xad8] sm:$0xff]
  %v1314 = vld [vmem:[%s3 + $0xae0] sm:$0xff]
  %v1315 = vld [vmem:[%s3 + $0xae8] sm:$0xff]
  %v1316 = vld [vmem:[%s3 + $0xaf0] sm:$0xff]
  %v1317 = vld [vmem:[%s3 + $0xaf8] sm:$0xff]
  %v1318 = vld [vmem:[%s3 + $0xb00] sm:$0xff]
  %v1319 = vld [vmem:[%s3 + $0xb08] sm:$0xff]
  %v1320 = vld [vmem:[%s3 + $0xb10] sm:$0xff]
  %v1321 = vld [vmem:[%s3 + $0xb18] sm:$0xff]
  %v1322 = vld [vmem:[%s3 + $0xb20] sm:$0xff]
  %v1323 = vld [vmem:[%s3 + $0xb28] sm:$0xff]
  %v1324 = vld [vmem:[%s3 + $0xb30] sm:$0xff]
  %v1325 = vld [vmem:[%s3 + $0xb38] sm:$0xff]
  %v1326 = vld [vmem:[%s3 + $0xb40] sm:$0xff]
  %v1327 = vld [vmem:[%s3 + $0xb48] sm:$0xff]
  %v1328 = vld [vmem:[%s3 + $0xb50] sm:$0xff]
  %v1329 = vld [vmem:[%s3 + $0xb58] sm:$0xff]
  %v1330 = vld [vmem:[%s3 + $0xb60] sm:$0xff]
  %v1331 = vld [vmem:[%s3 + $0xb68] sm:$0xff]
  %v1332 = vld [vmem:[%s3 + $0xb70] sm:$0xff]
  %v1333 = vld [vmem:[%s3 + $0xb78] sm:$0xff]
  %v1334 = vld [vmem:[%s3 + $0xb80] sm:$0xff]
  %v1335 = vld [vmem:[%s3 + $0xb88] sm:$0xff]
  %v1336 = vld [vmem:[%s3 + $0xb90] sm:$0xff]
  %v1337 = vld [vmem:[%s3 + $0xb98] sm:$0xff]
  %v1338 = vld [vmem:[%s3 + $0xba0] sm:$0xff]
  %v1339 = vld [vmem:[%s3 + $0xba8] sm:$0xff]
  %v1340 = vld [vmem:[%s3 + $0xbb0] sm:$0xff]
  %v1341 = vld [vmem:[%s3 + $0xbb8] sm:$0xff]
  %v1342 = vld [vmem:[%s3 + $0xbc0] sm:$0xff]
  %v1343 = vld [vmem:[%s3 + $0xbc8] sm:$0xff]
  %v1344 = vld [vmem:[%s3 + $0xbd0] sm:$0xff]
  %v1345 = vld [vmem:[%s3 + $0xbd8] sm:$0xff]
  %v1346 = vld [vmem:[%s3 + $0xbe0] sm:$0xff]
  %v1347 = vld [vmem:[%s3 + $0xbe8] sm:$0xff]
  %v1348 = vld [vmem:[%s3 + $0xbf0] sm:$0xff]
  %v1349 = vld [vmem:[%s3 + $0xbf8] sm:$0xff]
  %v1350 = vld [vmem:[%s3 + $0xc00] sm:$0xff]
  %v1351 = vld [vmem:[%s3 + $0xc08] sm:$0xff]
  %v1352 = vld [vmem:[%s3 + $0xc10] sm:$0xff]
  %v1353 = vld [vmem:[%s3 + $0xc18] sm:$0xff]
  %v1354 = vld [vmem:[%s3 + $0xc20] sm:$0xff]
  %v1355 = vld [vmem:[%s3 + $0xc28] sm:$0xff]
  %v1356 = vld [vmem:[%s3 + $0xc30] sm:$0xff]
  %v1357 = vld [vmem:[%s3 + $0xc38] sm:$0xff]
  %v1358 = vld [vmem:[%s3 + $0xc40] sm:$0xff]
  %v1359 = vld [vmem:[%s3 + $0xc48] sm:$0xff]
  %v1360 = vld [vmem:[%s3 + $0xc50] sm:$0xff]
  %v1361 = vld [vmem:[%s3 + $0xc58] sm:$0xff]
  %v1362 = vld [vmem:[%s3 + $0xc60] sm:$0xff]
  %v1363 = vld [vmem:[%s3 + $0xc68] sm:$0xff]
  %v1364 = vld [vmem:[%s3 + $0xc70] sm:$0xff]
  %v1365 = vld [vmem:[%s3 + $0xc78] sm:$0xff]
  %v1366 = vld [vmem:[%s3 + $0xc80] sm:$0xff]
  %v1367 = vld [vmem:[%s3 + $0xc88] sm:$0xff]
  %v1368 = vld [vmem:[%s3 + $0xc90] sm:$0xff]
  %v1369 = vld [vmem:[%s3 + $0xc98] sm:$0xff]
  %v1370 = vld [vmem:[%s3 + $0xca0] sm:$0xff]
  %v1371 = vld [vmem:[%s3 + $0xca8] sm:$0xff]
  %v1372 = vld [vmem:[%s3 + $0xcb0] sm:$0xff]
  %v1373 = vld [vmem:[%s3 + $0xcb8] sm:$0xff]
  %v1374 = vld [vmem:[%s3 + $0xcc0] sm:$0xff]
  %v1375 = vld [vmem:[%s3 + $0xcc8] sm:$0xff]
  %v1376 = vld [vmem:[%s3 + $0xcd0] sm:$0xff]
  %v1377 = vld [vmem:[%s3 + $0xcd8] sm:$0xff]
  %v1378 = vld [vmem:[%s3 + $0xce0] sm:$0xff]
  %v1379 = vld [vmem:[%s3 + $0xce8] sm:$0xff]
  %v1380 = vld [vmem:[%s3 + $0xcf0] sm:$0xff]
  %v1381 = vld [vmem:[%s3 + $0xcf8] sm:$0xff]
  %v1382 = vld [vmem:[%s3 + $0xd00] sm:$0xff]
  %v1383 = vld [vmem:[%s3 + $0xd08] sm:$0xff]
  %v1384 = vld [vmem:[%s3 + $0xd10] sm:$0xff]
  %v1385 = vld [vmem:[%s3 + $0xd18] sm:$0xff]
  %v1386 = vld [vmem:[%s3 + $0xd20] sm:$0xff]
  %v1387 = vld [vmem:[%s3 + $0xd28] sm:$0xff]
  %v1388 = vld [vmem:[%s3 + $0xd30] sm:$0xff]
  %v1389 = vld [vmem:[%s3 + $0xd38] sm:$0xff]
  %v1390 = vld [vmem:[%s3 + $0xd40] sm:$0xff]
  %v1391 = vld [vmem:[%s3 + $0xd48] sm:$0xff]
  %v1392 = vld [vmem:[%s3 + $0xd50] sm:$0xff]
  %v1393 = vld [vmem:[%s3 + $0xd58] sm:$0xff]
  %v1394 = vld [vmem:[%s3 + $0xd60] sm:$0xff]
  %v1395 = vld [vmem:[%s3 + $0xd68] sm:$0xff]
  %v1396 = vld [vmem:[%s3 + $0xd70] sm:$0xff]
  %v1397 = vld [vmem:[%s3 + $0xd78] sm:$0xff]
  %v1398 = vld [vmem:[%s3 + $0xd80] sm:$0xff]
  %v1399 = vld [vmem:[%s3 + $0xd88] sm:$0xff]
  %v1400 = vld [vmem:[%s3 + $0xd90] sm:$0xff]
  %v1401 = vld [vmem:[%s3 + $0xd98] sm:$0xff]
  %v1402 = vld [vmem:[%s3 + $0xda0] sm:$0xff]
  %v1403 = vld [vmem:[%s3 + $0xda8] sm:$0xff]
  %v1404 = vld [vmem:[%s3 + $0xdb0] sm:$0xff]
  %v1405 = vld [vmem:[%s3 + $0xdb8] sm:$0xff]
  %v1406 = vld [vmem:[%s3 + $0xdc0] sm:$0xff]
  %v1407 = vld [vmem:[%s3 + $0xdc8] sm:$0xff]
  %v1408 = vld [vmem:[%s3 + $0xdd0] sm:$0xff]
  %v1409 = vld [vmem:[%s3 + $0xdd8] sm:$0xff]
  %v1410 = vld [vmem:[%s3 + $0xde0] sm:$0xff]
  %v1411 = vld [vmem:[%s3 + $0xde8] sm:$0xff]
  %v1412 = vld [vmem:[%s3 + $0xdf0] sm:$0xff]
  %v1413 = vld [vmem:[%s3 + $0xdf8] sm:$0xff]
  %v1414 = vld [vmem:[%s3 + $0xe00] sm:$0xff]
  %v1415 = vld [vmem:[%s3 + $0xe08] sm:$0xff]
  %v1416 = vld [vmem:[%s3 + $0xe10] sm:$0xff]
  %v1417 = vld [vmem:[%s3 + $0xe18] sm:$0xff]
  %v1418 = vld [vmem:[%s3 + $0xe20] sm:$0xff]
  %v1419 = vld [vmem:[%s3 + $0xe28] sm:$0xff]
  %v1420 = vld [vmem:[%s3 + $0xe30] sm:$0xff]
  %v1421 = vld [vmem:[%s3 + $0xe38] sm:$0xff]
  %v1422 = vld [vmem:[%s3 + $0xe40] sm:$0xff]
  %v1423 = vld [vmem:[%s3 + $0xe48] sm:$0xff]
  %v1424 = vld [vmem:[%s3 + $0xe50] sm:$0xff]
  %v1425 = vld [vmem:[%s3 + $0xe58] sm:$0xff]
  %v1426 = vld [vmem:[%s3 + $0xe60] sm:$0xff]
  %v1427 = vld [vmem:[%s3 + $0xe68] sm:$0xff]
  %v1428 = vld [vmem:[%s3 + $0xe70] sm:$0xff]
  %v1429 = vld [vmem:[%s3 + $0xe78] sm:$0xff]
  %v1430 = vld [vmem:[%s3 + $0xe80] sm:$0xff]
  %v1431 = vld [vmem:[%s3 + $0xe88] sm:$0xff]
  %v1432 = vld [vmem:[%s3 + $0xe90] sm:$0xff]
  %v1433 = vld [vmem:[%s3 + $0xe98] sm:$0xff]
  %v1434 = vld [vmem:[%s3 + $0xea0] sm:$0xff]
  %v1435 = vld [vmem:[%s3 + $0xea8] sm:$0xff]
  %v1436 = vld [vmem:[%s3 + $0xeb0] sm:$0xff]
  %v1437 = vld [vmem:[%s3 + $0xeb8] sm:$0xff]
  %v1438 = vld [vmem:[%s3 + $0xec0] sm:$0xff]
  %v1439 = vld [vmem:[%s3 + $0xec8] sm:$0xff]
  %v1440 = vld [vmem:[%s3 + $0xed0] sm:$0xff]
  %v1441 = vld [vmem:[%s3 + $0xed8] sm:$0xff]
  %v1442 = vld [vmem:[%s3 + $0xee0] sm:$0xff]
  %v1443 = vld [vmem:[%s3 + $0xee8] sm:$0xff]
  %v1444 = vld [vmem:[%s3 + $0xef0] sm:$0xff]
  %v1445 = vld [vmem:[%s3 + $0xef8] sm:$0xff]
  %v1446 = vld [vmem:[%s3 + $0xf00] sm:$0xff]
  %v1447 = vld [vmem:[%s3 + $0xf08] sm:$0xff]
  %v1448 = vld [vmem:[%s3 + $0xf10] sm:$0xff]
  %v1449 = vld [vmem:[%s3 + $0xf18] sm:$0xff]
  %v1450 = vld [vmem:[%s3 + $0xf20] sm:$0xff]
  %v1451 = vld [vmem:[%s3 + $0xf28] sm:$0xff]
  %v1452 = vld [vmem:[%s3 + $0xf30] sm:$0xff]
  %v1453 = vld [vmem:[%s3 + $0xf38] sm:$0xff]
  %v1454 = vld [vmem:[%s3 + $0xf40] sm:$0xff]
  %v1455 = vld [vmem:[%s3 + $0xf48] sm:$0xff]
  %v1456 = vld [vmem:[%s3 + $0xf50] sm:$0xff]
  %v1457 = vld [vmem:[%s3 + $0xf58] sm:$0xff]
  %v1458 = vld [vmem:[%s3 + $0xf60] sm:$0xff]
  %v1459 = vld [vmem:[%s3 + $0xf68] sm:$0xff]
  %v1460 = vld [vmem:[%s3 + $0xf70] sm:$0xff]
  %v1461 = vld [vmem:[%s3 + $0xf78] sm:$0xff]
  %v1462 = vld [vmem:[%s3 + $0xf80] sm:$0xff]
  %v1463 = vld [vmem:[%s3 + $0xf88] sm:$0xff]
  %v1464 = vld [vmem:[%s3 + $0xf90] sm:$0xff]
  %v1465 = vld [vmem:[%s3 + $0xf98] sm:$0xff]
  %v1466 = vld [vmem:[%s3 + $0xfa0] sm:$0xff]
  %v1467 = vld [vmem:[%s3 + $0xfa8] sm:$0xff]
  %v1468 = vld [vmem:[%s3 + $0xfb0] sm:$0xff]
  %v1469 = vld [vmem:[%s3 + $0xfb8] sm:$0xff]
  %v1470 = vld [vmem:[%s3 + $0xfc0] sm:$0xff]
  %v1471 = vld [vmem:[%s3 + $0xfc8] sm:$0xff]
  %v1472 = vld [vmem:[%s3 + $0xfd0] sm:$0xff]
  %v1473 = vld [vmem:[%s3 + $0xfd8] sm:$0xff]
  %v1474 = vld [vmem:[%s3 + $0xfe0] sm:$0xff]
  %v1475 = vld [vmem:[%s3 + $0xfe8] sm:$0xff]
  %v1476 = vld [vmem:[%s3 + $0xff0] sm:$0xff]
  %v1477 = vld [vmem:[%s3 + $0xff8] sm:$0xff]
  %v1478 = vld [vmem:[%s3 + $0x1000] sm:$0xff]
  %v1479 = vld [vmem:[%s3 + $0x1008] sm:$0xff]
  %v1480 = vld [vmem:[%s3 + $0x1010] sm:$0xff]
  %v1481 = vld [vmem:[%s3 + $0x1018] sm:$0xff]
  %v1482 = vld [vmem:[%s3 + $0x1020] sm:$0xff]
  %v1483 = vld [vmem:[%s3 + $0x1028] sm:$0xff]
  %v1484 = vld [vmem:[%s3 + $0x1030] sm:$0xff]
  %v1485 = vld [vmem:[%s3 + $0x1038] sm:$0xff]
  %v1486 = vld [vmem:[%s3 + $0x1040] sm:$0xff]
  %v1487 = vld [vmem:[%s3 + $0x1048] sm:$0xff]
  %v1488 = vld [vmem:[%s3 + $0x1050] sm:$0xff]
  %v1489 = vld [vmem:[%s3 + $0x1058] sm:$0xff]
  %v1490 = vld [vmem:[%s3 + $0x1060] sm:$0xff]
  %v1491 = vld [vmem:[%s3 + $0x1068] sm:$0xff]
  %v1492 = vld [vmem:[%s3 + $0x1070] sm:$0xff]
  %v1493 = vld [vmem:[%s3 + $0x1078] sm:$0xff]
  %v1494 = vld [vmem:[%s3 + $0x1080] sm:$0xff]
  %v1495 = vld [vmem:[%s3 + $0x1088] sm:$0xff]
  %v1496 = vld [vmem:[%s3 + $0x1090] sm:$0xff]
  %v1497 = vld [vmem:[%s3 + $0x1098] sm:$0xff]
  %v1498 = vld [vmem:[%s3 + $0x10a0] sm:$0xff]
  %v1499 = vld [vmem:[%s3 + $0x10a8] sm:$0xff]
  %v1500 = vld [vmem:[%s3 + $0x10b0] sm:$0xff]
  %v1501 = vld [vmem:[%s3 + $0x10b8] sm:$0xff]
  %v1502 = vld [vmem:[%s3 + $0x10c0] sm:$0xff]
  %v1503 = vld [vmem:[%s3 + $0x10c8] sm:$0xff]
  %v1504 = vld [vmem:[%s3 + $0x10d0] sm:$0xff]
  %v1505 = vld [vmem:[%s3 + $0x10d8] sm:$0xff]
  %v1506 = vld [vmem:[%s3 + $0x10e0] sm:$0xff]
  %v1507 = vld [vmem:[%s3 + $0x10e8] sm:$0xff]
  %v1508 = vld [vmem:[%s3 + $0x10f0] sm:$0xff]
  %v1509 = vld [vmem:[%s3 + $0x10f8] sm:$0xff]
  %v1510 = vld [vmem:[%s3 + $0x1100] sm:$0xff]
  %v1511 = vld [vmem:[%s3 + $0x1108] sm:$0xff]
  %v1512 = vld [vmem:[%s3 + $0x1110] sm:$0xff]
  %v1513 = vld [vmem:[%s3 + $0x1118] sm:$0xff]
  %v1514 = vld [vmem:[%s3 + $0x1120] sm:$0xff]
  %v1515 = vld [vmem:[%s3 + $0x1128] sm:$0xff]
  %v1516 = vld [vmem:[%s3 + $0x1130] sm:$0xff]
  %v1517 = vld [vmem:[%s3 + $0x1138] sm:$0xff]
  %v1518 = vld [vmem:[%s3 + $0x1140] sm:$0xff]
  %v1519 = vld [vmem:[%s3 + $0x1148] sm:$0xff]
  %v1520 = vld [vmem:[%s3 + $0x1150] sm:$0xff]
  %v1521 = vld [vmem:[%s3 + $0x1158] sm:$0xff]
  %v1522 = vld [vmem:[%s3 + $0x1160] sm:$0xff]
  %v1523 = vld [vmem:[%s3 + $0x1168] sm:$0xff]
  %v1524 = vld [vmem:[%s3 + $0x1170] sm:$0xff]
  %v1525 = vld [vmem:[%s3 + $0x1178] sm:$0xff]
  %v1526 = vld [vmem:[%s3 + $0x1180] sm:$0xff]
  %v1527 = vld [vmem:[%s3 + $0x1188] sm:$0xff]
  %v1528 = vld [vmem:[%s3 + $0x1190] sm:$0xff]
  %v1529 = vld [vmem:[%s3 + $0x1198] sm:$0xff]
  %v1530 = vld [vmem:[%s3 + $0x11a0] sm:$0xff]
  %v1531 = vld [vmem:[%s3 + $0x11a8] sm:$0xff]
  %v1532 = vld [vmem:[%s3 + $0x11b0] sm:$0xff]
  %v1533 = vld [vmem:[%s3 + $0x11b8] sm:$0xff]
  %v1534 = vld [vmem:[%s3 + $0x11c0] sm:$0xff]
  %v1535 = vld [vmem:[%s3 + $0x11c8] sm:$0xff]
  %v1536 = vld [vmem:[%s3 + $0x11d0] sm:$0xff]
  %v1537 = vld [vmem:[%s3 + $0x11d8] sm:$0xff]
  %v1538 = vld [vmem:[%s3 + $0x11e0] sm:$0xff]
  %v1539 = vld [vmem:[%s3 + $0x11e8] sm:$0xff]
  %v1540 = vld [vmem:[%s3 + $0x11f0] sm:$0xff]
  %v1541 = vld [vmem:[%s3 + $0x11f8] sm:$0xff]
  %v1542 = vld [vmem:[%s3 + $0x1200] sm:$0xff]
  %v1543 = vld [vmem:[%s3 + $0x1208] sm:$0xff]
  %v1544 = vld [vmem:[%s3 + $0x1210] sm:$0xff]
  %v1545 = vld [vmem:[%s3 + $0x1218] sm:$0xff]
  %v1546 = vld [vmem:[%s3 + $0x1220] sm:$0xff]
  %v1547 = vld [vmem:[%s3 + $0x1228] sm:$0xff]
  %v1548 = vld [vmem:[%s3 + $0x1230] sm:$0xff]
  %v1549 = vld [vmem:[%s3 + $0x1238] sm:$0xff]
  %v1550 = vld [vmem:[%s3 + $0x1240] sm:$0xff]
  %v1551 = vld [vmem:[%s3 + $0x1248] sm:$0xff]
  %v1552 = vld [vmem:[%s3 + $0x1250] sm:$0xff]
  %v1553 = vld [vmem:[%s3 + $0x1258] sm:$0xff]
  %v1554 = vld [vmem:[%s3 + $0x1260] sm:$0xff]
  %v1555 = vld [vmem:[%s3 + $0x1268] sm:$0xff]
  %v1556 = vld [vmem:[%s3 + $0x1270] sm:$0xff]
  %v1557 = vld [vmem:[%s3 + $0x1278] sm:$0xff]
  %v1558 = vld [vmem:[%s3 + $0x1280] sm:$0xff]
  %v1559 = vld [vmem:[%s3 + $0x1288] sm:$0xff]
  %v1560 = vld [vmem:[%s3 + $0x1290] sm:$0xff]
  %v1561 = vld [vmem:[%s3 + $0x1298] sm:$0xff]
  %v1562 = vld [vmem:[%s3 + $0x12a0] sm:$0xff]
  %v1563 = vld [vmem:[%s3 + $0x12a8] sm:$0xff]
  %v1564 = vld [vmem:[%s3 + $0x12b0] sm:$0xff]
  %v1565 = vld [vmem:[%s3 + $0x12b8] sm:$0xff]
  %v1566 = vld [vmem:[%s3 + $0x12c0] sm:$0xff]
  %v1567 = vld [vmem:[%s3 + $0x12c8] sm:$0xff]
  %v1568 = vld [vmem:[%s3 + $0x12d0] sm:$0xff]
  %v1569 = vld [vmem:[%s3 + $0x12d8] sm:$0xff]
  %v1570 = vld [vmem:[%s3 + $0x12e0] sm:$0xff]
  %v1571 = vld [vmem:[%s3 + $0x12e8] sm:$0xff]
  %v1572 = vld [vmem:[%s3 + $0x12f0] sm:$0xff]
  %v1573 = vld [vmem:[%s3 + $0x12f8] sm:$0xff]
  %v1574 = vld [vmem:[%s3 + $0x1300] sm:$0xff]
  %v1575 = vld [vmem:[%s3 + $0x1308] sm:$0xff]
  %v1576 = vld [vmem:[%s3 + $0x1310] sm:$0xff]
  %v1577 = vld [vmem:[%s3 + $0x1318] sm:$0xff]
  %v1578 = vld [vmem:[%s3 + $0x1320] sm:$0xff]
  %v1579 = vld [vmem:[%s3 + $0x1328] sm:$0xff]
  %v1580 = vld [vmem:[%s3 + $0x1330] sm:$0xff]
  %v1581 = vld [vmem:[%s3 + $0x1338] sm:$0xff]
  %v1582 = vld [vmem:[%s3 + $0x1340] sm:$0xff]
  %v1583 = vld [vmem:[%s3 + $0x1348] sm:$0xff]
  %v1584 = vld [vmem:[%s3 + $0x1350] sm:$0xff]
  %v1585 = vld [vmem:[%s3 + $0x1358] sm:$0xff]
  %v1586 = vld [vmem:[%s3 + $0x1360] sm:$0xff]
  %v1587 = vld [vmem:[%s3 + $0x1368] sm:$0xff]
  %v1588 = vld [vmem:[%s3 + $0x1370] sm:$0xff]
  %v1589 = vld [vmem:[%s3 + $0x1378] sm:$0xff]
  %v1590 = vld [vmem:[%s3 + $0x1380] sm:$0xff]
  %v1591 = vld [vmem:[%s3 + $0x1388] sm:$0xff]
  %v1592 = vld [vmem:[%s3 + $0x1390] sm:$0xff]
  %v1593 = vld [vmem:[%s3 + $0x1398] sm:$0xff]
  %v1594 = vld [vmem:[%s3 + $0x13a0] sm:$0xff]
  %v1595 = vld [vmem:[%s3 + $0x13a8] sm:$0xff]
  %v1596 = vld [vmem:[%s3 + $0x13b0] sm:$0xff]
  %v1597 = vld [vmem:[%s3 + $0x13b8] sm:$0xff]
  %v1598 = vld [vmem:[%s3 + $0x13c0] sm:$0xff]
  %v1599 = vld [vmem:[%s3 + $0x13c8] sm:$0xff]
  %v1600 = vld [vmem:[%s3 + $0x13d0] sm:$0xff]
  %v1601 = vld [vmem:[%s3 + $0x13d8] sm:$0xff]
  %v1602 = vld [vmem:[%s3 + $0x13e0] sm:$0xff]
  %v1603 = vld [vmem:[%s3 + $0x13e8] sm:$0xff]
  %v1604 = vld [vmem:[%s3 + $0x13f0] sm:$0xff]
  %v1605 = vld [vmem:[%s3 + $0x13f8] sm:$0xff]
  %v1606 = vld [vmem:[%s3 + $0x1400] sm:$0xff]
  %v1607 = vld [vmem:[%s3 + $0x1408] sm:$0xff]
  %v1608 = vld [vmem:[%s3 + $0x1410] sm:$0xff]
  %v1609 = vld [vmem:[%s3 + $0x1418] sm:$0xff]
  %v1610 = vld [vmem:[%s3 + $0x1420] sm:$0xff]
  %v1611 = vld [vmem:[%s3 + $0x1428] sm:$0xff]
  %v1612 = vld [vmem:[%s3 + $0x1430] sm:$0xff]
  %v1613 = vld [vmem:[%s3 + $0x1438] sm:$0xff]
  %v1614 = vld [vmem:[%s3 + $0x1440] sm:$0xff]
  %v1615 = vld [vmem:[%s3 + $0x1448] sm:$0xff]
  %v1616 = vld [vmem:[%s3 + $0x1450] sm:$0xff]
  %v1617 = vld [vmem:[%s3 + $0x1458] sm:$0xff]
  %v1618 = vld [vmem:[%s3 + $0x1460] sm:$0xff]
  %v1619 = vld [vmem:[%s3 + $0x1468] sm:$0xff]
  %v1620 = vld [vmem:[%s3 + $0x1470] sm:$0xff]
  %v1621 = vld [vmem:[%s3 + $0x1478] sm:$0xff]
  %v1622 = vld [vmem:[%s3 + $0x1480] sm:$0xff]
  %v1623 = vld [vmem:[%s3 + $0x1488] sm:$0xff]
  %v1624 = vld [vmem:[%s3 + $0x1490] sm:$0xff]
  %v1625 = vld [vmem:[%s3 + $0x1498] sm:$0xff]
  %v1626 = vld [vmem:[%s3 + $0x14a0] sm:$0xff]
  %v1627 = vld [vmem:[%s3 + $0x14a8] sm:$0xff]
  %v1628 = vld [vmem:[%s3 + $0x14b0] sm:$0xff]
  %v1629 = vld [vmem:[%s3 + $0x14b8] sm:$0xff]
  %v1630 = vld [vmem:[%s3 + $0x14c0] sm:$0xff]
  %v1631 = vld [vmem:[%s3 + $0x14c8] sm:$0xff]
  %v1632 = vld [vmem:[%s3 + $0x14d0] sm:$0xff]
  %v1633 = vld [vmem:[%s3 + $0x14d8] sm:$0xff]
  %v1634 = vld [vmem:[%s3 + $0x14e0] sm:$0xff]
  %v1635 = vld [vmem:[%s3 + $0x14e8] sm:$0xff]
  %v1636 = vld [vmem:[%s3 + $0x14f0] sm:$0xff]
  %v1637 = vld [vmem:[%s3 + $0x14f8] sm:$0xff]
  %v1638 = vld [vmem:[%s3 + $0x1500] sm:$0xff]
  %v1639 = vld [vmem:[%s3 + $0x1508] sm:$0xff]
  %v1640 = vld [vmem:[%s3 + $0x1510] sm:$0xff]
  %v1641 = vld [vmem:[%s3 + $0x1518] sm:$0xff]
  %v1642 = vld [vmem:[%s3 + $0x1520] sm:$0xff]
  %v1643 = vld [vmem:[%s3 + $0x1528] sm:$0xff]
  %v1644 = vld [vmem:[%s3 + $0x1530] sm:$0xff]
  %v1645 = vld [vmem:[%s3 + $0x1538] sm:$0xff]
  %v1646 = vld [vmem:[%s3 + $0x1540] sm:$0xff]
  %v1647 = vld [vmem:[%s3 + $0x1548] sm:$0xff]
  %v1648 = vld [vmem:[%s3 + $0x1550] sm:$0xff]
  %v1649 = vld [vmem:[%s3 + $0x1558] sm:$0xff]
  %v1650 = vld [vmem:[%s3 + $0x1560] sm:$0xff]
  %v1651 = vld [vmem:[%s3 + $0x1568] sm:$0xff]
  %v1652 = vld [vmem:[%s3 + $0x1570] sm:$0xff]
  %v1653 = vld [vmem:[%s3 + $0x1578] sm:$0xff]
  %v1654 = vld [vmem:[%s3 + $0x1580] sm:$0xff]
  %v1655 = vld [vmem:[%s3 + $0x1588] sm:$0xff]
  %v1656 = vld [vmem:[%s3 + $0x1590] sm:$0xff]
  %v1657 = vld [vmem:[%s3 + $0x1598] sm:$0xff]
  %v1658 = vld [vmem:[%s3 + $0x15a0] sm:$0xff]
  %v1659 = vld [vmem:[%s3 + $0x15a8] sm:$0xff]
  %v1660 = vld [vmem:[%s3 + $0x15b0] sm:$0xff]
  %v1661 = vld [vmem:[%s3 + $0x15b8] sm:$0xff]
  %v1662 = vld [vmem:[%s3 + $0x15c0] sm:$0xff]
  %v1663 = vld [vmem:[%s3 + $0x15c8] sm:$0xff]
  %v1664 = vld [vmem:[%s3 + $0x15d0] sm:$0xff]
  %v1665 = vld [vmem:[%s3 + $0x15d8] sm:$0xff]
  %v1666 = vld [vmem:[%s4] sm:$0x7f]
  %v1668 = vperm.slane %v1666, 0
  %v1669 = vperm.slane %v1666, 1
  %v1670 = vperm.slane %v1666, 2
  %v1671 = vperm.slane %v1666, 3
  %v1672 = vperm.slane %v1666, 4
  %v1673 = vperm.slane %v1666, 5
  %v1674 = vperm.slane %v1666, 6
  %vm1682 = vcmask 261120
  %v1684 = vsel %vm1682, %v965, 0
  %1686 = vmatpush.msra.mxu0 %v1071
  %1687 = vmatpush.msra.mxu0 %v1064
  %1688 = vmatpush.msra.mxu0 %v1057
  %1689 = vmatpush.msra.mxu0 %v1050
  %1690 = vmatpush.msra.mxu0 %v1043
  %1691 = vmatpush.msra.mxu0 %v1036
  %1692 = vmatpush.msra.mxu0 %v1029
  %1693 = vmatpush.msra.mxu0 %v1022
  %1694 = vmatpush.msra.mxu0 %v1015
  %1695 = vmatpush.msra.mxu0 %v1008
  %1696 = vmatpush.msra.mxu0 %v1001
  %1697 = vmatpush.msra.mxu0 %v994
  %1698 = vmatpush.msra.mxu0 %v987
  %1699 = vmatpush.msra.mxu0 %v980
  %1700 = vmatpush.msra.mxu0 %v973
  %1701 = vmatpush.msra.mxu0 %v966
  %1702 = vmatmul.f32.gmra.mxu0 %v959
  %v1703 = vpop.f32.mrf.mxu0
  %v1704 = vadd.f32 %v1668, %v1703
  %1705 = vdwg.mxu0
  %1706 = vmatpush.msra.mxu0 %v1183
  %1707 = vmatpush.msra.mxu0 %v1176
  %1708 = vmatpush.msra.mxu0 %v1169
  %1709 = vmatpush.msra.mxu0 %v1162
  %1710 = vmatpush.msra.mxu0 %v1155
  %1711 = vmatpush.msra.mxu0 %v1148
  %1712 = vmatpush.msra.mxu0 %v1141
  %1713 = vmatpush.msra.mxu0 %v1134
  %1714 = vmatpush.msra.mxu0 %v1127
  %1715 = vmatpush.msra.mxu0 %v1120
  %1716 = vmatpush.msra.mxu0 %v1113
  %1717 = vmatpush.msra.mxu0 %v1106
  %1718 = vmatpush.msra.mxu0 %v1099
  %1719 = vmatpush.msra.mxu0 %v1092
  %1720 = vmatpush.msra.mxu0 %v1085
  %1721 = vmatpush.msra.mxu0 %v1078
  %1722 = vmatmul.f32.gmra.mxu0 %v960
  %v1723 = vpop.f32.mrf.mxu0
  %v1724 = vadd.f32 %v1704, %v1723
  %1725 = vdwg.mxu0
  %1726 = vmatpush.msra.mxu0 %v1295
  %1727 = vmatpush.msra.mxu0 %v1288
  %1728 = vmatpush.msra.mxu0 %v1281
  %1729 = vmatpush.msra.mxu0 %v1274
  %1730 = vmatpush.msra.mxu0 %v1267
  %1731 = vmatpush.msra.mxu0 %v1260
  %1732 = vmatpush.msra.mxu0 %v1253
  %1733 = vmatpush.msra.mxu0 %v1246
  %1734 = vmatpush.msra.mxu0 %v1239
  %1735 = vmatpush.msra.mxu0 %v1232
  %1736 = vmatpush.msra.mxu0 %v1225
  %1737 = vmatpush.msra.mxu0 %v1218
  %1738 = vmatpush.msra.mxu0 %v1211
  %1739 = vmatpush.msra.mxu0 %v1204
  %1740 = vmatpush.msra.mxu0 %v1197
  %1741 = vmatpush.msra.mxu0 %v1190
  %1742 = vmatmul.f32.gmra.mxu0 %v961
  %v1743 = vpop.f32.mrf.mxu0
  %v1744 = vadd.f32 %v1724, %v1743
  %1745 = vdwg.mxu0
  %1746 = vmatpush.msra.mxu0 %v1407
  %1747 = vmatpush.msra.mxu0 %v1400
  %1748 = vmatpush.msra.mxu0 %v1393
  %1749 = vmatpush.msra.mxu0 %v1386
  %1750 = vmatpush.msra.mxu0 %v1379
  %1751 = vmatpush.msra.mxu0 %v1372
  %1752 = vmatpush.msra.mxu0 %v1365
  %1753 = vmatpush.msra.mxu0 %v1358
  %1754 = vmatpush.msra.mxu0 %v1351
  %1755 = vmatpush.msra.mxu0 %v1344
  %1756 = vmatpush.msra.mxu0 %v1337
  %1757 = vmatpush.msra.mxu0 %v1330
  %1758 = vmatpush.msra.mxu0 %v1323
  %1759 = vmatpush.msra.mxu0 %v1316
  %1760 = vmatpush.msra.mxu0 %v1309
  %1761 = vmatpush.msra.mxu0 %v1302
  %1762 = vmatmul.f32.gmra.mxu0 %v962
  %v1763 = vpop.f32.mrf.mxu0
  %v1764 = vadd.f32 %v1744, %v1763
  %1765 = vdwg.mxu0
  %1766 = vmatpush.msra.mxu0 %v1519
  %1767 = vmatpush.msra.mxu0 %v1512
  %1768 = vmatpush.msra.mxu0 %v1505
  %1769 = vmatpush.msra.mxu0 %v1498
  %1770 = vmatpush.msra.mxu0 %v1491
  %1771 = vmatpush.msra.mxu0 %v1484
  %1772 = vmatpush.msra.mxu0 %v1477
  %1773 = vmatpush.msra.mxu0 %v1470
  %1774 = vmatpush.msra.mxu0 %v1463
  %1775 = vmatpush.msra.mxu0 %v1456
  %1776 = vmatpush.msra.mxu0 %v1449
  %1777 = vmatpush.msra.mxu0 %v1442
  %1778 = vmatpush.msra.mxu0 %v1435
  %1779 = vmatpush.msra.mxu0 %v1428
  %1780 = vmatpush.msra.mxu0 %v1421
  %1781 = vmatpush.msra.mxu0 %v1414
  %1782 = vmatmul.f32.gmra.mxu0 %v963
  %v1783 = vpop.f32.mrf.mxu0
  %v1784 = vadd.f32 %v1764, %v1783
  %1785 = vdwg.mxu0
  %1786 = vmatpush.msra.mxu0 %v1631
  %1787 = vmatpush.msra.mxu0 %v1624
  %1788 = vmatpush.msra.mxu0 %v1617
  %1789 = vmatpush.msra.mxu0 %v1610
  %1790 = vmatpush.msra.mxu0 %v1603
  %1791 = vmatpush.msra.mxu0 %v1596
  %1792 = vmatpush.msra.mxu0 %v1589
  %1793 = vmatpush.msra.mxu0 %v1582
  %1794 = vmatpush.msra.mxu0 %v1575
  %1795 = vmatpush.msra.mxu0 %v1568
  %1796 = vmatpush.msra.mxu0 %v1561
  %1797 = vmatpush.msra.mxu0 %v1554
  %1798 = vmatpush.msra.mxu0 %v1547
  %1799 = vmatpush.msra.mxu0 %v1540
  %1800 = vmatpush.msra.mxu0 %v1533
  %1801 = vmatpush.msra.mxu0 %v1526
  %1802 = vmatmul.f32.gmra.mxu0 %v964
  %v1803 = vpop.f32.mrf.mxu0
  %v1804 = vadd.f32 %v1784, %v1803
  %1805 = vdwg.mxu0
  %1806 = vmatpush.msra.mxu0 0.0
  %1807 = vmatpush.msra.mxu0 0.0
  %1808 = vmatpush.msra.mxu0 0.0
  %1809 = vmatpush.msra.mxu0 0.0
  %1810 = vmatpush.msra.mxu0 0.0
  %1811 = vmatpush.msra.mxu0 0.0
  %1812 = vmatpush.msra.mxu0 0.0
  %1813 = vmatpush.msra.mxu0 0.0
  %1814 = vmatpush.msra.mxu0 0.0
  %1815 = vmatpush.msra.mxu0 0.0
  %1816 = vmatpush.msra.mxu0 0.0
  %1817 = vmatpush.msra.mxu0 0.0
  %1818 = vmatpush.msra.mxu0 %v1659
  %1819 = vmatpush.msra.mxu0 %v1652
  %1820 = vmatpush.msra.mxu0 %v1645
  %1821 = vmatpush.msra.mxu0 %v1638
  %1822 = vmatmul.f32.gmra.mxu0 %v1684
  %v1823 = vpop.f32.mrf.mxu0
  %v1824 = vadd.f32 %v1804, %v1823
  %1825 = vdwg.mxu0
  %1826 = vmatpush.msra.mxu0 %v1072
  %1827 = vmatpush.msra.mxu0 %v1065
  %1828 = vmatpush.msra.mxu0 %v1058
  %1829 = vmatpush.msra.mxu0 %v1051
  %1830 = vmatpush.msra.mxu0 %v1044
  %1831 = vmatpush.msra.mxu0 %v1037
  %1832 = vmatpush.msra.mxu0 %v1030
  %1833 = vmatpush.msra.mxu0 %v1023
  %1834 = vmatpush.msra.mxu0 %v1016
  %1835 = vmatpush.msra.mxu0 %v1009
  %1836 = vmatpush.msra.mxu0 %v1002
  %1837 = vmatpush.msra.mxu0 %v995
  %1838 = vmatpush.msra.mxu0 %v988
  %1839 = vmatpush.msra.mxu0 %v981
  %1840 = vmatpush.msra.mxu0 %v974
  %1841 = vmatpush.msra.mxu0 %v967
  %1842 = vmatmul.f32.gmra.mxu0 %v959
  %v1843 = vpop.f32.mrf.mxu0
  %v1844 = vadd.f32 %v1669, %v1843
  %1845 = vdwg.mxu0
  %1846 = vmatpush.msra.mxu0 %v1184
  %1847 = vmatpush.msra.mxu0 %v1177
  %1848 = vmatpush.msra.mxu0 %v1170
  %1849 = vmatpush.msra.mxu0 %v1163
  %1850 = vmatpush.msra.mxu0 %v1156
  %1851 = vmatpush.msra.mxu0 %v1149
  %1852 = vmatpush.msra.mxu0 %v1142
  %1853 = vmatpush.msra.mxu0 %v1135
  %1854 = vmatpush.msra.mxu0 %v1128
  %1855 = vmatpush.msra.mxu0 %v1121
  %1856 = vmatpush.msra.mxu0 %v1114
  %1857 = vmatpush.msra.mxu0 %v1107
  %1858 = vmatpush.msra.mxu0 %v1100
  %1859 = vmatpush.msra.mxu0 %v1093
  %1860 = vmatpush.msra.mxu0 %v1086
  %1861 = vmatpush.msra.mxu0 %v1079
  %1862 = vmatmul.f32.gmra.mxu0 %v960
  %v1863 = vpop.f32.mrf.mxu0
  %v1864 = vadd.f32 %v1844, %v1863
  %1865 = vdwg.mxu0
  %1866 = vmatpush.msra.mxu0 %v1296
  %1867 = vmatpush.msra.mxu0 %v1289
  %1868 = vmatpush.msra.mxu0 %v1282
  %1869 = vmatpush.msra.mxu0 %v1275
  %1870 = vmatpush.msra.mxu0 %v1268
  %1871 = vmatpush.msra.mxu0 %v1261
  %1872 = vmatpush.msra.mxu0 %v1254
  %1873 = vmatpush.msra.mxu0 %v1247
  %1874 = vmatpush.msra.mxu0 %v1240
  %1875 = vmatpush.msra.mxu0 %v1233
  %1876 = vmatpush.msra.mxu0 %v1226
  %1877 = vmatpush.msra.mxu0 %v1219
  %1878 = vmatpush.msra.mxu0 %v1212
  %1879 = vmatpush.msra.mxu0 %v1205
  %1880 = vmatpush.msra.mxu0 %v1198
  %1881 = vmatpush.msra.mxu0 %v1191
  %1882 = vmatmul.f32.gmra.mxu0 %v961
  %v1883 = vpop.f32.mrf.mxu0
  %v1884 = vadd.f32 %v1864, %v1883
  %1885 = vdwg.mxu0
  %1886 = vmatpush.msra.mxu0 %v1408
  %1887 = vmatpush.msra.mxu0 %v1401
  %1888 = vmatpush.msra.mxu0 %v1394
  %1889 = vmatpush.msra.mxu0 %v1387
  %1890 = vmatpush.msra.mxu0 %v1380
  %1891 = vmatpush.msra.mxu0 %v1373
  %1892 = vmatpush.msra.mxu0 %v1366
  %1893 = vmatpush.msra.mxu0 %v1359
  %1894 = vmatpush.msra.mxu0 %v1352
  %1895 = vmatpush.msra.mxu0 %v1345
  %1896 = vmatpush.msra.mxu0 %v1338
  %1897 = vmatpush.msra.mxu0 %v1331
  %1898 = vmatpush.msra.mxu0 %v1324
  %1899 = vmatpush.msra.mxu0 %v1317
  %1900 = vmatpush.msra.mxu0 %v1310
  %1901 = vmatpush.msra.mxu0 %v1303
  %1902 = vmatmul.f32.gmra.mxu0 %v962
  %v1903 = vpop.f32.mrf.mxu0
  %v1904 = vadd.f32 %v1884, %v1903
  %1905 = vdwg.mxu0
  %1906 = vmatpush.msra.mxu0 %v1520
  %1907 = vmatpush.msra.mxu0 %v1513
  %1908 = vmatpush.msra.mxu0 %v1506
  %1909 = vmatpush.msra.mxu0 %v1499
  %1910 = vmatpush.msra.mxu0 %v1492
  %1911 = vmatpush.msra.mxu0 %v1485
  %1912 = vmatpush.msra.mxu0 %v1478
  %1913 = vmatpush.msra.mxu0 %v1471
  %1914 = vmatpush.msra.mxu0 %v1464
  %1915 = vmatpush.msra.mxu0 %v1457
  %1916 = vmatpush.msra.mxu0 %v1450
  %1917 = vmatpush.msra.mxu0 %v1443
  %1918 = vmatpush.msra.mxu0 %v1436
  %1919 = vmatpush.msra.mxu0 %v1429
  %1920 = vmatpush.msra.mxu0 %v1422
  %1921 = vmatpush.msra.mxu0 %v1415
  %1922 = vmatmul.f32.gmra.mxu0 %v963
  %v1923 = vpop.f32.mrf.mxu0
  %v1924 = vadd.f32 %v1904, %v1923
  %1925 = vdwg.mxu0
  %1926 = vmatpush.msra.mxu0 %v1632
  %1927 = vmatpush.msra.mxu0 %v1625
  %1928 = vmatpush.msra.mxu0 %v1618
  %1929 = vmatpush.msra.mxu0 %v1611
  %1930 = vmatpush.msra.mxu0 %v1604
  %1931 = vmatpush.msra.mxu0 %v1597
  %1932 = vmatpush.msra.mxu0 %v1590
  %1933 = vmatpush.msra.mxu0 %v1583
  %1934 = vmatpush.msra.mxu0 %v1576
  %1935 = vmatpush.msra.mxu0 %v1569
  %1936 = vmatpush.msra.mxu0 %v1562
  %1937 = vmatpush.msra.mxu0 %v1555
  %1938 = vmatpush.msra.mxu0 %v1548
  %1939 = vmatpush.msra.mxu0 %v1541
  %1940 = vmatpush.msra.mxu0 %v1534
  %1941 = vmatpush.msra.mxu0 %v1527
  %1942 = vmatmul.f32.gmra.mxu0 %v964
  %v1943 = vpop.f32.mrf.mxu0
  %v1944 = vadd.f32 %v1924, %v1943
  %1945 = vdwg.mxu0
  %1946 = vmatpush.msra.mxu0 0.0
  %1947 = vmatpush.msra.mxu0 0.0
  %1948 = vmatpush.msra.mxu0 0.0
  %1949 = vmatpush.msra.mxu0 0.0
  %1950 = vmatpush.msra.mxu0 0.0
  %1951 = vmatpush.msra.mxu0 0.0
  %1952 = vmatpush.msra.mxu0 0.0
  %1953 = vmatpush.msra.mxu0 0.0
  %1954 = vmatpush.msra.mxu0 0.0
  %1955 = vmatpush.msra.mxu0 0.0
  %1956 = vmatpush.msra.mxu0 0.0
  %1957 = vmatpush.msra.mxu0 0.0
  %1958 = vmatpush.msra.mxu0 %v1660
  %1959 = vmatpush.msra.mxu0 %v1653
  %1960 = vmatpush.msra.mxu0 %v1646
  %1961 = vmatpush.msra.mxu0 %v1639
  %1962 = vmatmul.f32.gmra.mxu0 %v1684
  %v1963 = vpop.f32.mrf.mxu0
  %v1964 = vadd.f32 %v1944, %v1963
  %1965 = vdwg.mxu0
  %1966 = vmatpush.msra.mxu0 %v1073
  %1967 = vmatpush.msra.mxu0 %v1066
  %1968 = vmatpush.msra.mxu0 %v1059
  %1969 = vmatpush.msra.mxu0 %v1052
  %1970 = vmatpush.msra.mxu0 %v1045
  %1971 = vmatpush.msra.mxu0 %v1038
  %1972 = vmatpush.msra.mxu0 %v1031
  %1973 = vmatpush.msra.mxu0 %v1024
  %1974 = vmatpush.msra.mxu0 %v1017
  %1975 = vmatpush.msra.mxu0 %v1010
  %1976 = vmatpush.msra.mxu0 %v1003
  %1977 = vmatpush.msra.mxu0 %v996
  %1978 = vmatpush.msra.mxu0 %v989
  %1979 = vmatpush.msra.mxu0 %v982
  %1980 = vmatpush.msra.mxu0 %v975
  %1981 = vmatpush.msra.mxu0 %v968
  %1982 = vmatmul.f32.gmra.mxu0 %v959
  %v1983 = vpop.f32.mrf.mxu0
  %v1984 = vadd.f32 %v1670, %v1983
  %1985 = vdwg.mxu0
  %1986 = vmatpush.msra.mxu0 %v1185
  %1987 = vmatpush.msra.mxu0 %v1178
  %1988 = vmatpush.msra.mxu0 %v1171
  %1989 = vmatpush.msra.mxu0 %v1164
  %1990 = vmatpush.msra.mxu0 %v1157
  %1991 = vmatpush.msra.mxu0 %v1150
  %1992 = vmatpush.msra.mxu0 %v1143
  %1993 = vmatpush.msra.mxu0 %v1136
  %1994 = vmatpush.msra.mxu0 %v1129
  %1995 = vmatpush.msra.mxu0 %v1122
  %1996 = vmatpush.msra.mxu0 %v1115
  %1997 = vmatpush.msra.mxu0 %v1108
  %1998 = vmatpush.msra.mxu0 %v1101
  %1999 = vmatpush.msra.mxu0 %v1094
  %2000 = vmatpush.msra.mxu0 %v1087
  %2001 = vmatpush.msra.mxu0 %v1080
  %2002 = vmatmul.f32.gmra.mxu0 %v960
  %v2003 = vpop.f32.mrf.mxu0
  %v2004 = vadd.f32 %v1984, %v2003
  %2005 = vdwg.mxu0
  %2006 = vmatpush.msra.mxu0 %v1297
  %2007 = vmatpush.msra.mxu0 %v1290
  %2008 = vmatpush.msra.mxu0 %v1283
  %2009 = vmatpush.msra.mxu0 %v1276
  %2010 = vmatpush.msra.mxu0 %v1269
  %2011 = vmatpush.msra.mxu0 %v1262
  %2012 = vmatpush.msra.mxu0 %v1255
  %2013 = vmatpush.msra.mxu0 %v1248
  %2014 = vmatpush.msra.mxu0 %v1241
  %2015 = vmatpush.msra.mxu0 %v1234
  %2016 = vmatpush.msra.mxu0 %v1227
  %2017 = vmatpush.msra.mxu0 %v1220
  %2018 = vmatpush.msra.mxu0 %v1213
  %2019 = vmatpush.msra.mxu0 %v1206
  %2020 = vmatpush.msra.mxu0 %v1199
  %2021 = vmatpush.msra.mxu0 %v1192
  %2022 = vmatmul.f32.gmra.mxu0 %v961
  %v2023 = vpop.f32.mrf.mxu0
  %v2024 = vadd.f32 %v2004, %v2023
  %2025 = vdwg.mxu0
  %2026 = vmatpush.msra.mxu0 %v1409
  %2027 = vmatpush.msra.mxu0 %v1402
  %2028 = vmatpush.msra.mxu0 %v1395
  %2029 = vmatpush.msra.mxu0 %v1388
  %2030 = vmatpush.msra.mxu0 %v1381
  %2031 = vmatpush.msra.mxu0 %v1374
  %2032 = vmatpush.msra.mxu0 %v1367
  %2033 = vmatpush.msra.mxu0 %v1360
  %2034 = vmatpush.msra.mxu0 %v1353
  %2035 = vmatpush.msra.mxu0 %v1346
  %2036 = vmatpush.msra.mxu0 %v1339
  %2037 = vmatpush.msra.mxu0 %v1332
  %2038 = vmatpush.msra.mxu0 %v1325
  %2039 = vmatpush.msra.mxu0 %v1318
  %2040 = vmatpush.msra.mxu0 %v1311
  %2041 = vmatpush.msra.mxu0 %v1304
  %2042 = vmatmul.f32.gmra.mxu0 %v962
  %v2043 = vpop.f32.mrf.mxu0
  %v2044 = vadd.f32 %v2024, %v2043
  %2045 = vdwg.mxu0
  %2046 = vmatpush.msra.mxu0 %v1521
  %2047 = vmatpush.msra.mxu0 %v1514
  %2048 = vmatpush.msra.mxu0 %v1507
  %2049 = vmatpush.msra.mxu0 %v1500
  %2050 = vmatpush.msra.mxu0 %v1493
  %2051 = vmatpush.msra.mxu0 %v1486
  %2052 = vmatpush.msra.mxu0 %v1479
  %2053 = vmatpush.msra.mxu0 %v1472
  %2054 = vmatpush.msra.mxu0 %v1465
  %2055 = vmatpush.msra.mxu0 %v1458
  %2056 = vmatpush.msra.mxu0 %v1451
  %2057 = vmatpush.msra.mxu0 %v1444
  %2058 = vmatpush.msra.mxu0 %v1437
  %2059 = vmatpush.msra.mxu0 %v1430
  %2060 = vmatpush.msra.mxu0 %v1423
  %2061 = vmatpush.msra.mxu0 %v1416
  %2062 = vmatmul.f32.gmra.mxu0 %v963
  %v2063 = vpop.f32.mrf.mxu0
  %v2064 = vadd.f32 %v2044, %v2063
  %2065 = vdwg.mxu0
  %2066 = vmatpush.msra.mxu0 %v1633
  %2067 = vmatpush.msra.mxu0 %v1626
  %2068 = vmatpush.msra.mxu0 %v1619
  %2069 = vmatpush.msra.mxu0 %v1612
  %2070 = vmatpush.msra.mxu0 %v1605
  %2071 = vmatpush.msra.mxu0 %v1598
  %2072 = vmatpush.msra.mxu0 %v1591
  %2073 = vmatpush.msra.mxu0 %v1584
  %2074 = vmatpush.msra.mxu0 %v1577
  %2075 = vmatpush.msra.mxu0 %v1570
  %2076 = vmatpush.msra.mxu0 %v1563
  %2077 = vmatpush.msra.mxu0 %v1556
  %2078 = vmatpush.msra.mxu0 %v1549
  %2079 = vmatpush.msra.mxu0 %v1542
  %2080 = vmatpush.msra.mxu0 %v1535
  %2081 = vmatpush.msra.mxu0 %v1528
  %2082 = vmatmul.f32.gmra.mxu0 %v964
  %v2083 = vpop.f32.mrf.mxu0
  %v2084 = vadd.f32 %v2064, %v2083
  %2085 = vdwg.mxu0
  %2086 = vmatpush.msra.mxu0 0.0
  %2087 = vmatpush.msra.mxu0 0.0
  %2088 = vmatpush.msra.mxu0 0.0
  %2089 = vmatpush.msra.mxu0 0.0
  %2090 = vmatpush.msra.mxu0 0.0
  %2091 = vmatpush.msra.mxu0 0.0
  %2092 = vmatpush.msra.mxu0 0.0
  %2093 = vmatpush.msra.mxu0 0.0
  %2094 = vmatpush.msra.mxu0 0.0
  %2095 = vmatpush.msra.mxu0 0.0
  %2096 = vmatpush.msra.mxu0 0.0
  %2097 = vmatpush.msra.mxu0 0.0
  %2098 = vmatpush.msra.mxu0 %v1661
  %2099 = vmatpush.msra.mxu0 %v1654
  %2100 = vmatpush.msra.mxu0 %v1647
  %2101 = vmatpush.msra.mxu0 %v1640
  %2102 = vmatmul.f32.gmra.mxu0 %v1684
  %v2103 = vpop.f32.mrf.mxu0
  %v2104 = vadd.f32 %v2084, %v2103
  %2105 = vdwg.mxu0
  %2106 = vmatpush.msra.mxu0 %v1074
  %2107 = vmatpush.msra.mxu0 %v1067
  %2108 = vmatpush.msra.mxu0 %v1060
  %2109 = vmatpush.msra.mxu0 %v1053
  %2110 = vmatpush.msra.mxu0 %v1046
  %2111 = vmatpush.msra.mxu0 %v1039
  %2112 = vmatpush.msra.mxu0 %v1032
  %2113 = vmatpush.msra.mxu0 %v1025
  %2114 = vmatpush.msra.mxu0 %v1018
  %2115 = vmatpush.msra.mxu0 %v1011
  %2116 = vmatpush.msra.mxu0 %v1004
  %2117 = vmatpush.msra.mxu0 %v997
  %2118 = vmatpush.msra.mxu0 %v990
  %2119 = vmatpush.msra.mxu0 %v983
  %2120 = vmatpush.msra.mxu0 %v976
  %2121 = vmatpush.msra.mxu0 %v969
  %2122 = vmatmul.f32.gmra.mxu0 %v959
  %v2123 = vpop.f32.mrf.mxu0
  %v2124 = vadd.f32 %v1671, %v2123
  %2125 = vdwg.mxu0
  %2126 = vmatpush.msra.mxu0 %v1186
  %2127 = vmatpush.msra.mxu0 %v1179
  %2128 = vmatpush.msra.mxu0 %v1172
  %2129 = vmatpush.msra.mxu0 %v1165
  %2130 = vmatpush.msra.mxu0 %v1158
  %2131 = vmatpush.msra.mxu0 %v1151
  %2132 = vmatpush.msra.mxu0 %v1144
  %2133 = vmatpush.msra.mxu0 %v1137
  %2134 = vmatpush.msra.mxu0 %v1130
  %2135 = vmatpush.msra.mxu0 %v1123
  %2136 = vmatpush.msra.mxu0 %v1116
  %2137 = vmatpush.msra.mxu0 %v1109
  %2138 = vmatpush.msra.mxu0 %v1102
  %2139 = vmatpush.msra.mxu0 %v1095
  %2140 = vmatpush.msra.mxu0 %v1088
  %2141 = vmatpush.msra.mxu0 %v1081
  %2142 = vmatmul.f32.gmra.mxu0 %v960
  %v2143 = vpop.f32.mrf.mxu0
  %v2144 = vadd.f32 %v2124, %v2143
  %2145 = vdwg.mxu0
  %2146 = vmatpush.msra.mxu0 %v1298
  %2147 = vmatpush.msra.mxu0 %v1291
  %2148 = vmatpush.msra.mxu0 %v1284
  %2149 = vmatpush.msra.mxu0 %v1277
  %2150 = vmatpush.msra.mxu0 %v1270
  %2151 = vmatpush.msra.mxu0 %v1263
  %2152 = vmatpush.msra.mxu0 %v1256
  %2153 = vmatpush.msra.mxu0 %v1249
  %2154 = vmatpush.msra.mxu0 %v1242
  %2155 = vmatpush.msra.mxu0 %v1235
  %2156 = vmatpush.msra.mxu0 %v1228
  %2157 = vmatpush.msra.mxu0 %v1221
  %2158 = vmatpush.msra.mxu0 %v1214
  %2159 = vmatpush.msra.mxu0 %v1207
  %2160 = vmatpush.msra.mxu0 %v1200
  %2161 = vmatpush.msra.mxu0 %v1193
  %2162 = vmatmul.f32.gmra.mxu0 %v961
  %v2163 = vpop.f32.mrf.mxu0
  %v2164 = vadd.f32 %v2144, %v2163
  %2165 = vdwg.mxu0
  %2166 = vmatpush.msra.mxu0 %v1410
  %2167 = vmatpush.msra.mxu0 %v1403
  %2168 = vmatpush.msra.mxu0 %v1396
  %2169 = vmatpush.msra.mxu0 %v1389
  %2170 = vmatpush.msra.mxu0 %v1382
  %2171 = vmatpush.msra.mxu0 %v1375
  %2172 = vmatpush.msra.mxu0 %v1368
  %2173 = vmatpush.msra.mxu0 %v1361
  %2174 = vmatpush.msra.mxu0 %v1354
  %2175 = vmatpush.msra.mxu0 %v1347
  %2176 = vmatpush.msra.mxu0 %v1340
  %2177 = vmatpush.msra.mxu0 %v1333
  %2178 = vmatpush.msra.mxu0 %v1326
  %2179 = vmatpush.msra.mxu0 %v1319
  %2180 = vmatpush.msra.mxu0 %v1312
  %2181 = vmatpush.msra.mxu0 %v1305
  %2182 = vmatmul.f32.gmra.mxu0 %v962
  %v2183 = vpop.f32.mrf.mxu0
  %v2184 = vadd.f32 %v2164, %v2183
  %2185 = vdwg.mxu0
  %2186 = vmatpush.msra.mxu0 %v1522
  %2187 = vmatpush.msra.mxu0 %v1515
  %2188 = vmatpush.msra.mxu0 %v1508
  %2189 = vmatpush.msra.mxu0 %v1501
  %2190 = vmatpush.msra.mxu0 %v1494
  %2191 = vmatpush.msra.mxu0 %v1487
  %2192 = vmatpush.msra.mxu0 %v1480
  %2193 = vmatpush.msra.mxu0 %v1473
  %2194 = vmatpush.msra.mxu0 %v1466
  %2195 = vmatpush.msra.mxu0 %v1459
  %2196 = vmatpush.msra.mxu0 %v1452
  %2197 = vmatpush.msra.mxu0 %v1445
  %2198 = vmatpush.msra.mxu0 %v1438
  %2199 = vmatpush.msra.mxu0 %v1431
  %2200 = vmatpush.msra.mxu0 %v1424
  %2201 = vmatpush.msra.mxu0 %v1417
  %2202 = vmatmul.f32.gmra.mxu0 %v963
  %v2203 = vpop.f32.mrf.mxu0
  %v2204 = vadd.f32 %v2184, %v2203
  %2205 = vdwg.mxu0
  %2206 = vmatpush.msra.mxu0 %v1634
  %2207 = vmatpush.msra.mxu0 %v1627
  %2208 = vmatpush.msra.mxu0 %v1620
  %2209 = vmatpush.msra.mxu0 %v1613
  %2210 = vmatpush.msra.mxu0 %v1606
  %2211 = vmatpush.msra.mxu0 %v1599
  %2212 = vmatpush.msra.mxu0 %v1592
  %2213 = vmatpush.msra.mxu0 %v1585
  %2214 = vmatpush.msra.mxu0 %v1578
  %2215 = vmatpush.msra.mxu0 %v1571
  %2216 = vmatpush.msra.mxu0 %v1564
  %2217 = vmatpush.msra.mxu0 %v1557
  %2218 = vmatpush.msra.mxu0 %v1550
  %2219 = vmatpush.msra.mxu0 %v1543
  %2220 = vmatpush.msra.mxu0 %v1536
  %2221 = vmatpush.msra.mxu0 %v1529
  %2222 = vmatmul.f32.gmra.mxu0 %v964
  %v2223 = vpop.f32.mrf.mxu0
  %v2224 = vadd.f32 %v2204, %v2223
  %2225 = vdwg.mxu0
  %2226 = vmatpush.msra.mxu0 0.0
  %2227 = vmatpush.msra.mxu0 0.0
  %2228 = vmatpush.msra.mxu0 0.0
  %2229 = vmatpush.msra.mxu0 0.0
  %2230 = vmatpush.msra.mxu0 0.0
  %2231 = vmatpush.msra.mxu0 0.0
  %2232 = vmatpush.msra.mxu0 0.0
  %2233 = vmatpush.msra.mxu0 0.0
  %2234 = vmatpush.msra.mxu0 0.0
  %2235 = vmatpush.msra.mxu0 0.0
  %2236 = vmatpush.msra.mxu0 0.0
  %2237 = vmatpush.msra.mxu0 0.0
  %2238 = vmatpush.msra.mxu0 %v1662
  %2239 = vmatpush.msra.mxu0 %v1655
  %2240 = vmatpush.msra.mxu0 %v1648
  %2241 = vmatpush.msra.mxu0 %v1641
  %2242 = vmatmul.f32.gmra.mxu0 %v1684
  %v2243 = vpop.f32.mrf.mxu0
  %v2244 = vadd.f32 %v2224, %v2243
  %2245 = vdwg.mxu0
  %2246 = vmatpush.msra.mxu0 %v1075
  %2247 = vmatpush.msra.mxu0 %v1068
  %2248 = vmatpush.msra.mxu0 %v1061
  %2249 = vmatpush.msra.mxu0 %v1054
  %2250 = vmatpush.msra.mxu0 %v1047
  %2251 = vmatpush.msra.mxu0 %v1040
  %2252 = vmatpush.msra.mxu0 %v1033
  %2253 = vmatpush.msra.mxu0 %v1026
  %2254 = vmatpush.msra.mxu0 %v1019
  %2255 = vmatpush.msra.mxu0 %v1012
  %2256 = vmatpush.msra.mxu0 %v1005
  %2257 = vmatpush.msra.mxu0 %v998
  %2258 = vmatpush.msra.mxu0 %v991
  %2259 = vmatpush.msra.mxu0 %v984
  %2260 = vmatpush.msra.mxu0 %v977
  %2261 = vmatpush.msra.mxu0 %v970
  %2262 = vmatmul.f32.gmra.mxu0 %v959
  %v2263 = vpop.f32.mrf.mxu0
  %v2264 = vadd.f32 %v1672, %v2263
  %2265 = vdwg.mxu0
  %2266 = vmatpush.msra.mxu0 %v1187
  %2267 = vmatpush.msra.mxu0 %v1180
  %2268 = vmatpush.msra.mxu0 %v1173
  %2269 = vmatpush.msra.mxu0 %v1166
  %2270 = vmatpush.msra.mxu0 %v1159
  %2271 = vmatpush.msra.mxu0 %v1152
  %2272 = vmatpush.msra.mxu0 %v1145
  %2273 = vmatpush.msra.mxu0 %v1138
  %2274 = vmatpush.msra.mxu0 %v1131
  %2275 = vmatpush.msra.mxu0 %v1124
  %2276 = vmatpush.msra.mxu0 %v1117
  %2277 = vmatpush.msra.mxu0 %v1110
  %2278 = vmatpush.msra.mxu0 %v1103
  %2279 = vmatpush.msra.mxu0 %v1096
  %2280 = vmatpush.msra.mxu0 %v1089
  %2281 = vmatpush.msra.mxu0 %v1082
  %2282 = vmatmul.f32.gmra.mxu0 %v960
  %v2283 = vpop.f32.mrf.mxu0
  %v2284 = vadd.f32 %v2264, %v2283
  %2285 = vdwg.mxu0
  %2286 = vmatpush.msra.mxu0 %v1299
  %2287 = vmatpush.msra.mxu0 %v1292
  %2288 = vmatpush.msra.mxu0 %v1285
  %2289 = vmatpush.msra.mxu0 %v1278
  %2290 = vmatpush.msra.mxu0 %v1271
  %2291 = vmatpush.msra.mxu0 %v1264
  %2292 = vmatpush.msra.mxu0 %v1257
  %2293 = vmatpush.msra.mxu0 %v1250
  %2294 = vmatpush.msra.mxu0 %v1243
  %2295 = vmatpush.msra.mxu0 %v1236
  %2296 = vmatpush.msra.mxu0 %v1229
  %2297 = vmatpush.msra.mxu0 %v1222
  %2298 = vmatpush.msra.mxu0 %v1215
  %2299 = vmatpush.msra.mxu0 %v1208
  %2300 = vmatpush.msra.mxu0 %v1201
  %2301 = vmatpush.msra.mxu0 %v1194
  %2302 = vmatmul.f32.gmra.mxu0 %v961
  %v2303 = vpop.f32.mrf.mxu0
  %v2304 = vadd.f32 %v2284, %v2303
  %2305 = vdwg.mxu0
  %2306 = vmatpush.msra.mxu0 %v1411
  %2307 = vmatpush.msra.mxu0 %v1404
  %2308 = vmatpush.msra.mxu0 %v1397
  %2309 = vmatpush.msra.mxu0 %v1390
  %2310 = vmatpush.msra.mxu0 %v1383
  %2311 = vmatpush.msra.mxu0 %v1376
  %2312 = vmatpush.msra.mxu0 %v1369
  %2313 = vmatpush.msra.mxu0 %v1362
  %2314 = vmatpush.msra.mxu0 %v1355
  %2315 = vmatpush.msra.mxu0 %v1348
  %2316 = vmatpush.msra.mxu0 %v1341
  %2317 = vmatpush.msra.mxu0 %v1334
  %2318 = vmatpush.msra.mxu0 %v1327
  %2319 = vmatpush.msra.mxu0 %v1320
  %2320 = vmatpush.msra.mxu0 %v1313
  %2321 = vmatpush.msra.mxu0 %v1306
  %2322 = vmatmul.f32.gmra.mxu0 %v962
  %v2323 = vpop.f32.mrf.mxu0
  %v2324 = vadd.f32 %v2304, %v2323
  %2325 = vdwg.mxu0
  %2326 = vmatpush.msra.mxu0 %v1523
  %2327 = vmatpush.msra.mxu0 %v1516
  %2328 = vmatpush.msra.mxu0 %v1509
  %2329 = vmatpush.msra.mxu0 %v1502
  %2330 = vmatpush.msra.mxu0 %v1495
  %2331 = vmatpush.msra.mxu0 %v1488
  %2332 = vmatpush.msra.mxu0 %v1481
  %2333 = vmatpush.msra.mxu0 %v1474
  %2334 = vmatpush.msra.mxu0 %v1467
  %2335 = vmatpush.msra.mxu0 %v1460
  %2336 = vmatpush.msra.mxu0 %v1453
  %2337 = vmatpush.msra.mxu0 %v1446
  %2338 = vmatpush.msra.mxu0 %v1439
  %2339 = vmatpush.msra.mxu0 %v1432
  %2340 = vmatpush.msra.mxu0 %v1425
  %2341 = vmatpush.msra.mxu0 %v1418
  %2342 = vmatmul.f32.gmra.mxu0 %v963
  %v2343 = vpop.f32.mrf.mxu0
  %v2344 = vadd.f32 %v2324, %v2343
  %2345 = vdwg.mxu0
  %2346 = vmatpush.msra.mxu0 %v1635
  %2347 = vmatpush.msra.mxu0 %v1628
  %2348 = vmatpush.msra.mxu0 %v1621
  %2349 = vmatpush.msra.mxu0 %v1614
  %2350 = vmatpush.msra.mxu0 %v1607
  %2351 = vmatpush.msra.mxu0 %v1600
  %2352 = vmatpush.msra.mxu0 %v1593
  %2353 = vmatpush.msra.mxu0 %v1586
  %2354 = vmatpush.msra.mxu0 %v1579
  %2355 = vmatpush.msra.mxu0 %v1572
  %2356 = vmatpush.msra.mxu0 %v1565
  %2357 = vmatpush.msra.mxu0 %v1558
  %2358 = vmatpush.msra.mxu0 %v1551
  %2359 = vmatpush.msra.mxu0 %v1544
  %2360 = vmatpush.msra.mxu0 %v1537
  %2361 = vmatpush.msra.mxu0 %v1530
  %2362 = vmatmul.f32.gmra.mxu0 %v964
  %v2363 = vpop.f32.mrf.mxu0
  %v2364 = vadd.f32 %v2344, %v2363
  %2365 = vdwg.mxu0
  %2366 = vmatpush.msra.mxu0 0.0
  %2367 = vmatpush.msra.mxu0 0.0
  %2368 = vmatpush.msra.mxu0 0.0
  %2369 = vmatpush.msra.mxu0 0.0
  %2370 = vmatpush.msra.mxu0 0.0
  %2371 = vmatpush.msra.mxu0 0.0
  %2372 = vmatpush.msra.mxu0 0.0
  %2373 = vmatpush.msra.mxu0 0.0
  %2374 = vmatpush.msra.mxu0 0.0
  %2375 = vmatpush.msra.mxu0 0.0
  %2376 = vmatpush.msra.mxu0 0.0
  %2377 = vmatpush.msra.mxu0 0.0
  %2378 = vmatpush.msra.mxu0 %v1663
  %2379 = vmatpush.msra.mxu0 %v1656
  %2380 = vmatpush.msra.mxu0 %v1649
  %2381 = vmatpush.msra.mxu0 %v1642
  %2382 = vmatmul.f32.gmra.mxu0 %v1684
  %v2383 = vpop.f32.mrf.mxu0
  %v2384 = vadd.f32 %v2364, %v2383
  %2385 = vdwg.mxu0
  %2386 = vmatpush.msra.mxu0 %v1076
  %2387 = vmatpush.msra.mxu0 %v1069
  %2388 = vmatpush.msra.mxu0 %v1062
  %2389 = vmatpush.msra.mxu0 %v1055
  %2390 = vmatpush.msra.mxu0 %v1048
  %2391 = vmatpush.msra.mxu0 %v1041
  %2392 = vmatpush.msra.mxu0 %v1034
  %2393 = vmatpush.msra.mxu0 %v1027
  %2394 = vmatpush.msra.mxu0 %v1020
  %2395 = vmatpush.msra.mxu0 %v1013
  %2396 = vmatpush.msra.mxu0 %v1006
  %2397 = vmatpush.msra.mxu0 %v999
  %2398 = vmatpush.msra.mxu0 %v992
  %2399 = vmatpush.msra.mxu0 %v985
  %2400 = vmatpush.msra.mxu0 %v978
  %2401 = vmatpush.msra.mxu0 %v971
  %2402 = vmatmul.f32.gmra.mxu0 %v959
  %v2403 = vpop.f32.mrf.mxu0
  %v2404 = vadd.f32 %v1673, %v2403
  %2405 = vdwg.mxu0
  %2406 = vmatpush.msra.mxu0 %v1188
  %2407 = vmatpush.msra.mxu0 %v1181
  %2408 = vmatpush.msra.mxu0 %v1174
  %2409 = vmatpush.msra.mxu0 %v1167
  %2410 = vmatpush.msra.mxu0 %v1160
  %2411 = vmatpush.msra.mxu0 %v1153
  %2412 = vmatpush.msra.mxu0 %v1146
  %2413 = vmatpush.msra.mxu0 %v1139
  %2414 = vmatpush.msra.mxu0 %v1132
  %2415 = vmatpush.msra.mxu0 %v1125
  %2416 = vmatpush.msra.mxu0 %v1118
  %2417 = vmatpush.msra.mxu0 %v1111
  %2418 = vmatpush.msra.mxu0 %v1104
  %2419 = vmatpush.msra.mxu0 %v1097
  %2420 = vmatpush.msra.mxu0 %v1090
  %2421 = vmatpush.msra.mxu0 %v1083
  %2422 = vmatmul.f32.gmra.mxu0 %v960
  %v2423 = vpop.f32.mrf.mxu0
  %v2424 = vadd.f32 %v2404, %v2423
  %2425 = vdwg.mxu0
  %2426 = vmatpush.msra.mxu0 %v1300
  %2427 = vmatpush.msra.mxu0 %v1293
  %2428 = vmatpush.msra.mxu0 %v1286
  %2429 = vmatpush.msra.mxu0 %v1279
  %2430 = vmatpush.msra.mxu0 %v1272
  %2431 = vmatpush.msra.mxu0 %v1265
  %2432 = vmatpush.msra.mxu0 %v1258
  %2433 = vmatpush.msra.mxu0 %v1251
  %2434 = vmatpush.msra.mxu0 %v1244
  %2435 = vmatpush.msra.mxu0 %v1237
  %2436 = vmatpush.msra.mxu0 %v1230
  %2437 = vmatpush.msra.mxu0 %v1223
  %2438 = vmatpush.msra.mxu0 %v1216
  %2439 = vmatpush.msra.mxu0 %v1209
  %2440 = vmatpush.msra.mxu0 %v1202
  %2441 = vmatpush.msra.mxu0 %v1195
  %2442 = vmatmul.f32.gmra.mxu0 %v961
  %v2443 = vpop.f32.mrf.mxu0
  %v2444 = vadd.f32 %v2424, %v2443
  %2445 = vdwg.mxu0
  %2446 = vmatpush.msra.mxu0 %v1412
  %2447 = vmatpush.msra.mxu0 %v1405
  %2448 = vmatpush.msra.mxu0 %v1398
  %2449 = vmatpush.msra.mxu0 %v1391
  %2450 = vmatpush.msra.mxu0 %v1384
  %2451 = vmatpush.msra.mxu0 %v1377
  %2452 = vmatpush.msra.mxu0 %v1370
  %2453 = vmatpush.msra.mxu0 %v1363
  %2454 = vmatpush.msra.mxu0 %v1356
  %2455 = vmatpush.msra.mxu0 %v1349
  %2456 = vmatpush.msra.mxu0 %v1342
  %2457 = vmatpush.msra.mxu0 %v1335
  %2458 = vmatpush.msra.mxu0 %v1328
  %2459 = vmatpush.msra.mxu0 %v1321
  %2460 = vmatpush.msra.mxu0 %v1314
  %2461 = vmatpush.msra.mxu0 %v1307
  %2462 = vmatmul.f32.gmra.mxu0 %v962
  %v2463 = vpop.f32.mrf.mxu0
  %v2464 = vadd.f32 %v2444, %v2463
  %2465 = vdwg.mxu0
  %2466 = vmatpush.msra.mxu0 %v1524
  %2467 = vmatpush.msra.mxu0 %v1517
  %2468 = vmatpush.msra.mxu0 %v1510
  %2469 = vmatpush.msra.mxu0 %v1503
  %2470 = vmatpush.msra.mxu0 %v1496
  %2471 = vmatpush.msra.mxu0 %v1489
  %2472 = vmatpush.msra.mxu0 %v1482
  %2473 = vmatpush.msra.mxu0 %v1475
  %2474 = vmatpush.msra.mxu0 %v1468
  %2475 = vmatpush.msra.mxu0 %v1461
  %2476 = vmatpush.msra.mxu0 %v1454
  %2477 = vmatpush.msra.mxu0 %v1447
  %2478 = vmatpush.msra.mxu0 %v1440
  %2479 = vmatpush.msra.mxu0 %v1433
  %2480 = vmatpush.msra.mxu0 %v1426
  %2481 = vmatpush.msra.mxu0 %v1419
  %2482 = vmatmul.f32.gmra.mxu0 %v963
  %v2483 = vpop.f32.mrf.mxu0
  %v2484 = vadd.f32 %v2464, %v2483
  %2485 = vdwg.mxu0
  %2486 = vmatpush.msra.mxu0 %v1636
  %2487 = vmatpush.msra.mxu0 %v1629
  %2488 = vmatpush.msra.mxu0 %v1622
  %2489 = vmatpush.msra.mxu0 %v1615
  %2490 = vmatpush.msra.mxu0 %v1608
  %2491 = vmatpush.msra.mxu0 %v1601
  %2492 = vmatpush.msra.mxu0 %v1594
  %2493 = vmatpush.msra.mxu0 %v1587
  %2494 = vmatpush.msra.mxu0 %v1580
  %2495 = vmatpush.msra.mxu0 %v1573
  %2496 = vmatpush.msra.mxu0 %v1566
  %2497 = vmatpush.msra.mxu0 %v1559
  %2498 = vmatpush.msra.mxu0 %v1552
  %2499 = vmatpush.msra.mxu0 %v1545
  %2500 = vmatpush.msra.mxu0 %v1538
  %2501 = vmatpush.msra.mxu0 %v1531
  %2502 = vmatmul.f32.gmra.mxu0 %v964
  %v2503 = vpop.f32.mrf.mxu0
  %v2504 = vadd.f32 %v2484, %v2503
  %2505 = vdwg.mxu0
  %2506 = vmatpush.msra.mxu0 0.0
  %2507 = vmatpush.msra.mxu0 0.0
  %2508 = vmatpush.msra.mxu0 0.0
  %2509 = vmatpush.msra.mxu0 0.0
  %2510 = vmatpush.msra.mxu0 0.0
  %2511 = vmatpush.msra.mxu0 0.0
  %2512 = vmatpush.msra.mxu0 0.0
  %2513 = vmatpush.msra.mxu0 0.0
  %2514 = vmatpush.msra.mxu0 0.0
  %2515 = vmatpush.msra.mxu0 0.0
  %2516 = vmatpush.msra.mxu0 0.0
  %2517 = vmatpush.msra.mxu0 0.0
  %2518 = vmatpush.msra.mxu0 %v1664
  %2519 = vmatpush.msra.mxu0 %v1657
  %2520 = vmatpush.msra.mxu0 %v1650
  %2521 = vmatpush.msra.mxu0 %v1643
  %2522 = vmatmul.f32.gmra.mxu0 %v1684
  %v2523 = vpop.f32.mrf.mxu0
  %v2524 = vadd.f32 %v2504, %v2523
  %2525 = vdwg.mxu0
  %2526 = vmatpush.msra.mxu0 %v1077
  %2527 = vmatpush.msra.mxu0 %v1070
  %2528 = vmatpush.msra.mxu0 %v1063
  %2529 = vmatpush.msra.mxu0 %v1056
  %2530 = vmatpush.msra.mxu0 %v1049
  %2531 = vmatpush.msra.mxu0 %v1042
  %2532 = vmatpush.msra.mxu0 %v1035
  %2533 = vmatpush.msra.mxu0 %v1028
  %2534 = vmatpush.msra.mxu0 %v1021
  %2535 = vmatpush.msra.mxu0 %v1014
  %2536 = vmatpush.msra.mxu0 %v1007
  %2537 = vmatpush.msra.mxu0 %v1000
  %2538 = vmatpush.msra.mxu0 %v993
  %2539 = vmatpush.msra.mxu0 %v986
  %2540 = vmatpush.msra.mxu0 %v979
  %2541 = vmatpush.msra.mxu0 %v972
  %2542 = vmatmul.f32.gmra.mxu0 %v959
  %v2543 = vpop.f32.mrf.mxu0
  %v2544 = vadd.f32 %v1674, %v2543
  %2545 = vdwg.mxu0
  %2546 = vmatpush.msra.mxu0 %v1189
  %2547 = vmatpush.msra.mxu0 %v1182
  %2548 = vmatpush.msra.mxu0 %v1175
  %2549 = vmatpush.msra.mxu0 %v1168
  %2550 = vmatpush.msra.mxu0 %v1161
  %2551 = vmatpush.msra.mxu0 %v1154
  %2552 = vmatpush.msra.mxu0 %v1147
  %2553 = vmatpush.msra.mxu0 %v1140
  %2554 = vmatpush.msra.mxu0 %v1133
  %2555 = vmatpush.msra.mxu0 %v1126
  %2556 = vmatpush.msra.mxu0 %v1119
  %2557 = vmatpush.msra.mxu0 %v1112
  %2558 = vmatpush.msra.mxu0 %v1105
  %2559 = vmatpush.msra.mxu0 %v1098
  %2560 = vmatpush.msra.mxu0 %v1091
  %2561 = vmatpush.msra.mxu0 %v1084
  %2562 = vmatmul.f32.gmra.mxu0 %v960
  %v2563 = vpop.f32.mrf.mxu0
  %v2564 = vadd.f32 %v2544, %v2563
  %2565 = vdwg.mxu0
  %2566 = vmatpush.msra.mxu0 %v1301
  %2567 = vmatpush.msra.mxu0 %v1294
  %2568 = vmatpush.msra.mxu0 %v1287
  %2569 = vmatpush.msra.mxu0 %v1280
  %2570 = vmatpush.msra.mxu0 %v1273
  %2571 = vmatpush.msra.mxu0 %v1266
  %2572 = vmatpush.msra.mxu0 %v1259
  %2573 = vmatpush.msra.mxu0 %v1252
  %2574 = vmatpush.msra.mxu0 %v1245
  %2575 = vmatpush.msra.mxu0 %v1238
  %2576 = vmatpush.msra.mxu0 %v1231
  %2577 = vmatpush.msra.mxu0 %v1224
  %2578 = vmatpush.msra.mxu0 %v1217
  %2579 = vmatpush.msra.mxu0 %v1210
  %2580 = vmatpush.msra.mxu0 %v1203
  %2581 = vmatpush.msra.mxu0 %v1196
  %2582 = vmatmul.f32.gmra.mxu0 %v961
  %v2583 = vpop.f32.mrf.mxu0
  %v2584 = vadd.f32 %v2564, %v2583
  %2585 = vdwg.mxu0
  %2586 = vmatpush.msra.mxu0 %v1413
  %2587 = vmatpush.msra.mxu0 %v1406
  %2588 = vmatpush.msra.mxu0 %v1399
  %2589 = vmatpush.msra.mxu0 %v1392
  %2590 = vmatpush.msra.mxu0 %v1385
  %2591 = vmatpush.msra.mxu0 %v1378
  %2592 = vmatpush.msra.mxu0 %v1371
  %2593 = vmatpush.msra.mxu0 %v1364
  %2594 = vmatpush.msra.mxu0 %v1357
  %2595 = vmatpush.msra.mxu0 %v1350
  %2596 = vmatpush.msra.mxu0 %v1343
  %2597 = vmatpush.msra.mxu0 %v1336
  %2598 = vmatpush.msra.mxu0 %v1329
  %2599 = vmatpush.msra.mxu0 %v1322
  %2600 = vmatpush.msra.mxu0 %v1315
  %2601 = vmatpush.msra.mxu0 %v1308
  %2602 = vmatmul.f32.gmra.mxu0 %v962
  %v2603 = vpop.f32.mrf.mxu0
  %v2604 = vadd.f32 %v2584, %v2603
  %2605 = vdwg.mxu0
  %2606 = vmatpush.msra.mxu0 %v1525
  %2607 = vmatpush.msra.mxu0 %v1518
  %2608 = vmatpush.msra.mxu0 %v1511
  %2609 = vmatpush.msra.mxu0 %v1504
  %2610 = vmatpush.msra.mxu0 %v1497
  %2611 = vmatpush.msra.mxu0 %v1490
  %2612 = vmatpush.msra.mxu0 %v1483
  %2613 = vmatpush.msra.mxu0 %v1476
  %2614 = vmatpush.msra.mxu0 %v1469
  %2615 = vmatpush.msra.mxu0 %v1462
  %2616 = vmatpush.msra.mxu0 %v1455
  %2617 = vmatpush.msra.mxu0 %v1448
  %2618 = vmatpush.msra.mxu0 %v1441
  %2619 = vmatpush.msra.mxu0 %v1434
  %2620 = vmatpush.msra.mxu0 %v1427
  %2621 = vmatpush.msra.mxu0 %v1420
  %2622 = vmatmul.f32.gmra.mxu0 %v963
  %v2623 = vpop.f32.mrf.mxu0
  %v2624 = vadd.f32 %v2604, %v2623
  %2625 = vdwg.mxu0
  %2626 = vmatpush.msra.mxu0 %v1637
  %2627 = vmatpush.msra.mxu0 %v1630
  %2628 = vmatpush.msra.mxu0 %v1623
  %2629 = vmatpush.msra.mxu0 %v1616
  %2630 = vmatpush.msra.mxu0 %v1609
  %2631 = vmatpush.msra.mxu0 %v1602
  %2632 = vmatpush.msra.mxu0 %v1595
  %2633 = vmatpush.msra.mxu0 %v1588
  %2634 = vmatpush.msra.mxu0 %v1581
  %2635 = vmatpush.msra.mxu0 %v1574
  %2636 = vmatpush.msra.mxu0 %v1567
  %2637 = vmatpush.msra.mxu0 %v1560
  %2638 = vmatpush.msra.mxu0 %v1553
  %2639 = vmatpush.msra.mxu0 %v1546
  %2640 = vmatpush.msra.mxu0 %v1539
  %2641 = vmatpush.msra.mxu0 %v1532
  %2642 = vmatmul.f32.gmra.mxu0 %v964
  %v2643 = vpop.f32.mrf.mxu0
  %v2644 = vadd.f32 %v2624, %v2643
  %2645 = vdwg.mxu0
  %2646 = vmatpush.msra.mxu0 0.0
  %2647 = vmatpush.msra.mxu0 0.0
  %2648 = vmatpush.msra.mxu0 0.0
  %2649 = vmatpush.msra.mxu0 0.0
  %2650 = vmatpush.msra.mxu0 0.0
  %2651 = vmatpush.msra.mxu0 0.0
  %2652 = vmatpush.msra.mxu0 0.0
  %2653 = vmatpush.msra.mxu0 0.0
  %2654 = vmatpush.msra.mxu0 0.0
  %2655 = vmatpush.msra.mxu0 0.0
  %2656 = vmatpush.msra.mxu0 0.0
  %2657 = vmatpush.msra.mxu0 0.0
  %2658 = vmatpush.msra.mxu0 %v1665
  %2659 = vmatpush.msra.mxu0 %v1658
  %2660 = vmatpush.msra.mxu0 %v1651
  %2661 = vmatpush.msra.mxu0 %v1644
  %2662 = vmatmul.f32.gmra.mxu0 %v1684
  %v2663 = vpop.f32.mrf.mxu0
  %v2664 = vadd.f32 %v2644, %v2663
  %2665 = vdwg.mxu0
  %v2673 = vrot.slane %v1964, 6
  %v2674 = vrot.slane %v2104, 4
  %v2675 = vrot.slane %v2244, 2
  %v2676 = vrot.slane %v2524, 6
  %v2677 = vrot.slane %v2664, 4
  %vm2678 = vcmask 1041408
  %v2679 = vsel %vm2678, %v1824, %v2673
  %vm2680 = vcmask 1045508
  %v2681 = vsel %vm2680, %v2674, %v2675
  %vm2682 = vcmask 1043456
  %v2683 = vsel %vm2682, %v2679, %v2681
  %v2684 = vsel %vm2678, %v2384, %v2676
  %v2685 = vsel %vm2682, %v2684, %v2677
  %2688 = vst [vmem:[%s5] sm:$0xff] %v2683
  %vm2689 = vcmask 1043458
  %vm2690 = vmor %vm2689, %vm2678
  %vm2691 = vcmask 259076
  %vm2692 = vmor %vm2691, %vm2690
  %2693 = vst.msk [vmem:[%s5 + $0x8] sm:$0x3f] %vm2692, %v2685
  // Predicated region
  $region22: #{_lambda_.5} parent=0 // pred_check
    _
  $region23: #{_lambda_.5} parent=0 // pred_check_branch
    %2695 = sbr.rel (0) target = $region25
  $region24: #{_lambda_.5} parent=0 // pred_region
    _
  $region25: #{_lambda_.5} parent=0 // pred_fallthru
    _
  // Predicated region
  $region26: #{_lambda_.5} parent=0 // pred_check
    _
  $region27: #{_lambda_.5} parent=0 // pred_check_branch
    %2697 = sbr.rel (0) target = $region29
  $region28: #{_lambda_.5} parent=0 // pred_region
    _
  $region29: #{_lambda_.5} parent=0 // pred_fallthru
    _

// kernel: _lambda_.9
$region0: #{_lambda_.9}
  #allocation0 [shape = 'u32[]', space=smem, size = 0x4, offset = 0x4, fixed_abs, tag = 'smem constant byte address 0x4 - core index']
  #allocation1 [shape = 'u32[72,128]{1,0:T(1,128)}', space=vmem, size = 0x9000, scoped, tag = 'internal scratch']
  #allocation2 [shape = 'f32[1,1]{1,0:T(1,128)S(1)}', space=vmem, size = 0x200, scoped, tag = 'scoped memory for _lambda_.9']
  %s0 = inlined_call_operand.vmem [shape: f32[2,1250], index: 0, kind: input, shape index: {}]
  %s1 = inlined_call_operand.vmem [shape: f32[1250,1250], index: 1, kind: input, shape index: {}]
  %s2 = inlined_call_operand.vmem [shape: f32[1,1250], index: 2, kind: input, shape index: {}]
  %s3 = inlined_call_operand.vmem [shape: f32[1250,1], index: 3, kind: input, shape index: {}]
  %s4 = inlined_call_operand.<no memory space> [shape: f32[1,1], index: 4, kind: input, shape index: {}]
  %s5 = inlined_call_operand.vmem [shape: f32[2,1], index: 5, kind: output, shape index: {}]
  %s6 = sld [smem:[#allocation0]]
  $region30: #{_lambda_.9} parent=0
    _
  %s8 = ssub.s32 1, %s6
  %s9 = scalar_select 0, %s8, %s6
  %v10 = vstv %s4
  %11 = vst [vmem:[#allocation2] sm:$0x1] %v10
  // Predicated region
  $region2: #{_lambda_.9} parent=0 // pred_check
    _
  $region3: #{_lambda_.9} parent=0 // pred_check_branch
    %13 = sbr.rel (0) target = $region5
  $region4: #{_lambda_.9} parent=0 // pred_region
    _
  $region5: #{_lambda_.9} parent=0 // pred_fallthru
    _
  // Predicated region
  $region6: #{_lambda_.9} parent=0 // pred_check
    _
  $region7: #{_lambda_.9} parent=0 // pred_check_branch
    %15 = sbr.rel (0) target = $region9
  $region8: #{_lambda_.9} parent=0 // pred_region
    _
  $region9: #{_lambda_.9} parent=0 // pred_fallthru
    _
  // Predicated region
  $region10: #{_lambda_.9} parent=0 // pred_check
    _
  $region11: #{_lambda_.9} parent=0 // pred_check_branch
    %17 = sbr.rel (0) target = $region13
  $region12: #{_lambda_.9} parent=0 // pred_region
    _
  $region13: #{_lambda_.9} parent=0 // pred_fallthru
    _
  // Predicated region
  $region14: #{_lambda_.9} parent=0 // pred_check
    _
  $region15: #{_lambda_.9} parent=0 // pred_check_branch
    %19 = sbr.rel (0) target = $region17
  $region16: #{_lambda_.9} parent=0 // pred_region
    _
  $region17: #{_lambda_.9} parent=0 // pred_fallthru
    _
  // Predicated region
  $region18: #{_lambda_.9} parent=0 // pred_check
    _
  $region19: #{_lambda_.9} parent=0 // pred_check_branch
    %21 = sbr.rel (0) target = $region21
  $region20: #{_lambda_.9} parent=0 // pred_region
    _
  $region21: #{_lambda_.9} parent=0 // pred_fallthru
    _
  %v22 = vld [vmem:[%s0] sm:$0xff]
  %v23 = vld [vmem:[%s0 + $0x8] sm:$0xff]
  %v24 = vld [vmem:[%s0 + $0x10] sm:$0xf]
  %v25 = vld [vmem:[%s1] sm:$0xff]
  %v26 = vld [vmem:[%s1 + $0x8] sm:$0xff]
  %v27 = vld [vmem:[%s1 + $0x10] sm:$0xff]
  %v28 = vld [vmem:[%s1 + $0x18] sm:$0xff]
  %v29 = vld [vmem:[%s1 + $0x20] sm:$0xff]
  %v30 = vld [vmem:[%s1 + $0x28] sm:$0xff]
  %v31 = vld [vmem:[%s1 + $0x30] sm:$0xff]
  %v32 = vld [vmem:[%s1 + $0x38] sm:$0xff]
  %v33 = vld [vmem:[%s1 + $0x40] sm:$0xff]
  %v34 = vld [vmem:[%s1 + $0x48] sm:$0xff]
  %v35 = vld [vmem:[%s1 + $0x50] sm:$0xff]
  %v36 = vld [vmem:[%s1 + $0x58] sm:$0xff]
  %v37 = vld [vmem:[%s1 + $0x60] sm:$0xff]
  %v38 = vld [vmem:[%s1 + $0x68] sm:$0xff]
  %v39 = vld [vmem:[%s1 + $0x70] sm:$0xff]
  %v40 = vld [vmem:[%s1 + $0x78] sm:$0xff]
  %v41 = vld [vmem:[%s1 + $0x80] sm:$0xff]
  %v42 = vld [vmem:[%s1 + $0x88] sm:$0xff]
  %v43 = vld [vmem:[%s1 + $0x90] sm:$0xff]
  %v44 = vld [vmem:[%s1 + $0x98] sm:$0xff]
  %v45 = vld [vmem:[%s1 + $0xa0] sm:$0xff]
  %v46 = vld [vmem:[%s1 + $0xa8] sm:$0xff]
  %v47 = vld [vmem:[%s1 + $0xb0] sm:$0xff]
  %v48 = vld [vmem:[%s1 + $0xb8] sm:$0xff]
  %v49 = vld [vmem:[%s1 + $0xc0] sm:$0xff]
  %v50 = vld [vmem:[%s1 + $0xc8] sm:$0xff]
  %v51 = vld [vmem:[%s1 + $0xd0] sm:$0xff]
  %v52 = vld [vmem:[%s1 + $0xd8] sm:$0xff]
  %v53 = vld [vmem:[%s1 + $0xe0] sm:$0xff]
  %v54 = vld [vmem:[%s1 + $0xe8] sm:$0xff]
  %v55 = vld [vmem:[%s1 + $0xf0] sm:$0xff]
  %v56 = vld [vmem:[%s1 + $0xf8] sm:$0xff]
  %v57 = vld [vmem:[%s1 + $0x100] sm:$0xff]
  %v58 = vld [vmem:[%s1 + $0x108] sm:$0xff]
  %v59 = vld [vmem:[%s1 + $0x110] sm:$0xff]
  %v60 = vld [vmem:[%s1 + $0x118] sm:$0xff]
  %v61 = vld [vmem:[%s1 + $0x120] sm:$0xff]
  %v62 = vld [vmem:[%s1 + $0x128] sm:$0xff]
  %v63 = vld [vmem:[%s1 + $0x130] sm:$0xff]
  %v64 = vld [vmem:[%s1 + $0x138] sm:$0xff]
  %v65 = vld [vmem:[%s1 + $0x140] sm:$0xff]
  %v66 = vld [vmem:[%s1 + $0x148] sm:$0xff]
  %v67 = vld [vmem:[%s1 + $0x150] sm:$0xff]
  %v68 = vld [vmem:[%s1 + $0x158] sm:$0xff]
  %v69 = vld [vmem:[%s1 + $0x160] sm:$0xff]
  %v70 = vld [vmem:[%s1 + $0x168] sm:$0xff]
  %v71 = vld [vmem:[%s1 + $0x170] sm:$0xff]
  %v72 = vld [vmem:[%s1 + $0x178] sm:$0xff]
  %v73 = vld [vmem:[%s1 + $0x180] sm:$0xff]
  %v74 = vld [vmem:[%s1 + $0x188] sm:$0xff]
  %v75 = vld [vmem:[%s1 + $0x190] sm:$0xff]
  %v76 = vld [vmem:[%s1 + $0x198] sm:$0xff]
  %v77 = vld [vmem:[%s1 + $0x1a0] sm:$0xff]
  %v78 = vld [vmem:[%s1 + $0x1a8] sm:$0xff]
  %v79 = vld [vmem:[%s1 + $0x1b0] sm:$0xff]
  %v80 = vld [vmem:[%s1 + $0x1b8] sm:$0xff]
  %v81 = vld [vmem:[%s1 + $0x1c0] sm:$0xff]
  %v82 = vld [vmem:[%s1 + $0x1c8] sm:$0xff]
  %v83 = vld [vmem:[%s1 + $0x1d0] sm:$0xff]
  %v84 = vld [vmem:[%s1 + $0x1d8] sm:$0xff]
  %v85 = vld [vmem:[%s1 + $0x1e0] sm:$0xff]
  %v86 = vld [vmem:[%s1 + $0x1e8] sm:$0xff]
  %v87 = vld [vmem:[%s1 + $0x1f0] sm:$0xff]
  %v88 = vld [vmem:[%s1 + $0x1f8] sm:$0xff]
  %v89 = vld [vmem:[%s1 + $0x200] sm:$0xff]
  %v90 = vld [vmem:[%s1 + $0x208] sm:$0xff]
  %v91 = vld [vmem:[%s1 + $0x210] sm:$0xff]
  %v92 = vld [vmem:[%s1 + $0x218] sm:$0xff]
  %v93 = vld [vmem:[%s1 + $0x220] sm:$0xff]
  %v94 = vld [vmem:[%s1 + $0x228] sm:$0xff]
  %v95 = vld [vmem:[%s1 + $0x230] sm:$0xff]
  %v96 = vld [vmem:[%s1 + $0x238] sm:$0xff]
  %v97 = vld [vmem:[%s1 + $0x240] sm:$0xff]
  %v98 = vld [vmem:[%s1 + $0x248] sm:$0xff]
  %v99 = vld [vmem:[%s1 + $0x250] sm:$0xff]
  %v100 = vld [vmem:[%s1 + $0x258] sm:$0xff]
  %v101 = vld [vmem:[%s1 + $0x260] sm:$0xff]
  %v102 = vld [vmem:[%s1 + $0x268] sm:$0xff]
  %v103 = vld [vmem:[%s1 + $0x270] sm:$0xff]
  %v104 = vld [vmem:[%s1 + $0x278] sm:$0xff]
  %v105 = vld [vmem:[%s1 + $0x280] sm:$0xff]
  %v106 = vld [vmem:[%s1 + $0x288] sm:$0xff]
  %v107 = vld [vmem:[%s1 + $0x290] sm:$0xff]
  %v108 = vld [vmem:[%s1 + $0x298] sm:$0xff]
  %v109 = vld [vmem:[%s1 + $0x2a0] sm:$0xff]
  %v110 = vld [vmem:[%s1 + $0x2a8] sm:$0xff]
  %v111 = vld [vmem:[%s1 + $0x2b0] sm:$0xff]
  %v112 = vld [vmem:[%s1 + $0x2b8] sm:$0xff]
  %v113 = vld [vmem:[%s1 + $0x2c0] sm:$0xff]
  %v114 = vld [vmem:[%s1 + $0x2c8] sm:$0xff]
  %v115 = vld [vmem:[%s1 + $0x2d0] sm:$0xff]
  %v116 = vld [vmem:[%s1 + $0x2d8] sm:$0xff]
  %v117 = vld [vmem:[%s1 + $0x2e0] sm:$0xff]
  %v118 = vld [vmem:[%s1 + $0x2e8] sm:$0xff]
  %v119 = vld [vmem:[%s1 + $0x2f0] sm:$0xff]
  %v120 = vld [vmem:[%s1 + $0x2f8] sm:$0xff]
  %v121 = vld [vmem:[%s1 + $0x300] sm:$0xff]
  %v122 = vld [vmem:[%s1 + $0x308] sm:$0xff]
  %v123 = vld [vmem:[%s1 + $0x310] sm:$0xff]
  %v124 = vld [vmem:[%s1 + $0x318] sm:$0xff]
  %v125 = vld [vmem:[%s1 + $0x320] sm:$0xff]
  %v126 = vld [vmem:[%s1 + $0x328] sm:$0xff]
  %v127 = vld [vmem:[%s1 + $0x330] sm:$0xff]
  %v128 = vld [vmem:[%s1 + $0x338] sm:$0xff]
  %v129 = vld [vmem:[%s1 + $0x340] sm:$0xff]
  %v130 = vld [vmem:[%s1 + $0x348] sm:$0xff]
  %v131 = vld [vmem:[%s1 + $0x350] sm:$0xff]
  %v132 = vld [vmem:[%s1 + $0x358] sm:$0xff]
  %v133 = vld [vmem:[%s1 + $0x360] sm:$0xff]
  %v134 = vld [vmem:[%s1 + $0x368] sm:$0xff]
  %v135 = vld [vmem:[%s1 + $0x370] sm:$0xff]
  %v136 = vld [vmem:[%s1 + $0x378] sm:$0xff]
  %v137 = vld [vmem:[%s1 + $0x380] sm:$0xff]
  %v138 = vld [vmem:[%s1 + $0x388] sm:$0xff]
  %v139 = vld [vmem:[%s1 + $0x390] sm:$0xff]
  %v140 = vld [vmem:[%s1 + $0x398] sm:$0xff]
  %v141 = vld [vmem:[%s1 + $0x3a0] sm:$0xff]
  %v142 = vld [vmem:[%s1 + $0x3a8] sm:$0xff]
  %v143 = vld [vmem:[%s1 + $0x3b0] sm:$0xff]
  %v144 = vld [vmem:[%s1 + $0x3b8] sm:$0xff]
  %v145 = vld [vmem:[%s1 + $0x3c0] sm:$0xff]
  %v146 = vld [vmem:[%s1 + $0x3c8] sm:$0xff]
  %v147 = vld [vmem:[%s1 + $0x3d0] sm:$0xff]
  %v148 = vld [vmem:[%s1 + $0x3d8] sm:$0xff]
  %v149 = vld [vmem:[%s1 + $0x3e0] sm:$0xff]
  %v150 = vld [vmem:[%s1 + $0x3e8] sm:$0xff]
  %v151 = vld [vmem:[%s1 + $0x3f0] sm:$0xff]
  %v152 = vld [vmem:[%s1 + $0x3f8] sm:$0xff]
  %v153 = vld [vmem:[%s1 + $0x400] sm:$0xff]
  %v154 = vld [vmem:[%s1 + $0x408] sm:$0xff]
  %v155 = vld [vmem:[%s1 + $0x410] sm:$0xff]
  %v156 = vld [vmem:[%s1 + $0x418] sm:$0xff]
  %v157 = vld [vmem:[%s1 + $0x420] sm:$0xff]
  %v158 = vld [vmem:[%s1 + $0x428] sm:$0xff]
  %v159 = vld [vmem:[%s1 + $0x430] sm:$0xff]
  %v160 = vld [vmem:[%s1 + $0x438] sm:$0xff]
  %v161 = vld [vmem:[%s1 + $0x440] sm:$0xff]
  %v162 = vld [vmem:[%s1 + $0x448] sm:$0xff]
  %v163 = vld [vmem:[%s1 + $0x450] sm:$0xff]
  %v164 = vld [vmem:[%s1 + $0x458] sm:$0xff]
  %v165 = vld [vmem:[%s1 + $0x460] sm:$0xff]
  %v166 = vld [vmem:[%s1 + $0x468] sm:$0xff]
  %v167 = vld [vmem:[%s1 + $0x470] sm:$0xff]
  %v168 = vld [vmem:[%s1 + $0x478] sm:$0xff]
  %v169 = vld [vmem:[%s1 + $0x480] sm:$0xff]
  %v170 = vld [vmem:[%s1 + $0x488] sm:$0xff]
  %v171 = vld [vmem:[%s1 + $0x490] sm:$0xff]
  %v172 = vld [vmem:[%s1 + $0x498] sm:$0xff]
  %v173 = vld [vmem:[%s1 + $0x4a0] sm:$0xff]
  %v174 = vld [vmem:[%s1 + $0x4a8] sm:$0xff]
  %v175 = vld [vmem:[%s1 + $0x4b0] sm:$0xff]
  %v176 = vld [vmem:[%s1 + $0x4b8] sm:$0xff]
  %v177 = vld [vmem:[%s1 + $0x4c0] sm:$0xff]
  %v178 = vld [vmem:[%s1 + $0x4c8] sm:$0xff]
  %v179 = vld [vmem:[%s1 + $0x4d0] sm:$0xff]
  %v180 = vld [vmem:[%s1 + $0x4d8] sm:$0xff]
  %v181 = vld [vmem:[%s1 + $0x4e0] sm:$0xff]
  %v182 = vld [vmem:[%s1 + $0x4e8] sm:$0xff]
  %v183 = vld [vmem:[%s1 + $0x4f0] sm:$0xff]
  %v184 = vld [vmem:[%s1 + $0x4f8] sm:$0xff]
  %v185 = vld [vmem:[%s1 + $0x500] sm:$0xff]
  %v186 = vld [vmem:[%s1 + $0x508] sm:$0xff]
  %v187 = vld [vmem:[%s1 + $0x510] sm:$0xff]
  %v188 = vld [vmem:[%s1 + $0x518] sm:$0xff]
  %v189 = vld [vmem:[%s1 + $0x520] sm:$0xff]
  %v190 = vld [vmem:[%s1 + $0x528] sm:$0xff]
  %v191 = vld [vmem:[%s1 + $0x530] sm:$0xff]
  %v192 = vld [vmem:[%s1 + $0x538] sm:$0xff]
  %v193 = vld [vmem:[%s1 + $0x540] sm:$0xff]
  %v194 = vld [vmem:[%s1 + $0x548] sm:$0xff]
  %v195 = vld [vmem:[%s1 + $0x550] sm:$0xff]
  %v196 = vld [vmem:[%s1 + $0x558] sm:$0xff]
  %v197 = vld [vmem:[%s1 + $0x560] sm:$0xff]
  %v198 = vld [vmem:[%s1 + $0x568] sm:$0xff]
  %v199 = vld [vmem:[%s1 + $0x570] sm:$0xff]
  %v200 = vld [vmem:[%s1 + $0x578] sm:$0xff]
  %v201 = vld [vmem:[%s1 + $0x580] sm:$0xff]
  %v202 = vld [vmem:[%s1 + $0x588] sm:$0xff]
  %v203 = vld [vmem:[%s1 + $0x590] sm:$0xff]
  %v204 = vld [vmem:[%s1 + $0x598] sm:$0xff]
  %v205 = vld [vmem:[%s1 + $0x5a0] sm:$0xff]
  %v206 = vld [vmem:[%s1 + $0x5a8] sm:$0xff]
  %v207 = vld [vmem:[%s1 + $0x5b0] sm:$0xff]
  %v208 = vld [vmem:[%s1 + $0x5b8] sm:$0xff]
  %v209 = vld [vmem:[%s1 + $0x5c0] sm:$0xff]
  %v210 = vld [vmem:[%s1 + $0x5c8] sm:$0xff]
  %v211 = vld [vmem:[%s1 + $0x5d0] sm:$0xff]
  %v212 = vld [vmem:[%s1 + $0x5d8] sm:$0xff]
  %v213 = vld [vmem:[%s1 + $0x5e0] sm:$0xff]
  %v214 = vld [vmem:[%s1 + $0x5e8] sm:$0xff]
  %v215 = vld [vmem:[%s1 + $0x5f0] sm:$0xff]
  %v216 = vld [vmem:[%s1 + $0x5f8] sm:$0xff]
  %v217 = vld [vmem:[%s1 + $0x600] sm:$0xff]
  %v218 = vld [vmem:[%s1 + $0x608] sm:$0xff]
  %v219 = vld [vmem:[%s1 + $0x610] sm:$0xff]
  %v220 = vld [vmem:[%s1 + $0x618] sm:$0xff]
  %v221 = vld [vmem:[%s1 + $0x620] sm:$0xff]
  %v222 = vld [vmem:[%s1 + $0x628] sm:$0xff]
  %v223 = vld [vmem:[%s1 + $0x630] sm:$0xff]
  %v224 = vld [vmem:[%s1 + $0x638] sm:$0xff]
  %v225 = vld [vmem:[%s1 + $0x640] sm:$0xff]
  %v226 = vld [vmem:[%s1 + $0x648] sm:$0xff]
  %v227 = vld [vmem:[%s1 + $0x650] sm:$0xff]
  %v228 = vld [vmem:[%s1 + $0x658] sm:$0xff]
  %v229 = vld [vmem:[%s1 + $0x660] sm:$0xff]
  %v230 = vld [vmem:[%s1 + $0x668] sm:$0xff]
  %v231 = vld [vmem:[%s1 + $0x670] sm:$0xff]
  %v232 = vld [vmem:[%s1 + $0x678] sm:$0xff]
  %v233 = vld [vmem:[%s1 + $0x680] sm:$0xff]
  %v234 = vld [vmem:[%s1 + $0x688] sm:$0xff]
  %v235 = vld [vmem:[%s1 + $0x690] sm:$0xff]
  %v236 = vld [vmem:[%s1 + $0x698] sm:$0xff]
  %v237 = vld [vmem:[%s1 + $0x6a0] sm:$0xff]
  %v238 = vld [vmem:[%s1 + $0x6a8] sm:$0xff]
  %v239 = vld [vmem:[%s1 + $0x6b0] sm:$0xff]
  %v240 = vld [vmem:[%s1 + $0x6b8] sm:$0xff]
  %v241 = vld [vmem:[%s1 + $0x6c0] sm:$0xff]
  %v242 = vld [vmem:[%s1 + $0x6c8] sm:$0xff]
  %v243 = vld [vmem:[%s1 + $0x6d0] sm:$0xff]
  %v244 = vld [vmem:[%s1 + $0x6d8] sm:$0xff]
  %v245 = vld [vmem:[%s1 + $0x6e0] sm:$0xff]
  %v246 = vld [vmem:[%s1 + $0x6e8] sm:$0xff]
  %v247 = vld [vmem:[%s1 + $0x6f0] sm:$0xff]
  %v248 = vld [vmem:[%s1 + $0x6f8] sm:$0xff]
  %v249 = vld [vmem:[%s1 + $0x700] sm:$0xff]
  %v250 = vld [vmem:[%s1 + $0x708] sm:$0xff]
  %v251 = vld [vmem:[%s1 + $0x710] sm:$0xff]
  %v252 = vld [vmem:[%s1 + $0x718] sm:$0xff]
  %v253 = vld [vmem:[%s1 + $0x720] sm:$0xff]
  %v254 = vld [vmem:[%s1 + $0x728] sm:$0xff]
  %v255 = vld [vmem:[%s1 + $0x730] sm:$0xff]
  %v256 = vld [vmem:[%s1 + $0x738] sm:$0xff]
  %v257 = vld [vmem:[%s1 + $0x740] sm:$0xff]
  %v258 = vld [vmem:[%s1 + $0x748] sm:$0xff]
  %v259 = vld [vmem:[%s1 + $0x750] sm:$0xff]
  %v260 = vld [vmem:[%s1 + $0x758] sm:$0xff]
  %v261 = vld [vmem:[%s1 + $0x760] sm:$0xff]
  %v262 = vld [vmem:[%s1 + $0x768] sm:$0xff]
  %v263 = vld [vmem:[%s1 + $0x770] sm:$0xff]
  %v264 = vld [vmem:[%s1 + $0x778] sm:$0xff]
  %v265 = vld [vmem:[%s1 + $0x780] sm:$0xff]
  %v266 = vld [vmem:[%s1 + $0x788] sm:$0xff]
  %v267 = vld [vmem:[%s1 + $0x790] sm:$0xff]
  %v268 = vld [vmem:[%s1 + $0x798] sm:$0xff]
  %v269 = vld [vmem:[%s1 + $0x7a0] sm:$0xff]
  %v270 = vld [vmem:[%s1 + $0x7a8] sm:$0xff]
  %v271 = vld [vmem:[%s1 + $0x7b0] sm:$0xff]
  %v272 = vld [vmem:[%s1 + $0x7b8] sm:$0xff]
  %v273 = vld [vmem:[%s1 + $0x7c0] sm:$0xff]
  %v274 = vld [vmem:[%s1 + $0x7c8] sm:$0xff]
  %v275 = vld [vmem:[%s1 + $0x7d0] sm:$0xff]
  %v276 = vld [vmem:[%s1 + $0x7d8] sm:$0xff]
  %v277 = vld [vmem:[%s1 + $0x7e0] sm:$0xff]
  %v278 = vld [vmem:[%s1 + $0x7e8] sm:$0xff]
  %v279 = vld [vmem:[%s1 + $0x7f0] sm:$0xff]
  %v280 = vld [vmem:[%s1 + $0x7f8] sm:$0xff]
  %v281 = vld [vmem:[%s1 + $0x800] sm:$0xff]
  %v282 = vld [vmem:[%s1 + $0x808] sm:$0xff]
  %v283 = vld [vmem:[%s1 + $0x810] sm:$0xff]
  %v284 = vld [vmem:[%s1 + $0x818] sm:$0xff]
  %v285 = vld [vmem:[%s1 + $0x820] sm:$0xff]
  %v286 = vld [vmem:[%s1 + $0x828] sm:$0xff]
  %v287 = vld [vmem:[%s1 + $0x830] sm:$0xff]
  %v288 = vld [vmem:[%s1 + $0x838] sm:$0xff]
  %v289 = vld [vmem:[%s1 + $0x840] sm:$0xff]
  %v290 = vld [vmem:[%s1 + $0x848] sm:$0xff]
  %v291 = vld [vmem:[%s1 + $0x850] sm:$0xff]
  %v292 = vld [vmem:[%s1 + $0x858] sm:$0xff]
  %v293 = vld [vmem:[%s1 + $0x860] sm:$0xff]
  %v294 = vld [vmem:[%s1 + $0x868] sm:$0xff]
  %v295 = vld [vmem:[%s1 + $0x870] sm:$0xff]
  %v296 = vld [vmem:[%s1 + $0x878] sm:$0xff]
  %v297 = vld [vmem:[%s1 + $0x880] sm:$0xff]
  %v298 = vld [vmem:[%s1 + $0x888] sm:$0xff]
  %v299 = vld [vmem:[%s1 + $0x890] sm:$0xff]
  %v300 = vld [vmem:[%s1 + $0x898] sm:$0xff]
  %v301 = vld [vmem:[%s1 + $0x8a0] sm:$0xff]
  %v302 = vld [vmem:[%s1 + $0x8a8] sm:$0xff]
  %v303 = vld [vmem:[%s1 + $0x8b0] sm:$0xff]
  %v304 = vld [vmem:[%s1 + $0x8b8] sm:$0xff]
  %v305 = vld [vmem:[%s1 + $0x8c0] sm:$0xff]
  %v306 = vld [vmem:[%s1 + $0x8c8] sm:$0xff]
  %v307 = vld [vmem:[%s1 + $0x8d0] sm:$0xff]
  %v308 = vld [vmem:[%s1 + $0x8d8] sm:$0xff]
  %v309 = vld [vmem:[%s1 + $0x8e0] sm:$0xff]
  %v310 = vld [vmem:[%s1 + $0x8e8] sm:$0xff]
  %v311 = vld [vmem:[%s1 + $0x8f0] sm:$0xff]
  %v312 = vld [vmem:[%s1 + $0x8f8] sm:$0xff]
  %v313 = vld [vmem:[%s1 + $0x900] sm:$0xff]
  %v314 = vld [vmem:[%s1 + $0x908] sm:$0xff]
  %v315 = vld [vmem:[%s1 + $0x910] sm:$0xff]
  %v316 = vld [vmem:[%s1 + $0x918] sm:$0xff]
  %v317 = vld [vmem:[%s1 + $0x920] sm:$0xff]
  %v318 = vld [vmem:[%s1 + $0x928] sm:$0xff]
  %v319 = vld [vmem:[%s1 + $0x930] sm:$0xff]
  %v320 = vld [vmem:[%s1 + $0x938] sm:$0xff]
  %v321 = vld [vmem:[%s1 + $0x940] sm:$0xff]
  %v322 = vld [vmem:[%s1 + $0x948] sm:$0xff]
  %v323 = vld [vmem:[%s1 + $0x950] sm:$0xff]
  %v324 = vld [vmem:[%s1 + $0x958] sm:$0xff]
  %v325 = vld [vmem:[%s1 + $0x960] sm:$0xff]
  %v326 = vld [vmem:[%s1 + $0x968] sm:$0xff]
  %v327 = vld [vmem:[%s1 + $0x970] sm:$0xff]
  %v328 = vld [vmem:[%s1 + $0x978] sm:$0xff]
  %v329 = vld [vmem:[%s1 + $0x980] sm:$0xff]
  %v330 = vld [vmem:[%s1 + $0x988] sm:$0xff]
  %v331 = vld [vmem:[%s1 + $0x990] sm:$0xff]
  %v332 = vld [vmem:[%s1 + $0x998] sm:$0xff]
  %v333 = vld [vmem:[%s1 + $0x9a0] sm:$0xff]
  %v334 = vld [vmem:[%s1 + $0x9a8] sm:$0xff]
  %v335 = vld [vmem:[%s1 + $0x9b0] sm:$0xff]
  %v336 = vld [vmem:[%s1 + $0x9b8] sm:$0xff]
  %v337 = vld [vmem:[%s1 + $0x9c0] sm:$0xff]
  %v338 = vld [vmem:[%s1 + $0x9c8] sm:$0xff]
  %v339 = vld [vmem:[%s1 + $0x9d0] sm:$0xff]
  %v340 = vld [vmem:[%s1 + $0x9d8] sm:$0xff]
  %v341 = vld [vmem:[%s1 + $0x9e0] sm:$0xff]
  %v342 = vld [vmem:[%s1 + $0x9e8] sm:$0xff]
  %v343 = vld [vmem:[%s1 + $0x9f0] sm:$0xff]
  %v344 = vld [vmem:[%s1 + $0x9f8] sm:$0xff]
  %v345 = vld [vmem:[%s1 + $0xa00] sm:$0xff]
  %v346 = vld [vmem:[%s1 + $0xa08] sm:$0xff]
  %v347 = vld [vmem:[%s1 + $0xa10] sm:$0xff]
  %v348 = vld [vmem:[%s1 + $0xa18] sm:$0xff]
  %v349 = vld [vmem:[%s1 + $0xa20] sm:$0xff]
  %v350 = vld [vmem:[%s1 + $0xa28] sm:$0xff]
  %v351 = vld [vmem:[%s1 + $0xa30] sm:$0xff]
  %v352 = vld [vmem:[%s1 + $0xa38] sm:$0xff]
  %v353 = vld [vmem:[%s1 + $0xa40] sm:$0xff]
  %v354 = vld [vmem:[%s1 + $0xa48] sm:$0xff]
  %v355 = vld [vmem:[%s1 + $0xa50] sm:$0xff]
  %v356 = vld [vmem:[%s1 + $0xa58] sm:$0xff]
  %v357 = vld [vmem:[%s1 + $0xa60] sm:$0xff]
  %v358 = vld [vmem:[%s1 + $0xa68] sm:$0xff]
  %v359 = vld [vmem:[%s1 + $0xa70] sm:$0xff]
  %v360 = vld [vmem:[%s1 + $0xa78] sm:$0xff]
  %v361 = vld [vmem:[%s1 + $0xa80] sm:$0xff]
  %v362 = vld [vmem:[%s1 + $0xa88] sm:$0xff]
  %v363 = vld [vmem:[%s1 + $0xa90] sm:$0xff]
  %v364 = vld [vmem:[%s1 + $0xa98] sm:$0xff]
  %v365 = vld [vmem:[%s1 + $0xaa0] sm:$0xff]
  %v366 = vld [vmem:[%s1 + $0xaa8] sm:$0xff]
  %v367 = vld [vmem:[%s1 + $0xab0] sm:$0xff]
  %v368 = vld [vmem:[%s1 + $0xab8] sm:$0xff]
  %v369 = vld [vmem:[%s1 + $0xac0] sm:$0xff]
  %v370 = vld [vmem:[%s1 + $0xac8] sm:$0xff]
  %v371 = vld [vmem:[%s1 + $0xad0] sm:$0xff]
  %v372 = vld [vmem:[%s1 + $0xad8] sm:$0xff]
  %v373 = vld [vmem:[%s1 + $0xae0] sm:$0xff]
  %v374 = vld [vmem:[%s1 + $0xae8] sm:$0xff]
  %v375 = vld [vmem:[%s1 + $0xaf0] sm:$0xff]
  %v376 = vld [vmem:[%s1 + $0xaf8] sm:$0xff]
  %v377 = vld [vmem:[%s1 + $0xb00] sm:$0xff]
  %v378 = vld [vmem:[%s1 + $0xb08] sm:$0xff]
  %v379 = vld [vmem:[%s1 + $0xb10] sm:$0xff]
  %v380 = vld [vmem:[%s1 + $0xb18] sm:$0xff]
  %v381 = vld [vmem:[%s1 + $0xb20] sm:$0xff]
  %v382 = vld [vmem:[%s1 + $0xb28] sm:$0xff]
  %v383 = vld [vmem:[%s1 + $0xb30] sm:$0xff]
  %v384 = vld [vmem:[%s1 + $0xb38] sm:$0xff]
  %v385 = vld [vmem:[%s1 + $0xb40] sm:$0xff]
  %v386 = vld [vmem:[%s1 + $0xb48] sm:$0xff]
  %v387 = vld [vmem:[%s1 + $0xb50] sm:$0xff]
  %v388 = vld [vmem:[%s1 + $0xb58] sm:$0xff]
  %v389 = vld [vmem:[%s1 + $0xb60] sm:$0xff]
  %v390 = vld [vmem:[%s1 + $0xb68] sm:$0xff]
  %v391 = vld [vmem:[%s1 + $0xb70] sm:$0xff]
  %v392 = vld [vmem:[%s1 + $0xb78] sm:$0xff]
  %v393 = vld [vmem:[%s1 + $0xb80] sm:$0xff]
  %v394 = vld [vmem:[%s1 + $0xb88] sm:$0xff]
  %v395 = vld [vmem:[%s1 + $0xb90] sm:$0xff]
  %v396 = vld [vmem:[%s1 + $0xb98] sm:$0xff]
  %v397 = vld [vmem:[%s1 + $0xba0] sm:$0xff]
  %v398 = vld [vmem:[%s1 + $0xba8] sm:$0xff]
  %v399 = vld [vmem:[%s1 + $0xbb0] sm:$0xff]
  %v400 = vld [vmem:[%s1 + $0xbb8] sm:$0xff]
  %v401 = vld [vmem:[%s1 + $0xbc0] sm:$0xff]
  %v402 = vld [vmem:[%s1 + $0xbc8] sm:$0xff]
  %v403 = vld [vmem:[%s1 + $0xbd0] sm:$0xff]
  %v404 = vld [vmem:[%s1 + $0xbd8] sm:$0xff]
  %v405 = vld [vmem:[%s1 + $0xbe0] sm:$0xff]
  %v406 = vld [vmem:[%s1 + $0xbe8] sm:$0xff]
  %v407 = vld [vmem:[%s1 + $0xbf0] sm:$0xff]
  %v408 = vld [vmem:[%s1 + $0xbf8] sm:$0xff]
  %v409 = vld [vmem:[%s1 + $0xc00] sm:$0xff]
  %v410 = vld [vmem:[%s1 + $0xc08] sm:$0xff]
  %v411 = vld [vmem:[%s1 + $0xc10] sm:$0xff]
  %v412 = vld [vmem:[%s1 + $0xc18] sm:$0xff]
  %v413 = vld [vmem:[%s1 + $0xc20] sm:$0xff]
  %v414 = vld [vmem:[%s1 + $0xc28] sm:$0xff]
  %v415 = vld [vmem:[%s1 + $0xc30] sm:$0xff]
  %v416 = vld [vmem:[%s1 + $0xc38] sm:$0xff]
  %v417 = vld [vmem:[%s1 + $0xc40] sm:$0xff]
  %v418 = vld [vmem:[%s1 + $0xc48] sm:$0xff]
  %v419 = vld [vmem:[%s1 + $0xc50] sm:$0xff]
  %v420 = vld [vmem:[%s1 + $0xc58] sm:$0xff]
  %v421 = vld [vmem:[%s1 + $0xc60] sm:$0xff]
  %v422 = vld [vmem:[%s1 + $0xc68] sm:$0xff]
  %v423 = vld [vmem:[%s1 + $0xc70] sm:$0xff]
  %v424 = vld [vmem:[%s1 + $0xc78] sm:$0xff]
  %v425 = vld [vmem:[%s1 + $0xc80] sm:$0xff]
  %v426 = vld [vmem:[%s1 + $0xc88] sm:$0xff]
  %v427 = vld [vmem:[%s1 + $0xc90] sm:$0xff]
  %v428 = vld [vmem:[%s1 + $0xc98] sm:$0xff]
  %v429 = vld [vmem:[%s1 + $0xca0] sm:$0xff]
  %v430 = vld [vmem:[%s1 + $0xca8] sm:$0xff]
  %v431 = vld [vmem:[%s1 + $0xcb0] sm:$0xff]
  %v432 = vld [vmem:[%s1 + $0xcb8] sm:$0xff]
  %v433 = vld [vmem:[%s1 + $0xcc0] sm:$0xff]
  %v434 = vld [vmem:[%s1 + $0xcc8] sm:$0xff]
  %v435 = vld [vmem:[%s1 + $0xcd0] sm:$0xff]
  %v436 = vld [vmem:[%s1 + $0xcd8] sm:$0xff]
  %v437 = vld [vmem:[%s1 + $0xce0] sm:$0xff]
  %v438 = vld [vmem:[%s1 + $0xce8] sm:$0xff]
  %v439 = vld [vmem:[%s1 + $0xcf0] sm:$0xff]
  %v440 = vld [vmem:[%s1 + $0xcf8] sm:$0xff]
  %v441 = vld [vmem:[%s1 + $0xd00] sm:$0xff]
  %v442 = vld [vmem:[%s1 + $0xd08] sm:$0xff]
  %v443 = vld [vmem:[%s1 + $0xd10] sm:$0xff]
  %v444 = vld [vmem:[%s1 + $0xd18] sm:$0xff]
  %v445 = vld [vmem:[%s1 + $0xd20] sm:$0xff]
  %v446 = vld [vmem:[%s1 + $0xd28] sm:$0xff]
  %v447 = vld [vmem:[%s1 + $0xd30] sm:$0xff]
  %v448 = vld [vmem:[%s1 + $0xd38] sm:$0xff]
  %v449 = vld [vmem:[%s1 + $0xd40] sm:$0xff]
  %v450 = vld [vmem:[%s1 + $0xd48] sm:$0xff]
  %v451 = vld [vmem:[%s1 + $0xd50] sm:$0xff]
  %v452 = vld [vmem:[%s1 + $0xd58] sm:$0xff]
  %v453 = vld [vmem:[%s1 + $0xd60] sm:$0xff]
  %v454 = vld [vmem:[%s1 + $0xd68] sm:$0xff]
  %v455 = vld [vmem:[%s1 + $0xd70] sm:$0xff]
  %v456 = vld [vmem:[%s1 + $0xd78] sm:$0xff]
  %v457 = vld [vmem:[%s1 + $0xd80] sm:$0xff]
  %v458 = vld [vmem:[%s1 + $0xd88] sm:$0xff]
  %v459 = vld [vmem:[%s1 + $0xd90] sm:$0xff]
  %v460 = vld [vmem:[%s1 + $0xd98] sm:$0xff]
  %v461 = vld [vmem:[%s1 + $0xda0] sm:$0xff]
  %v462 = vld [vmem:[%s1 + $0xda8] sm:$0xff]
  %v463 = vld [vmem:[%s1 + $0xdb0] sm:$0xff]
  %v464 = vld [vmem:[%s1 + $0xdb8] sm:$0xff]
  %v465 = vld [vmem:[%s1 + $0xdc0] sm:$0xff]
  %v466 = vld [vmem:[%s1 + $0xdc8] sm:$0xff]
  %v467 = vld [vmem:[%s1 + $0xdd0] sm:$0xff]
  %v468 = vld [vmem:[%s1 + $0xdd8] sm:$0xff]
  %v469 = vld [vmem:[%s1 + $0xde0] sm:$0xff]
  %v470 = vld [vmem:[%s1 + $0xde8] sm:$0xff]
  %v471 = vld [vmem:[%s1 + $0xdf0] sm:$0xff]
  %v472 = vld [vmem:[%s1 + $0xdf8] sm:$0xff]
  %v473 = vld [vmem:[%s1 + $0xe00] sm:$0xff]
  %v474 = vld [vmem:[%s1 + $0xe08] sm:$0xff]
  %v475 = vld [vmem:[%s1 + $0xe10] sm:$0xff]
  %v476 = vld [vmem:[%s1 + $0xe18] sm:$0xff]
  %v477 = vld [vmem:[%s1 + $0xe20] sm:$0xff]
  %v478 = vld [vmem:[%s1 + $0xe28] sm:$0xff]
  %v479 = vld [vmem:[%s1 + $0xe30] sm:$0xff]
  %v480 = vld [vmem:[%s1 + $0xe38] sm:$0xff]
  %v481 = vld [vmem:[%s1 + $0xe40] sm:$0xff]
  %v482 = vld [vmem:[%s1 + $0xe48] sm:$0xff]
  %v483 = vld [vmem:[%s1 + $0xe50] sm:$0xff]
  %v484 = vld [vmem:[%s1 + $0xe58] sm:$0xff]
  %v485 = vld [vmem:[%s1 + $0xe60] sm:$0xff]
  %v486 = vld [vmem:[%s1 + $0xe68] sm:$0xff]
  %v487 = vld [vmem:[%s1 + $0xe70] sm:$0xff]
  %v488 = vld [vmem:[%s1 + $0xe78] sm:$0xff]
  %v489 = vld [vmem:[%s1 + $0xe80] sm:$0xff]
  %v490 = vld [vmem:[%s1 + $0xe88] sm:$0xff]
  %v491 = vld [vmem:[%s1 + $0xe90] sm:$0xff]
  %v492 = vld [vmem:[%s1 + $0xe98] sm:$0xff]
  %v493 = vld [vmem:[%s1 + $0xea0] sm:$0xff]
  %v494 = vld [vmem:[%s1 + $0xea8] sm:$0xff]
  %v495 = vld [vmem:[%s1 + $0xeb0] sm:$0xff]
  %v496 = vld [vmem:[%s1 + $0xeb8] sm:$0xff]
  %v497 = vld [vmem:[%s1 + $0xec0] sm:$0xff]
  %v498 = vld [vmem:[%s1 + $0xec8] sm:$0xff]
  %v499 = vld [vmem:[%s1 + $0xed0] sm:$0xff]
  %v500 = vld [vmem:[%s1 + $0xed8] sm:$0xff]
  %v501 = vld [vmem:[%s1 + $0xee0] sm:$0xff]
  %v502 = vld [vmem:[%s1 + $0xee8] sm:$0xff]
  %v503 = vld [vmem:[%s1 + $0xef0] sm:$0xff]
  %v504 = vld [vmem:[%s1 + $0xef8] sm:$0xff]
  %v505 = vld [vmem:[%s1 + $0xf00] sm:$0xff]
  %v506 = vld [vmem:[%s1 + $0xf08] sm:$0xff]
  %v507 = vld [vmem:[%s1 + $0xf10] sm:$0xff]
  %v508 = vld [vmem:[%s1 + $0xf18] sm:$0xff]
  %v509 = vld [vmem:[%s1 + $0xf20] sm:$0xff]
  %v510 = vld [vmem:[%s1 + $0xf28] sm:$0xff]
  %v511 = vld [vmem:[%s1 + $0xf30] sm:$0xff]
  %v512 = vld [vmem:[%s1 + $0xf38] sm:$0xff]
  %v513 = vld [vmem:[%s1 + $0xf40] sm:$0xff]
  %v514 = vld [vmem:[%s1 + $0xf48] sm:$0xff]
  %v515 = vld [vmem:[%s1 + $0xf50] sm:$0xff]
  %v516 = vld [vmem:[%s1 + $0xf58] sm:$0xff]
  %v517 = vld [vmem:[%s1 + $0xf60] sm:$0xff]
  %v518 = vld [vmem:[%s1 + $0xf68] sm:$0xff]
  %v519 = vld [vmem:[%s1 + $0xf70] sm:$0xff]
  %v520 = vld [vmem:[%s1 + $0xf78] sm:$0xff]
  %v521 = vld [vmem:[%s1 + $0xf80] sm:$0xff]
  %v522 = vld [vmem:[%s1 + $0xf88] sm:$0xff]
  %v523 = vld [vmem:[%s1 + $0xf90] sm:$0xff]
  %v524 = vld [vmem:[%s1 + $0xf98] sm:$0xff]
  %v525 = vld [vmem:[%s1 + $0xfa0] sm:$0xff]
  %v526 = vld [vmem:[%s1 + $0xfa8] sm:$0xff]
  %v527 = vld [vmem:[%s1 + $0xfb0] sm:$0xff]
  %v528 = vld [vmem:[%s1 + $0xfb8] sm:$0xff]
  %v529 = vld [vmem:[%s1 + $0xfc0] sm:$0xff]
  %v530 = vld [vmem:[%s1 + $0xfc8] sm:$0xff]
  %v531 = vld [vmem:[%s1 + $0xfd0] sm:$0xff]
  %v532 = vld [vmem:[%s1 + $0xfd8] sm:$0xff]
  %v533 = vld [vmem:[%s1 + $0xfe0] sm:$0xff]
  %v534 = vld [vmem:[%s1 + $0xfe8] sm:$0xff]
  %v535 = vld [vmem:[%s1 + $0xff0] sm:$0xff]
  %v536 = vld [vmem:[%s1 + $0xff8] sm:$0xff]
  %v537 = vld [vmem:[%s1 + $0x1000] sm:$0xff]
  %v538 = vld [vmem:[%s1 + $0x1008] sm:$0xff]
  %v539 = vld [vmem:[%s1 + $0x1010] sm:$0xff]
  %v540 = vld [vmem:[%s1 + $0x1018] sm:$0xff]
  %v541 = vld [vmem:[%s1 + $0x1020] sm:$0xff]
  %v542 = vld [vmem:[%s1 + $0x1028] sm:$0xff]
  %v543 = vld [vmem:[%s1 + $0x1030] sm:$0xff]
  %v544 = vld [vmem:[%s1 + $0x1038] sm:$0xff]
  %v545 = vld [vmem:[%s1 + $0x1040] sm:$0xff]
  %v546 = vld [vmem:[%s1 + $0x1048] sm:$0xff]
  %v547 = vld [vmem:[%s1 + $0x1050] sm:$0xff]
  %v548 = vld [vmem:[%s1 + $0x1058] sm:$0xff]
  %v549 = vld [vmem:[%s1 + $0x1060] sm:$0xff]
  %v550 = vld [vmem:[%s1 + $0x1068] sm:$0xff]
  %v551 = vld [vmem:[%s1 + $0x1070] sm:$0xff]
  %v552 = vld [vmem:[%s1 + $0x1078] sm:$0xff]
  %v553 = vld [vmem:[%s1 + $0x1080] sm:$0xff]
  %v554 = vld [vmem:[%s1 + $0x1088] sm:$0xff]
  %v555 = vld [vmem:[%s1 + $0x1090] sm:$0xff]
  %v556 = vld [vmem:[%s1 + $0x1098] sm:$0xff]
  %v557 = vld [vmem:[%s1 + $0x10a0] sm:$0xff]
  %v558 = vld [vmem:[%s1 + $0x10a8] sm:$0xff]
  %v559 = vld [vmem:[%s1 + $0x10b0] sm:$0xff]
  %v560 = vld [vmem:[%s1 + $0x10b8] sm:$0xff]
  %v561 = vld [vmem:[%s1 + $0x10c0] sm:$0xff]
  %v562 = vld [vmem:[%s1 + $0x10c8] sm:$0xff]
  %v563 = vld [vmem:[%s1 + $0x10d0] sm:$0xff]
  %v564 = vld [vmem:[%s1 + $0x10d8] sm:$0xff]
  %v565 = vld [vmem:[%s1 + $0x10e0] sm:$0xff]
  %v566 = vld [vmem:[%s1 + $0x10e8] sm:$0xff]
  %v567 = vld [vmem:[%s1 + $0x10f0] sm:$0xff]
  %v568 = vld [vmem:[%s1 + $0x10f8] sm:$0xff]
  %v569 = vld [vmem:[%s1 + $0x1100] sm:$0xff]
  %v570 = vld [vmem:[%s1 + $0x1108] sm:$0xff]
  %v571 = vld [vmem:[%s1 + $0x1110] sm:$0xff]
  %v572 = vld [vmem:[%s1 + $0x1118] sm:$0xff]
  %v573 = vld [vmem:[%s1 + $0x1120] sm:$0xff]
  %v574 = vld [vmem:[%s1 + $0x1128] sm:$0xff]
  %v575 = vld [vmem:[%s1 + $0x1130] sm:$0xff]
  %v576 = vld [vmem:[%s1 + $0x1138] sm:$0xff]
  %v577 = vld [vmem:[%s1 + $0x1140] sm:$0xff]
  %v578 = vld [vmem:[%s1 + $0x1148] sm:$0xff]
  %v579 = vld [vmem:[%s1 + $0x1150] sm:$0xff]
  %v580 = vld [vmem:[%s1 + $0x1158] sm:$0xff]
  %v581 = vld [vmem:[%s1 + $0x1160] sm:$0xff]
  %v582 = vld [vmem:[%s1 + $0x1168] sm:$0xff]
  %v583 = vld [vmem:[%s1 + $0x1170] sm:$0xff]
  %v584 = vld [vmem:[%s1 + $0x1178] sm:$0xff]
  %v585 = vld [vmem:[%s1 + $0x1180] sm:$0xff]
  %v586 = vld [vmem:[%s1 + $0x1188] sm:$0xff]
  %v587 = vld [vmem:[%s1 + $0x1190] sm:$0xff]
  %v588 = vld [vmem:[%s1 + $0x1198] sm:$0xff]
  %v589 = vld [vmem:[%s1 + $0x11a0] sm:$0xff]
  %v590 = vld [vmem:[%s1 + $0x11a8] sm:$0xff]
  %v591 = vld [vmem:[%s1 + $0x11b0] sm:$0xff]
  %v592 = vld [vmem:[%s1 + $0x11b8] sm:$0xff]
  %v593 = vld [vmem:[%s1 + $0x11c0] sm:$0xff]
  %v594 = vld [vmem:[%s1 + $0x11c8] sm:$0xff]
  %v595 = vld [vmem:[%s1 + $0x11d0] sm:$0xff]
  %v596 = vld [vmem:[%s1 + $0x11d8] sm:$0xff]
  %v597 = vld [vmem:[%s1 + $0x11e0] sm:$0xff]
  %v598 = vld [vmem:[%s1 + $0x11e8] sm:$0xff]
  %v599 = vld [vmem:[%s1 + $0x11f0] sm:$0xff]
  %v600 = vld [vmem:[%s1 + $0x11f8] sm:$0xff]
  %v601 = vld [vmem:[%s1 + $0x1200] sm:$0xff]
  %v602 = vld [vmem:[%s1 + $0x1208] sm:$0xff]
  %v603 = vld [vmem:[%s1 + $0x1210] sm:$0xff]
  %v604 = vld [vmem:[%s1 + $0x1218] sm:$0xff]
  %v605 = vld [vmem:[%s1 + $0x1220] sm:$0xff]
  %v606 = vld [vmem:[%s1 + $0x1228] sm:$0xff]
  %v607 = vld [vmem:[%s1 + $0x1230] sm:$0xff]
  %v608 = vld [vmem:[%s1 + $0x1238] sm:$0xff]
  %v609 = vld [vmem:[%s1 + $0x1240] sm:$0xff]
  %v610 = vld [vmem:[%s1 + $0x1248] sm:$0xff]
  %v611 = vld [vmem:[%s1 + $0x1250] sm:$0xff]
  %v612 = vld [vmem:[%s1 + $0x1258] sm:$0xff]
  %v613 = vld [vmem:[%s1 + $0x1260] sm:$0xff]
  %v614 = vld [vmem:[%s1 + $0x1268] sm:$0xff]
  %v615 = vld [vmem:[%s1 + $0x1270] sm:$0xff]
  %v616 = vld [vmem:[%s1 + $0x1278] sm:$0xff]
  %v617 = vld [vmem:[%s1 + $0x1280] sm:$0xff]
  %v618 = vld [vmem:[%s1 + $0x1288] sm:$0xff]
  %v619 = vld [vmem:[%s1 + $0x1290] sm:$0xff]
  %v620 = vld [vmem:[%s1 + $0x1298] sm:$0xff]
  %v621 = vld [vmem:[%s1 + $0x12a0] sm:$0xff]
  %v622 = vld [vmem:[%s1 + $0x12a8] sm:$0xff]
  %v623 = vld [vmem:[%s1 + $0x12b0] sm:$0xff]
  %v624 = vld [vmem:[%s1 + $0x12b8] sm:$0xff]
  %v625 = vld [vmem:[%s1 + $0x12c0] sm:$0xff]
  %v626 = vld [vmem:[%s1 + $0x12c8] sm:$0xff]
  %v627 = vld [vmem:[%s1 + $0x12d0] sm:$0xff]
  %v628 = vld [vmem:[%s1 + $0x12d8] sm:$0xff]
  %v629 = vld [vmem:[%s1 + $0x12e0] sm:$0xff]
  %v630 = vld [vmem:[%s1 + $0x12e8] sm:$0xff]
  %v631 = vld [vmem:[%s1 + $0x12f0] sm:$0xff]
  %v632 = vld [vmem:[%s1 + $0x12f8] sm:$0xff]
  %v633 = vld [vmem:[%s1 + $0x1300] sm:$0xff]
  %v634 = vld [vmem:[%s1 + $0x1308] sm:$0xff]
  %v635 = vld [vmem:[%s1 + $0x1310] sm:$0xff]
  %v636 = vld [vmem:[%s1 + $0x1318] sm:$0xff]
  %v637 = vld [vmem:[%s1 + $0x1320] sm:$0xff]
  %v638 = vld [vmem:[%s1 + $0x1328] sm:$0xff]
  %v639 = vld [vmem:[%s1 + $0x1330] sm:$0xff]
  %v640 = vld [vmem:[%s1 + $0x1338] sm:$0xff]
  %v641 = vld [vmem:[%s1 + $0x1340] sm:$0xff]
  %v642 = vld [vmem:[%s1 + $0x1348] sm:$0xff]
  %v643 = vld [vmem:[%s1 + $0x1350] sm:$0xff]
  %v644 = vld [vmem:[%s1 + $0x1358] sm:$0xff]
  %v645 = vld [vmem:[%s1 + $0x1360] sm:$0xff]
  %v646 = vld [vmem:[%s1 + $0x1368] sm:$0xff]
  %v647 = vld [vmem:[%s1 + $0x1370] sm:$0xff]
  %v648 = vld [vmem:[%s1 + $0x1378] sm:$0xff]
  %v649 = vld [vmem:[%s1 + $0x1380] sm:$0xff]
  %v650 = vld [vmem:[%s1 + $0x1388] sm:$0xff]
  %v651 = vld [vmem:[%s1 + $0x1390] sm:$0xff]
  %v652 = vld [vmem:[%s1 + $0x1398] sm:$0xff]
  %v653 = vld [vmem:[%s1 + $0x13a0] sm:$0xff]
  %v654 = vld [vmem:[%s1 + $0x13a8] sm:$0xff]
  %v655 = vld [vmem:[%s1 + $0x13b0] sm:$0xff]
  %v656 = vld [vmem:[%s1 + $0x13b8] sm:$0xff]
  %v657 = vld [vmem:[%s1 + $0x13c0] sm:$0xff]
  %v658 = vld [vmem:[%s1 + $0x13c8] sm:$0xff]
  %v659 = vld [vmem:[%s1 + $0x13d0] sm:$0xff]
  %v660 = vld [vmem:[%s1 + $0x13d8] sm:$0xff]
  %v661 = vld [vmem:[%s1 + $0x13e0] sm:$0xff]
  %v662 = vld [vmem:[%s1 + $0x13e8] sm:$0xff]
  %v663 = vld [vmem:[%s1 + $0x13f0] sm:$0xff]
  %v664 = vld [vmem:[%s1 + $0x13f8] sm:$0xff]
  %v665 = vld [vmem:[%s1 + $0x1400] sm:$0xff]
  %v666 = vld [vmem:[%s1 + $0x1408] sm:$0xff]
  %v667 = vld [vmem:[%s1 + $0x1410] sm:$0xff]
  %v668 = vld [vmem:[%s1 + $0x1418] sm:$0xff]
  %v669 = vld [vmem:[%s1 + $0x1420] sm:$0xff]
  %v670 = vld [vmem:[%s1 + $0x1428] sm:$0xff]
  %v671 = vld [vmem:[%s1 + $0x1430] sm:$0xff]
  %v672 = vld [vmem:[%s1 + $0x1438] sm:$0xff]
  %v673 = vld [vmem:[%s1 + $0x1440] sm:$0xff]
  %v674 = vld [vmem:[%s1 + $0x1448] sm:$0xff]
  %v675 = vld [vmem:[%s1 + $0x1450] sm:$0xff]
  %v676 = vld [vmem:[%s1 + $0x1458] sm:$0xff]
  %v677 = vld [vmem:[%s1 + $0x1460] sm:$0xff]
  %v678 = vld [vmem:[%s1 + $0x1468] sm:$0xff]
  %v679 = vld [vmem:[%s1 + $0x1470] sm:$0xff]
  %v680 = vld [vmem:[%s1 + $0x1478] sm:$0xff]
  %v681 = vld [vmem:[%s1 + $0x1480] sm:$0xff]
  %v682 = vld [vmem:[%s1 + $0x1488] sm:$0xff]
  %v683 = vld [vmem:[%s1 + $0x1490] sm:$0xff]
  %v684 = vld [vmem:[%s1 + $0x1498] sm:$0xff]
  %v685 = vld [vmem:[%s1 + $0x14a0] sm:$0xff]
  %v686 = vld [vmem:[%s1 + $0x14a8] sm:$0xff]
  %v687 = vld [vmem:[%s1 + $0x14b0] sm:$0xff]
  %v688 = vld [vmem:[%s1 + $0x14b8] sm:$0xff]
  %v689 = vld [vmem:[%s1 + $0x14c0] sm:$0xff]
  %v690 = vld [vmem:[%s1 + $0x14c8] sm:$0xff]
  %v691 = vld [vmem:[%s1 + $0x14d0] sm:$0xff]
  %v692 = vld [vmem:[%s1 + $0x14d8] sm:$0xff]
  %v693 = vld [vmem:[%s1 + $0x14e0] sm:$0xff]
  %v694 = vld [vmem:[%s1 + $0x14e8] sm:$0xff]
  %v695 = vld [vmem:[%s1 + $0x14f0] sm:$0xff]
  %v696 = vld [vmem:[%s1 + $0x14f8] sm:$0xff]
  %v697 = vld [vmem:[%s1 + $0x1500] sm:$0xff]
  %v698 = vld [vmem:[%s1 + $0x1508] sm:$0xff]
  %v699 = vld [vmem:[%s1 + $0x1510] sm:$0xff]
  %v700 = vld [vmem:[%s1 + $0x1518] sm:$0xff]
  %v701 = vld [vmem:[%s1 + $0x1520] sm:$0xff]
  %v702 = vld [vmem:[%s1 + $0x1528] sm:$0xff]
  %v703 = vld [vmem:[%s1 + $0x1530] sm:$0xff]
  %v704 = vld [vmem:[%s1 + $0x1538] sm:$0xff]
  %v705 = vld [vmem:[%s1 + $0x1540] sm:$0xff]
  %v706 = vld [vmem:[%s1 + $0x1548] sm:$0xff]
  %v707 = vld [vmem:[%s1 + $0x1550] sm:$0xff]
  %v708 = vld [vmem:[%s1 + $0x1558] sm:$0xff]
  %v709 = vld [vmem:[%s1 + $0x1560] sm:$0xff]
  %v710 = vld [vmem:[%s1 + $0x1568] sm:$0xff]
  %v711 = vld [vmem:[%s1 + $0x1570] sm:$0xff]
  %v712 = vld [vmem:[%s1 + $0x1578] sm:$0xff]
  %v713 = vld [vmem:[%s1 + $0x1580] sm:$0xff]
  %v714 = vld [vmem:[%s1 + $0x1588] sm:$0xff]
  %v715 = vld [vmem:[%s1 + $0x1590] sm:$0xff]
  %v716 = vld [vmem:[%s1 + $0x1598] sm:$0xff]
  %v717 = vld [vmem:[%s1 + $0x15a0] sm:$0xff]
  %v718 = vld [vmem:[%s1 + $0x15a8] sm:$0xff]
  %v719 = vld [vmem:[%s1 + $0x15b0] sm:$0xff]
  %v720 = vld [vmem:[%s1 + $0x15b8] sm:$0xff]
  %v721 = vld [vmem:[%s1 + $0x15c0] sm:$0xff]
  %v722 = vld [vmem:[%s1 + $0x15c8] sm:$0xff]
  %v723 = vld [vmem:[%s1 + $0x15d0] sm:$0xff]
  %v724 = vld [vmem:[%s1 + $0x15d8] sm:$0xff]
  %v725 = vld [vmem:[%s1 + $0x15e0] sm:$0xff]
  %v726 = vld [vmem:[%s1 + $0x15e8] sm:$0xff]
  %v727 = vld [vmem:[%s1 + $0x15f0] sm:$0xff]
  %v728 = vld [vmem:[%s1 + $0x15f8] sm:$0xff]
  %v729 = vld [vmem:[%s1 + $0x1600] sm:$0xff]
  %v730 = vld [vmem:[%s1 + $0x1608] sm:$0xff]
  %v731 = vld [vmem:[%s1 + $0x1610] sm:$0xff]
  %v732 = vld [vmem:[%s1 + $0x1618] sm:$0xff]
  %v733 = vld [vmem:[%s1 + $0x1620] sm:$0xff]
  %v734 = vld [vmem:[%s1 + $0x1628] sm:$0xff]
  %v735 = vld [vmem:[%s1 + $0x1630] sm:$0xff]
  %v736 = vld [vmem:[%s1 + $0x1638] sm:$0xff]
  %v737 = vld [vmem:[%s1 + $0x1640] sm:$0xff]
  %v738 = vld [vmem:[%s1 + $0x1648] sm:$0xff]
  %v739 = vld [vmem:[%s1 + $0x1650] sm:$0xff]
  %v740 = vld [vmem:[%s1 + $0x1658] sm:$0xff]
  %v741 = vld [vmem:[%s1 + $0x1660] sm:$0xff]
  %v742 = vld [vmem:[%s1 + $0x1668] sm:$0xff]
  %v743 = vld [vmem:[%s1 + $0x1670] sm:$0xff]
  %v744 = vld [vmem:[%s1 + $0x1678] sm:$0xff]
  %v745 = vld [vmem:[%s1 + $0x1680] sm:$0xff]
  %v746 = vld [vmem:[%s1 + $0x1688] sm:$0xff]
  %v747 = vld [vmem:[%s1 + $0x1690] sm:$0xff]
  %v748 = vld [vmem:[%s1 + $0x1698] sm:$0xff]
  %v749 = vld [vmem:[%s1 + $0x16a0] sm:$0xff]
  %v750 = vld [vmem:[%s1 + $0x16a8] sm:$0xff]
  %v751 = vld [vmem:[%s1 + $0x16b0] sm:$0xff]
  %v752 = vld [vmem:[%s1 + $0x16b8] sm:$0xff]
  %v753 = vld [vmem:[%s1 + $0x16c0] sm:$0xff]
  %v754 = vld [vmem:[%s1 + $0x16c8] sm:$0xff]
  %v755 = vld [vmem:[%s1 + $0x16d0] sm:$0xff]
  %v756 = vld [vmem:[%s1 + $0x16d8] sm:$0xff]
  %v757 = vld [vmem:[%s1 + $0x16e0] sm:$0xff]
  %v758 = vld [vmem:[%s1 + $0x16e8] sm:$0xff]
  %v759 = vld [vmem:[%s1 + $0x16f0] sm:$0xff]
  %v760 = vld [vmem:[%s1 + $0x16f8] sm:$0xff]
  %v761 = vld [vmem:[%s1 + $0x1700] sm:$0xff]
  %v762 = vld [vmem:[%s1 + $0x1708] sm:$0xff]
  %v763 = vld [vmem:[%s1 + $0x1710] sm:$0xff]
  %v764 = vld [vmem:[%s1 + $0x1718] sm:$0xff]
  %v765 = vld [vmem:[%s1 + $0x1720] sm:$0xff]
  %v766 = vld [vmem:[%s1 + $0x1728] sm:$0xff]
  %v767 = vld [vmem:[%s1 + $0x1730] sm:$0xff]
  %v768 = vld [vmem:[%s1 + $0x1738] sm:$0xff]
  %v769 = vld [vmem:[%s1 + $0x1740] sm:$0xff]
  %v770 = vld [vmem:[%s1 + $0x1748] sm:$0xff]
  %v771 = vld [vmem:[%s1 + $0x1750] sm:$0xff]
  %v772 = vld [vmem:[%s1 + $0x1758] sm:$0xff]
  %v773 = vld [vmem:[%s1 + $0x1760] sm:$0xff]
  %v774 = vld [vmem:[%s1 + $0x1768] sm:$0xff]
  %v775 = vld [vmem:[%s1 + $0x1770] sm:$0xff]
  %v776 = vld [vmem:[%s1 + $0x1778] sm:$0xff]
  %v777 = vld [vmem:[%s1 + $0x1780] sm:$0xff]
  %v778 = vld [vmem:[%s1 + $0x1788] sm:$0xff]
  %v779 = vld [vmem:[%s1 + $0x1790] sm:$0xff]
  %v780 = vld [vmem:[%s1 + $0x1798] sm:$0xff]
  %v781 = vld [vmem:[%s1 + $0x17a0] sm:$0xff]
  %v782 = vld [vmem:[%s1 + $0x17a8] sm:$0xff]
  %v783 = vld [vmem:[%s1 + $0x17b0] sm:$0xff]
  %v784 = vld [vmem:[%s1 + $0x17b8] sm:$0xff]
  %v785 = vld [vmem:[%s1 + $0x17c0] sm:$0xff]
  %v786 = vld [vmem:[%s1 + $0x17c8] sm:$0xff]
  %v787 = vld [vmem:[%s1 + $0x17d0] sm:$0xff]
  %v788 = vld [vmem:[%s1 + $0x17d8] sm:$0xff]
  %v789 = vld [vmem:[%s1 + $0x17e0] sm:$0xff]
  %v790 = vld [vmem:[%s1 + $0x17e8] sm:$0xff]
  %v791 = vld [vmem:[%s1 + $0x17f0] sm:$0xff]
  %v792 = vld [vmem:[%s1 + $0x17f8] sm:$0xff]
  %v793 = vld [vmem:[%s1 + $0x1800] sm:$0xff]
  %v794 = vld [vmem:[%s1 + $0x1808] sm:$0xff]
  %v795 = vld [vmem:[%s1 + $0x1810] sm:$0xff]
  %v796 = vld [vmem:[%s1 + $0x1818] sm:$0xff]
  %v797 = vld [vmem:[%s1 + $0x1820] sm:$0xff]
  %v798 = vld [vmem:[%s1 + $0x1828] sm:$0xff]
  %v799 = vld [vmem:[%s1 + $0x1830] sm:$0xff]
  %v800 = vld [vmem:[%s1 + $0x1838] sm:$0xff]
  %v801 = vld [vmem:[%s1 + $0x1840] sm:$0xff]
  %v802 = vld [vmem:[%s1 + $0x1848] sm:$0xff]
  %v803 = vld [vmem:[%s1 + $0x1850] sm:$0xff]
  %v804 = vld [vmem:[%s1 + $0x1858] sm:$0xff]
  %v805 = vld [vmem:[%s1 + $0x1860] sm:$0xff]
  %v806 = vld [vmem:[%s1 + $0x1868] sm:$0xff]
  %v807 = vld [vmem:[%s1 + $0x1870] sm:$0xff]
  %v808 = vld [vmem:[%s1 + $0x1878] sm:$0xff]
  %v809 = vld [vmem:[%s1 + $0x1880] sm:$0xff]
  %v810 = vld [vmem:[%s1 + $0x1888] sm:$0xff]
  %v811 = vld [vmem:[%s1 + $0x1890] sm:$0xff]
  %v812 = vld [vmem:[%s1 + $0x1898] sm:$0xff]
  %v813 = vld [vmem:[%s1 + $0x18a0] sm:$0xff]
  %v814 = vld [vmem:[%s1 + $0x18a8] sm:$0xff]
  %v815 = vld [vmem:[%s1 + $0x18b0] sm:$0xff]
  %v816 = vld [vmem:[%s1 + $0x18b8] sm:$0xff]
  %v817 = vld [vmem:[%s1 + $0x18c0] sm:$0xff]
  %v818 = vld [vmem:[%s1 + $0x18c8] sm:$0xff]
  %v819 = vld [vmem:[%s1 + $0x18d0] sm:$0xff]
  %v820 = vld [vmem:[%s1 + $0x18d8] sm:$0xff]
  %v821 = vld [vmem:[%s1 + $0x18e0] sm:$0xff]
  %v822 = vld [vmem:[%s1 + $0x18e8] sm:$0xff]
  %v823 = vld [vmem:[%s1 + $0x18f0] sm:$0xff]
  %v824 = vld [vmem:[%s1 + $0x18f8] sm:$0xff]
  %v825 = vld [vmem:[%s1 + $0x1900] sm:$0xff]
  %v826 = vld [vmem:[%s1 + $0x1908] sm:$0xff]
  %v827 = vld [vmem:[%s1 + $0x1910] sm:$0xff]
  %v828 = vld [vmem:[%s1 + $0x1918] sm:$0xff]
  %v829 = vld [vmem:[%s1 + $0x1920] sm:$0xff]
  %v830 = vld [vmem:[%s1 + $0x1928] sm:$0xff]
  %v831 = vld [vmem:[%s1 + $0x1930] sm:$0xff]
  %v832 = vld [vmem:[%s1 + $0x1938] sm:$0xff]
  %v833 = vld [vmem:[%s1 + $0x1940] sm:$0xff]
  %v834 = vld [vmem:[%s1 + $0x1948] sm:$0xff]
  %v835 = vld [vmem:[%s1 + $0x1950] sm:$0xff]
  %v836 = vld [vmem:[%s1 + $0x1958] sm:$0xff]
  %v837 = vld [vmem:[%s1 + $0x1960] sm:$0xff]
  %v838 = vld [vmem:[%s1 + $0x1968] sm:$0xff]
  %v839 = vld [vmem:[%s1 + $0x1970] sm:$0xff]
  %v840 = vld [vmem:[%s1 + $0x1978] sm:$0xff]
  %v841 = vld [vmem:[%s1 + $0x1980] sm:$0xff]
  %v842 = vld [vmem:[%s1 + $0x1988] sm:$0xff]
  %v843 = vld [vmem:[%s1 + $0x1990] sm:$0xff]
  %v844 = vld [vmem:[%s1 + $0x1998] sm:$0xff]
  %v845 = vld [vmem:[%s1 + $0x19a0] sm:$0xff]
  %v846 = vld [vmem:[%s1 + $0x19a8] sm:$0xff]
  %v847 = vld [vmem:[%s1 + $0x19b0] sm:$0xff]
  %v848 = vld [vmem:[%s1 + $0x19b8] sm:$0xff]
  %v849 = vld [vmem:[%s1 + $0x19c0] sm:$0xff]
  %v850 = vld [vmem:[%s1 + $0x19c8] sm:$0xff]
  %v851 = vld [vmem:[%s1 + $0x19d0] sm:$0xff]
  %v852 = vld [vmem:[%s1 + $0x19d8] sm:$0xff]
  %v853 = vld [vmem:[%s1 + $0x19e0] sm:$0xff]
  %v854 = vld [vmem:[%s1 + $0x19e8] sm:$0xff]
  %v855 = vld [vmem:[%s1 + $0x19f0] sm:$0xff]
  %v856 = vld [vmem:[%s1 + $0x19f8] sm:$0xff]
  %v857 = vld [vmem:[%s1 + $0x1a00] sm:$0xff]
  %v858 = vld [vmem:[%s1 + $0x1a08] sm:$0xff]
  %v859 = vld [vmem:[%s1 + $0x1a10] sm:$0xff]
  %v860 = vld [vmem:[%s1 + $0x1a18] sm:$0xff]
  %v861 = vld [vmem:[%s1 + $0x1a20] sm:$0xff]
  %v862 = vld [vmem:[%s1 + $0x1a28] sm:$0xff]
  %v863 = vld [vmem:[%s1 + $0x1a30] sm:$0xff]
  %v864 = vld [vmem:[%s1 + $0x1a38] sm:$0xff]
  %v865 = vld [vmem:[%s1 + $0x1a40] sm:$0xff]
  %v866 = vld [vmem:[%s1 + $0x1a48] sm:$0xff]
  %v867 = vld [vmem:[%s1 + $0x1a50] sm:$0xff]
  %v868 = vld [vmem:[%s1 + $0x1a58] sm:$0xff]
  %v869 = vld [vmem:[%s1 + $0x1a60] sm:$0xff]
  %v870 = vld [vmem:[%s1 + $0x1a68] sm:$0xff]
  %v871 = vld [vmem:[%s1 + $0x1a70] sm:$0xff]
  %v872 = vld [vmem:[%s1 + $0x1a78] sm:$0xff]
  %v873 = vld [vmem:[%s1 + $0x1a80] sm:$0xff]
  %v874 = vld [vmem:[%s1 + $0x1a88] sm:$0xff]
  %v875 = vld [vmem:[%s1 + $0x1a90] sm:$0xff]
  %v876 = vld [vmem:[%s1 + $0x1a98] sm:$0xff]
  %v877 = vld [vmem:[%s1 + $0x1aa0] sm:$0xff]
  %v878 = vld [vmem:[%s1 + $0x1aa8] sm:$0xff]
  %v879 = vld [vmem:[%s1 + $0x1ab0] sm:$0xff]
  %v880 = vld [vmem:[%s1 + $0x1ab8] sm:$0xff]
  %v881 = vld [vmem:[%s1 + $0x1ac0] sm:$0xff]
  %v882 = vld [vmem:[%s1 + $0x1ac8] sm:$0xff]
  %v883 = vld [vmem:[%s1 + $0x1ad0] sm:$0xff]
  %v884 = vld [vmem:[%s1 + $0x1ad8] sm:$0xff]
  %v885 = vld [vmem:[%s1 + $0x1ae0] sm:$0xff]
  %v886 = vld [vmem:[%s1 + $0x1ae8] sm:$0xff]
  %v887 = vld [vmem:[%s1 + $0x1af0] sm:$0xff]
  %v888 = vld [vmem:[%s1 + $0x1af8] sm:$0xff]
  %v889 = vld [vmem:[%s1 + $0x1b00] sm:$0xff]
  %v890 = vld [vmem:[%s1 + $0x1b08] sm:$0xff]
  %v891 = vld [vmem:[%s1 + $0x1b10] sm:$0xff]
  %v892 = vld [vmem:[%s1 + $0x1b18] sm:$0xff]
  %v893 = vld [vmem:[%s1 + $0x1b20] sm:$0xff]
  %v894 = vld [vmem:[%s1 + $0x1b28] sm:$0xff]
  %v895 = vld [vmem:[%s1 + $0x1b30] sm:$0xff]
  %v896 = vld [vmem:[%s1 + $0x1b38] sm:$0xff]
  %v897 = vld [vmem:[%s1 + $0x1b40] sm:$0xff]
  %v898 = vld [vmem:[%s1 + $0x1b48] sm:$0xff]
  %v899 = vld [vmem:[%s1 + $0x1b50] sm:$0xff]
  %v900 = vld [vmem:[%s1 + $0x1b58] sm:$0xff]
  %v901 = vld [vmem:[%s1 + $0x1b60] sm:$0xff]
  %v902 = vld [vmem:[%s1 + $0x1b68] sm:$0xff]
  %v903 = vld [vmem:[%s1 + $0x1b70] sm:$0xff]
  %v904 = vld [vmem:[%s1 + $0x1b78] sm:$0xff]
  %v905 = vld [vmem:[%s1 + $0x1b80] sm:$0xff]
  %v906 = vld [vmem:[%s1 + $0x1b88] sm:$0xff]
  %v907 = vld [vmem:[%s1 + $0x1b90] sm:$0xff]
  %v908 = vld [vmem:[%s1 + $0x1b98] sm:$0xff]
  %v909 = vld [vmem:[%s1 + $0x1ba0] sm:$0xff]
  %v910 = vld [vmem:[%s1 + $0x1ba8] sm:$0xff]
  %v911 = vld [vmem:[%s1 + $0x1bb0] sm:$0xff]
  %v912 = vld [vmem:[%s1 + $0x1bb8] sm:$0xff]
  %v913 = vld [vmem:[%s1 + $0x1bc0] sm:$0xff]
  %v914 = vld [vmem:[%s1 + $0x1bc8] sm:$0xff]
  %v915 = vld [vmem:[%s1 + $0x1bd0] sm:$0xff]
  %v916 = vld [vmem:[%s1 + $0x1bd8] sm:$0xff]
  %v917 = vld [vmem:[%s1 + $0x1be0] sm:$0xff]
  %v918 = vld [vmem:[%s1 + $0x1be8] sm:$0xff]
  %v919 = vld [vmem:[%s1 + $0x1bf0] sm:$0xff]
  %v920 = vld [vmem:[%s1 + $0x1bf8] sm:$0xff]
  %v921 = vld [vmem:[%s1 + $0x1c00] sm:$0xff]
  %v922 = vld [vmem:[%s1 + $0x1c08] sm:$0xff]
  %v923 = vld [vmem:[%s1 + $0x1c10] sm:$0xff]
  %v924 = vld [vmem:[%s1 + $0x1c18] sm:$0xff]
  %v925 = vld [vmem:[%s1 + $0x1c20] sm:$0xff]
  %v926 = vld [vmem:[%s1 + $0x1c28] sm:$0xff]
  %v927 = vld [vmem:[%s1 + $0x1c30] sm:$0xff]
  %v928 = vld [vmem:[%s1 + $0x1c38] sm:$0xff]
  %v929 = vld [vmem:[%s1 + $0x1c40] sm:$0xff]
  %v930 = vld [vmem:[%s1 + $0x1c48] sm:$0xff]
  %v931 = vld [vmem:[%s1 + $0x1c50] sm:$0xff]
  %v932 = vld [vmem:[%s1 + $0x1c58] sm:$0xff]
  %v933 = vld [vmem:[%s1 + $0x1c60] sm:$0xff]
  %v934 = vld [vmem:[%s1 + $0x1c68] sm:$0xff]
  %v935 = vld [vmem:[%s1 + $0x1c70] sm:$0xff]
  %v936 = vld [vmem:[%s1 + $0x1c78] sm:$0xff]
  %v937 = vld [vmem:[%s1 + $0x1c80] sm:$0xff]
  %v938 = vld [vmem:[%s1 + $0x1c88] sm:$0xff]
  %v939 = vld [vmem:[%s1 + $0x1c90] sm:$0xff]
  %v940 = vld [vmem:[%s1 + $0x1c98] sm:$0xff]
  %v941 = vld [vmem:[%s1 + $0x1ca0] sm:$0xff]
  %v942 = vld [vmem:[%s1 + $0x1ca8] sm:$0xff]
  %v943 = vld [vmem:[%s1 + $0x1cb0] sm:$0xff]
  %v944 = vld [vmem:[%s1 + $0x1cb8] sm:$0xff]
  %v945 = vld [vmem:[%s1 + $0x1cc0] sm:$0xff]
  %v946 = vld [vmem:[%s1 + $0x1cc8] sm:$0xff]
  %v947 = vld [vmem:[%s1 + $0x1cd0] sm:$0xff]
  %v948 = vld [vmem:[%s1 + $0x1cd8] sm:$0xff]
  %v949 = vld [vmem:[%s1 + $0x1ce0] sm:$0xff]
  %v950 = vld [vmem:[%s1 + $0x1ce8] sm:$0xff]
  %v951 = vld [vmem:[%s1 + $0x1cf0] sm:$0xff]
  %v952 = vld [vmem:[%s1 + $0x1cf8] sm:$0xff]
  %v953 = vld [vmem:[%s1 + $0x1d00] sm:$0xff]
  %v954 = vld [vmem:[%s1 + $0x1d08] sm:$0xff]
  %v955 = vld [vmem:[%s1 + $0x1d10] sm:$0xff]
  %v956 = vld [vmem:[%s1 + $0x1d18] sm:$0xff]
  %v957 = vld [vmem:[%s1 + $0x1d20] sm:$0xff]
  %v958 = vld [vmem:[%s1 + $0x1d28] sm:$0xff]
  %v959 = vld [vmem:[%s1 + $0x1d30] sm:$0xff]
  %v960 = vld [vmem:[%s1 + $0x1d38] sm:$0xff]
  %v961 = vld [vmem:[%s1 + $0x1d40] sm:$0xff]
  %v962 = vld [vmem:[%s1 + $0x1d48] sm:$0xff]
  %v963 = vld [vmem:[%s1 + $0x1d50] sm:$0xff]
  %v964 = vld [vmem:[%s1 + $0x1d58] sm:$0xff]
  %v965 = vld [vmem:[%s1 + $0x1d60] sm:$0xff]
  %v966 = vld [vmem:[%s1 + $0x1d68] sm:$0xff]
  %v967 = vld [vmem:[%s1 + $0x1d70] sm:$0xff]
  %v968 = vld [vmem:[%s1 + $0x1d78] sm:$0xff]
  %v969 = vld [vmem:[%s1 + $0x1d80] sm:$0xff]
  %v970 = vld [vmem:[%s1 + $0x1d88] sm:$0xff]
  %v971 = vld [vmem:[%s1 + $0x1d90] sm:$0xff]
  %v972 = vld [vmem:[%s1 + $0x1d98] sm:$0xff]
  %v973 = vld [vmem:[%s1 + $0x1da0] sm:$0xff]
  %v974 = vld [vmem:[%s1 + $0x1da8] sm:$0xff]
  %v975 = vld [vmem:[%s1 + $0x1db0] sm:$0xff]
  %v976 = vld [vmem:[%s1 + $0x1db8] sm:$0xff]
  %v977 = vld [vmem:[%s1 + $0x1dc0] sm:$0xff]
  %v978 = vld [vmem:[%s1 + $0x1dc8] sm:$0xff]
  %v979 = vld [vmem:[%s1 + $0x1dd0] sm:$0xff]
  %v980 = vld [vmem:[%s1 + $0x1dd8] sm:$0xff]
  %v981 = vld [vmem:[%s1 + $0x1de0] sm:$0xff]
  %v982 = vld [vmem:[%s1 + $0x1de8] sm:$0xff]
  %v983 = vld [vmem:[%s1 + $0x1df0] sm:$0xff]
  %v984 = vld [vmem:[%s1 + $0x1df8] sm:$0xff]
  %v985 = vld [vmem:[%s1 + $0x1e00] sm:$0xff]
  %v986 = vld [vmem:[%s1 + $0x1e08] sm:$0xff]
  %v987 = vld [vmem:[%s1 + $0x1e10] sm:$0xff]
  %v988 = vld [vmem:[%s1 + $0x1e18] sm:$0xff]
  %v989 = vld [vmem:[%s1 + $0x1e20] sm:$0xff]
  %v990 = vld [vmem:[%s1 + $0x1e28] sm:$0xff]
  %v991 = vld [vmem:[%s1 + $0x1e30] sm:$0xff]
  %v992 = vld [vmem:[%s1 + $0x1e38] sm:$0xff]
  %v993 = vld [vmem:[%s1 + $0x1e40] sm:$0xff]
  %v994 = vld [vmem:[%s1 + $0x1e48] sm:$0xff]
  %v995 = vld [vmem:[%s1 + $0x1e50] sm:$0xff]
  %v996 = vld [vmem:[%s1 + $0x1e58] sm:$0xff]
  %v997 = vld [vmem:[%s1 + $0x1e60] sm:$0xff]
  %v998 = vld [vmem:[%s1 + $0x1e68] sm:$0xff]
  %v999 = vld [vmem:[%s1 + $0x1e70] sm:$0xff]
  %v1000 = vld [vmem:[%s1 + $0x1e78] sm:$0xff]
  %v1001 = vld [vmem:[%s1 + $0x1e80] sm:$0xff]
  %v1002 = vld [vmem:[%s1 + $0x1e88] sm:$0xff]
  %v1003 = vld [vmem:[%s1 + $0x1e90] sm:$0xff]
  %v1004 = vld [vmem:[%s1 + $0x1e98] sm:$0xff]
  %v1005 = vld [vmem:[%s1 + $0x1ea0] sm:$0xff]
  %v1006 = vld [vmem:[%s1 + $0x1ea8] sm:$0xff]
  %v1007 = vld [vmem:[%s1 + $0x1eb0] sm:$0xff]
  %v1008 = vld [vmem:[%s1 + $0x1eb8] sm:$0xff]
  %v1009 = vld [vmem:[%s1 + $0x1ec0] sm:$0xff]
  %v1010 = vld [vmem:[%s1 + $0x1ec8] sm:$0xff]
  %v1011 = vld [vmem:[%s1 + $0x1ed0] sm:$0xff]
  %v1012 = vld [vmem:[%s1 + $0x1ed8] sm:$0xff]
  %v1013 = vld [vmem:[%s1 + $0x1ee0] sm:$0xff]
  %v1014 = vld [vmem:[%s1 + $0x1ee8] sm:$0xff]
  %v1015 = vld [vmem:[%s1 + $0x1ef0] sm:$0xff]
  %v1016 = vld [vmem:[%s1 + $0x1ef8] sm:$0xff]
  %v1017 = vld [vmem:[%s1 + $0x1f00] sm:$0xff]
  %v1018 = vld [vmem:[%s1 + $0x1f08] sm:$0xff]
  %v1019 = vld [vmem:[%s1 + $0x1f10] sm:$0xff]
  %v1020 = vld [vmem:[%s1 + $0x1f18] sm:$0xff]
  %v1021 = vld [vmem:[%s1 + $0x1f20] sm:$0xff]
  %v1022 = vld [vmem:[%s1 + $0x1f28] sm:$0xff]
  %v1023 = vld [vmem:[%s1 + $0x1f30] sm:$0xff]
  %v1024 = vld [vmem:[%s1 + $0x1f38] sm:$0xff]
  %v1025 = vld [vmem:[%s1 + $0x1f40] sm:$0xff]
  %v1026 = vld [vmem:[%s1 + $0x1f48] sm:$0xff]
  %v1027 = vld [vmem:[%s1 + $0x1f50] sm:$0xff]
  %v1028 = vld [vmem:[%s1 + $0x1f58] sm:$0xff]
  %v1029 = vld [vmem:[%s1 + $0x1f60] sm:$0xff]
  %v1030 = vld [vmem:[%s1 + $0x1f68] sm:$0xff]
  %v1031 = vld [vmem:[%s1 + $0x1f70] sm:$0xff]
  %v1032 = vld [vmem:[%s1 + $0x1f78] sm:$0xff]
  %v1033 = vld [vmem:[%s1 + $0x1f80] sm:$0xff]
  %v1034 = vld [vmem:[%s1 + $0x1f88] sm:$0xff]
  %v1035 = vld [vmem:[%s1 + $0x1f90] sm:$0xff]
  %v1036 = vld [vmem:[%s1 + $0x1f98] sm:$0xff]
  %v1037 = vld [vmem:[%s1 + $0x1fa0] sm:$0xff]
  %v1038 = vld [vmem:[%s1 + $0x1fa8] sm:$0xff]
  %v1039 = vld [vmem:[%s1 + $0x1fb0] sm:$0xff]
  %v1040 = vld [vmem:[%s1 + $0x1fb8] sm:$0xff]
  %v1041 = vld [vmem:[%s1 + $0x1fc0] sm:$0xff]
  %v1042 = vld [vmem:[%s1 + $0x1fc8] sm:$0xff]
  %v1043 = vld [vmem:[%s1 + $0x1fd0] sm:$0xff]
  %v1044 = vld [vmem:[%s1 + $0x1fd8] sm:$0xff]
  %v1045 = vld [vmem:[%s1 + $0x1fe0] sm:$0xff]
  %v1046 = vld [vmem:[%s1 + $0x1fe8] sm:$0xff]
  %v1047 = vld [vmem:[%s1 + $0x1ff0] sm:$0xff]
  %v1048 = vld [vmem:[%s1 + $0x1ff8] sm:$0xff]
  %v1049 = vld [vmem:[%s1 + $0x2000] sm:$0xff]
  %v1050 = vld [vmem:[%s1 + $0x2008] sm:$0xff]
  %v1051 = vld [vmem:[%s1 + $0x2010] sm:$0xff]
  %v1052 = vld [vmem:[%s1 + $0x2018] sm:$0xff]
  %v1053 = vld [vmem:[%s1 + $0x2020] sm:$0xff]
  %v1054 = vld [vmem:[%s1 + $0x2028] sm:$0xff]
  %v1055 = vld [vmem:[%s1 + $0x2030] sm:$0xff]
  %v1056 = vld [vmem:[%s1 + $0x2038] sm:$0xff]
  %v1057 = vld [vmem:[%s1 + $0x2040] sm:$0xff]
  %v1058 = vld [vmem:[%s1 + $0x2048] sm:$0xff]
  %v1059 = vld [vmem:[%s1 + $0x2050] sm:$0xff]
  %v1060 = vld [vmem:[%s1 + $0x2058] sm:$0xff]
  %v1061 = vld [vmem:[%s1 + $0x2060] sm:$0xff]
  %v1062 = vld [vmem:[%s1 + $0x2068] sm:$0xff]
  %v1063 = vld [vmem:[%s1 + $0x2070] sm:$0xff]
  %v1064 = vld [vmem:[%s1 + $0x2078] sm:$0xff]
  %v1065 = vld [vmem:[%s1 + $0x2080] sm:$0xff]
  %v1066 = vld [vmem:[%s1 + $0x2088] sm:$0xff]
  %v1067 = vld [vmem:[%s1 + $0x2090] sm:$0xff]
  %v1068 = vld [vmem:[%s1 + $0x2098] sm:$0xff]
  %v1069 = vld [vmem:[%s1 + $0x20a0] sm:$0xff]
  %v1070 = vld [vmem:[%s1 + $0x20a8] sm:$0xff]
  %v1071 = vld [vmem:[%s1 + $0x20b0] sm:$0xff]
  %v1072 = vld [vmem:[%s1 + $0x20b8] sm:$0xff]
  %v1073 = vld [vmem:[%s1 + $0x20c0] sm:$0xff]
  %v1074 = vld [vmem:[%s1 + $0x20c8] sm:$0xff]
  %v1075 = vld [vmem:[%s1 + $0x20d0] sm:$0xff]
  %v1076 = vld [vmem:[%s1 + $0x20d8] sm:$0xff]
  %v1077 = vld [vmem:[%s1 + $0x20e0] sm:$0xff]
  %v1078 = vld [vmem:[%s1 + $0x20e8] sm:$0xff]
  %v1079 = vld [vmem:[%s1 + $0x20f0] sm:$0xff]
  %v1080 = vld [vmem:[%s1 + $0x20f8] sm:$0xff]
  %v1081 = vld [vmem:[%s1 + $0x2100] sm:$0xff]
  %v1082 = vld [vmem:[%s1 + $0x2108] sm:$0xff]
  %v1083 = vld [vmem:[%s1 + $0x2110] sm:$0xff]
  %v1084 = vld [vmem:[%s1 + $0x2118] sm:$0xff]
  %v1085 = vld [vmem:[%s1 + $0x2120] sm:$0xff]
  %v1086 = vld [vmem:[%s1 + $0x2128] sm:$0xff]
  %v1087 = vld [vmem:[%s1 + $0x2130] sm:$0xff]
  %v1088 = vld [vmem:[%s1 + $0x2138] sm:$0xff]
  %v1089 = vld [vmem:[%s1 + $0x2140] sm:$0xff]
  %v1090 = vld [vmem:[%s1 + $0x2148] sm:$0xff]
  %v1091 = vld [vmem:[%s1 + $0x2150] sm:$0xff]
  %v1092 = vld [vmem:[%s1 + $0x2158] sm:$0xff]
  %v1093 = vld [vmem:[%s1 + $0x2160] sm:$0xff]
  %v1094 = vld [vmem:[%s1 + $0x2168] sm:$0xff]
  %v1095 = vld [vmem:[%s1 + $0x2170] sm:$0xff]
  %v1096 = vld [vmem:[%s1 + $0x2178] sm:$0xff]
  %v1097 = vld [vmem:[%s1 + $0x2180] sm:$0xff]
  %v1098 = vld [vmem:[%s1 + $0x2188] sm:$0xff]
  %v1099 = vld [vmem:[%s1 + $0x2190] sm:$0xff]
  %v1100 = vld [vmem:[%s1 + $0x2198] sm:$0xff]
  %v1101 = vld [vmem:[%s1 + $0x21a0] sm:$0xff]
  %v1102 = vld [vmem:[%s1 + $0x21a8] sm:$0xff]
  %v1103 = vld [vmem:[%s1 + $0x21b0] sm:$0xff]
  %v1104 = vld [vmem:[%s1 + $0x21b8] sm:$0xff]
  %v1105 = vld [vmem:[%s1 + $0x21c0] sm:$0xff]
  %v1106 = vld [vmem:[%s1 + $0x21c8] sm:$0xff]
  %v1107 = vld [vmem:[%s1 + $0x21d0] sm:$0xff]
  %v1108 = vld [vmem:[%s1 + $0x21d8] sm:$0xff]
  %v1109 = vld [vmem:[%s1 + $0x21e0] sm:$0xff]
  %v1110 = vld [vmem:[%s1 + $0x21e8] sm:$0xff]
  %v1111 = vld [vmem:[%s1 + $0x21f0] sm:$0xff]
  %v1112 = vld [vmem:[%s1 + $0x21f8] sm:$0xff]
  %v1113 = vld [vmem:[%s1 + $0x2200] sm:$0xff]
  %v1114 = vld [vmem:[%s1 + $0x2208] sm:$0xff]
  %v1115 = vld [vmem:[%s1 + $0x2210] sm:$0xff]
  %v1116 = vld [vmem:[%s1 + $0x2218] sm:$0xff]
  %v1117 = vld [vmem:[%s1 + $0x2220] sm:$0xff]
  %v1118 = vld [vmem:[%s1 + $0x2228] sm:$0xff]
  %v1119 = vld [vmem:[%s1 + $0x2230] sm:$0xff]
  %v1120 = vld [vmem:[%s1 + $0x2238] sm:$0xff]
  %v1121 = vld [vmem:[%s1 + $0x2240] sm:$0xff]
  %v1122 = vld [vmem:[%s1 + $0x2248] sm:$0xff]
  %v1123 = vld [vmem:[%s1 + $0x2250] sm:$0xff]
  %v1124 = vld [vmem:[%s1 + $0x2258] sm:$0xff]
  %v1125 = vld [vmem:[%s1 + $0x2260] sm:$0xff]
  %v1126 = vld [vmem:[%s1 + $0x2268] sm:$0xff]
  %v1127 = vld [vmem:[%s1 + $0x2270] sm:$0xff]
  %v1128 = vld [vmem:[%s1 + $0x2278] sm:$0xff]
  %v1129 = vld [vmem:[%s1 + $0x2280] sm:$0xff]
  %v1130 = vld [vmem:[%s1 + $0x2288] sm:$0xff]
  %v1131 = vld [vmem:[%s1 + $0x2290] sm:$0xff]
  %v1132 = vld [vmem:[%s1 + $0x2298] sm:$0xff]
  %v1133 = vld [vmem:[%s1 + $0x22a0] sm:$0xff]
  %v1134 = vld [vmem:[%s1 + $0x22a8] sm:$0xff]
  %v1135 = vld [vmem:[%s1 + $0x22b0] sm:$0xff]
  %v1136 = vld [vmem:[%s1 + $0x22b8] sm:$0xff]
  %v1137 = vld [vmem:[%s1 + $0x22c0] sm:$0xff]
  %v1138 = vld [vmem:[%s1 + $0x22c8] sm:$0xff]
  %v1139 = vld [vmem:[%s1 + $0x22d0] sm:$0xff]
  %v1140 = vld [vmem:[%s1 + $0x22d8] sm:$0xff]
  %v1141 = vld [vmem:[%s1 + $0x22e0] sm:$0xff]
  %v1142 = vld [vmem:[%s1 + $0x22e8] sm:$0xff]
  %v1143 = vld [vmem:[%s1 + $0x22f0] sm:$0xff]
  %v1144 = vld [vmem:[%s1 + $0x22f8] sm:$0xff]
  %v1145 = vld [vmem:[%s1 + $0x2300] sm:$0xff]
  %v1146 = vld [vmem:[%s1 + $0x2308] sm:$0xff]
  %v1147 = vld [vmem:[%s1 + $0x2310] sm:$0xff]
  %v1148 = vld [vmem:[%s1 + $0x2318] sm:$0xff]
  %v1149 = vld [vmem:[%s1 + $0x2320] sm:$0xff]
  %v1150 = vld [vmem:[%s1 + $0x2328] sm:$0xff]
  %v1151 = vld [vmem:[%s1 + $0x2330] sm:$0xff]
  %v1152 = vld [vmem:[%s1 + $0x2338] sm:$0xff]
  %v1153 = vld [vmem:[%s1 + $0x2340] sm:$0xff]
  %v1154 = vld [vmem:[%s1 + $0x2348] sm:$0xff]
  %v1155 = vld [vmem:[%s1 + $0x2350] sm:$0xff]
  %v1156 = vld [vmem:[%s1 + $0x2358] sm:$0xff]
  %v1157 = vld [vmem:[%s1 + $0x2360] sm:$0xff]
  %v1158 = vld [vmem:[%s1 + $0x2368] sm:$0xff]
  %v1159 = vld [vmem:[%s1 + $0x2370] sm:$0xff]
  %v1160 = vld [vmem:[%s1 + $0x2378] sm:$0xff]
  %v1161 = vld [vmem:[%s1 + $0x2380] sm:$0xff]
  %v1162 = vld [vmem:[%s1 + $0x2388] sm:$0xff]
  %v1163 = vld [vmem:[%s1 + $0x2390] sm:$0xff]
  %v1164 = vld [vmem:[%s1 + $0x2398] sm:$0xff]
  %v1165 = vld [vmem:[%s1 + $0x23a0] sm:$0xff]
  %v1166 = vld [vmem:[%s1 + $0x23a8] sm:$0xff]
  %v1167 = vld [vmem:[%s1 + $0x23b0] sm:$0xff]
  %v1168 = vld [vmem:[%s1 + $0x23b8] sm:$0xff]
  %v1169 = vld [vmem:[%s1 + $0x23c0] sm:$0xff]
  %v1170 = vld [vmem:[%s1 + $0x23c8] sm:$0xff]
  %v1171 = vld [vmem:[%s1 + $0x23d0] sm:$0xff]
  %v1172 = vld [vmem:[%s1 + $0x23d8] sm:$0xff]
  %v1173 = vld [vmem:[%s1 + $0x23e0] sm:$0xff]
  %v1174 = vld [vmem:[%s1 + $0x23e8] sm:$0xff]
  %v1175 = vld [vmem:[%s1 + $0x23f0] sm:$0xff]
  %v1176 = vld [vmem:[%s1 + $0x23f8] sm:$0xff]
  %v1177 = vld [vmem:[%s1 + $0x2400] sm:$0xff]
  %v1178 = vld [vmem:[%s1 + $0x2408] sm:$0xff]
  %v1179 = vld [vmem:[%s1 + $0x2410] sm:$0xff]
  %v1180 = vld [vmem:[%s1 + $0x2418] sm:$0xff]
  %v1181 = vld [vmem:[%s1 + $0x2420] sm:$0xff]
  %v1182 = vld [vmem:[%s1 + $0x2428] sm:$0xff]
  %v1183 = vld [vmem:[%s1 + $0x2430] sm:$0xff]
  %v1184 = vld [vmem:[%s1 + $0x2438] sm:$0xff]
  %v1185 = vld [vmem:[%s1 + $0x2440] sm:$0xff]
  %v1186 = vld [vmem:[%s1 + $0x2448] sm:$0xff]
  %v1187 = vld [vmem:[%s1 + $0x2450] sm:$0xff]
  %v1188 = vld [vmem:[%s1 + $0x2458] sm:$0xff]
  %v1189 = vld [vmem:[%s1 + $0x2460] sm:$0xff]
  %v1190 = vld [vmem:[%s1 + $0x2468] sm:$0xff]
  %v1191 = vld [vmem:[%s1 + $0x2470] sm:$0xff]
  %v1192 = vld [vmem:[%s1 + $0x2478] sm:$0xff]
  %v1193 = vld [vmem:[%s1 + $0x2480] sm:$0xff]
  %v1194 = vld [vmem:[%s1 + $0x2488] sm:$0xff]
  %v1195 = vld [vmem:[%s1 + $0x2490] sm:$0xff]
  %v1196 = vld [vmem:[%s1 + $0x2498] sm:$0xff]
  %v1197 = vld [vmem:[%s1 + $0x24a0] sm:$0xff]
  %v1198 = vld [vmem:[%s1 + $0x24a8] sm:$0xff]
  %v1199 = vld [vmem:[%s1 + $0x24b0] sm:$0xff]
  %v1200 = vld [vmem:[%s1 + $0x24b8] sm:$0xff]
  %v1201 = vld [vmem:[%s1 + $0x24c0] sm:$0xff]
  %v1202 = vld [vmem:[%s1 + $0x24c8] sm:$0xff]
  %v1203 = vld [vmem:[%s1 + $0x24d0] sm:$0xff]
  %v1204 = vld [vmem:[%s1 + $0x24d8] sm:$0xff]
  %v1205 = vld [vmem:[%s1 + $0x24e0] sm:$0xff]
  %v1206 = vld [vmem:[%s1 + $0x24e8] sm:$0xff]
  %v1207 = vld [vmem:[%s1 + $0x24f0] sm:$0xff]
  %v1208 = vld [vmem:[%s1 + $0x24f8] sm:$0xff]
  %v1209 = vld [vmem:[%s1 + $0x2500] sm:$0xff]
  %v1210 = vld [vmem:[%s1 + $0x2508] sm:$0xff]
  %v1211 = vld [vmem:[%s1 + $0x2510] sm:$0xff]
  %v1212 = vld [vmem:[%s1 + $0x2518] sm:$0xff]
  %v1213 = vld [vmem:[%s1 + $0x2520] sm:$0xff]
  %v1214 = vld [vmem:[%s1 + $0x2528] sm:$0xff]
  %v1215 = vld [vmem:[%s1 + $0x2530] sm:$0xff]
  %v1216 = vld [vmem:[%s1 + $0x2538] sm:$0xff]
  %v1217 = vld [vmem:[%s1 + $0x2540] sm:$0xff]
  %v1218 = vld [vmem:[%s1 + $0x2548] sm:$0xff]
  %v1219 = vld [vmem:[%s1 + $0x2550] sm:$0xff]
  %v1220 = vld [vmem:[%s1 + $0x2558] sm:$0xff]
  %v1221 = vld [vmem:[%s1 + $0x2560] sm:$0xff]
  %v1222 = vld [vmem:[%s1 + $0x2568] sm:$0xff]
  %v1223 = vld [vmem:[%s1 + $0x2570] sm:$0xff]
  %v1224 = vld [vmem:[%s1 + $0x2578] sm:$0xff]
  %v1225 = vld [vmem:[%s1 + $0x2580] sm:$0xff]
  %v1226 = vld [vmem:[%s1 + $0x2588] sm:$0xff]
  %v1227 = vld [vmem:[%s1 + $0x2590] sm:$0xff]
  %v1228 = vld [vmem:[%s1 + $0x2598] sm:$0xff]
  %v1229 = vld [vmem:[%s1 + $0x25a0] sm:$0xff]
  %v1230 = vld [vmem:[%s1 + $0x25a8] sm:$0xff]
  %v1231 = vld [vmem:[%s1 + $0x25b0] sm:$0xff]
  %v1232 = vld [vmem:[%s1 + $0x25b8] sm:$0xff]
  %v1233 = vld [vmem:[%s1 + $0x25c0] sm:$0xff]
  %v1234 = vld [vmem:[%s1 + $0x25c8] sm:$0xff]
  %v1235 = vld [vmem:[%s1 + $0x25d0] sm:$0xff]
  %v1236 = vld [vmem:[%s1 + $0x25d8] sm:$0xff]
  %v1237 = vld [vmem:[%s1 + $0x25e0] sm:$0xff]
  %v1238 = vld [vmem:[%s1 + $0x25e8] sm:$0xff]
  %v1239 = vld [vmem:[%s1 + $0x25f0] sm:$0xff]
  %v1240 = vld [vmem:[%s1 + $0x25f8] sm:$0xff]
  %v1241 = vld [vmem:[%s1 + $0x2600] sm:$0xff]
  %v1242 = vld [vmem:[%s1 + $0x2608] sm:$0xff]
  %v1243 = vld [vmem:[%s1 + $0x2610] sm:$0xff]
  %v1244 = vld [vmem:[%s1 + $0x2618] sm:$0xff]
  %v1245 = vld [vmem:[%s1 + $0x2620] sm:$0xff]
  %v1246 = vld [vmem:[%s1 + $0x2628] sm:$0xff]
  %v1247 = vld [vmem:[%s1 + $0x2630] sm:$0xff]
  %v1248 = vld [vmem:[%s1 + $0x2638] sm:$0xff]
  %v1249 = vld [vmem:[%s1 + $0x2640] sm:$0xff]
  %v1250 = vld [vmem:[%s1 + $0x2648] sm:$0xff]
  %v1251 = vld [vmem:[%s1 + $0x2650] sm:$0xff]
  %v1252 = vld [vmem:[%s1 + $0x2658] sm:$0xff]
  %v1253 = vld [vmem:[%s1 + $0x2660] sm:$0xff]
  %v1254 = vld [vmem:[%s1 + $0x2668] sm:$0xff]
  %v1255 = vld [vmem:[%s1 + $0x2670] sm:$0xff]
  %v1256 = vld [vmem:[%s1 + $0x2678] sm:$0xff]
  %v1257 = vld [vmem:[%s1 + $0x2680] sm:$0xff]
  %v1258 = vld [vmem:[%s1 + $0x2688] sm:$0xff]
  %v1259 = vld [vmem:[%s1 + $0x2690] sm:$0xff]
  %v1260 = vld [vmem:[%s1 + $0x2698] sm:$0xff]
  %v1261 = vld [vmem:[%s1 + $0x26a0] sm:$0xff]
  %v1262 = vld [vmem:[%s1 + $0x26a8] sm:$0xff]
  %v1263 = vld [vmem:[%s1 + $0x26b0] sm:$0xff]
  %v1264 = vld [vmem:[%s1 + $0x26b8] sm:$0xff]
  %v1265 = vld [vmem:[%s1 + $0x26c0] sm:$0xff]
  %v1266 = vld [vmem:[%s1 + $0x26c8] sm:$0xff]
  %v1267 = vld [vmem:[%s1 + $0x26d0] sm:$0xff]
  %v1268 = vld [vmem:[%s1 + $0x26d8] sm:$0xff]
  %v1269 = vld [vmem:[%s1 + $0x26e0] sm:$0xff]
  %v1270 = vld [vmem:[%s1 + $0x26e8] sm:$0xff]
  %v1271 = vld [vmem:[%s1 + $0x26f0] sm:$0xff]
  %v1272 = vld [vmem:[%s1 + $0x26f8] sm:$0xff]
  %v1273 = vld [vmem:[%s1 + $0x2700] sm:$0xff]
  %v1274 = vld [vmem:[%s1 + $0x2708] sm:$0xff]
  %v1275 = vld [vmem:[%s1 + $0x2710] sm:$0xff]
  %v1276 = vld [vmem:[%s1 + $0x2718] sm:$0xff]
  %v1277 = vld [vmem:[%s1 + $0x2720] sm:$0xff]
  %v1278 = vld [vmem:[%s1 + $0x2728] sm:$0xff]
  %v1279 = vld [vmem:[%s1 + $0x2730] sm:$0xff]
  %v1280 = vld [vmem:[%s1 + $0x2738] sm:$0xff]
  %v1281 = vld [vmem:[%s1 + $0x2740] sm:$0xff]
  %v1282 = vld [vmem:[%s1 + $0x2748] sm:$0xff]
  %v1283 = vld [vmem:[%s1 + $0x2750] sm:$0xff]
  %v1284 = vld [vmem:[%s1 + $0x2758] sm:$0xff]
  %v1285 = vld [vmem:[%s1 + $0x2760] sm:$0xff]
  %v1286 = vld [vmem:[%s1 + $0x2768] sm:$0xff]
  %v1287 = vld [vmem:[%s1 + $0x2770] sm:$0xff]
  %v1288 = vld [vmem:[%s1 + $0x2778] sm:$0xff]
  %v1289 = vld [vmem:[%s1 + $0x2780] sm:$0xff]
  %v1290 = vld [vmem:[%s1 + $0x2788] sm:$0xff]
  %v1291 = vld [vmem:[%s1 + $0x2790] sm:$0xff]
  %v1292 = vld [vmem:[%s1 + $0x2798] sm:$0xff]
  %v1293 = vld [vmem:[%s1 + $0x27a0] sm:$0xff]
  %v1294 = vld [vmem:[%s1 + $0x27a8] sm:$0xff]
  %v1295 = vld [vmem:[%s1 + $0x27b0] sm:$0xff]
  %v1296 = vld [vmem:[%s1 + $0x27b8] sm:$0xff]
  %v1297 = vld [vmem:[%s1 + $0x27c0] sm:$0xff]
  %v1298 = vld [vmem:[%s1 + $0x27c8] sm:$0xff]
  %v1299 = vld [vmem:[%s1 + $0x27d0] sm:$0xff]
  %v1300 = vld [vmem:[%s1 + $0x27d8] sm:$0xff]
  %v1301 = vld [vmem:[%s1 + $0x27e0] sm:$0xff]
  %v1302 = vld [vmem:[%s1 + $0x27e8] sm:$0xff]
  %v1303 = vld [vmem:[%s1 + $0x27f0] sm:$0xff]
  %v1304 = vld [vmem:[%s1 + $0x27f8] sm:$0xff]
  %v1305 = vld [vmem:[%s1 + $0x2800] sm:$0xff]
  %v1306 = vld [vmem:[%s1 + $0x2808] sm:$0xff]
  %v1307 = vld [vmem:[%s1 + $0x2810] sm:$0xff]
  %v1308 = vld [vmem:[%s1 + $0x2818] sm:$0xff]
  %v1309 = vld [vmem:[%s1 + $0x2820] sm:$0xff]
  %v1310 = vld [vmem:[%s1 + $0x2828] sm:$0xff]
  %v1311 = vld [vmem:[%s1 + $0x2830] sm:$0xff]
  %v1312 = vld [vmem:[%s1 + $0x2838] sm:$0xff]
  %v1313 = vld [vmem:[%s1 + $0x2840] sm:$0xff]
  %v1314 = vld [vmem:[%s1 + $0x2848] sm:$0xff]
  %v1315 = vld [vmem:[%s1 + $0x2850] sm:$0xff]
  %v1316 = vld [vmem:[%s1 + $0x2858] sm:$0xff]
  %v1317 = vld [vmem:[%s1 + $0x2860] sm:$0xff]
  %v1318 = vld [vmem:[%s1 + $0x2868] sm:$0xff]
  %v1319 = vld [vmem:[%s1 + $0x2870] sm:$0xff]
  %v1320 = vld [vmem:[%s1 + $0x2878] sm:$0xff]
  %v1321 = vld [vmem:[%s1 + $0x2880] sm:$0xff]
  %v1322 = vld [vmem:[%s1 + $0x2888] sm:$0xff]
  %v1323 = vld [vmem:[%s1 + $0x2890] sm:$0xff]
  %v1324 = vld [vmem:[%s1 + $0x2898] sm:$0xff]
  %v1325 = vld [vmem:[%s1 + $0x28a0] sm:$0xff]
  %v1326 = vld [vmem:[%s1 + $0x28a8] sm:$0xff]
  %v1327 = vld [vmem:[%s1 + $0x28b0] sm:$0xff]
  %v1328 = vld [vmem:[%s1 + $0x28b8] sm:$0xff]
  %v1329 = vld [vmem:[%s1 + $0x28c0] sm:$0xff]
  %v1330 = vld [vmem:[%s1 + $0x28c8] sm:$0xff]
  %v1331 = vld [vmem:[%s1 + $0x28d0] sm:$0xff]
  %v1332 = vld [vmem:[%s1 + $0x28d8] sm:$0xff]
  %v1333 = vld [vmem:[%s1 + $0x28e0] sm:$0xff]
  %v1334 = vld [vmem:[%s1 + $0x28e8] sm:$0xff]
  %v1335 = vld [vmem:[%s1 + $0x28f0] sm:$0xff]
  %v1336 = vld [vmem:[%s1 + $0x28f8] sm:$0xff]
  %v1337 = vld [vmem:[%s1 + $0x2900] sm:$0xff]
  %v1338 = vld [vmem:[%s1 + $0x2908] sm:$0xff]
  %v1339 = vld [vmem:[%s1 + $0x2910] sm:$0xff]
  %v1340 = vld [vmem:[%s1 + $0x2918] sm:$0xff]
  %v1341 = vld [vmem:[%s1 + $0x2920] sm:$0xff]
  %v1342 = vld [vmem:[%s1 + $0x2928] sm:$0xff]
  %v1343 = vld [vmem:[%s1 + $0x2930] sm:$0xff]
  %v1344 = vld [vmem:[%s1 + $0x2938] sm:$0xff]
  %v1345 = vld [vmem:[%s1 + $0x2940] sm:$0xff]
  %v1346 = vld [vmem:[%s1 + $0x2948] sm:$0xff]
  %v1347 = vld [vmem:[%s1 + $0x2950] sm:$0xff]
  %v1348 = vld [vmem:[%s1 + $0x2958] sm:$0xff]
  %v1349 = vld [vmem:[%s1 + $0x2960] sm:$0xff]
  %v1350 = vld [vmem:[%s1 + $0x2968] sm:$0xff]
  %v1351 = vld [vmem:[%s1 + $0x2970] sm:$0xff]
  %v1352 = vld [vmem:[%s1 + $0x2978] sm:$0xff]
  %v1353 = vld [vmem:[%s1 + $0x2980] sm:$0xff]
  %v1354 = vld [vmem:[%s1 + $0x2988] sm:$0xff]
  %v1355 = vld [vmem:[%s1 + $0x2990] sm:$0xff]
  %v1356 = vld [vmem:[%s1 + $0x2998] sm:$0xff]
  %v1357 = vld [vmem:[%s1 + $0x29a0] sm:$0xff]
  %v1358 = vld [vmem:[%s1 + $0x29a8] sm:$0xff]
  %v1359 = vld [vmem:[%s1 + $0x29b0] sm:$0xff]
  %v1360 = vld [vmem:[%s1 + $0x29b8] sm:$0xff]
  %v1361 = vld [vmem:[%s1 + $0x29c0] sm:$0xff]
  %v1362 = vld [vmem:[%s1 + $0x29c8] sm:$0xff]
  %v1363 = vld [vmem:[%s1 + $0x29d0] sm:$0xff]
  %v1364 = vld [vmem:[%s1 + $0x29d8] sm:$0xff]
  %v1365 = vld [vmem:[%s1 + $0x29e0] sm:$0xff]
  %v1366 = vld [vmem:[%s1 + $0x29e8] sm:$0xff]
  %v1367 = vld [vmem:[%s1 + $0x29f0] sm:$0xff]
  %v1368 = vld [vmem:[%s1 + $0x29f8] sm:$0xff]
  %v1369 = vld [vmem:[%s1 + $0x2a00] sm:$0xff]
  %v1370 = vld [vmem:[%s1 + $0x2a08] sm:$0xff]
  %v1371 = vld [vmem:[%s1 + $0x2a10] sm:$0xff]
  %v1372 = vld [vmem:[%s1 + $0x2a18] sm:$0xff]
  %v1373 = vld [vmem:[%s1 + $0x2a20] sm:$0xff]
  %v1374 = vld [vmem:[%s1 + $0x2a28] sm:$0xff]
  %v1375 = vld [vmem:[%s1 + $0x2a30] sm:$0xff]
  %v1376 = vld [vmem:[%s1 + $0x2a38] sm:$0xff]
  %v1377 = vld [vmem:[%s1 + $0x2a40] sm:$0xff]
  %v1378 = vld [vmem:[%s1 + $0x2a48] sm:$0xff]
  %v1379 = vld [vmem:[%s1 + $0x2a50] sm:$0xff]
  %v1380 = vld [vmem:[%s1 + $0x2a58] sm:$0xff]
  %v1381 = vld [vmem:[%s1 + $0x2a60] sm:$0xff]
  %v1382 = vld [vmem:[%s1 + $0x2a68] sm:$0xff]
  %v1383 = vld [vmem:[%s1 + $0x2a70] sm:$0xff]
  %v1384 = vld [vmem:[%s1 + $0x2a78] sm:$0xff]
  %v1385 = vld [vmem:[%s1 + $0x2a80] sm:$0xff]
  %v1386 = vld [vmem:[%s1 + $0x2a88] sm:$0xff]
  %v1387 = vld [vmem:[%s1 + $0x2a90] sm:$0xff]
  %v1388 = vld [vmem:[%s1 + $0x2a98] sm:$0xff]
  %v1389 = vld [vmem:[%s1 + $0x2aa0] sm:$0xff]
  %v1390 = vld [vmem:[%s1 + $0x2aa8] sm:$0xff]
  %v1391 = vld [vmem:[%s1 + $0x2ab0] sm:$0xff]
  %v1392 = vld [vmem:[%s1 + $0x2ab8] sm:$0xff]
  %v1393 = vld [vmem:[%s1 + $0x2ac0] sm:$0xff]
  %v1394 = vld [vmem:[%s1 + $0x2ac8] sm:$0xff]
  %v1395 = vld [vmem:[%s1 + $0x2ad0] sm:$0xff]
  %v1396 = vld [vmem:[%s1 + $0x2ad8] sm:$0xff]
  %v1397 = vld [vmem:[%s1 + $0x2ae0] sm:$0xff]
  %v1398 = vld [vmem:[%s1 + $0x2ae8] sm:$0xff]
  %v1399 = vld [vmem:[%s1 + $0x2af0] sm:$0xff]
  %v1400 = vld [vmem:[%s1 + $0x2af8] sm:$0xff]
  %v1401 = vld [vmem:[%s1 + $0x2b00] sm:$0xff]
  %v1402 = vld [vmem:[%s1 + $0x2b08] sm:$0xff]
  %v1403 = vld [vmem:[%s1 + $0x2b10] sm:$0xff]
  %v1404 = vld [vmem:[%s1 + $0x2b18] sm:$0xff]
  %v1405 = vld [vmem:[%s1 + $0x2b20] sm:$0xff]
  %v1406 = vld [vmem:[%s1 + $0x2b28] sm:$0xff]
  %v1407 = vld [vmem:[%s1 + $0x2b30] sm:$0xff]
  %v1408 = vld [vmem:[%s1 + $0x2b38] sm:$0xff]
  %v1409 = vld [vmem:[%s1 + $0x2b40] sm:$0xff]
  %v1410 = vld [vmem:[%s1 + $0x2b48] sm:$0xff]
  %v1411 = vld [vmem:[%s1 + $0x2b50] sm:$0xff]
  %v1412 = vld [vmem:[%s1 + $0x2b58] sm:$0xff]
  %v1413 = vld [vmem:[%s1 + $0x2b60] sm:$0xff]
  %v1414 = vld [vmem:[%s1 + $0x2b68] sm:$0xff]
  %v1415 = vld [vmem:[%s1 + $0x2b70] sm:$0xff]
  %v1416 = vld [vmem:[%s1 + $0x2b78] sm:$0xff]
  %v1417 = vld [vmem:[%s1 + $0x2b80] sm:$0xff]
  %v1418 = vld [vmem:[%s1 + $0x2b88] sm:$0xff]
  %v1419 = vld [vmem:[%s1 + $0x2b90] sm:$0xff]
  %v1420 = vld [vmem:[%s1 + $0x2b98] sm:$0xff]
  %v1421 = vld [vmem:[%s1 + $0x2ba0] sm:$0xff]
  %v1422 = vld [vmem:[%s1 + $0x2ba8] sm:$0xff]
  %v1423 = vld [vmem:[%s1 + $0x2bb0] sm:$0xff]
  %v1424 = vld [vmem:[%s1 + $0x2bb8] sm:$0xff]
  %v1425 = vld [vmem:[%s1 + $0x2bc0] sm:$0xff]
  %v1426 = vld [vmem:[%s1 + $0x2bc8] sm:$0xff]
  %v1427 = vld [vmem:[%s1 + $0x2bd0] sm:$0xff]
  %v1428 = vld [vmem:[%s1 + $0x2bd8] sm:$0xff]
  %v1429 = vld [vmem:[%s1 + $0x2be0] sm:$0xff]
  %v1430 = vld [vmem:[%s1 + $0x2be8] sm:$0xff]
  %v1431 = vld [vmem:[%s1 + $0x2bf0] sm:$0xff]
  %v1432 = vld [vmem:[%s1 + $0x2bf8] sm:$0xff]
  %v1433 = vld [vmem:[%s1 + $0x2c00] sm:$0xff]
  %v1434 = vld [vmem:[%s1 + $0x2c08] sm:$0xff]
  %v1435 = vld [vmem:[%s1 + $0x2c10] sm:$0xff]
  %v1436 = vld [vmem:[%s1 + $0x2c18] sm:$0xff]
  %v1437 = vld [vmem:[%s1 + $0x2c20] sm:$0xff]
  %v1438 = vld [vmem:[%s1 + $0x2c28] sm:$0xff]
  %v1439 = vld [vmem:[%s1 + $0x2c30] sm:$0xff]
  %v1440 = vld [vmem:[%s1 + $0x2c38] sm:$0xff]
  %v1441 = vld [vmem:[%s1 + $0x2c40] sm:$0xff]
  %v1442 = vld [vmem:[%s1 + $0x2c48] sm:$0xff]
  %v1443 = vld [vmem:[%s1 + $0x2c50] sm:$0xff]
  %v1444 = vld [vmem:[%s1 + $0x2c58] sm:$0xff]
  %v1445 = vld [vmem:[%s1 + $0x2c60] sm:$0xff]
  %v1446 = vld [vmem:[%s1 + $0x2c68] sm:$0xff]
  %v1447 = vld [vmem:[%s1 + $0x2c70] sm:$0xff]
  %v1448 = vld [vmem:[%s1 + $0x2c78] sm:$0xff]
  %v1449 = vld [vmem:[%s1 + $0x2c80] sm:$0xff]
  %v1450 = vld [vmem:[%s1 + $0x2c88] sm:$0xff]
  %v1451 = vld [vmem:[%s1 + $0x2c90] sm:$0xff]
  %v1452 = vld [vmem:[%s1 + $0x2c98] sm:$0xff]
  %v1453 = vld [vmem:[%s1 + $0x2ca0] sm:$0xff]
  %v1454 = vld [vmem:[%s1 + $0x2ca8] sm:$0xff]
  %v1455 = vld [vmem:[%s1 + $0x2cb0] sm:$0xff]
  %v1456 = vld [vmem:[%s1 + $0x2cb8] sm:$0xff]
  %v1457 = vld [vmem:[%s1 + $0x2cc0] sm:$0xff]
  %v1458 = vld [vmem:[%s1 + $0x2cc8] sm:$0xff]
  %v1459 = vld [vmem:[%s1 + $0x2cd0] sm:$0xff]
  %v1460 = vld [vmem:[%s1 + $0x2cd8] sm:$0xff]
  %v1461 = vld [vmem:[%s1 + $0x2ce0] sm:$0xff]
  %v1462 = vld [vmem:[%s1 + $0x2ce8] sm:$0xff]
  %v1463 = vld [vmem:[%s1 + $0x2cf0] sm:$0xff]
  %v1464 = vld [vmem:[%s1 + $0x2cf8] sm:$0xff]
  %v1465 = vld [vmem:[%s1 + $0x2d00] sm:$0xff]
  %v1466 = vld [vmem:[%s1 + $0x2d08] sm:$0xff]
  %v1467 = vld [vmem:[%s1 + $0x2d10] sm:$0xff]
  %v1468 = vld [vmem:[%s1 + $0x2d18] sm:$0xff]
  %v1469 = vld [vmem:[%s1 + $0x2d20] sm:$0xff]
  %v1470 = vld [vmem:[%s1 + $0x2d28] sm:$0xff]
  %v1471 = vld [vmem:[%s1 + $0x2d30] sm:$0xff]
  %v1472 = vld [vmem:[%s1 + $0x2d38] sm:$0xff]
  %v1473 = vld [vmem:[%s1 + $0x2d40] sm:$0xff]
  %v1474 = vld [vmem:[%s1 + $0x2d48] sm:$0xff]
  %v1475 = vld [vmem:[%s1 + $0x2d50] sm:$0xff]
  %v1476 = vld [vmem:[%s1 + $0x2d58] sm:$0xff]
  %v1477 = vld [vmem:[%s1 + $0x2d60] sm:$0xff]
  %v1478 = vld [vmem:[%s1 + $0x2d68] sm:$0xff]
  %v1479 = vld [vmem:[%s1 + $0x2d70] sm:$0xff]
  %v1480 = vld [vmem:[%s1 + $0x2d78] sm:$0xff]
  %v1481 = vld [vmem:[%s1 + $0x2d80] sm:$0xff]
  %v1482 = vld [vmem:[%s1 + $0x2d88] sm:$0xff]
  %v1483 = vld [vmem:[%s1 + $0x2d90] sm:$0xff]
  %v1484 = vld [vmem:[%s1 + $0x2d98] sm:$0xff]
  %v1485 = vld [vmem:[%s1 + $0x2da0] sm:$0xff]
  %v1486 = vld [vmem:[%s1 + $0x2da8] sm:$0xff]
  %v1487 = vld [vmem:[%s1 + $0x2db0] sm:$0xff]
  %v1488 = vld [vmem:[%s1 + $0x2db8] sm:$0xff]
  %v1489 = vld [vmem:[%s1 + $0x2dc0] sm:$0xff]
  %v1490 = vld [vmem:[%s1 + $0x2dc8] sm:$0xff]
  %v1491 = vld [vmem:[%s1 + $0x2dd0] sm:$0xff]
  %v1492 = vld [vmem:[%s1 + $0x2dd8] sm:$0xff]
  %v1493 = vld [vmem:[%s1 + $0x2de0] sm:$0xff]
  %v1494 = vld [vmem:[%s1 + $0x2de8] sm:$0xff]
  %v1495 = vld [vmem:[%s1 + $0x2df0] sm:$0xff]
  %v1496 = vld [vmem:[%s1 + $0x2df8] sm:$0xff]
  %v1497 = vld [vmem:[%s1 + $0x2e00] sm:$0xff]
  %v1498 = vld [vmem:[%s1 + $0x2e08] sm:$0xff]
  %v1499 = vld [vmem:[%s1 + $0x2e10] sm:$0xff]
  %v1500 = vld [vmem:[%s1 + $0x2e18] sm:$0xff]
  %v1501 = vld [vmem:[%s1 + $0x2e20] sm:$0xff]
  %v1502 = vld [vmem:[%s1 + $0x2e28] sm:$0xff]
  %v1503 = vld [vmem:[%s1 + $0x2e30] sm:$0xff]
  %v1504 = vld [vmem:[%s1 + $0x2e38] sm:$0xff]
  %v1505 = vld [vmem:[%s1 + $0x2e40] sm:$0xff]
  %v1506 = vld [vmem:[%s1 + $0x2e48] sm:$0xff]
  %v1507 = vld [vmem:[%s1 + $0x2e50] sm:$0xff]
  %v1508 = vld [vmem:[%s1 + $0x2e58] sm:$0xff]
  %v1509 = vld [vmem:[%s1 + $0x2e60] sm:$0xff]
  %v1510 = vld [vmem:[%s1 + $0x2e68] sm:$0xff]
  %v1511 = vld [vmem:[%s1 + $0x2e70] sm:$0xff]
  %v1512 = vld [vmem:[%s1 + $0x2e78] sm:$0xff]
  %v1513 = vld [vmem:[%s1 + $0x2e80] sm:$0xff]
  %v1514 = vld [vmem:[%s1 + $0x2e88] sm:$0xff]
  %v1515 = vld [vmem:[%s1 + $0x2e90] sm:$0xff]
  %v1516 = vld [vmem:[%s1 + $0x2e98] sm:$0xff]
  %v1517 = vld [vmem:[%s1 + $0x2ea0] sm:$0xff]
  %v1518 = vld [vmem:[%s1 + $0x2ea8] sm:$0xff]
  %v1519 = vld [vmem:[%s1 + $0x2eb0] sm:$0xff]
  %v1520 = vld [vmem:[%s1 + $0x2eb8] sm:$0xff]
  %v1521 = vld [vmem:[%s1 + $0x2ec0] sm:$0xff]
  %v1522 = vld [vmem:[%s1 + $0x2ec8] sm:$0xff]
  %v1523 = vld [vmem:[%s1 + $0x2ed0] sm:$0xff]
  %v1524 = vld [vmem:[%s1 + $0x2ed8] sm:$0xff]
  %v1525 = vld [vmem:[%s1 + $0x2ee0] sm:$0xff]
  %v1526 = vld [vmem:[%s1 + $0x2ee8] sm:$0xff]
  %v1527 = vld [vmem:[%s1 + $0x2ef0] sm:$0xff]
  %v1528 = vld [vmem:[%s1 + $0x2ef8] sm:$0xff]
  %v1529 = vld [vmem:[%s1 + $0x2f00] sm:$0xff]
  %v1530 = vld [vmem:[%s1 + $0x2f08] sm:$0xff]
  %v1531 = vld [vmem:[%s1 + $0x2f10] sm:$0xff]
  %v1532 = vld [vmem:[%s1 + $0x2f18] sm:$0xff]
  %v1533 = vld [vmem:[%s1 + $0x2f20] sm:$0xff]
  %v1534 = vld [vmem:[%s1 + $0x2f28] sm:$0xff]
  %v1535 = vld [vmem:[%s1 + $0x2f30] sm:$0xff]
  %v1536 = vld [vmem:[%s1 + $0x2f38] sm:$0xff]
  %v1537 = vld [vmem:[%s1 + $0x2f40] sm:$0xff]
  %v1538 = vld [vmem:[%s1 + $0x2f48] sm:$0xff]
  %v1539 = vld [vmem:[%s1 + $0x2f50] sm:$0xff]
  %v1540 = vld [vmem:[%s1 + $0x2f58] sm:$0xff]
  %v1541 = vld [vmem:[%s1 + $0x2f60] sm:$0xff]
  %v1542 = vld [vmem:[%s1 + $0x2f68] sm:$0xff]
  %v1543 = vld [vmem:[%s1 + $0x2f70] sm:$0xff]
  %v1544 = vld [vmem:[%s1 + $0x2f78] sm:$0xff]
  %v1545 = vld [vmem:[%s1 + $0x2f80] sm:$0xff]
  %v1546 = vld [vmem:[%s1 + $0x2f88] sm:$0xff]
  %v1547 = vld [vmem:[%s1 + $0x2f90] sm:$0xff]
  %v1548 = vld [vmem:[%s1 + $0x2f98] sm:$0xff]
  %v1549 = vld [vmem:[%s1 + $0x2fa0] sm:$0xff]
  %v1550 = vld [vmem:[%s1 + $0x2fa8] sm:$0xff]
  %v1551 = vld [vmem:[%s1 + $0x2fb0] sm:$0xff]
  %v1552 = vld [vmem:[%s1 + $0x2fb8] sm:$0xff]
  %v1553 = vld [vmem:[%s1 + $0x2fc0] sm:$0xff]
  %v1554 = vld [vmem:[%s1 + $0x2fc8] sm:$0xff]
  %v1555 = vld [vmem:[%s1 + $0x2fd0] sm:$0xff]
  %v1556 = vld [vmem:[%s1 + $0x2fd8] sm:$0xff]
  %v1557 = vld [vmem:[%s1 + $0x2fe0] sm:$0xff]
  %v1558 = vld [vmem:[%s1 + $0x2fe8] sm:$0xff]
  %v1559 = vld [vmem:[%s1 + $0x2ff0] sm:$0xff]
  %v1560 = vld [vmem:[%s1 + $0x2ff8] sm:$0xff]
  %v1561 = vld [vmem:[%s1 + $0x3000] sm:$0xff]
  %v1562 = vld [vmem:[%s1 + $0x3008] sm:$0xff]
  %v1563 = vld [vmem:[%s1 + $0x3010] sm:$0xff]
  %v1564 = vld [vmem:[%s1 + $0x3018] sm:$0xff]
  %v1565 = vld [vmem:[%s1 + $0x3020] sm:$0xff]
  %v1566 = vld [vmem:[%s1 + $0x3028] sm:$0xff]
  %v1567 = vld [vmem:[%s1 + $0x3030] sm:$0xff]
  %v1568 = vld [vmem:[%s1 + $0x3038] sm:$0xff]
  %v1569 = vld [vmem:[%s1 + $0x3040] sm:$0xff]
  %v1570 = vld [vmem:[%s1 + $0x3048] sm:$0xff]
  %v1571 = vld [vmem:[%s1 + $0x3050] sm:$0xff]
  %v1572 = vld [vmem:[%s1 + $0x3058] sm:$0xff]
  %v1573 = vld [vmem:[%s1 + $0x3060] sm:$0xff]
  %v1574 = vld [vmem:[%s1 + $0x3068] sm:$0xff]
  %v1575 = vld [vmem:[%s1 + $0x3070] sm:$0xff]
  %v1576 = vld [vmem:[%s1 + $0x3078] sm:$0xff]
  %v1577 = vld [vmem:[%s1 + $0x3080] sm:$0xff]
  %v1578 = vld [vmem:[%s1 + $0x3088] sm:$0xff]
  %v1579 = vld [vmem:[%s1 + $0x3090] sm:$0xff]
  %v1580 = vld [vmem:[%s1 + $0x3098] sm:$0xff]
  %v1581 = vld [vmem:[%s1 + $0x30a0] sm:$0xff]
  %v1582 = vld [vmem:[%s1 + $0x30a8] sm:$0xff]
  %v1583 = vld [vmem:[%s1 + $0x30b0] sm:$0xff]
  %v1584 = vld [vmem:[%s1 + $0x30b8] sm:$0xff]
  %v1585 = vld [vmem:[%s1 + $0x30c0] sm:$0x3]
  %v1586 = vld [vmem:[%s1 + $0x30c8] sm:$0x3]
  %v1587 = vld [vmem:[%s1 + $0x30d0] sm:$0x3]
  %v1588 = vld [vmem:[%s1 + $0x30d8] sm:$0x3]
  %v1589 = vld [vmem:[%s1 + $0x30e0] sm:$0x3]
  %v1590 = vld [vmem:[%s1 + $0x30e8] sm:$0x3]
  %v1591 = vld [vmem:[%s1 + $0x30f0] sm:$0x3]
  %v1592 = vld [vmem:[%s1 + $0x30f8] sm:$0x3]
  %v1593 = vld [vmem:[%s1 + $0x3100] sm:$0x3]
  %v1594 = vld [vmem:[%s1 + $0x3108] sm:$0x3]
  %v1595 = vld [vmem:[%s2] sm:$0xff]
  %v1596 = vld [vmem:[%s2 + $0x8] sm:$0x3]
  %v1599 = vperm.slane %v1595, 0
  %v1600 = vperm.slane %v1595, 1
  %v1601 = vperm.slane %v1595, 2
  %v1602 = vperm.slane %v1595, 3
  %v1603 = vperm.slane %v1595, 4
  %v1604 = vperm.slane %v1595, 5
  %v1605 = vperm.slane %v1595, 6
  %v1606 = vperm.slane %v1595, 7
  %v1607 = vperm.slane %v1596, 0
  %v1608 = vperm.slane %v1596, 1
  %1622 = vst [vmem:[#allocation1] ss:$4 sm:$0xff] %v22
  %s1623 = scalar_lea.vmem [#allocation1], 32
  %1624 = vst [vmem:[%s1623] ss:$4 sm:$0xff] %v23
  %v1625 = vld.sshfl [vmem:[#allocation1] sm:$0xff pattern:$0x73625140]
  %v1626 = vld.sshfl [vmem:[#allocation1 + $0x8] sm:$0xff pattern:$0x73625140]
  %v1627 = vld.sshfl [vmem:[#allocation1 + $0x10] sm:$0xff pattern:$0x73625140]
  %v1628 = vld.sshfl [vmem:[#allocation1 + $0x18] sm:$0xff pattern:$0x73625140]
  %v1629 = vld.sshfl [vmem:[#allocation1 + $0x20] sm:$0xff pattern:$0x73625140]
  %v1630 = vld.sshfl [vmem:[#allocation1 + $0x28] sm:$0xff pattern:$0x73625140]
  %v1631 = vld.sshfl [vmem:[#allocation1 + $0x30] sm:$0xff pattern:$0x73625140]
  %v1632 = vld.sshfl [vmem:[#allocation1 + $0x38] sm:$0xff pattern:$0x73625140]
  %1633 = vst [vmem:[#allocation1] ss:$4 sm:$0xff] %v24
  %v1634 = vld.sshfl [vmem:[#allocation1] sm:$0xff pattern:$0x73625140]
  %v1635 = vld.sshfl [vmem:[#allocation1 + $0x8] sm:$0xff pattern:$0x73625140]
  %vm1645 = vcmask 801792
  %v1646 = vsel %vm1645, %v1635, 0
  %vm1648 = vcmask 1041408
  %v1650 = vsel %vm1648, %v1585, 0
  %v1653 = vsel %vm1648, %v1586, 0
  %v1656 = vsel %vm1648, %v1587, 0
  %v1659 = vsel %vm1648, %v1588, 0
  %v1662 = vsel %vm1648, %v1589, 0
  %v1665 = vsel %vm1648, %v1590, 0
  %v1668 = vsel %vm1648, %v1591, 0
  %v1671 = vsel %vm1648, %v1592, 0
  %v1674 = vsel %vm1648, %v1593, 0
  %v1677 = vsel %vm1648, %v1594, 0
  %1679 = vmatpush.msra.mxu0 %v175
  %1680 = vmatpush.msra.mxu0 %v165
  %1681 = vmatpush.msra.mxu0 %v155
  %1682 = vmatpush.msra.mxu0 %v145
  %1683 = vmatpush.msra.mxu0 %v135
  %1684 = vmatpush.msra.mxu0 %v125
  %1685 = vmatpush.msra.mxu0 %v115
  %1686 = vmatpush.msra.mxu0 %v105
  %1687 = vmatpush.msra.mxu0 %v95
  %1688 = vmatpush.msra.mxu0 %v85
  %1689 = vmatpush.msra.mxu0 %v75
  %1690 = vmatpush.msra.mxu0 %v65
  %1691 = vmatpush.msra.mxu0 %v55
  %1692 = vmatpush.msra.mxu0 %v45
  %1693 = vmatpush.msra.mxu0 %v35
  %1694 = vmatpush.msra.mxu0 %v25
  %1695 = vmatmul.f32.gmra.mxu0 %v1625
  %v1696 = vpop.f32.mrf.mxu0
  %v1697 = vadd.f32 %v1599, %v1696
  %1698 = vdwg.mxu0
  %1699 = vmatpush.msra.mxu0 %v335
  %1700 = vmatpush.msra.mxu0 %v325
  %1701 = vmatpush.msra.mxu0 %v315
  %1702 = vmatpush.msra.mxu0 %v305
  %1703 = vmatpush.msra.mxu0 %v295
  %1704 = vmatpush.msra.mxu0 %v285
  %1705 = vmatpush.msra.mxu0 %v275
  %1706 = vmatpush.msra.mxu0 %v265
  %1707 = vmatpush.msra.mxu0 %v255
  %1708 = vmatpush.msra.mxu0 %v245
  %1709 = vmatpush.msra.mxu0 %v235
  %1710 = vmatpush.msra.mxu0 %v225
  %1711 = vmatpush.msra.mxu0 %v215
  %1712 = vmatpush.msra.mxu0 %v205
  %1713 = vmatpush.msra.mxu0 %v195
  %1714 = vmatpush.msra.mxu0 %v185
  %1715 = vmatmul.f32.gmra.mxu0 %v1626
  %v1716 = vpop.f32.mrf.mxu0
  %v1717 = vadd.f32 %v1697, %v1716
  %1718 = vdwg.mxu0
  %1719 = vmatpush.msra.mxu0 %v495
  %1720 = vmatpush.msra.mxu0 %v485
  %1721 = vmatpush.msra.mxu0 %v475
  %1722 = vmatpush.msra.mxu0 %v465
  %1723 = vmatpush.msra.mxu0 %v455
  %1724 = vmatpush.msra.mxu0 %v445
  %1725 = vmatpush.msra.mxu0 %v435
  %1726 = vmatpush.msra.mxu0 %v425
  %1727 = vmatpush.msra.mxu0 %v415
  %1728 = vmatpush.msra.mxu0 %v405
  %1729 = vmatpush.msra.mxu0 %v395
  %1730 = vmatpush.msra.mxu0 %v385
  %1731 = vmatpush.msra.mxu0 %v375
  %1732 = vmatpush.msra.mxu0 %v365
  %1733 = vmatpush.msra.mxu0 %v355
  %1734 = vmatpush.msra.mxu0 %v345
  %1735 = vmatmul.f32.gmra.mxu0 %v1627
  %v1736 = vpop.f32.mrf.mxu0
  %v1737 = vadd.f32 %v1717, %v1736
  %1738 = vdwg.mxu0
  %1739 = vmatpush.msra.mxu0 %v655
  %1740 = vmatpush.msra.mxu0 %v645
  %1741 = vmatpush.msra.mxu0 %v635
  %1742 = vmatpush.msra.mxu0 %v625
  %1743 = vmatpush.msra.mxu0 %v615
  %1744 = vmatpush.msra.mxu0 %v605
  %1745 = vmatpush.msra.mxu0 %v595
  %1746 = vmatpush.msra.mxu0 %v585
  %1747 = vmatpush.msra.mxu0 %v575
  %1748 = vmatpush.msra.mxu0 %v565
  %1749 = vmatpush.msra.mxu0 %v555
  %1750 = vmatpush.msra.mxu0 %v545
  %1751 = vmatpush.msra.mxu0 %v535
  %1752 = vmatpush.msra.mxu0 %v525
  %1753 = vmatpush.msra.mxu0 %v515
  %1754 = vmatpush.msra.mxu0 %v505
  %1755 = vmatmul.f32.gmra.mxu0 %v1628
  %v1756 = vpop.f32.mrf.mxu0
  %v1757 = vadd.f32 %v1737, %v1756
  %1758 = vdwg.mxu0
  %1759 = vmatpush.msra.mxu0 %v815
  %1760 = vmatpush.msra.mxu0 %v805
  %1761 = vmatpush.msra.mxu0 %v795
  %1762 = vmatpush.msra.mxu0 %v785
  %1763 = vmatpush.msra.mxu0 %v775
  %1764 = vmatpush.msra.mxu0 %v765
  %1765 = vmatpush.msra.mxu0 %v755
  %1766 = vmatpush.msra.mxu0 %v745
  %1767 = vmatpush.msra.mxu0 %v735
  %1768 = vmatpush.msra.mxu0 %v725
  %1769 = vmatpush.msra.mxu0 %v715
  %1770 = vmatpush.msra.mxu0 %v705
  %1771 = vmatpush.msra.mxu0 %v695
  %1772 = vmatpush.msra.mxu0 %v685
  %1773 = vmatpush.msra.mxu0 %v675
  %1774 = vmatpush.msra.mxu0 %v665
  %1775 = vmatmul.f32.gmra.mxu0 %v1629
  %v1776 = vpop.f32.mrf.mxu0
  %v1777 = vadd.f32 %v1757, %v1776
  %1778 = vdwg.mxu0
  %1779 = vmatpush.msra.mxu0 %v975
  %1780 = vmatpush.msra.mxu0 %v965
  %1781 = vmatpush.msra.mxu0 %v955
  %1782 = vmatpush.msra.mxu0 %v945
  %1783 = vmatpush.msra.mxu0 %v935
  %1784 = vmatpush.msra.mxu0 %v925
  %1785 = vmatpush.msra.mxu0 %v915
  %1786 = vmatpush.msra.mxu0 %v905
  %1787 = vmatpush.msra.mxu0 %v895
  %1788 = vmatpush.msra.mxu0 %v885
  %1789 = vmatpush.msra.mxu0 %v875
  %1790 = vmatpush.msra.mxu0 %v865
  %1791 = vmatpush.msra.mxu0 %v855
  %1792 = vmatpush.msra.mxu0 %v845
  %1793 = vmatpush.msra.mxu0 %v835
  %1794 = vmatpush.msra.mxu0 %v825
  %1795 = vmatmul.f32.gmra.mxu0 %v1630
  %v1796 = vpop.f32.mrf.mxu0
  %v1797 = vadd.f32 %v1777, %v1796
  %1798 = vdwg.mxu0
  %1799 = vmatpush.msra.mxu0 %v1135
  %1800 = vmatpush.msra.mxu0 %v1125
  %1801 = vmatpush.msra.mxu0 %v1115
  %1802 = vmatpush.msra.mxu0 %v1105
  %1803 = vmatpush.msra.mxu0 %v1095
  %1804 = vmatpush.msra.mxu0 %v1085
  %1805 = vmatpush.msra.mxu0 %v1075
  %1806 = vmatpush.msra.mxu0 %v1065
  %1807 = vmatpush.msra.mxu0 %v1055
  %1808 = vmatpush.msra.mxu0 %v1045
  %1809 = vmatpush.msra.mxu0 %v1035
  %1810 = vmatpush.msra.mxu0 %v1025
  %1811 = vmatpush.msra.mxu0 %v1015
  %1812 = vmatpush.msra.mxu0 %v1005
  %1813 = vmatpush.msra.mxu0 %v995
  %1814 = vmatpush.msra.mxu0 %v985
  %1815 = vmatmul.f32.gmra.mxu0 %v1631
  %v1816 = vpop.f32.mrf.mxu0
  %v1817 = vadd.f32 %v1797, %v1816
  %1818 = vdwg.mxu0
  %1819 = vmatpush.msra.mxu0 %v1295
  %1820 = vmatpush.msra.mxu0 %v1285
  %1821 = vmatpush.msra.mxu0 %v1275
  %1822 = vmatpush.msra.mxu0 %v1265
  %1823 = vmatpush.msra.mxu0 %v1255
  %1824 = vmatpush.msra.mxu0 %v1245
  %1825 = vmatpush.msra.mxu0 %v1235
  %1826 = vmatpush.msra.mxu0 %v1225
  %1827 = vmatpush.msra.mxu0 %v1215
  %1828 = vmatpush.msra.mxu0 %v1205
  %1829 = vmatpush.msra.mxu0 %v1195
  %1830 = vmatpush.msra.mxu0 %v1185
  %1831 = vmatpush.msra.mxu0 %v1175
  %1832 = vmatpush.msra.mxu0 %v1165
  %1833 = vmatpush.msra.mxu0 %v1155
  %1834 = vmatpush.msra.mxu0 %v1145
  %1835 = vmatmul.f32.gmra.mxu0 %v1632
  %v1836 = vpop.f32.mrf.mxu0
  %v1837 = vadd.f32 %v1817, %v1836
  %1838 = vdwg.mxu0
  %1839 = vmatpush.msra.mxu0 %v1455
  %1840 = vmatpush.msra.mxu0 %v1445
  %1841 = vmatpush.msra.mxu0 %v1435
  %1842 = vmatpush.msra.mxu0 %v1425
  %1843 = vmatpush.msra.mxu0 %v1415
  %1844 = vmatpush.msra.mxu0 %v1405
  %1845 = vmatpush.msra.mxu0 %v1395
  %1846 = vmatpush.msra.mxu0 %v1385
  %1847 = vmatpush.msra.mxu0 %v1375
  %1848 = vmatpush.msra.mxu0 %v1365
  %1849 = vmatpush.msra.mxu0 %v1355
  %1850 = vmatpush.msra.mxu0 %v1345
  %1851 = vmatpush.msra.mxu0 %v1335
  %1852 = vmatpush.msra.mxu0 %v1325
  %1853 = vmatpush.msra.mxu0 %v1315
  %1854 = vmatpush.msra.mxu0 %v1305
  %1855 = vmatmul.f32.gmra.mxu0 %v1634
  %v1856 = vpop.f32.mrf.mxu0
  %v1857 = vadd.f32 %v1837, %v1856
  %1858 = vdwg.mxu0
  %1859 = vmatpush.msra.mxu0 0.0
  %1860 = vmatpush.msra.mxu0 0.0
  %1861 = vmatpush.msra.mxu0 0.0
  %1862 = vmatpush.msra.mxu0 %v1650
  %1863 = vmatpush.msra.mxu0 %v1575
  %1864 = vmatpush.msra.mxu0 %v1565
  %1865 = vmatpush.msra.mxu0 %v1555
  %1866 = vmatpush.msra.mxu0 %v1545
  %1867 = vmatpush.msra.mxu0 %v1535
  %1868 = vmatpush.msra.mxu0 %v1525
  %1869 = vmatpush.msra.mxu0 %v1515
  %1870 = vmatpush.msra.mxu0 %v1505
  %1871 = vmatpush.msra.mxu0 %v1495
  %1872 = vmatpush.msra.mxu0 %v1485
  %1873 = vmatpush.msra.mxu0 %v1475
  %1874 = vmatpush.msra.mxu0 %v1465
  %1875 = vmatmul.f32.gmra.mxu0 %v1646
  %v1876 = vpop.f32.mrf.mxu0
  %v1877 = vadd.f32 %v1857, %v1876
  %1878 = vdwg.mxu0
  %1879 = vmatpush.msra.mxu0 %v176
  %1880 = vmatpush.msra.mxu0 %v166
  %1881 = vmatpush.msra.mxu0 %v156
  %1882 = vmatpush.msra.mxu0 %v146
  %1883 = vmatpush.msra.mxu0 %v136
  %1884 = vmatpush.msra.mxu0 %v126
  %1885 = vmatpush.msra.mxu0 %v116
  %1886 = vmatpush.msra.mxu0 %v106
  %1887 = vmatpush.msra.mxu0 %v96
  %1888 = vmatpush.msra.mxu0 %v86
  %1889 = vmatpush.msra.mxu0 %v76
  %1890 = vmatpush.msra.mxu0 %v66
  %1891 = vmatpush.msra.mxu0 %v56
  %1892 = vmatpush.msra.mxu0 %v46
  %1893 = vmatpush.msra.mxu0 %v36
  %1894 = vmatpush.msra.mxu0 %v26
  %1895 = vmatmul.f32.gmra.mxu0 %v1625
  %v1896 = vpop.f32.mrf.mxu0
  %v1897 = vadd.f32 %v1600, %v1896
  %1898 = vdwg.mxu0
  %1899 = vmatpush.msra.mxu0 %v336
  %1900 = vmatpush.msra.mxu0 %v326
  %1901 = vmatpush.msra.mxu0 %v316
  %1902 = vmatpush.msra.mxu0 %v306
  %1903 = vmatpush.msra.mxu0 %v296
  %1904 = vmatpush.msra.mxu0 %v286
  %1905 = vmatpush.msra.mxu0 %v276
  %1906 = vmatpush.msra.mxu0 %v266
  %1907 = vmatpush.msra.mxu0 %v256
  %1908 = vmatpush.msra.mxu0 %v246
  %1909 = vmatpush.msra.mxu0 %v236
  %1910 = vmatpush.msra.mxu0 %v226
  %1911 = vmatpush.msra.mxu0 %v216
  %1912 = vmatpush.msra.mxu0 %v206
  %1913 = vmatpush.msra.mxu0 %v196
  %1914 = vmatpush.msra.mxu0 %v186
  %1915 = vmatmul.f32.gmra.mxu0 %v1626
  %v1916 = vpop.f32.mrf.mxu0
  %v1917 = vadd.f32 %v1897, %v1916
  %1918 = vdwg.mxu0
  %1919 = vmatpush.msra.mxu0 %v496
  %1920 = vmatpush.msra.mxu0 %v486
  %1921 = vmatpush.msra.mxu0 %v476
  %1922 = vmatpush.msra.mxu0 %v466
  %1923 = vmatpush.msra.mxu0 %v456
  %1924 = vmatpush.msra.mxu0 %v446
  %1925 = vmatpush.msra.mxu0 %v436
  %1926 = vmatpush.msra.mxu0 %v426
  %1927 = vmatpush.msra.mxu0 %v416
  %1928 = vmatpush.msra.mxu0 %v406
  %1929 = vmatpush.msra.mxu0 %v396
  %1930 = vmatpush.msra.mxu0 %v386
  %1931 = vmatpush.msra.mxu0 %v376
  %1932 = vmatpush.msra.mxu0 %v366
  %1933 = vmatpush.msra.mxu0 %v356
  %1934 = vmatpush.msra.mxu0 %v346
  %1935 = vmatmul.f32.gmra.mxu0 %v1627
  %v1936 = vpop.f32.mrf.mxu0
  %v1937 = vadd.f32 %v1917, %v1936
  %1938 = vdwg.mxu0
  %1939 = vmatpush.msra.mxu0 %v656
  %1940 = vmatpush.msra.mxu0 %v646
  %1941 = vmatpush.msra.mxu0 %v636
  %1942 = vmatpush.msra.mxu0 %v626
  %1943 = vmatpush.msra.mxu0 %v616
  %1944 = vmatpush.msra.mxu0 %v606
  %1945 = vmatpush.msra.mxu0 %v596
  %1946 = vmatpush.msra.mxu0 %v586
  %1947 = vmatpush.msra.mxu0 %v576
  %1948 = vmatpush.msra.mxu0 %v566
  %1949 = vmatpush.msra.mxu0 %v556
  %1950 = vmatpush.msra.mxu0 %v546
  %1951 = vmatpush.msra.mxu0 %v536
  %1952 = vmatpush.msra.mxu0 %v526
  %1953 = vmatpush.msra.mxu0 %v516
  %1954 = vmatpush.msra.mxu0 %v506
  %1955 = vmatmul.f32.gmra.mxu0 %v1628
  %v1956 = vpop.f32.mrf.mxu0
  %v1957 = vadd.f32 %v1937, %v1956
  %1958 = vdwg.mxu0
  %1959 = vmatpush.msra.mxu0 %v816
  %1960 = vmatpush.msra.mxu0 %v806
  %1961 = vmatpush.msra.mxu0 %v796
  %1962 = vmatpush.msra.mxu0 %v786
  %1963 = vmatpush.msra.mxu0 %v776
  %1964 = vmatpush.msra.mxu0 %v766
  %1965 = vmatpush.msra.mxu0 %v756
  %1966 = vmatpush.msra.mxu0 %v746
  %1967 = vmatpush.msra.mxu0 %v736
  %1968 = vmatpush.msra.mxu0 %v726
  %1969 = vmatpush.msra.mxu0 %v716
  %1970 = vmatpush.msra.mxu0 %v706
  %1971 = vmatpush.msra.mxu0 %v696
  %1972 = vmatpush.msra.mxu0 %v686
  %1973 = vmatpush.msra.mxu0 %v676
  %1974 = vmatpush.msra.mxu0 %v666
  %1975 = vmatmul.f32.gmra.mxu0 %v1629
  %v1976 = vpop.f32.mrf.mxu0
  %v1977 = vadd.f32 %v1957, %v1976
  %1978 = vdwg.mxu0
  %1979 = vmatpush.msra.mxu0 %v976
  %1980 = vmatpush.msra.mxu0 %v966
  %1981 = vmatpush.msra.mxu0 %v956
  %1982 = vmatpush.msra.mxu0 %v946
  %1983 = vmatpush.msra.mxu0 %v936
  %1984 = vmatpush.msra.mxu0 %v926
  %1985 = vmatpush.msra.mxu0 %v916
  %1986 = vmatpush.msra.mxu0 %v906
  %1987 = vmatpush.msra.mxu0 %v896
  %1988 = vmatpush.msra.mxu0 %v886
  %1989 = vmatpush.msra.mxu0 %v876
  %1990 = vmatpush.msra.mxu0 %v866
  %1991 = vmatpush.msra.mxu0 %v856
  %1992 = vmatpush.msra.mxu0 %v846
  %1993 = vmatpush.msra.mxu0 %v836
  %1994 = vmatpush.msra.mxu0 %v826
  %1995 = vmatmul.f32.gmra.mxu0 %v1630
  %v1996 = vpop.f32.mrf.mxu0
  %v1997 = vadd.f32 %v1977, %v1996
  %1998 = vdwg.mxu0
  %1999 = vmatpush.msra.mxu0 %v1136
  %2000 = vmatpush.msra.mxu0 %v1126
  %2001 = vmatpush.msra.mxu0 %v1116
  %2002 = vmatpush.msra.mxu0 %v1106
  %2003 = vmatpush.msra.mxu0 %v1096
  %2004 = vmatpush.msra.mxu0 %v1086
  %2005 = vmatpush.msra.mxu0 %v1076
  %2006 = vmatpush.msra.mxu0 %v1066
  %2007 = vmatpush.msra.mxu0 %v1056
  %2008 = vmatpush.msra.mxu0 %v1046
  %2009 = vmatpush.msra.mxu0 %v1036
  %2010 = vmatpush.msra.mxu0 %v1026
  %2011 = vmatpush.msra.mxu0 %v1016
  %2012 = vmatpush.msra.mxu0 %v1006
  %2013 = vmatpush.msra.mxu0 %v996
  %2014 = vmatpush.msra.mxu0 %v986
  %2015 = vmatmul.f32.gmra.mxu0 %v1631
  %v2016 = vpop.f32.mrf.mxu0
  %v2017 = vadd.f32 %v1997, %v2016
  %2018 = vdwg.mxu0
  %2019 = vmatpush.msra.mxu0 %v1296
  %2020 = vmatpush.msra.mxu0 %v1286
  %2021 = vmatpush.msra.mxu0 %v1276
  %2022 = vmatpush.msra.mxu0 %v1266
  %2023 = vmatpush.msra.mxu0 %v1256
  %2024 = vmatpush.msra.mxu0 %v1246
  %2025 = vmatpush.msra.mxu0 %v1236
  %2026 = vmatpush.msra.mxu0 %v1226
  %2027 = vmatpush.msra.mxu0 %v1216
  %2028 = vmatpush.msra.mxu0 %v1206
  %2029 = vmatpush.msra.mxu0 %v1196
  %2030 = vmatpush.msra.mxu0 %v1186
  %2031 = vmatpush.msra.mxu0 %v1176
  %2032 = vmatpush.msra.mxu0 %v1166
  %2033 = vmatpush.msra.mxu0 %v1156
  %2034 = vmatpush.msra.mxu0 %v1146
  %2035 = vmatmul.f32.gmra.mxu0 %v1632
  %v2036 = vpop.f32.mrf.mxu0
  %v2037 = vadd.f32 %v2017, %v2036
  %2038 = vdwg.mxu0
  %2039 = vmatpush.msra.mxu0 %v1456
  %2040 = vmatpush.msra.mxu0 %v1446
  %2041 = vmatpush.msra.mxu0 %v1436
  %2042 = vmatpush.msra.mxu0 %v1426
  %2043 = vmatpush.msra.mxu0 %v1416
  %2044 = vmatpush.msra.mxu0 %v1406
  %2045 = vmatpush.msra.mxu0 %v1396
  %2046 = vmatpush.msra.mxu0 %v1386
  %2047 = vmatpush.msra.mxu0 %v1376
  %2048 = vmatpush.msra.mxu0 %v1366
  %2049 = vmatpush.msra.mxu0 %v1356
  %2050 = vmatpush.msra.mxu0 %v1346
  %2051 = vmatpush.msra.mxu0 %v1336
  %2052 = vmatpush.msra.mxu0 %v1326
  %2053 = vmatpush.msra.mxu0 %v1316
  %2054 = vmatpush.msra.mxu0 %v1306
  %2055 = vmatmul.f32.gmra.mxu0 %v1634
  %v2056 = vpop.f32.mrf.mxu0
  %v2057 = vadd.f32 %v2037, %v2056
  %2058 = vdwg.mxu0
  %2059 = vmatpush.msra.mxu0 0.0
  %2060 = vmatpush.msra.mxu0 0.0
  %2061 = vmatpush.msra.mxu0 0.0
  %2062 = vmatpush.msra.mxu0 %v1653
  %2063 = vmatpush.msra.mxu0 %v1576
  %2064 = vmatpush.msra.mxu0 %v1566
  %2065 = vmatpush.msra.mxu0 %v1556
  %2066 = vmatpush.msra.mxu0 %v1546
  %2067 = vmatpush.msra.mxu0 %v1536
  %2068 = vmatpush.msra.mxu0 %v1526
  %2069 = vmatpush.msra.mxu0 %v1516
  %2070 = vmatpush.msra.mxu0 %v1506
  %2071 = vmatpush.msra.mxu0 %v1496
  %2072 = vmatpush.msra.mxu0 %v1486
  %2073 = vmatpush.msra.mxu0 %v1476
  %2074 = vmatpush.msra.mxu0 %v1466
  %2075 = vmatmul.f32.gmra.mxu0 %v1646
  %v2076 = vpop.f32.mrf.mxu0
  %v2077 = vadd.f32 %v2057, %v2076
  %2078 = vdwg.mxu0
  %2079 = vmatpush.msra.mxu0 %v177
  %2080 = vmatpush.msra.mxu0 %v167
  %2081 = vmatpush.msra.mxu0 %v157
  %2082 = vmatpush.msra.mxu0 %v147
  %2083 = vmatpush.msra.mxu0 %v137
  %2084 = vmatpush.msra.mxu0 %v127
  %2085 = vmatpush.msra.mxu0 %v117
  %2086 = vmatpush.msra.mxu0 %v107
  %2087 = vmatpush.msra.mxu0 %v97
  %2088 = vmatpush.msra.mxu0 %v87
  %2089 = vmatpush.msra.mxu0 %v77
  %2090 = vmatpush.msra.mxu0 %v67
  %2091 = vmatpush.msra.mxu0 %v57
  %2092 = vmatpush.msra.mxu0 %v47
  %2093 = vmatpush.msra.mxu0 %v37
  %2094 = vmatpush.msra.mxu0 %v27
  %2095 = vmatmul.f32.gmra.mxu0 %v1625
  %v2096 = vpop.f32.mrf.mxu0
  %v2097 = vadd.f32 %v1601, %v2096
  %2098 = vdwg.mxu0
  %2099 = vmatpush.msra.mxu0 %v337
  %2100 = vmatpush.msra.mxu0 %v327
  %2101 = vmatpush.msra.mxu0 %v317
  %2102 = vmatpush.msra.mxu0 %v307
  %2103 = vmatpush.msra.mxu0 %v297
  %2104 = vmatpush.msra.mxu0 %v287
  %2105 = vmatpush.msra.mxu0 %v277
  %2106 = vmatpush.msra.mxu0 %v267
  %2107 = vmatpush.msra.mxu0 %v257
  %2108 = vmatpush.msra.mxu0 %v247
  %2109 = vmatpush.msra.mxu0 %v237
  %2110 = vmatpush.msra.mxu0 %v227
  %2111 = vmatpush.msra.mxu0 %v217
  %2112 = vmatpush.msra.mxu0 %v207
  %2113 = vmatpush.msra.mxu0 %v197
  %2114 = vmatpush.msra.mxu0 %v187
  %2115 = vmatmul.f32.gmra.mxu0 %v1626
  %v2116 = vpop.f32.mrf.mxu0
  %v2117 = vadd.f32 %v2097, %v2116
  %2118 = vdwg.mxu0
  %2119 = vmatpush.msra.mxu0 %v497
  %2120 = vmatpush.msra.mxu0 %v487
  %2121 = vmatpush.msra.mxu0 %v477
  %2122 = vmatpush.msra.mxu0 %v467
  %2123 = vmatpush.msra.mxu0 %v457
  %2124 = vmatpush.msra.mxu0 %v447
  %2125 = vmatpush.msra.mxu0 %v437
  %2126 = vmatpush.msra.mxu0 %v427
  %2127 = vmatpush.msra.mxu0 %v417
  %2128 = vmatpush.msra.mxu0 %v407
  %2129 = vmatpush.msra.mxu0 %v397
  %2130 = vmatpush.msra.mxu0 %v387
  %2131 = vmatpush.msra.mxu0 %v377
  %2132 = vmatpush.msra.mxu0 %v367
  %2133 = vmatpush.msra.mxu0 %v357
  %2134 = vmatpush.msra.mxu0 %v347
  %2135 = vmatmul.f32.gmra.mxu0 %v1627
  %v2136 = vpop.f32.mrf.mxu0
  %v2137 = vadd.f32 %v2117, %v2136
  %2138 = vdwg.mxu0
  %2139 = vmatpush.msra.mxu0 %v657
  %2140 = vmatpush.msra.mxu0 %v647
  %2141 = vmatpush.msra.mxu0 %v637
  %2142 = vmatpush.msra.mxu0 %v627
  %2143 = vmatpush.msra.mxu0 %v617
  %2144 = vmatpush.msra.mxu0 %v607
  %2145 = vmatpush.msra.mxu0 %v597
  %2146 = vmatpush.msra.mxu0 %v587
  %2147 = vmatpush.msra.mxu0 %v577
  %2148 = vmatpush.msra.mxu0 %v567
  %2149 = vmatpush.msra.mxu0 %v557
  %2150 = vmatpush.msra.mxu0 %v547
  %2151 = vmatpush.msra.mxu0 %v537
  %2152 = vmatpush.msra.mxu0 %v527
  %2153 = vmatpush.msra.mxu0 %v517
  %2154 = vmatpush.msra.mxu0 %v507
  %2155 = vmatmul.f32.gmra.mxu0 %v1628
  %v2156 = vpop.f32.mrf.mxu0
  %v2157 = vadd.f32 %v2137, %v2156
  %2158 = vdwg.mxu0
  %2159 = vmatpush.msra.mxu0 %v817
  %2160 = vmatpush.msra.mxu0 %v807
  %2161 = vmatpush.msra.mxu0 %v797
  %2162 = vmatpush.msra.mxu0 %v787
  %2163 = vmatpush.msra.mxu0 %v777
  %2164 = vmatpush.msra.mxu0 %v767
  %2165 = vmatpush.msra.mxu0 %v757
  %2166 = vmatpush.msra.mxu0 %v747
  %2167 = vmatpush.msra.mxu0 %v737
  %2168 = vmatpush.msra.mxu0 %v727
  %2169 = vmatpush.msra.mxu0 %v717
  %2170 = vmatpush.msra.mxu0 %v707
  %2171 = vmatpush.msra.mxu0 %v697
  %2172 = vmatpush.msra.mxu0 %v687
  %2173 = vmatpush.msra.mxu0 %v677
  %2174 = vmatpush.msra.mxu0 %v667
  %2175 = vmatmul.f32.gmra.mxu0 %v1629
  %v2176 = vpop.f32.mrf.mxu0
  %v2177 = vadd.f32 %v2157, %v2176
  %2178 = vdwg.mxu0
  %2179 = vmatpush.msra.mxu0 %v977
  %2180 = vmatpush.msra.mxu0 %v967
  %2181 = vmatpush.msra.mxu0 %v957
  %2182 = vmatpush.msra.mxu0 %v947
  %2183 = vmatpush.msra.mxu0 %v937
  %2184 = vmatpush.msra.mxu0 %v927
  %2185 = vmatpush.msra.mxu0 %v917
  %2186 = vmatpush.msra.mxu0 %v907
  %2187 = vmatpush.msra.mxu0 %v897
  %2188 = vmatpush.msra.mxu0 %v887
  %2189 = vmatpush.msra.mxu0 %v877
  %2190 = vmatpush.msra.mxu0 %v867
  %2191 = vmatpush.msra.mxu0 %v857
  %2192 = vmatpush.msra.mxu0 %v847
  %2193 = vmatpush.msra.mxu0 %v837
  %2194 = vmatpush.msra.mxu0 %v827
  %2195 = vmatmul.f32.gmra.mxu0 %v1630
  %v2196 = vpop.f32.mrf.mxu0
  %v2197 = vadd.f32 %v2177, %v2196
  %2198 = vdwg.mxu0
  %2199 = vmatpush.msra.mxu0 %v1137
  %2200 = vmatpush.msra.mxu0 %v1127
  %2201 = vmatpush.msra.mxu0 %v1117
  %2202 = vmatpush.msra.mxu0 %v1107
  %2203 = vmatpush.msra.mxu0 %v1097
  %2204 = vmatpush.msra.mxu0 %v1087
  %2205 = vmatpush.msra.mxu0 %v1077
  %2206 = vmatpush.msra.mxu0 %v1067
  %2207 = vmatpush.msra.mxu0 %v1057
  %2208 = vmatpush.msra.mxu0 %v1047
  %2209 = vmatpush.msra.mxu0 %v1037
  %2210 = vmatpush.msra.mxu0 %v1027
  %2211 = vmatpush.msra.mxu0 %v1017
  %2212 = vmatpush.msra.mxu0 %v1007
  %2213 = vmatpush.msra.mxu0 %v997
  %2214 = vmatpush.msra.mxu0 %v987
  %2215 = vmatmul.f32.gmra.mxu0 %v1631
  %v2216 = vpop.f32.mrf.mxu0
  %v2217 = vadd.f32 %v2197, %v2216
  %2218 = vdwg.mxu0
  %2219 = vmatpush.msra.mxu0 %v1297
  %2220 = vmatpush.msra.mxu0 %v1287
  %2221 = vmatpush.msra.mxu0 %v1277
  %2222 = vmatpush.msra.mxu0 %v1267
  %2223 = vmatpush.msra.mxu0 %v1257
  %2224 = vmatpush.msra.mxu0 %v1247
  %2225 = vmatpush.msra.mxu0 %v1237
  %2226 = vmatpush.msra.mxu0 %v1227
  %2227 = vmatpush.msra.mxu0 %v1217
  %2228 = vmatpush.msra.mxu0 %v1207
  %2229 = vmatpush.msra.mxu0 %v1197
  %2230 = vmatpush.msra.mxu0 %v1187
  %2231 = vmatpush.msra.mxu0 %v1177
  %2232 = vmatpush.msra.mxu0 %v1167
  %2233 = vmatpush.msra.mxu0 %v1157
  %2234 = vmatpush.msra.mxu0 %v1147
  %2235 = vmatmul.f32.gmra.mxu0 %v1632
  %v2236 = vpop.f32.mrf.mxu0
  %v2237 = vadd.f32 %v2217, %v2236
  %2238 = vdwg.mxu0
  %2239 = vmatpush.msra.mxu0 %v1457
  %2240 = vmatpush.msra.mxu0 %v1447
  %2241 = vmatpush.msra.mxu0 %v1437
  %2242 = vmatpush.msra.mxu0 %v1427
  %2243 = vmatpush.msra.mxu0 %v1417
  %2244 = vmatpush.msra.mxu0 %v1407
  %2245 = vmatpush.msra.mxu0 %v1397
  %2246 = vmatpush.msra.mxu0 %v1387
  %2247 = vmatpush.msra.mxu0 %v1377
  %2248 = vmatpush.msra.mxu0 %v1367
  %2249 = vmatpush.msra.mxu0 %v1357
  %2250 = vmatpush.msra.mxu0 %v1347
  %2251 = vmatpush.msra.mxu0 %v1337
  %2252 = vmatpush.msra.mxu0 %v1327
  %2253 = vmatpush.msra.mxu0 %v1317
  %2254 = vmatpush.msra.mxu0 %v1307
  %2255 = vmatmul.f32.gmra.mxu0 %v1634
  %v2256 = vpop.f32.mrf.mxu0
  %v2257 = vadd.f32 %v2237, %v2256
  %2258 = vdwg.mxu0
  %2259 = vmatpush.msra.mxu0 0.0
  %2260 = vmatpush.msra.mxu0 0.0
  %2261 = vmatpush.msra.mxu0 0.0
  %2262 = vmatpush.msra.mxu0 %v1656
  %2263 = vmatpush.msra.mxu0 %v1577
  %2264 = vmatpush.msra.mxu0 %v1567
  %2265 = vmatpush.msra.mxu0 %v1557
  %2266 = vmatpush.msra.mxu0 %v1547
  %2267 = vmatpush.msra.mxu0 %v1537
  %2268 = vmatpush.msra.mxu0 %v1527
  %2269 = vmatpush.msra.mxu0 %v1517
  %2270 = vmatpush.msra.mxu0 %v1507
  %2271 = vmatpush.msra.mxu0 %v1497
  %2272 = vmatpush.msra.mxu0 %v1487
  %2273 = vmatpush.msra.mxu0 %v1477
  %2274 = vmatpush.msra.mxu0 %v1467
  %2275 = vmatmul.f32.gmra.mxu0 %v1646
  %v2276 = vpop.f32.mrf.mxu0
  %v2277 = vadd.f32 %v2257, %v2276
  %2278 = vdwg.mxu0
  %2279 = vmatpush.msra.mxu0 %v178
  %2280 = vmatpush.msra.mxu0 %v168
  %2281 = vmatpush.msra.mxu0 %v158
  %2282 = vmatpush.msra.mxu0 %v148
  %2283 = vmatpush.msra.mxu0 %v138
  %2284 = vmatpush.msra.mxu0 %v128
  %2285 = vmatpush.msra.mxu0 %v118
  %2286 = vmatpush.msra.mxu0 %v108
  %2287 = vmatpush.msra.mxu0 %v98
  %2288 = vmatpush.msra.mxu0 %v88
  %2289 = vmatpush.msra.mxu0 %v78
  %2290 = vmatpush.msra.mxu0 %v68
  %2291 = vmatpush.msra.mxu0 %v58
  %2292 = vmatpush.msra.mxu0 %v48
  %2293 = vmatpush.msra.mxu0 %v38
  %2294 = vmatpush.msra.mxu0 %v28
  %2295 = vmatmul.f32.gmra.mxu0 %v1625
  %v2296 = vpop.f32.mrf.mxu0
  %v2297 = vadd.f32 %v1602, %v2296
  %2298 = vdwg.mxu0
  %2299 = vmatpush.msra.mxu0 %v338
  %2300 = vmatpush.msra.mxu0 %v328
  %2301 = vmatpush.msra.mxu0 %v318
  %2302 = vmatpush.msra.mxu0 %v308
  %2303 = vmatpush.msra.mxu0 %v298
  %2304 = vmatpush.msra.mxu0 %v288
  %2305 = vmatpush.msra.mxu0 %v278
  %2306 = vmatpush.msra.mxu0 %v268
  %2307 = vmatpush.msra.mxu0 %v258
  %2308 = vmatpush.msra.mxu0 %v248
  %2309 = vmatpush.msra.mxu0 %v238
  %2310 = vmatpush.msra.mxu0 %v228
  %2311 = vmatpush.msra.mxu0 %v218
  %2312 = vmatpush.msra.mxu0 %v208
  %2313 = vmatpush.msra.mxu0 %v198
  %2314 = vmatpush.msra.mxu0 %v188
  %2315 = vmatmul.f32.gmra.mxu0 %v1626
  %v2316 = vpop.f32.mrf.mxu0
  %v2317 = vadd.f32 %v2297, %v2316
  %2318 = vdwg.mxu0
  %2319 = vmatpush.msra.mxu0 %v498
  %2320 = vmatpush.msra.mxu0 %v488
  %2321 = vmatpush.msra.mxu0 %v478
  %2322 = vmatpush.msra.mxu0 %v468
  %2323 = vmatpush.msra.mxu0 %v458
  %2324 = vmatpush.msra.mxu0 %v448
  %2325 = vmatpush.msra.mxu0 %v438
  %2326 = vmatpush.msra.mxu0 %v428
  %2327 = vmatpush.msra.mxu0 %v418
  %2328 = vmatpush.msra.mxu0 %v408
  %2329 = vmatpush.msra.mxu0 %v398
  %2330 = vmatpush.msra.mxu0 %v388
  %2331 = vmatpush.msra.mxu0 %v378
  %2332 = vmatpush.msra.mxu0 %v368
  %2333 = vmatpush.msra.mxu0 %v358
  %2334 = vmatpush.msra.mxu0 %v348
  %2335 = vmatmul.f32.gmra.mxu0 %v1627
  %v2336 = vpop.f32.mrf.mxu0
  %v2337 = vadd.f32 %v2317, %v2336
  %2338 = vdwg.mxu0
  %2339 = vmatpush.msra.mxu0 %v658
  %2340 = vmatpush.msra.mxu0 %v648
  %2341 = vmatpush.msra.mxu0 %v638
  %2342 = vmatpush.msra.mxu0 %v628
  %2343 = vmatpush.msra.mxu0 %v618
  %2344 = vmatpush.msra.mxu0 %v608
  %2345 = vmatpush.msra.mxu0 %v598
  %2346 = vmatpush.msra.mxu0 %v588
  %2347 = vmatpush.msra.mxu0 %v578
  %2348 = vmatpush.msra.mxu0 %v568
  %2349 = vmatpush.msra.mxu0 %v558
  %2350 = vmatpush.msra.mxu0 %v548
  %2351 = vmatpush.msra.mxu0 %v538
  %2352 = vmatpush.msra.mxu0 %v528
  %2353 = vmatpush.msra.mxu0 %v518
  %2354 = vmatpush.msra.mxu0 %v508
  %2355 = vmatmul.f32.gmra.mxu0 %v1628
  %v2356 = vpop.f32.mrf.mxu0
  %v2357 = vadd.f32 %v2337, %v2356
  %2358 = vdwg.mxu0
  %2359 = vmatpush.msra.mxu0 %v818
  %2360 = vmatpush.msra.mxu0 %v808
  %2361 = vmatpush.msra.mxu0 %v798
  %2362 = vmatpush.msra.mxu0 %v788
  %2363 = vmatpush.msra.mxu0 %v778
  %2364 = vmatpush.msra.mxu0 %v768
  %2365 = vmatpush.msra.mxu0 %v758
  %2366 = vmatpush.msra.mxu0 %v748
  %2367 = vmatpush.msra.mxu0 %v738
  %2368 = vmatpush.msra.mxu0 %v728
  %2369 = vmatpush.msra.mxu0 %v718
  %2370 = vmatpush.msra.mxu0 %v708
  %2371 = vmatpush.msra.mxu0 %v698
  %2372 = vmatpush.msra.mxu0 %v688
  %2373 = vmatpush.msra.mxu0 %v678
  %2374 = vmatpush.msra.mxu0 %v668
  %2375 = vmatmul.f32.gmra.mxu0 %v1629
  %v2376 = vpop.f32.mrf.mxu0
  %v2377 = vadd.f32 %v2357, %v2376
  %2378 = vdwg.mxu0
  %2379 = vmatpush.msra.mxu0 %v978
  %2380 = vmatpush.msra.mxu0 %v968
  %2381 = vmatpush.msra.mxu0 %v958
  %2382 = vmatpush.msra.mxu0 %v948
  %2383 = vmatpush.msra.mxu0 %v938
  %2384 = vmatpush.msra.mxu0 %v928
  %2385 = vmatpush.msra.mxu0 %v918
  %2386 = vmatpush.msra.mxu0 %v908
  %2387 = vmatpush.msra.mxu0 %v898
  %2388 = vmatpush.msra.mxu0 %v888
  %2389 = vmatpush.msra.mxu0 %v878
  %2390 = vmatpush.msra.mxu0 %v868
  %2391 = vmatpush.msra.mxu0 %v858
  %2392 = vmatpush.msra.mxu0 %v848
  %2393 = vmatpush.msra.mxu0 %v838
  %2394 = vmatpush.msra.mxu0 %v828
  %2395 = vmatmul.f32.gmra.mxu0 %v1630
  %v2396 = vpop.f32.mrf.mxu0
  %v2397 = vadd.f32 %v2377, %v2396
  %2398 = vdwg.mxu0
  %2399 = vmatpush.msra.mxu0 %v1138
  %2400 = vmatpush.msra.mxu0 %v1128
  %2401 = vmatpush.msra.mxu0 %v1118
  %2402 = vmatpush.msra.mxu0 %v1108
  %2403 = vmatpush.msra.mxu0 %v1098
  %2404 = vmatpush.msra.mxu0 %v1088
  %2405 = vmatpush.msra.mxu0 %v1078
  %2406 = vmatpush.msra.mxu0 %v1068
  %2407 = vmatpush.msra.mxu0 %v1058
  %2408 = vmatpush.msra.mxu0 %v1048
  %2409 = vmatpush.msra.mxu0 %v1038
  %2410 = vmatpush.msra.mxu0 %v1028
  %2411 = vmatpush.msra.mxu0 %v1018
  %2412 = vmatpush.msra.mxu0 %v1008
  %2413 = vmatpush.msra.mxu0 %v998
  %2414 = vmatpush.msra.mxu0 %v988
  %2415 = vmatmul.f32.gmra.mxu0 %v1631
  %v2416 = vpop.f32.mrf.mxu0
  %v2417 = vadd.f32 %v2397, %v2416
  %2418 = vdwg.mxu0
  %2419 = vmatpush.msra.mxu0 %v1298
  %2420 = vmatpush.msra.mxu0 %v1288
  %2421 = vmatpush.msra.mxu0 %v1278
  %2422 = vmatpush.msra.mxu0 %v1268
  %2423 = vmatpush.msra.mxu0 %v1258
  %2424 = vmatpush.msra.mxu0 %v1248
  %2425 = vmatpush.msra.mxu0 %v1238
  %2426 = vmatpush.msra.mxu0 %v1228
  %2427 = vmatpush.msra.mxu0 %v1218
  %2428 = vmatpush.msra.mxu0 %v1208
  %2429 = vmatpush.msra.mxu0 %v1198
  %2430 = vmatpush.msra.mxu0 %v1188
  %2431 = vmatpush.msra.mxu0 %v1178
  %2432 = vmatpush.msra.mxu0 %v1168
  %2433 = vmatpush.msra.mxu0 %v1158
  %2434 = vmatpush.msra.mxu0 %v1148
  %2435 = vmatmul.f32.gmra.mxu0 %v1632
  %v2436 = vpop.f32.mrf.mxu0
  %v2437 = vadd.f32 %v2417, %v2436
  %2438 = vdwg.mxu0
  %2439 = vmatpush.msra.mxu0 %v1458
  %2440 = vmatpush.msra.mxu0 %v1448
  %2441 = vmatpush.msra.mxu0 %v1438
  %2442 = vmatpush.msra.mxu0 %v1428
  %2443 = vmatpush.msra.mxu0 %v1418
  %2444 = vmatpush.msra.mxu0 %v1408
  %2445 = vmatpush.msra.mxu0 %v1398
  %2446 = vmatpush.msra.mxu0 %v1388
  %2447 = vmatpush.msra.mxu0 %v1378
  %2448 = vmatpush.msra.mxu0 %v1368
  %2449 = vmatpush.msra.mxu0 %v1358
  %2450 = vmatpush.msra.mxu0 %v1348
  %2451 = vmatpush.msra.mxu0 %v1338
  %2452 = vmatpush.msra.mxu0 %v1328
  %2453 = vmatpush.msra.mxu0 %v1318
  %2454 = vmatpush.msra.mxu0 %v1308
  %2455 = vmatmul.f32.gmra.mxu0 %v1634
  %v2456 = vpop.f32.mrf.mxu0
  %v2457 = vadd.f32 %v2437, %v2456
  %2458 = vdwg.mxu0
  %2459 = vmatpush.msra.mxu0 0.0
  %2460 = vmatpush.msra.mxu0 0.0
  %2461 = vmatpush.msra.mxu0 0.0
  %2462 = vmatpush.msra.mxu0 %v1659
  %2463 = vmatpush.msra.mxu0 %v1578
  %2464 = vmatpush.msra.mxu0 %v1568
  %2465 = vmatpush.msra.mxu0 %v1558
  %2466 = vmatpush.msra.mxu0 %v1548
  %2467 = vmatpush.msra.mxu0 %v1538
  %2468 = vmatpush.msra.mxu0 %v1528
  %2469 = vmatpush.msra.mxu0 %v1518
  %2470 = vmatpush.msra.mxu0 %v1508
  %2471 = vmatpush.msra.mxu0 %v1498
  %2472 = vmatpush.msra.mxu0 %v1488
  %2473 = vmatpush.msra.mxu0 %v1478
  %2474 = vmatpush.msra.mxu0 %v1468
  %2475 = vmatmul.f32.gmra.mxu0 %v1646
  %v2476 = vpop.f32.mrf.mxu0
  %v2477 = vadd.f32 %v2457, %v2476
  %2478 = vdwg.mxu0
  %2479 = vmatpush.msra.mxu0 %v179
  %2480 = vmatpush.msra.mxu0 %v169
  %2481 = vmatpush.msra.mxu0 %v159
  %2482 = vmatpush.msra.mxu0 %v149
  %2483 = vmatpush.msra.mxu0 %v139
  %2484 = vmatpush.msra.mxu0 %v129
  %2485 = vmatpush.msra.mxu0 %v119
  %2486 = vmatpush.msra.mxu0 %v109
  %2487 = vmatpush.msra.mxu0 %v99
  %2488 = vmatpush.msra.mxu0 %v89
  %2489 = vmatpush.msra.mxu0 %v79
  %2490 = vmatpush.msra.mxu0 %v69
  %2491 = vmatpush.msra.mxu0 %v59
  %2492 = vmatpush.msra.mxu0 %v49
  %2493 = vmatpush.msra.mxu0 %v39
  %2494 = vmatpush.msra.mxu0 %v29
  %2495 = vmatmul.f32.gmra.mxu0 %v1625
  %v2496 = vpop.f32.mrf.mxu0
  %v2497 = vadd.f32 %v1603, %v2496
  %2498 = vdwg.mxu0
  %2499 = vmatpush.msra.mxu0 %v339
  %2500 = vmatpush.msra.mxu0 %v329
  %2501 = vmatpush.msra.mxu0 %v319
  %2502 = vmatpush.msra.mxu0 %v309
  %2503 = vmatpush.msra.mxu0 %v299
  %2504 = vmatpush.msra.mxu0 %v289
  %2505 = vmatpush.msra.mxu0 %v279
  %2506 = vmatpush.msra.mxu0 %v269
  %2507 = vmatpush.msra.mxu0 %v259
  %2508 = vmatpush.msra.mxu0 %v249
  %2509 = vmatpush.msra.mxu0 %v239
  %2510 = vmatpush.msra.mxu0 %v229
  %2511 = vmatpush.msra.mxu0 %v219
  %2512 = vmatpush.msra.mxu0 %v209
  %2513 = vmatpush.msra.mxu0 %v199
  %2514 = vmatpush.msra.mxu0 %v189
  %2515 = vmatmul.f32.gmra.mxu0 %v1626
  %v2516 = vpop.f32.mrf.mxu0
  %v2517 = vadd.f32 %v2497, %v2516
  %2518 = vdwg.mxu0
  %2519 = vmatpush.msra.mxu0 %v499
  %2520 = vmatpush.msra.mxu0 %v489
  %2521 = vmatpush.msra.mxu0 %v479
  %2522 = vmatpush.msra.mxu0 %v469
  %2523 = vmatpush.msra.mxu0 %v459
  %2524 = vmatpush.msra.mxu0 %v449
  %2525 = vmatpush.msra.mxu0 %v439
  %2526 = vmatpush.msra.mxu0 %v429
  %2527 = vmatpush.msra.mxu0 %v419
  %2528 = vmatpush.msra.mxu0 %v409
  %2529 = vmatpush.msra.mxu0 %v399
  %2530 = vmatpush.msra.mxu0 %v389
  %2531 = vmatpush.msra.mxu0 %v379
  %2532 = vmatpush.msra.mxu0 %v369
  %2533 = vmatpush.msra.mxu0 %v359
  %2534 = vmatpush.msra.mxu0 %v349
  %2535 = vmatmul.f32.gmra.mxu0 %v1627
  %v2536 = vpop.f32.mrf.mxu0
  %v2537 = vadd.f32 %v2517, %v2536
  %2538 = vdwg.mxu0
  %2539 = vmatpush.msra.mxu0 %v659
  %2540 = vmatpush.msra.mxu0 %v649
  %2541 = vmatpush.msra.mxu0 %v639
  %2542 = vmatpush.msra.mxu0 %v629
  %2543 = vmatpush.msra.mxu0 %v619
  %2544 = vmatpush.msra.mxu0 %v609
  %2545 = vmatpush.msra.mxu0 %v599
  %2546 = vmatpush.msra.mxu0 %v589
  %2547 = vmatpush.msra.mxu0 %v579
  %2548 = vmatpush.msra.mxu0 %v569
  %2549 = vmatpush.msra.mxu0 %v559
  %2550 = vmatpush.msra.mxu0 %v549
  %2551 = vmatpush.msra.mxu0 %v539
  %2552 = vmatpush.msra.mxu0 %v529
  %2553 = vmatpush.msra.mxu0 %v519
  %2554 = vmatpush.msra.mxu0 %v509
  %2555 = vmatmul.f32.gmra.mxu0 %v1628
  %v2556 = vpop.f32.mrf.mxu0
  %v2557 = vadd.f32 %v2537, %v2556
  %2558 = vdwg.mxu0
  %2559 = vmatpush.msra.mxu0 %v819
  %2560 = vmatpush.msra.mxu0 %v809
  %2561 = vmatpush.msra.mxu0 %v799
  %2562 = vmatpush.msra.mxu0 %v789
  %2563 = vmatpush.msra.mxu0 %v779
  %2564 = vmatpush.msra.mxu0 %v769
  %2565 = vmatpush.msra.mxu0 %v759
  %2566 = vmatpush.msra.mxu0 %v749
  %2567 = vmatpush.msra.mxu0 %v739
  %2568 = vmatpush.msra.mxu0 %v729
  %2569 = vmatpush.msra.mxu0 %v719
  %2570 = vmatpush.msra.mxu0 %v709
  %2571 = vmatpush.msra.mxu0 %v699
  %2572 = vmatpush.msra.mxu0 %v689
  %2573 = vmatpush.msra.mxu0 %v679
  %2574 = vmatpush.msra.mxu0 %v669
  %2575 = vmatmul.f32.gmra.mxu0 %v1629
  %v2576 = vpop.f32.mrf.mxu0
  %v2577 = vadd.f32 %v2557, %v2576
  %2578 = vdwg.mxu0
  %2579 = vmatpush.msra.mxu0 %v979
  %2580 = vmatpush.msra.mxu0 %v969
  %2581 = vmatpush.msra.mxu0 %v959
  %2582 = vmatpush.msra.mxu0 %v949
  %2583 = vmatpush.msra.mxu0 %v939
  %2584 = vmatpush.msra.mxu0 %v929
  %2585 = vmatpush.msra.mxu0 %v919
  %2586 = vmatpush.msra.mxu0 %v909
  %2587 = vmatpush.msra.mxu0 %v899
  %2588 = vmatpush.msra.mxu0 %v889
  %2589 = vmatpush.msra.mxu0 %v879
  %2590 = vmatpush.msra.mxu0 %v869
  %2591 = vmatpush.msra.mxu0 %v859
  %2592 = vmatpush.msra.mxu0 %v849
  %2593 = vmatpush.msra.mxu0 %v839
  %2594 = vmatpush.msra.mxu0 %v829
  %2595 = vmatmul.f32.gmra.mxu0 %v1630
  %v2596 = vpop.f32.mrf.mxu0
  %v2597 = vadd.f32 %v2577, %v2596
  %2598 = vdwg.mxu0
  %2599 = vmatpush.msra.mxu0 %v1139
  %2600 = vmatpush.msra.mxu0 %v1129
  %2601 = vmatpush.msra.mxu0 %v1119
  %2602 = vmatpush.msra.mxu0 %v1109
  %2603 = vmatpush.msra.mxu0 %v1099
  %2604 = vmatpush.msra.mxu0 %v1089
  %2605 = vmatpush.msra.mxu0 %v1079
  %2606 = vmatpush.msra.mxu0 %v1069
  %2607 = vmatpush.msra.mxu0 %v1059
  %2608 = vmatpush.msra.mxu0 %v1049
  %2609 = vmatpush.msra.mxu0 %v1039
  %2610 = vmatpush.msra.mxu0 %v1029
  %2611 = vmatpush.msra.mxu0 %v1019
  %2612 = vmatpush.msra.mxu0 %v1009
  %2613 = vmatpush.msra.mxu0 %v999
  %2614 = vmatpush.msra.mxu0 %v989
  %2615 = vmatmul.f32.gmra.mxu0 %v1631
  %v2616 = vpop.f32.mrf.mxu0
  %v2617 = vadd.f32 %v2597, %v2616
  %2618 = vdwg.mxu0
  %2619 = vmatpush.msra.mxu0 %v1299
  %2620 = vmatpush.msra.mxu0 %v1289
  %2621 = vmatpush.msra.mxu0 %v1279
  %2622 = vmatpush.msra.mxu0 %v1269
  %2623 = vmatpush.msra.mxu0 %v1259
  %2624 = vmatpush.msra.mxu0 %v1249
  %2625 = vmatpush.msra.mxu0 %v1239
  %2626 = vmatpush.msra.mxu0 %v1229
  %2627 = vmatpush.msra.mxu0 %v1219
  %2628 = vmatpush.msra.mxu0 %v1209
  %2629 = vmatpush.msra.mxu0 %v1199
  %2630 = vmatpush.msra.mxu0 %v1189
  %2631 = vmatpush.msra.mxu0 %v1179
  %2632 = vmatpush.msra.mxu0 %v1169
  %2633 = vmatpush.msra.mxu0 %v1159
  %2634 = vmatpush.msra.mxu0 %v1149
  %2635 = vmatmul.f32.gmra.mxu0 %v1632
  %v2636 = vpop.f32.mrf.mxu0
  %v2637 = vadd.f32 %v2617, %v2636
  %2638 = vdwg.mxu0
  %2639 = vmatpush.msra.mxu0 %v1459
  %2640 = vmatpush.msra.mxu0 %v1449
  %2641 = vmatpush.msra.mxu0 %v1439
  %2642 = vmatpush.msra.mxu0 %v1429
  %2643 = vmatpush.msra.mxu0 %v1419
  %2644 = vmatpush.msra.mxu0 %v1409
  %2645 = vmatpush.msra.mxu0 %v1399
  %2646 = vmatpush.msra.mxu0 %v1389
  %2647 = vmatpush.msra.mxu0 %v1379
  %2648 = vmatpush.msra.mxu0 %v1369
  %2649 = vmatpush.msra.mxu0 %v1359
  %2650 = vmatpush.msra.mxu0 %v1349
  %2651 = vmatpush.msra.mxu0 %v1339
  %2652 = vmatpush.msra.mxu0 %v1329
  %2653 = vmatpush.msra.mxu0 %v1319
  %2654 = vmatpush.msra.mxu0 %v1309
  %2655 = vmatmul.f32.gmra.mxu0 %v1634
  %v2656 = vpop.f32.mrf.mxu0
  %v2657 = vadd.f32 %v2637, %v2656
  %2658 = vdwg.mxu0
  %2659 = vmatpush.msra.mxu0 0.0
  %2660 = vmatpush.msra.mxu0 0.0
  %2661 = vmatpush.msra.mxu0 0.0
  %2662 = vmatpush.msra.mxu0 %v1662
  %2663 = vmatpush.msra.mxu0 %v1579
  %2664 = vmatpush.msra.mxu0 %v1569
  %2665 = vmatpush.msra.mxu0 %v1559
  %2666 = vmatpush.msra.mxu0 %v1549
  %2667 = vmatpush.msra.mxu0 %v1539
  %2668 = vmatpush.msra.mxu0 %v1529
  %2669 = vmatpush.msra.mxu0 %v1519
  %2670 = vmatpush.msra.mxu0 %v1509
  %2671 = vmatpush.msra.mxu0 %v1499
  %2672 = vmatpush.msra.mxu0 %v1489
  %2673 = vmatpush.msra.mxu0 %v1479
  %2674 = vmatpush.msra.mxu0 %v1469
  %2675 = vmatmul.f32.gmra.mxu0 %v1646
  %v2676 = vpop.f32.mrf.mxu0
  %v2677 = vadd.f32 %v2657, %v2676
  %2678 = vdwg.mxu0
  %2679 = vmatpush.msra.mxu0 %v180
  %2680 = vmatpush.msra.mxu0 %v170
  %2681 = vmatpush.msra.mxu0 %v160
  %2682 = vmatpush.msra.mxu0 %v150
  %2683 = vmatpush.msra.mxu0 %v140
  %2684 = vmatpush.msra.mxu0 %v130
  %2685 = vmatpush.msra.mxu0 %v120
  %2686 = vmatpush.msra.mxu0 %v110
  %2687 = vmatpush.msra.mxu0 %v100
  %2688 = vmatpush.msra.mxu0 %v90
  %2689 = vmatpush.msra.mxu0 %v80
  %2690 = vmatpush.msra.mxu0 %v70
  %2691 = vmatpush.msra.mxu0 %v60
  %2692 = vmatpush.msra.mxu0 %v50
  %2693 = vmatpush.msra.mxu0 %v40
  %2694 = vmatpush.msra.mxu0 %v30
  %2695 = vmatmul.f32.gmra.mxu0 %v1625
  %v2696 = vpop.f32.mrf.mxu0
  %v2697 = vadd.f32 %v1604, %v2696
  %2698 = vdwg.mxu0
  %2699 = vmatpush.msra.mxu0 %v340
  %2700 = vmatpush.msra.mxu0 %v330
  %2701 = vmatpush.msra.mxu0 %v320
  %2702 = vmatpush.msra.mxu0 %v310
  %2703 = vmatpush.msra.mxu0 %v300
  %2704 = vmatpush.msra.mxu0 %v290
  %2705 = vmatpush.msra.mxu0 %v280
  %2706 = vmatpush.msra.mxu0 %v270
  %2707 = vmatpush.msra.mxu0 %v260
  %2708 = vmatpush.msra.mxu0 %v250
  %2709 = vmatpush.msra.mxu0 %v240
  %2710 = vmatpush.msra.mxu0 %v230
  %2711 = vmatpush.msra.mxu0 %v220
  %2712 = vmatpush.msra.mxu0 %v210
  %2713 = vmatpush.msra.mxu0 %v200
  %2714 = vmatpush.msra.mxu0 %v190
  %2715 = vmatmul.f32.gmra.mxu0 %v1626
  %v2716 = vpop.f32.mrf.mxu0
  %v2717 = vadd.f32 %v2697, %v2716
  %2718 = vdwg.mxu0
  %2719 = vmatpush.msra.mxu0 %v500
  %2720 = vmatpush.msra.mxu0 %v490
  %2721 = vmatpush.msra.mxu0 %v480
  %2722 = vmatpush.msra.mxu0 %v470
  %2723 = vmatpush.msra.mxu0 %v460
  %2724 = vmatpush.msra.mxu0 %v450
  %2725 = vmatpush.msra.mxu0 %v440
  %2726 = vmatpush.msra.mxu0 %v430
  %2727 = vmatpush.msra.mxu0 %v420
  %2728 = vmatpush.msra.mxu0 %v410
  %2729 = vmatpush.msra.mxu0 %v400
  %2730 = vmatpush.msra.mxu0 %v390
  %2731 = vmatpush.msra.mxu0 %v380
  %2732 = vmatpush.msra.mxu0 %v370
  %2733 = vmatpush.msra.mxu0 %v360
  %2734 = vmatpush.msra.mxu0 %v350
  %2735 = vmatmul.f32.gmra.mxu0 %v1627
  %v2736 = vpop.f32.mrf.mxu0
  %v2737 = vadd.f32 %v2717, %v2736
  %2738 = vdwg.mxu0
  %2739 = vmatpush.msra.mxu0 %v660
  %2740 = vmatpush.msra.mxu0 %v650
  %2741 = vmatpush.msra.mxu0 %v640
  %2742 = vmatpush.msra.mxu0 %v630
  %2743 = vmatpush.msra.mxu0 %v620
  %2744 = vmatpush.msra.mxu0 %v610
  %2745 = vmatpush.msra.mxu0 %v600
  %2746 = vmatpush.msra.mxu0 %v590
  %2747 = vmatpush.msra.mxu0 %v580
  %2748 = vmatpush.msra.mxu0 %v570
  %2749 = vmatpush.msra.mxu0 %v560
  %2750 = vmatpush.msra.mxu0 %v550
  %2751 = vmatpush.msra.mxu0 %v540
  %2752 = vmatpush.msra.mxu0 %v530
  %2753 = vmatpush.msra.mxu0 %v520
  %2754 = vmatpush.msra.mxu0 %v510
  %2755 = vmatmul.f32.gmra.mxu0 %v1628
  %v2756 = vpop.f32.mrf.mxu0
  %v2757 = vadd.f32 %v2737, %v2756
  %2758 = vdwg.mxu0
  %2759 = vmatpush.msra.mxu0 %v820
  %2760 = vmatpush.msra.mxu0 %v810
  %2761 = vmatpush.msra.mxu0 %v800
  %2762 = vmatpush.msra.mxu0 %v790
  %2763 = vmatpush.msra.mxu0 %v780
  %2764 = vmatpush.msra.mxu0 %v770
  %2765 = vmatpush.msra.mxu0 %v760
  %2766 = vmatpush.msra.mxu0 %v750
  %2767 = vmatpush.msra.mxu0 %v740
  %2768 = vmatpush.msra.mxu0 %v730
  %2769 = vmatpush.msra.mxu0 %v720
  %2770 = vmatpush.msra.mxu0 %v710
  %2771 = vmatpush.msra.mxu0 %v700
  %2772 = vmatpush.msra.mxu0 %v690
  %2773 = vmatpush.msra.mxu0 %v680
  %2774 = vmatpush.msra.mxu0 %v670
  %2775 = vmatmul.f32.gmra.mxu0 %v1629
  %v2776 = vpop.f32.mrf.mxu0
  %v2777 = vadd.f32 %v2757, %v2776
  %2778 = vdwg.mxu0
  %2779 = vmatpush.msra.mxu0 %v980
  %2780 = vmatpush.msra.mxu0 %v970
  %2781 = vmatpush.msra.mxu0 %v960
  %2782 = vmatpush.msra.mxu0 %v950
  %2783 = vmatpush.msra.mxu0 %v940
  %2784 = vmatpush.msra.mxu0 %v930
  %2785 = vmatpush.msra.mxu0 %v920
  %2786 = vmatpush.msra.mxu0 %v910
  %2787 = vmatpush.msra.mxu0 %v900
  %2788 = vmatpush.msra.mxu0 %v890
  %2789 = vmatpush.msra.mxu0 %v880
  %2790 = vmatpush.msra.mxu0 %v870
  %2791 = vmatpush.msra.mxu0 %v860
  %2792 = vmatpush.msra.mxu0 %v850
  %2793 = vmatpush.msra.mxu0 %v840
  %2794 = vmatpush.msra.mxu0 %v830
  %2795 = vmatmul.f32.gmra.mxu0 %v1630
  %v2796 = vpop.f32.mrf.mxu0
  %v2797 = vadd.f32 %v2777, %v2796
  %2798 = vdwg.mxu0
  %2799 = vmatpush.msra.mxu0 %v1140
  %2800 = vmatpush.msra.mxu0 %v1130
  %2801 = vmatpush.msra.mxu0 %v1120
  %2802 = vmatpush.msra.mxu0 %v1110
  %2803 = vmatpush.msra.mxu0 %v1100
  %2804 = vmatpush.msra.mxu0 %v1090
  %2805 = vmatpush.msra.mxu0 %v1080
  %2806 = vmatpush.msra.mxu0 %v1070
  %2807 = vmatpush.msra.mxu0 %v1060
  %2808 = vmatpush.msra.mxu0 %v1050
  %2809 = vmatpush.msra.mxu0 %v1040
  %2810 = vmatpush.msra.mxu0 %v1030
  %2811 = vmatpush.msra.mxu0 %v1020
  %2812 = vmatpush.msra.mxu0 %v1010
  %2813 = vmatpush.msra.mxu0 %v1000
  %2814 = vmatpush.msra.mxu0 %v990
  %2815 = vmatmul.f32.gmra.mxu0 %v1631
  %v2816 = vpop.f32.mrf.mxu0
  %v2817 = vadd.f32 %v2797, %v2816
  %2818 = vdwg.mxu0
  %2819 = vmatpush.msra.mxu0 %v1300
  %2820 = vmatpush.msra.mxu0 %v1290
  %2821 = vmatpush.msra.mxu0 %v1280
  %2822 = vmatpush.msra.mxu0 %v1270
  %2823 = vmatpush.msra.mxu0 %v1260
  %2824 = vmatpush.msra.mxu0 %v1250
  %2825 = vmatpush.msra.mxu0 %v1240
  %2826 = vmatpush.msra.mxu0 %v1230
  %2827 = vmatpush.msra.mxu0 %v1220
  %2828 = vmatpush.msra.mxu0 %v1210
  %2829 = vmatpush.msra.mxu0 %v1200
  %2830 = vmatpush.msra.mxu0 %v1190
  %2831 = vmatpush.msra.mxu0 %v1180
  %2832 = vmatpush.msra.mxu0 %v1170
  %2833 = vmatpush.msra.mxu0 %v1160
  %2834 = vmatpush.msra.mxu0 %v1150
  %2835 = vmatmul.f32.gmra.mxu0 %v1632
  %v2836 = vpop.f32.mrf.mxu0
  %v2837 = vadd.f32 %v2817, %v2836
  %2838 = vdwg.mxu0
  %2839 = vmatpush.msra.mxu0 %v1460
  %2840 = vmatpush.msra.mxu0 %v1450
  %2841 = vmatpush.msra.mxu0 %v1440
  %2842 = vmatpush.msra.mxu0 %v1430
  %2843 = vmatpush.msra.mxu0 %v1420
  %2844 = vmatpush.msra.mxu0 %v1410
  %2845 = vmatpush.msra.mxu0 %v1400
  %2846 = vmatpush.msra.mxu0 %v1390
  %2847 = vmatpush.msra.mxu0 %v1380
  %2848 = vmatpush.msra.mxu0 %v1370
  %2849 = vmatpush.msra.mxu0 %v1360
  %2850 = vmatpush.msra.mxu0 %v1350
  %2851 = vmatpush.msra.mxu0 %v1340
  %2852 = vmatpush.msra.mxu0 %v1330
  %2853 = vmatpush.msra.mxu0 %v1320
  %2854 = vmatpush.msra.mxu0 %v1310
  %2855 = vmatmul.f32.gmra.mxu0 %v1634
  %v2856 = vpop.f32.mrf.mxu0
  %v2857 = vadd.f32 %v2837, %v2856
  %2858 = vdwg.mxu0
  %2859 = vmatpush.msra.mxu0 0.0
  %2860 = vmatpush.msra.mxu0 0.0
  %2861 = vmatpush.msra.mxu0 0.0
  %2862 = vmatpush.msra.mxu0 %v1665
  %2863 = vmatpush.msra.mxu0 %v1580
  %2864 = vmatpush.msra.mxu0 %v1570
  %2865 = vmatpush.msra.mxu0 %v1560
  %2866 = vmatpush.msra.mxu0 %v1550
  %2867 = vmatpush.msra.mxu0 %v1540
  %2868 = vmatpush.msra.mxu0 %v1530
  %2869 = vmatpush.msra.mxu0 %v1520
  %2870 = vmatpush.msra.mxu0 %v1510
  %2871 = vmatpush.msra.mxu0 %v1500
  %2872 = vmatpush.msra.mxu0 %v1490
  %2873 = vmatpush.msra.mxu0 %v1480
  %2874 = vmatpush.msra.mxu0 %v1470
  %2875 = vmatmul.f32.gmra.mxu0 %v1646
  %v2876 = vpop.f32.mrf.mxu0
  %v2877 = vadd.f32 %v2857, %v2876
  %2878 = vdwg.mxu0
  %2879 = vmatpush.msra.mxu0 %v181
  %2880 = vmatpush.msra.mxu0 %v171
  %2881 = vmatpush.msra.mxu0 %v161
  %2882 = vmatpush.msra.mxu0 %v151
  %2883 = vmatpush.msra.mxu0 %v141
  %2884 = vmatpush.msra.mxu0 %v131
  %2885 = vmatpush.msra.mxu0 %v121
  %2886 = vmatpush.msra.mxu0 %v111
  %2887 = vmatpush.msra.mxu0 %v101
  %2888 = vmatpush.msra.mxu0 %v91
  %2889 = vmatpush.msra.mxu0 %v81
  %2890 = vmatpush.msra.mxu0 %v71
  %2891 = vmatpush.msra.mxu0 %v61
  %2892 = vmatpush.msra.mxu0 %v51
  %2893 = vmatpush.msra.mxu0 %v41
  %2894 = vmatpush.msra.mxu0 %v31
  %2895 = vmatmul.f32.gmra.mxu0 %v1625
  %v2896 = vpop.f32.mrf.mxu0
  %v2897 = vadd.f32 %v1605, %v2896
  %2898 = vdwg.mxu0
  %2899 = vmatpush.msra.mxu0 %v341
  %2900 = vmatpush.msra.mxu0 %v331
  %2901 = vmatpush.msra.mxu0 %v321
  %2902 = vmatpush.msra.mxu0 %v311
  %2903 = vmatpush.msra.mxu0 %v301
  %2904 = vmatpush.msra.mxu0 %v291
  %2905 = vmatpush.msra.mxu0 %v281
  %2906 = vmatpush.msra.mxu0 %v271
  %2907 = vmatpush.msra.mxu0 %v261
  %2908 = vmatpush.msra.mxu0 %v251
  %2909 = vmatpush.msra.mxu0 %v241
  %2910 = vmatpush.msra.mxu0 %v231
  %2911 = vmatpush.msra.mxu0 %v221
  %2912 = vmatpush.msra.mxu0 %v211
  %2913 = vmatpush.msra.mxu0 %v201
  %2914 = vmatpush.msra.mxu0 %v191
  %2915 = vmatmul.f32.gmra.mxu0 %v1626
  %v2916 = vpop.f32.mrf.mxu0
  %v2917 = vadd.f32 %v2897, %v2916
  %2918 = vdwg.mxu0
  %2919 = vmatpush.msra.mxu0 %v501
  %2920 = vmatpush.msra.mxu0 %v491
  %2921 = vmatpush.msra.mxu0 %v481
  %2922 = vmatpush.msra.mxu0 %v471
  %2923 = vmatpush.msra.mxu0 %v461
  %2924 = vmatpush.msra.mxu0 %v451
  %2925 = vmatpush.msra.mxu0 %v441
  %2926 = vmatpush.msra.mxu0 %v431
  %2927 = vmatpush.msra.mxu0 %v421
  %2928 = vmatpush.msra.mxu0 %v411
  %2929 = vmatpush.msra.mxu0 %v401
  %2930 = vmatpush.msra.mxu0 %v391
  %2931 = vmatpush.msra.mxu0 %v381
  %2932 = vmatpush.msra.mxu0 %v371
  %2933 = vmatpush.msra.mxu0 %v361
  %2934 = vmatpush.msra.mxu0 %v351
  %2935 = vmatmul.f32.gmra.mxu0 %v1627
  %v2936 = vpop.f32.mrf.mxu0
  %v2937 = vadd.f32 %v2917, %v2936
  %2938 = vdwg.mxu0
  %2939 = vmatpush.msra.mxu0 %v661
  %2940 = vmatpush.msra.mxu0 %v651
  %2941 = vmatpush.msra.mxu0 %v641
  %2942 = vmatpush.msra.mxu0 %v631
  %2943 = vmatpush.msra.mxu0 %v621
  %2944 = vmatpush.msra.mxu0 %v611
  %2945 = vmatpush.msra.mxu0 %v601
  %2946 = vmatpush.msra.mxu0 %v591
  %2947 = vmatpush.msra.mxu0 %v581
  %2948 = vmatpush.msra.mxu0 %v571
  %2949 = vmatpush.msra.mxu0 %v561
  %2950 = vmatpush.msra.mxu0 %v551
  %2951 = vmatpush.msra.mxu0 %v541
  %2952 = vmatpush.msra.mxu0 %v531
  %2953 = vmatpush.msra.mxu0 %v521
  %2954 = vmatpush.msra.mxu0 %v511
  %2955 = vmatmul.f32.gmra.mxu0 %v1628
  %v2956 = vpop.f32.mrf.mxu0
  %v2957 = vadd.f32 %v2937, %v2956
  %2958 = vdwg.mxu0
  %2959 = vmatpush.msra.mxu0 %v821
  %2960 = vmatpush.msra.mxu0 %v811
  %2961 = vmatpush.msra.mxu0 %v801
  %2962 = vmatpush.msra.mxu0 %v791
  %2963 = vmatpush.msra.mxu0 %v781
  %2964 = vmatpush.msra.mxu0 %v771
  %2965 = vmatpush.msra.mxu0 %v761
  %2966 = vmatpush.msra.mxu0 %v751
  %2967 = vmatpush.msra.mxu0 %v741
  %2968 = vmatpush.msra.mxu0 %v731
  %2969 = vmatpush.msra.mxu0 %v721
  %2970 = vmatpush.msra.mxu0 %v711
  %2971 = vmatpush.msra.mxu0 %v701
  %2972 = vmatpush.msra.mxu0 %v691
  %2973 = vmatpush.msra.mxu0 %v681
  %2974 = vmatpush.msra.mxu0 %v671
  %2975 = vmatmul.f32.gmra.mxu0 %v1629
  %v2976 = vpop.f32.mrf.mxu0
  %v2977 = vadd.f32 %v2957, %v2976
  %2978 = vdwg.mxu0
  %2979 = vmatpush.msra.mxu0 %v981
  %2980 = vmatpush.msra.mxu0 %v971
  %2981 = vmatpush.msra.mxu0 %v961
  %2982 = vmatpush.msra.mxu0 %v951
  %2983 = vmatpush.msra.mxu0 %v941
  %2984 = vmatpush.msra.mxu0 %v931
  %2985 = vmatpush.msra.mxu0 %v921
  %2986 = vmatpush.msra.mxu0 %v911
  %2987 = vmatpush.msra.mxu0 %v901
  %2988 = vmatpush.msra.mxu0 %v891
  %2989 = vmatpush.msra.mxu0 %v881
  %2990 = vmatpush.msra.mxu0 %v871
  %2991 = vmatpush.msra.mxu0 %v861
  %2992 = vmatpush.msra.mxu0 %v851
  %2993 = vmatpush.msra.mxu0 %v841
  %2994 = vmatpush.msra.mxu0 %v831
  %2995 = vmatmul.f32.gmra.mxu0 %v1630
  %v2996 = vpop.f32.mrf.mxu0
  %v2997 = vadd.f32 %v2977, %v2996
  %2998 = vdwg.mxu0
  %2999 = vmatpush.msra.mxu0 %v1141
  %3000 = vmatpush.msra.mxu0 %v1131
  %3001 = vmatpush.msra.mxu0 %v1121
  %3002 = vmatpush.msra.mxu0 %v1111
  %3003 = vmatpush.msra.mxu0 %v1101
  %3004 = vmatpush.msra.mxu0 %v1091
  %3005 = vmatpush.msra.mxu0 %v1081
  %3006 = vmatpush.msra.mxu0 %v1071
  %3007 = vmatpush.msra.mxu0 %v1061
  %3008 = vmatpush.msra.mxu0 %v1051
  %3009 = vmatpush.msra.mxu0 %v1041
  %3010 = vmatpush.msra.mxu0 %v1031
  %3011 = vmatpush.msra.mxu0 %v1021
  %3012 = vmatpush.msra.mxu0 %v1011
  %3013 = vmatpush.msra.mxu0 %v1001
  %3014 = vmatpush.msra.mxu0 %v991
  %3015 = vmatmul.f32.gmra.mxu0 %v1631
  %v3016 = vpop.f32.mrf.mxu0
  %v3017 = vadd.f32 %v2997, %v3016
  %3018 = vdwg.mxu0
  %3019 = vmatpush.msra.mxu0 %v1301
  %3020 = vmatpush.msra.mxu0 %v1291
  %3021 = vmatpush.msra.mxu0 %v1281
  %3022 = vmatpush.msra.mxu0 %v1271
  %3023 = vmatpush.msra.mxu0 %v1261
  %3024 = vmatpush.msra.mxu0 %v1251
  %3025 = vmatpush.msra.mxu0 %v1241
  %3026 = vmatpush.msra.mxu0 %v1231
  %3027 = vmatpush.msra.mxu0 %v1221
  %3028 = vmatpush.msra.mxu0 %v1211
  %3029 = vmatpush.msra.mxu0 %v1201
  %3030 = vmatpush.msra.mxu0 %v1191
  %3031 = vmatpush.msra.mxu0 %v1181
  %3032 = vmatpush.msra.mxu0 %v1171
  %3033 = vmatpush.msra.mxu0 %v1161
  %3034 = vmatpush.msra.mxu0 %v1151
  %3035 = vmatmul.f32.gmra.mxu0 %v1632
  %v3036 = vpop.f32.mrf.mxu0
  %v3037 = vadd.f32 %v3017, %v3036
  %3038 = vdwg.mxu0
  %3039 = vmatpush.msra.mxu0 %v1461
  %3040 = vmatpush.msra.mxu0 %v1451
  %3041 = vmatpush.msra.mxu0 %v1441
  %3042 = vmatpush.msra.mxu0 %v1431
  %3043 = vmatpush.msra.mxu0 %v1421
  %3044 = vmatpush.msra.mxu0 %v1411
  %3045 = vmatpush.msra.mxu0 %v1401
  %3046 = vmatpush.msra.mxu0 %v1391
  %3047 = vmatpush.msra.mxu0 %v1381
  %3048 = vmatpush.msra.mxu0 %v1371
  %3049 = vmatpush.msra.mxu0 %v1361
  %3050 = vmatpush.msra.mxu0 %v1351
  %3051 = vmatpush.msra.mxu0 %v1341
  %3052 = vmatpush.msra.mxu0 %v1331
  %3053 = vmatpush.msra.mxu0 %v1321
  %3054 = vmatpush.msra.mxu0 %v1311
  %3055 = vmatmul.f32.gmra.mxu0 %v1634
  %v3056 = vpop.f32.mrf.mxu0
  %v3057 = vadd.f32 %v3037, %v3056
  %3058 = vdwg.mxu0
  %3059 = vmatpush.msra.mxu0 0.0
  %3060 = vmatpush.msra.mxu0 0.0
  %3061 = vmatpush.msra.mxu0 0.0
  %3062 = vmatpush.msra.mxu0 %v1668
  %3063 = vmatpush.msra.mxu0 %v1581
  %3064 = vmatpush.msra.mxu0 %v1571
  %3065 = vmatpush.msra.mxu0 %v1561
  %3066 = vmatpush.msra.mxu0 %v1551
  %3067 = vmatpush.msra.mxu0 %v1541
  %3068 = vmatpush.msra.mxu0 %v1531
  %3069 = vmatpush.msra.mxu0 %v1521
  %3070 = vmatpush.msra.mxu0 %v1511
  %3071 = vmatpush.msra.mxu0 %v1501
  %3072 = vmatpush.msra.mxu0 %v1491
  %3073 = vmatpush.msra.mxu0 %v1481
  %3074 = vmatpush.msra.mxu0 %v1471
  %3075 = vmatmul.f32.gmra.mxu0 %v1646
  %v3076 = vpop.f32.mrf.mxu0
  %v3077 = vadd.f32 %v3057, %v3076
  %3078 = vdwg.mxu0
  %3079 = vmatpush.msra.mxu0 %v182
  %3080 = vmatpush.msra.mxu0 %v172
  %3081 = vmatpush.msra.mxu0 %v162
  %3082 = vmatpush.msra.mxu0 %v152
  %3083 = vmatpush.msra.mxu0 %v142
  %3084 = vmatpush.msra.mxu0 %v132
  %3085 = vmatpush.msra.mxu0 %v122
  %3086 = vmatpush.msra.mxu0 %v112
  %3087 = vmatpush.msra.mxu0 %v102
  %3088 = vmatpush.msra.mxu0 %v92
  %3089 = vmatpush.msra.mxu0 %v82
  %3090 = vmatpush.msra.mxu0 %v72
  %3091 = vmatpush.msra.mxu0 %v62
  %3092 = vmatpush.msra.mxu0 %v52
  %3093 = vmatpush.msra.mxu0 %v42
  %3094 = vmatpush.msra.mxu0 %v32
  %3095 = vmatmul.f32.gmra.mxu0 %v1625
  %v3096 = vpop.f32.mrf.mxu0
  %v3097 = vadd.f32 %v1606, %v3096
  %3098 = vdwg.mxu0
  %3099 = vmatpush.msra.mxu0 %v342
  %3100 = vmatpush.msra.mxu0 %v332
  %3101 = vmatpush.msra.mxu0 %v322
  %3102 = vmatpush.msra.mxu0 %v312
  %3103 = vmatpush.msra.mxu0 %v302
  %3104 = vmatpush.msra.mxu0 %v292
  %3105 = vmatpush.msra.mxu0 %v282
  %3106 = vmatpush.msra.mxu0 %v272
  %3107 = vmatpush.msra.mxu0 %v262
  %3108 = vmatpush.msra.mxu0 %v252
  %3109 = vmatpush.msra.mxu0 %v242
  %3110 = vmatpush.msra.mxu0 %v232
  %3111 = vmatpush.msra.mxu0 %v222
  %3112 = vmatpush.msra.mxu0 %v212
  %3113 = vmatpush.msra.mxu0 %v202
  %3114 = vmatpush.msra.mxu0 %v192
  %3115 = vmatmul.f32.gmra.mxu0 %v1626
  %v3116 = vpop.f32.mrf.mxu0
  %v3117 = vadd.f32 %v3097, %v3116
  %3118 = vdwg.mxu0
  %3119 = vmatpush.msra.mxu0 %v502
  %3120 = vmatpush.msra.mxu0 %v492
  %3121 = vmatpush.msra.mxu0 %v482
  %3122 = vmatpush.msra.mxu0 %v472
  %3123 = vmatpush.msra.mxu0 %v462
  %3124 = vmatpush.msra.mxu0 %v452
  %3125 = vmatpush.msra.mxu0 %v442
  %3126 = vmatpush.msra.mxu0 %v432
  %3127 = vmatpush.msra.mxu0 %v422
  %3128 = vmatpush.msra.mxu0 %v412
  %3129 = vmatpush.msra.mxu0 %v402
  %3130 = vmatpush.msra.mxu0 %v392
  %3131 = vmatpush.msra.mxu0 %v382
  %3132 = vmatpush.msra.mxu0 %v372
  %3133 = vmatpush.msra.mxu0 %v362
  %3134 = vmatpush.msra.mxu0 %v352
  %3135 = vmatmul.f32.gmra.mxu0 %v1627
  %v3136 = vpop.f32.mrf.mxu0
  %v3137 = vadd.f32 %v3117, %v3136
  %3138 = vdwg.mxu0
  %3139 = vmatpush.msra.mxu0 %v662
  %3140 = vmatpush.msra.mxu0 %v652
  %3141 = vmatpush.msra.mxu0 %v642
  %3142 = vmatpush.msra.mxu0 %v632
  %3143 = vmatpush.msra.mxu0 %v622
  %3144 = vmatpush.msra.mxu0 %v612
  %3145 = vmatpush.msra.mxu0 %v602
  %3146 = vmatpush.msra.mxu0 %v592
  %3147 = vmatpush.msra.mxu0 %v582
  %3148 = vmatpush.msra.mxu0 %v572
  %3149 = vmatpush.msra.mxu0 %v562
  %3150 = vmatpush.msra.mxu0 %v552
  %3151 = vmatpush.msra.mxu0 %v542
  %3152 = vmatpush.msra.mxu0 %v532
  %3153 = vmatpush.msra.mxu0 %v522
  %3154 = vmatpush.msra.mxu0 %v512
  %3155 = vmatmul.f32.gmra.mxu0 %v1628
  %v3156 = vpop.f32.mrf.mxu0
  %v3157 = vadd.f32 %v3137, %v3156
  %3158 = vdwg.mxu0
  %3159 = vmatpush.msra.mxu0 %v822
  %3160 = vmatpush.msra.mxu0 %v812
  %3161 = vmatpush.msra.mxu0 %v802
  %3162 = vmatpush.msra.mxu0 %v792
  %3163 = vmatpush.msra.mxu0 %v782
  %3164 = vmatpush.msra.mxu0 %v772
  %3165 = vmatpush.msra.mxu0 %v762
  %3166 = vmatpush.msra.mxu0 %v752
  %3167 = vmatpush.msra.mxu0 %v742
  %3168 = vmatpush.msra.mxu0 %v732
  %3169 = vmatpush.msra.mxu0 %v722
  %3170 = vmatpush.msra.mxu0 %v712
  %3171 = vmatpush.msra.mxu0 %v702
  %3172 = vmatpush.msra.mxu0 %v692
  %3173 = vmatpush.msra.mxu0 %v682
  %3174 = vmatpush.msra.mxu0 %v672
  %3175 = vmatmul.f32.gmra.mxu0 %v1629
  %v3176 = vpop.f32.mrf.mxu0
  %v3177 = vadd.f32 %v3157, %v3176
  %3178 = vdwg.mxu0
  %3179 = vmatpush.msra.mxu0 %v982
  %3180 = vmatpush.msra.mxu0 %v972
  %3181 = vmatpush.msra.mxu0 %v962
  %3182 = vmatpush.msra.mxu0 %v952
  %3183 = vmatpush.msra.mxu0 %v942
  %3184 = vmatpush.msra.mxu0 %v932
  %3185 = vmatpush.msra.mxu0 %v922
  %3186 = vmatpush.msra.mxu0 %v912
  %3187 = vmatpush.msra.mxu0 %v902
  %3188 = vmatpush.msra.mxu0 %v892
  %3189 = vmatpush.msra.mxu0 %v882
  %3190 = vmatpush.msra.mxu0 %v872
  %3191 = vmatpush.msra.mxu0 %v862
  %3192 = vmatpush.msra.mxu0 %v852
  %3193 = vmatpush.msra.mxu0 %v842
  %3194 = vmatpush.msra.mxu0 %v832
  %3195 = vmatmul.f32.gmra.mxu0 %v1630
  %v3196 = vpop.f32.mrf.mxu0
  %v3197 = vadd.f32 %v3177, %v3196
  %3198 = vdwg.mxu0
  %3199 = vmatpush.msra.mxu0 %v1142
  %3200 = vmatpush.msra.mxu0 %v1132
  %3201 = vmatpush.msra.mxu0 %v1122
  %3202 = vmatpush.msra.mxu0 %v1112
  %3203 = vmatpush.msra.mxu0 %v1102
  %3204 = vmatpush.msra.mxu0 %v1092
  %3205 = vmatpush.msra.mxu0 %v1082
  %3206 = vmatpush.msra.mxu0 %v1072
  %3207 = vmatpush.msra.mxu0 %v1062
  %3208 = vmatpush.msra.mxu0 %v1052
  %3209 = vmatpush.msra.mxu0 %v1042
  %3210 = vmatpush.msra.mxu0 %v1032
  %3211 = vmatpush.msra.mxu0 %v1022
  %3212 = vmatpush.msra.mxu0 %v1012
  %3213 = vmatpush.msra.mxu0 %v1002
  %3214 = vmatpush.msra.mxu0 %v992
  %3215 = vmatmul.f32.gmra.mxu0 %v1631
  %v3216 = vpop.f32.mrf.mxu0
  %v3217 = vadd.f32 %v3197, %v3216
  %3218 = vdwg.mxu0
  %3219 = vmatpush.msra.mxu0 %v1302
  %3220 = vmatpush.msra.mxu0 %v1292
  %3221 = vmatpush.msra.mxu0 %v1282
  %3222 = vmatpush.msra.mxu0 %v1272
  %3223 = vmatpush.msra.mxu0 %v1262
  %3224 = vmatpush.msra.mxu0 %v1252
  %3225 = vmatpush.msra.mxu0 %v1242
  %3226 = vmatpush.msra.mxu0 %v1232
  %3227 = vmatpush.msra.mxu0 %v1222
  %3228 = vmatpush.msra.mxu0 %v1212
  %3229 = vmatpush.msra.mxu0 %v1202
  %3230 = vmatpush.msra.mxu0 %v1192
  %3231 = vmatpush.msra.mxu0 %v1182
  %3232 = vmatpush.msra.mxu0 %v1172
  %3233 = vmatpush.msra.mxu0 %v1162
  %3234 = vmatpush.msra.mxu0 %v1152
  %3235 = vmatmul.f32.gmra.mxu0 %v1632
  %v3236 = vpop.f32.mrf.mxu0
  %v3237 = vadd.f32 %v3217, %v3236
  %3238 = vdwg.mxu0
  %3239 = vmatpush.msra.mxu0 %v1462
  %3240 = vmatpush.msra.mxu0 %v1452
  %3241 = vmatpush.msra.mxu0 %v1442
  %3242 = vmatpush.msra.mxu0 %v1432
  %3243 = vmatpush.msra.mxu0 %v1422
  %3244 = vmatpush.msra.mxu0 %v1412
  %3245 = vmatpush.msra.mxu0 %v1402
  %3246 = vmatpush.msra.mxu0 %v1392
  %3247 = vmatpush.msra.mxu0 %v1382
  %3248 = vmatpush.msra.mxu0 %v1372
  %3249 = vmatpush.msra.mxu0 %v1362
  %3250 = vmatpush.msra.mxu0 %v1352
  %3251 = vmatpush.msra.mxu0 %v1342
  %3252 = vmatpush.msra.mxu0 %v1332
  %3253 = vmatpush.msra.mxu0 %v1322
  %3254 = vmatpush.msra.mxu0 %v1312
  %3255 = vmatmul.f32.gmra.mxu0 %v1634
  %v3256 = vpop.f32.mrf.mxu0
  %v3257 = vadd.f32 %v3237, %v3256
  %3258 = vdwg.mxu0
  %3259 = vmatpush.msra.mxu0 0.0
  %3260 = vmatpush.msra.mxu0 0.0
  %3261 = vmatpush.msra.mxu0 0.0
  %3262 = vmatpush.msra.mxu0 %v1671
  %3263 = vmatpush.msra.mxu0 %v1582
  %3264 = vmatpush.msra.mxu0 %v1572
  %3265 = vmatpush.msra.mxu0 %v1562
  %3266 = vmatpush.msra.mxu0 %v1552
  %3267 = vmatpush.msra.mxu0 %v1542
  %3268 = vmatpush.msra.mxu0 %v1532
  %3269 = vmatpush.msra.mxu0 %v1522
  %3270 = vmatpush.msra.mxu0 %v1512
  %3271 = vmatpush.msra.mxu0 %v1502
  %3272 = vmatpush.msra.mxu0 %v1492
  %3273 = vmatpush.msra.mxu0 %v1482
  %3274 = vmatpush.msra.mxu0 %v1472
  %3275 = vmatmul.f32.gmra.mxu0 %v1646
  %v3276 = vpop.f32.mrf.mxu0
  %v3277 = vadd.f32 %v3257, %v3276
  %3278 = vdwg.mxu0
  %3279 = vmatpush.msra.mxu0 %v183
  %3280 = vmatpush.msra.mxu0 %v173
  %3281 = vmatpush.msra.mxu0 %v163
  %3282 = vmatpush.msra.mxu0 %v153
  %3283 = vmatpush.msra.mxu0 %v143
  %3284 = vmatpush.msra.mxu0 %v133
  %3285 = vmatpush.msra.mxu0 %v123
  %3286 = vmatpush.msra.mxu0 %v113
  %3287 = vmatpush.msra.mxu0 %v103
  %3288 = vmatpush.msra.mxu0 %v93
  %3289 = vmatpush.msra.mxu0 %v83
  %3290 = vmatpush.msra.mxu0 %v73
  %3291 = vmatpush.msra.mxu0 %v63
  %3292 = vmatpush.msra.mxu0 %v53
  %3293 = vmatpush.msra.mxu0 %v43
  %3294 = vmatpush.msra.mxu0 %v33
  %3295 = vmatmul.f32.gmra.mxu0 %v1625
  %v3296 = vpop.f32.mrf.mxu0
  %v3297 = vadd.f32 %v1607, %v3296
  %3298 = vdwg.mxu0
  %3299 = vmatpush.msra.mxu0 %v343
  %3300 = vmatpush.msra.mxu0 %v333
  %3301 = vmatpush.msra.mxu0 %v323
  %3302 = vmatpush.msra.mxu0 %v313
  %3303 = vmatpush.msra.mxu0 %v303
  %3304 = vmatpush.msra.mxu0 %v293
  %3305 = vmatpush.msra.mxu0 %v283
  %3306 = vmatpush.msra.mxu0 %v273
  %3307 = vmatpush.msra.mxu0 %v263
  %3308 = vmatpush.msra.mxu0 %v253
  %3309 = vmatpush.msra.mxu0 %v243
  %3310 = vmatpush.msra.mxu0 %v233
  %3311 = vmatpush.msra.mxu0 %v223
  %3312 = vmatpush.msra.mxu0 %v213
  %3313 = vmatpush.msra.mxu0 %v203
  %3314 = vmatpush.msra.mxu0 %v193
  %3315 = vmatmul.f32.gmra.mxu0 %v1626
  %v3316 = vpop.f32.mrf.mxu0
  %v3317 = vadd.f32 %v3297, %v3316
  %3318 = vdwg.mxu0
  %3319 = vmatpush.msra.mxu0 %v503
  %3320 = vmatpush.msra.mxu0 %v493
  %3321 = vmatpush.msra.mxu0 %v483
  %3322 = vmatpush.msra.mxu0 %v473
  %3323 = vmatpush.msra.mxu0 %v463
  %3324 = vmatpush.msra.mxu0 %v453
  %3325 = vmatpush.msra.mxu0 %v443
  %3326 = vmatpush.msra.mxu0 %v433
  %3327 = vmatpush.msra.mxu0 %v423
  %3328 = vmatpush.msra.mxu0 %v413
  %3329 = vmatpush.msra.mxu0 %v403
  %3330 = vmatpush.msra.mxu0 %v393
  %3331 = vmatpush.msra.mxu0 %v383
  %3332 = vmatpush.msra.mxu0 %v373
  %3333 = vmatpush.msra.mxu0 %v363
  %3334 = vmatpush.msra.mxu0 %v353
  %3335 = vmatmul.f32.gmra.mxu0 %v1627
  %v3336 = vpop.f32.mrf.mxu0
  %v3337 = vadd.f32 %v3317, %v3336
  %3338 = vdwg.mxu0
  %3339 = vmatpush.msra.mxu0 %v663
  %3340 = vmatpush.msra.mxu0 %v653
  %3341 = vmatpush.msra.mxu0 %v643
  %3342 = vmatpush.msra.mxu0 %v633
  %3343 = vmatpush.msra.mxu0 %v623
  %3344 = vmatpush.msra.mxu0 %v613
  %3345 = vmatpush.msra.mxu0 %v603
  %3346 = vmatpush.msra.mxu0 %v593
  %3347 = vmatpush.msra.mxu0 %v583
  %3348 = vmatpush.msra.mxu0 %v573
  %3349 = vmatpush.msra.mxu0 %v563
  %3350 = vmatpush.msra.mxu0 %v553
  %3351 = vmatpush.msra.mxu0 %v543
  %3352 = vmatpush.msra.mxu0 %v533
  %3353 = vmatpush.msra.mxu0 %v523
  %3354 = vmatpush.msra.mxu0 %v513
  %3355 = vmatmul.f32.gmra.mxu0 %v1628
  %v3356 = vpop.f32.mrf.mxu0
  %v3357 = vadd.f32 %v3337, %v3356
  %3358 = vdwg.mxu0
  %3359 = vmatpush.msra.mxu0 %v823
  %3360 = vmatpush.msra.mxu0 %v813
  %3361 = vmatpush.msra.mxu0 %v803
  %3362 = vmatpush.msra.mxu0 %v793
  %3363 = vmatpush.msra.mxu0 %v783
  %3364 = vmatpush.msra.mxu0 %v773
  %3365 = vmatpush.msra.mxu0 %v763
  %3366 = vmatpush.msra.mxu0 %v753
  %3367 = vmatpush.msra.mxu0 %v743
  %3368 = vmatpush.msra.mxu0 %v733
  %3369 = vmatpush.msra.mxu0 %v723
  %3370 = vmatpush.msra.mxu0 %v713
  %3371 = vmatpush.msra.mxu0 %v703
  %3372 = vmatpush.msra.mxu0 %v693
  %3373 = vmatpush.msra.mxu0 %v683
  %3374 = vmatpush.msra.mxu0 %v673
  %3375 = vmatmul.f32.gmra.mxu0 %v1629
  %v3376 = vpop.f32.mrf.mxu0
  %v3377 = vadd.f32 %v3357, %v3376
  %3378 = vdwg.mxu0
  %3379 = vmatpush.msra.mxu0 %v983
  %3380 = vmatpush.msra.mxu0 %v973
  %3381 = vmatpush.msra.mxu0 %v963
  %3382 = vmatpush.msra.mxu0 %v953
  %3383 = vmatpush.msra.mxu0 %v943
  %3384 = vmatpush.msra.mxu0 %v933
  %3385 = vmatpush.msra.mxu0 %v923
  %3386 = vmatpush.msra.mxu0 %v913
  %3387 = vmatpush.msra.mxu0 %v903
  %3388 = vmatpush.msra.mxu0 %v893
  %3389 = vmatpush.msra.mxu0 %v883
  %3390 = vmatpush.msra.mxu0 %v873
  %3391 = vmatpush.msra.mxu0 %v863
  %3392 = vmatpush.msra.mxu0 %v853
  %3393 = vmatpush.msra.mxu0 %v843
  %3394 = vmatpush.msra.mxu0 %v833
  %3395 = vmatmul.f32.gmra.mxu0 %v1630
  %v3396 = vpop.f32.mrf.mxu0
  %v3397 = vadd.f32 %v3377, %v3396
  %3398 = vdwg.mxu0
  %3399 = vmatpush.msra.mxu0 %v1143
  %3400 = vmatpush.msra.mxu0 %v1133
  %3401 = vmatpush.msra.mxu0 %v1123
  %3402 = vmatpush.msra.mxu0 %v1113
  %3403 = vmatpush.msra.mxu0 %v1103
  %3404 = vmatpush.msra.mxu0 %v1093
  %3405 = vmatpush.msra.mxu0 %v1083
  %3406 = vmatpush.msra.mxu0 %v1073
  %3407 = vmatpush.msra.mxu0 %v1063
  %3408 = vmatpush.msra.mxu0 %v1053
  %3409 = vmatpush.msra.mxu0 %v1043
  %3410 = vmatpush.msra.mxu0 %v1033
  %3411 = vmatpush.msra.mxu0 %v1023
  %3412 = vmatpush.msra.mxu0 %v1013
  %3413 = vmatpush.msra.mxu0 %v1003
  %3414 = vmatpush.msra.mxu0 %v993
  %3415 = vmatmul.f32.gmra.mxu0 %v1631
  %v3416 = vpop.f32.mrf.mxu0
  %v3417 = vadd.f32 %v3397, %v3416
  %3418 = vdwg.mxu0
  %3419 = vmatpush.msra.mxu0 %v1303
  %3420 = vmatpush.msra.mxu0 %v1293
  %3421 = vmatpush.msra.mxu0 %v1283
  %3422 = vmatpush.msra.mxu0 %v1273
  %3423 = vmatpush.msra.mxu0 %v1263
  %3424 = vmatpush.msra.mxu0 %v1253
  %3425 = vmatpush.msra.mxu0 %v1243
  %3426 = vmatpush.msra.mxu0 %v1233
  %3427 = vmatpush.msra.mxu0 %v1223
  %3428 = vmatpush.msra.mxu0 %v1213
  %3429 = vmatpush.msra.mxu0 %v1203
  %3430 = vmatpush.msra.mxu0 %v1193
  %3431 = vmatpush.msra.mxu0 %v1183
  %3432 = vmatpush.msra.mxu0 %v1173
  %3433 = vmatpush.msra.mxu0 %v1163
  %3434 = vmatpush.msra.mxu0 %v1153
  %3435 = vmatmul.f32.gmra.mxu0 %v1632
  %v3436 = vpop.f32.mrf.mxu0
  %v3437 = vadd.f32 %v3417, %v3436
  %3438 = vdwg.mxu0
  %3439 = vmatpush.msra.mxu0 %v1463
  %3440 = vmatpush.msra.mxu0 %v1453
  %3441 = vmatpush.msra.mxu0 %v1443
  %3442 = vmatpush.msra.mxu0 %v1433
  %3443 = vmatpush.msra.mxu0 %v1423
  %3444 = vmatpush.msra.mxu0 %v1413
  %3445 = vmatpush.msra.mxu0 %v1403
  %3446 = vmatpush.msra.mxu0 %v1393
  %3447 = vmatpush.msra.mxu0 %v1383
  %3448 = vmatpush.msra.mxu0 %v1373
  %3449 = vmatpush.msra.mxu0 %v1363
  %3450 = vmatpush.msra.mxu0 %v1353
  %3451 = vmatpush.msra.mxu0 %v1343
  %3452 = vmatpush.msra.mxu0 %v1333
  %3453 = vmatpush.msra.mxu0 %v1323
  %3454 = vmatpush.msra.mxu0 %v1313
  %3455 = vmatmul.f32.gmra.mxu0 %v1634
  %v3456 = vpop.f32.mrf.mxu0
  %v3457 = vadd.f32 %v3437, %v3456
  %3458 = vdwg.mxu0
  %3459 = vmatpush.msra.mxu0 0.0
  %3460 = vmatpush.msra.mxu0 0.0
  %3461 = vmatpush.msra.mxu0 0.0
  %3462 = vmatpush.msra.mxu0 %v1674
  %3463 = vmatpush.msra.mxu0 %v1583
  %3464 = vmatpush.msra.mxu0 %v1573
  %3465 = vmatpush.msra.mxu0 %v1563
  %3466 = vmatpush.msra.mxu0 %v1553
  %3467 = vmatpush.msra.mxu0 %v1543
  %3468 = vmatpush.msra.mxu0 %v1533
  %3469 = vmatpush.msra.mxu0 %v1523
  %3470 = vmatpush.msra.mxu0 %v1513
  %3471 = vmatpush.msra.mxu0 %v1503
  %3472 = vmatpush.msra.mxu0 %v1493
  %3473 = vmatpush.msra.mxu0 %v1483
  %3474 = vmatpush.msra.mxu0 %v1473
  %3475 = vmatmul.f32.gmra.mxu0 %v1646
  %v3476 = vpop.f32.mrf.mxu0
  %v3477 = vadd.f32 %v3457, %v3476
  %3478 = vdwg.mxu0
  %3479 = vmatpush.msra.mxu0 %v184
  %3480 = vmatpush.msra.mxu0 %v174
  %3481 = vmatpush.msra.mxu0 %v164
  %3482 = vmatpush.msra.mxu0 %v154
  %3483 = vmatpush.msra.mxu0 %v144
  %3484 = vmatpush.msra.mxu0 %v134
  %3485 = vmatpush.msra.mxu0 %v124
  %3486 = vmatpush.msra.mxu0 %v114
  %3487 = vmatpush.msra.mxu0 %v104
  %3488 = vmatpush.msra.mxu0 %v94
  %3489 = vmatpush.msra.mxu0 %v84
  %3490 = vmatpush.msra.mxu0 %v74
  %3491 = vmatpush.msra.mxu0 %v64
  %3492 = vmatpush.msra.mxu0 %v54
  %3493 = vmatpush.msra.mxu0 %v44
  %3494 = vmatpush.msra.mxu0 %v34
  %3495 = vmatmul.f32.gmra.mxu0 %v1625
  %v3496 = vpop.f32.mrf.mxu0
  %v3497 = vadd.f32 %v1608, %v3496
  %3498 = vdwg.mxu0
  %3499 = vmatpush.msra.mxu0 %v344
  %3500 = vmatpush.msra.mxu0 %v334
  %3501 = vmatpush.msra.mxu0 %v324
  %3502 = vmatpush.msra.mxu0 %v314
  %3503 = vmatpush.msra.mxu0 %v304
  %3504 = vmatpush.msra.mxu0 %v294
  %3505 = vmatpush.msra.mxu0 %v284
  %3506 = vmatpush.msra.mxu0 %v274
  %3507 = vmatpush.msra.mxu0 %v264
  %3508 = vmatpush.msra.mxu0 %v254
  %3509 = vmatpush.msra.mxu0 %v244
  %3510 = vmatpush.msra.mxu0 %v234
  %3511 = vmatpush.msra.mxu0 %v224
  %3512 = vmatpush.msra.mxu0 %v214
  %3513 = vmatpush.msra.mxu0 %v204
  %3514 = vmatpush.msra.mxu0 %v194
  %3515 = vmatmul.f32.gmra.mxu0 %v1626
  %v3516 = vpop.f32.mrf.mxu0
  %v3517 = vadd.f32 %v3497, %v3516
  %3518 = vdwg.mxu0
  %3519 = vmatpush.msra.mxu0 %v504
  %3520 = vmatpush.msra.mxu0 %v494
  %3521 = vmatpush.msra.mxu0 %v484
  %3522 = vmatpush.msra.mxu0 %v474
  %3523 = vmatpush.msra.mxu0 %v464
  %3524 = vmatpush.msra.mxu0 %v454
  %3525 = vmatpush.msra.mxu0 %v444
  %3526 = vmatpush.msra.mxu0 %v434
  %3527 = vmatpush.msra.mxu0 %v424
  %3528 = vmatpush.msra.mxu0 %v414
  %3529 = vmatpush.msra.mxu0 %v404
  %3530 = vmatpush.msra.mxu0 %v394
  %3531 = vmatpush.msra.mxu0 %v384
  %3532 = vmatpush.msra.mxu0 %v374
  %3533 = vmatpush.msra.mxu0 %v364
  %3534 = vmatpush.msra.mxu0 %v354
  %3535 = vmatmul.f32.gmra.mxu0 %v1627
  %v3536 = vpop.f32.mrf.mxu0
  %v3537 = vadd.f32 %v3517, %v3536
  %3538 = vdwg.mxu0
  %3539 = vmatpush.msra.mxu0 %v664
  %3540 = vmatpush.msra.mxu0 %v654
  %3541 = vmatpush.msra.mxu0 %v644
  %3542 = vmatpush.msra.mxu0 %v634
  %3543 = vmatpush.msra.mxu0 %v624
  %3544 = vmatpush.msra.mxu0 %v614
  %3545 = vmatpush.msra.mxu0 %v604
  %3546 = vmatpush.msra.mxu0 %v594
  %3547 = vmatpush.msra.mxu0 %v584
  %3548 = vmatpush.msra.mxu0 %v574
  %3549 = vmatpush.msra.mxu0 %v564
  %3550 = vmatpush.msra.mxu0 %v554
  %3551 = vmatpush.msra.mxu0 %v544
  %3552 = vmatpush.msra.mxu0 %v534
  %3553 = vmatpush.msra.mxu0 %v524
  %3554 = vmatpush.msra.mxu0 %v514
  %3555 = vmatmul.f32.gmra.mxu0 %v1628
  %v3556 = vpop.f32.mrf.mxu0
  %v3557 = vadd.f32 %v3537, %v3556
  %3558 = vdwg.mxu0
  %3559 = vmatpush.msra.mxu0 %v824
  %3560 = vmatpush.msra.mxu0 %v814
  %3561 = vmatpush.msra.mxu0 %v804
  %3562 = vmatpush.msra.mxu0 %v794
  %3563 = vmatpush.msra.mxu0 %v784
  %3564 = vmatpush.msra.mxu0 %v774
  %3565 = vmatpush.msra.mxu0 %v764
  %3566 = vmatpush.msra.mxu0 %v754
  %3567 = vmatpush.msra.mxu0 %v744
  %3568 = vmatpush.msra.mxu0 %v734
  %3569 = vmatpush.msra.mxu0 %v724
  %3570 = vmatpush.msra.mxu0 %v714
  %3571 = vmatpush.msra.mxu0 %v704
  %3572 = vmatpush.msra.mxu0 %v694
  %3573 = vmatpush.msra.mxu0 %v684
  %3574 = vmatpush.msra.mxu0 %v674
  %3575 = vmatmul.f32.gmra.mxu0 %v1629
  %v3576 = vpop.f32.mrf.mxu0
  %v3577 = vadd.f32 %v3557, %v3576
  %3578 = vdwg.mxu0
  %3579 = vmatpush.msra.mxu0 %v984
  %3580 = vmatpush.msra.mxu0 %v974
  %3581 = vmatpush.msra.mxu0 %v964
  %3582 = vmatpush.msra.mxu0 %v954
  %3583 = vmatpush.msra.mxu0 %v944
  %3584 = vmatpush.msra.mxu0 %v934
  %3585 = vmatpush.msra.mxu0 %v924
  %3586 = vmatpush.msra.mxu0 %v914
  %3587 = vmatpush.msra.mxu0 %v904
  %3588 = vmatpush.msra.mxu0 %v894
  %3589 = vmatpush.msra.mxu0 %v884
  %3590 = vmatpush.msra.mxu0 %v874
  %3591 = vmatpush.msra.mxu0 %v864
  %3592 = vmatpush.msra.mxu0 %v854
  %3593 = vmatpush.msra.mxu0 %v844
  %3594 = vmatpush.msra.mxu0 %v834
  %3595 = vmatmul.f32.gmra.mxu0 %v1630
  %v3596 = vpop.f32.mrf.mxu0
  %v3597 = vadd.f32 %v3577, %v3596
  %3598 = vdwg.mxu0
  %3599 = vmatpush.msra.mxu0 %v1144
  %3600 = vmatpush.msra.mxu0 %v1134
  %3601 = vmatpush.msra.mxu0 %v1124
  %3602 = vmatpush.msra.mxu0 %v1114
  %3603 = vmatpush.msra.mxu0 %v1104
  %3604 = vmatpush.msra.mxu0 %v1094
  %3605 = vmatpush.msra.mxu0 %v1084
  %3606 = vmatpush.msra.mxu0 %v1074
  %3607 = vmatpush.msra.mxu0 %v1064
  %3608 = vmatpush.msra.mxu0 %v1054
  %3609 = vmatpush.msra.mxu0 %v1044
  %3610 = vmatpush.msra.mxu0 %v1034
  %3611 = vmatpush.msra.mxu0 %v1024
  %3612 = vmatpush.msra.mxu0 %v1014
  %3613 = vmatpush.msra.mxu0 %v1004
  %3614 = vmatpush.msra.mxu0 %v994
  %3615 = vmatmul.f32.gmra.mxu0 %v1631
  %v3616 = vpop.f32.mrf.mxu0
  %v3617 = vadd.f32 %v3597, %v3616
  %3618 = vdwg.mxu0
  %3619 = vmatpush.msra.mxu0 %v1304
  %3620 = vmatpush.msra.mxu0 %v1294
  %3621 = vmatpush.msra.mxu0 %v1284
  %3622 = vmatpush.msra.mxu0 %v1274
  %3623 = vmatpush.msra.mxu0 %v1264
  %3624 = vmatpush.msra.mxu0 %v1254
  %3625 = vmatpush.msra.mxu0 %v1244
  %3626 = vmatpush.msra.mxu0 %v1234
  %3627 = vmatpush.msra.mxu0 %v1224
  %3628 = vmatpush.msra.mxu0 %v1214
  %3629 = vmatpush.msra.mxu0 %v1204
  %3630 = vmatpush.msra.mxu0 %v1194
  %3631 = vmatpush.msra.mxu0 %v1184
  %3632 = vmatpush.msra.mxu0 %v1174
  %3633 = vmatpush.msra.mxu0 %v1164
  %3634 = vmatpush.msra.mxu0 %v1154
  %3635 = vmatmul.f32.gmra.mxu0 %v1632
  %v3636 = vpop.f32.mrf.mxu0
  %v3637 = vadd.f32 %v3617, %v3636
  %3638 = vdwg.mxu0
  %3639 = vmatpush.msra.mxu0 %v1464
  %3640 = vmatpush.msra.mxu0 %v1454
  %3641 = vmatpush.msra.mxu0 %v1444
  %3642 = vmatpush.msra.mxu0 %v1434
  %3643 = vmatpush.msra.mxu0 %v1424
  %3644 = vmatpush.msra.mxu0 %v1414
  %3645 = vmatpush.msra.mxu0 %v1404
  %3646 = vmatpush.msra.mxu0 %v1394
  %3647 = vmatpush.msra.mxu0 %v1384
  %3648 = vmatpush.msra.mxu0 %v1374
  %3649 = vmatpush.msra.mxu0 %v1364
  %3650 = vmatpush.msra.mxu0 %v1354
  %3651 = vmatpush.msra.mxu0 %v1344
  %3652 = vmatpush.msra.mxu0 %v1334
  %3653 = vmatpush.msra.mxu0 %v1324
  %3654 = vmatpush.msra.mxu0 %v1314
  %3655 = vmatmul.f32.gmra.mxu0 %v1634
  %v3656 = vpop.f32.mrf.mxu0
  %v3657 = vadd.f32 %v3637, %v3656
  %3658 = vdwg.mxu0
  %3659 = vmatpush.msra.mxu0 0.0
  %3660 = vmatpush.msra.mxu0 0.0
  %3661 = vmatpush.msra.mxu0 0.0
  %3662 = vmatpush.msra.mxu0 %v1677
  %3663 = vmatpush.msra.mxu0 %v1584
  %3664 = vmatpush.msra.mxu0 %v1574
  %3665 = vmatpush.msra.mxu0 %v1564
  %3666 = vmatpush.msra.mxu0 %v1554
  %3667 = vmatpush.msra.mxu0 %v1544
  %3668 = vmatpush.msra.mxu0 %v1534
  %3669 = vmatpush.msra.mxu0 %v1524
  %3670 = vmatpush.msra.mxu0 %v1514
  %3671 = vmatpush.msra.mxu0 %v1504
  %3672 = vmatpush.msra.mxu0 %v1494
  %3673 = vmatpush.msra.mxu0 %v1484
  %3674 = vmatpush.msra.mxu0 %v1474
  %3675 = vmatmul.f32.gmra.mxu0 %v1646
  %v3676 = vpop.f32.mrf.mxu0
  %v3677 = vadd.f32 %v3657, %v3676
  %3678 = vdwg.mxu0
  %v3679 = vmax.f32 %v1877, 0.0
  %v3680 = vmax.f32 %v2077, 0.0
  %v3681 = vmax.f32 %v2277, 0.0
  %v3682 = vmax.f32 %v2477, 0.0
  %v3683 = vmax.f32 %v2677, 0.0
  %v3684 = vmax.f32 %v2877, 0.0
  %v3685 = vmax.f32 %v3077, 0.0
  %v3686 = vmax.f32 %v3277, 0.0
  %v3687 = vmax.f32 %v3477, 0.0
  %v3688 = vmax.f32 %v3677, 0.0
  %v3689 = vld [vmem:[%s3] sm:$0xff]
  %v3690 = vld [vmem:[%s3 + $0x8] sm:$0xff]
  %v3691 = vld [vmem:[%s3 + $0x10] sm:$0xff]
  %v3692 = vld [vmem:[%s3 + $0x18] sm:$0xff]
  %v3693 = vld [vmem:[%s3 + $0x20] sm:$0xff]
  %v3694 = vld [vmem:[%s3 + $0x28] sm:$0xff]
  %v3695 = vld [vmem:[%s3 + $0x30] sm:$0xff]
  %v3696 = vld [vmem:[%s3 + $0x38] sm:$0xff]
  %v3697 = vld [vmem:[%s3 + $0x40] sm:$0xff]
  %v3698 = vld [vmem:[%s3 + $0x48] sm:$0xff]
  %v3699 = vld [vmem:[%s3 + $0x50] sm:$0xff]
  %v3700 = vld [vmem:[%s3 + $0x58] sm:$0xff]
  %v3701 = vld [vmem:[%s3 + $0x60] sm:$0xff]
  %v3702 = vld [vmem:[%s3 + $0x68] sm:$0xff]
  %v3703 = vld [vmem:[%s3 + $0x70] sm:$0xff]
  %v3704 = vld [vmem:[%s3 + $0x78] sm:$0xff]
  %v3705 = vld [vmem:[%s3 + $0x80] sm:$0xff]
  %v3706 = vld [vmem:[%s3 + $0x88] sm:$0xff]
  %v3707 = vld [vmem:[%s3 + $0x90] sm:$0xff]
  %v3708 = vld [vmem:[%s3 + $0x98] sm:$0xff]
  %v3709 = vld [vmem:[%s3 + $0xa0] sm:$0xff]
  %v3710 = vld [vmem:[%s3 + $0xa8] sm:$0xff]
  %v3711 = vld [vmem:[%s3 + $0xb0] sm:$0xff]
  %v3712 = vld [vmem:[%s3 + $0xb8] sm:$0xff]
  %v3713 = vld [vmem:[%s3 + $0xc0] sm:$0xff]
  %v3714 = vld [vmem:[%s3 + $0xc8] sm:$0xff]
  %v3715 = vld [vmem:[%s3 + $0xd0] sm:$0xff]
  %v3716 = vld [vmem:[%s3 + $0xd8] sm:$0xff]
  %v3717 = vld [vmem:[%s3 + $0xe0] sm:$0xff]
  %v3718 = vld [vmem:[%s3 + $0xe8] sm:$0xff]
  %v3719 = vld [vmem:[%s3 + $0xf0] sm:$0xff]
  %v3720 = vld [vmem:[%s3 + $0xf8] sm:$0xff]
  %v3721 = vld [vmem:[%s3 + $0x100] sm:$0xff]
  %v3722 = vld [vmem:[%s3 + $0x108] sm:$0xff]
  %v3723 = vld [vmem:[%s3 + $0x110] sm:$0xff]
  %v3724 = vld [vmem:[%s3 + $0x118] sm:$0xff]
  %v3725 = vld [vmem:[%s3 + $0x120] sm:$0xff]
  %v3726 = vld [vmem:[%s3 + $0x128] sm:$0xff]
  %v3727 = vld [vmem:[%s3 + $0x130] sm:$0xff]
  %v3728 = vld [vmem:[%s3 + $0x138] sm:$0xff]
  %v3729 = vld [vmem:[%s3 + $0x140] sm:$0xff]
  %v3730 = vld [vmem:[%s3 + $0x148] sm:$0xff]
  %v3731 = vld [vmem:[%s3 + $0x150] sm:$0xff]
  %v3732 = vld [vmem:[%s3 + $0x158] sm:$0xff]
  %v3733 = vld [vmem:[%s3 + $0x160] sm:$0xff]
  %v3734 = vld [vmem:[%s3 + $0x168] sm:$0xff]
  %v3735 = vld [vmem:[%s3 + $0x170] sm:$0xff]
  %v3736 = vld [vmem:[%s3 + $0x178] sm:$0xff]
  %v3737 = vld [vmem:[%s3 + $0x180] sm:$0xff]
  %v3738 = vld [vmem:[%s3 + $0x188] sm:$0xff]
  %v3739 = vld [vmem:[%s3 + $0x190] sm:$0xff]
  %v3740 = vld [vmem:[%s3 + $0x198] sm:$0xff]
  %v3741 = vld [vmem:[%s3 + $0x1a0] sm:$0xff]
  %v3742 = vld [vmem:[%s3 + $0x1a8] sm:$0xff]
  %v3743 = vld [vmem:[%s3 + $0x1b0] sm:$0xff]
  %v3744 = vld [vmem:[%s3 + $0x1b8] sm:$0xff]
  %v3745 = vld [vmem:[%s3 + $0x1c0] sm:$0xff]
  %v3746 = vld [vmem:[%s3 + $0x1c8] sm:$0xff]
  %v3747 = vld [vmem:[%s3 + $0x1d0] sm:$0xff]
  %v3748 = vld [vmem:[%s3 + $0x1d8] sm:$0xff]
  %v3749 = vld [vmem:[%s3 + $0x1e0] sm:$0xff]
  %v3750 = vld [vmem:[%s3 + $0x1e8] sm:$0xff]
  %v3751 = vld [vmem:[%s3 + $0x1f0] sm:$0xff]
  %v3752 = vld [vmem:[%s3 + $0x1f8] sm:$0xff]
  %v3753 = vld [vmem:[%s3 + $0x200] sm:$0xff]
  %v3754 = vld [vmem:[%s3 + $0x208] sm:$0xff]
  %v3755 = vld [vmem:[%s3 + $0x210] sm:$0xff]
  %v3756 = vld [vmem:[%s3 + $0x218] sm:$0xff]
  %v3757 = vld [vmem:[%s3 + $0x220] sm:$0xff]
  %v3758 = vld [vmem:[%s3 + $0x228] sm:$0xff]
  %v3759 = vld [vmem:[%s3 + $0x230] sm:$0xff]
  %v3760 = vld [vmem:[%s3 + $0x238] sm:$0xff]
  %v3761 = vld [vmem:[%s3 + $0x240] sm:$0xff]
  %v3762 = vld [vmem:[%s3 + $0x248] sm:$0xff]
  %v3763 = vld [vmem:[%s3 + $0x250] sm:$0xff]
  %v3764 = vld [vmem:[%s3 + $0x258] sm:$0xff]
  %v3765 = vld [vmem:[%s3 + $0x260] sm:$0xff]
  %v3766 = vld [vmem:[%s3 + $0x268] sm:$0xff]
  %v3767 = vld [vmem:[%s3 + $0x270] sm:$0xff]
  %v3768 = vld [vmem:[%s3 + $0x278] sm:$0xff]
  %v3769 = vld [vmem:[%s3 + $0x280] sm:$0xff]
  %v3770 = vld [vmem:[%s3 + $0x288] sm:$0xff]
  %v3771 = vld [vmem:[%s3 + $0x290] sm:$0xff]
  %v3772 = vld [vmem:[%s3 + $0x298] sm:$0xff]
  %v3773 = vld [vmem:[%s3 + $0x2a0] sm:$0xff]
  %v3774 = vld [vmem:[%s3 + $0x2a8] sm:$0xff]
  %v3775 = vld [vmem:[%s3 + $0x2b0] sm:$0xff]
  %v3776 = vld [vmem:[%s3 + $0x2b8] sm:$0xff]
  %v3777 = vld [vmem:[%s3 + $0x2c0] sm:$0xff]
  %v3778 = vld [vmem:[%s3 + $0x2c8] sm:$0xff]
  %v3779 = vld [vmem:[%s3 + $0x2d0] sm:$0xff]
  %v3780 = vld [vmem:[%s3 + $0x2d8] sm:$0xff]
  %v3781 = vld [vmem:[%s3 + $0x2e0] sm:$0xff]
  %v3782 = vld [vmem:[%s3 + $0x2e8] sm:$0xff]
  %v3783 = vld [vmem:[%s3 + $0x2f0] sm:$0xff]
  %v3784 = vld [vmem:[%s3 + $0x2f8] sm:$0xff]
  %v3785 = vld [vmem:[%s3 + $0x300] sm:$0xff]
  %v3786 = vld [vmem:[%s3 + $0x308] sm:$0xff]
  %v3787 = vld [vmem:[%s3 + $0x310] sm:$0xff]
  %v3788 = vld [vmem:[%s3 + $0x318] sm:$0xff]
  %v3789 = vld [vmem:[%s3 + $0x320] sm:$0xff]
  %v3790 = vld [vmem:[%s3 + $0x328] sm:$0xff]
  %v3791 = vld [vmem:[%s3 + $0x330] sm:$0xff]
  %v3792 = vld [vmem:[%s3 + $0x338] sm:$0xff]
  %v3793 = vld [vmem:[%s3 + $0x340] sm:$0xff]
  %v3794 = vld [vmem:[%s3 + $0x348] sm:$0xff]
  %v3795 = vld [vmem:[%s3 + $0x350] sm:$0xff]
  %v3796 = vld [vmem:[%s3 + $0x358] sm:$0xff]
  %v3797 = vld [vmem:[%s3 + $0x360] sm:$0xff]
  %v3798 = vld [vmem:[%s3 + $0x368] sm:$0xff]
  %v3799 = vld [vmem:[%s3 + $0x370] sm:$0xff]
  %v3800 = vld [vmem:[%s3 + $0x378] sm:$0xff]
  %v3801 = vld [vmem:[%s3 + $0x380] sm:$0xff]
  %v3802 = vld [vmem:[%s3 + $0x388] sm:$0xff]
  %v3803 = vld [vmem:[%s3 + $0x390] sm:$0xff]
  %v3804 = vld [vmem:[%s3 + $0x398] sm:$0xff]
  %v3805 = vld [vmem:[%s3 + $0x3a0] sm:$0xff]
  %v3806 = vld [vmem:[%s3 + $0x3a8] sm:$0xff]
  %v3807 = vld [vmem:[%s3 + $0x3b0] sm:$0xff]
  %v3808 = vld [vmem:[%s3 + $0x3b8] sm:$0xff]
  %v3809 = vld [vmem:[%s3 + $0x3c0] sm:$0xff]
  %v3810 = vld [vmem:[%s3 + $0x3c8] sm:$0xff]
  %v3811 = vld [vmem:[%s3 + $0x3d0] sm:$0xff]
  %v3812 = vld [vmem:[%s3 + $0x3d8] sm:$0xff]
  %v3813 = vld [vmem:[%s3 + $0x3e0] sm:$0xff]
  %v3814 = vld [vmem:[%s3 + $0x3e8] sm:$0xff]
  %v3815 = vld [vmem:[%s3 + $0x3f0] sm:$0xff]
  %v3816 = vld [vmem:[%s3 + $0x3f8] sm:$0xff]
  %v3817 = vld [vmem:[%s3 + $0x400] sm:$0xff]
  %v3818 = vld [vmem:[%s3 + $0x408] sm:$0xff]
  %v3819 = vld [vmem:[%s3 + $0x410] sm:$0xff]
  %v3820 = vld [vmem:[%s3 + $0x418] sm:$0xff]
  %v3821 = vld [vmem:[%s3 + $0x420] sm:$0xff]
  %v3822 = vld [vmem:[%s3 + $0x428] sm:$0xff]
  %v3823 = vld [vmem:[%s3 + $0x430] sm:$0xff]
  %v3824 = vld [vmem:[%s3 + $0x438] sm:$0xff]
  %v3825 = vld [vmem:[%s3 + $0x440] sm:$0xff]
  %v3826 = vld [vmem:[%s3 + $0x448] sm:$0xff]
  %v3827 = vld [vmem:[%s3 + $0x450] sm:$0xff]
  %v3828 = vld [vmem:[%s3 + $0x458] sm:$0xff]
  %v3829 = vld [vmem:[%s3 + $0x460] sm:$0xff]
  %v3830 = vld [vmem:[%s3 + $0x468] sm:$0xff]
  %v3831 = vld [vmem:[%s3 + $0x470] sm:$0xff]
  %v3832 = vld [vmem:[%s3 + $0x478] sm:$0xff]
  %v3833 = vld [vmem:[%s3 + $0x480] sm:$0xff]
  %v3834 = vld [vmem:[%s3 + $0x488] sm:$0xff]
  %v3835 = vld [vmem:[%s3 + $0x490] sm:$0xff]
  %v3836 = vld [vmem:[%s3 + $0x498] sm:$0xff]
  %v3837 = vld [vmem:[%s3 + $0x4a0] sm:$0xff]
  %v3838 = vld [vmem:[%s3 + $0x4a8] sm:$0xff]
  %v3839 = vld [vmem:[%s3 + $0x4b0] sm:$0xff]
  %v3840 = vld [vmem:[%s3 + $0x4b8] sm:$0xff]
  %v3841 = vld [vmem:[%s3 + $0x4c0] sm:$0xff]
  %v3842 = vld [vmem:[%s3 + $0x4c8] sm:$0xff]
  %v3843 = vld [vmem:[%s3 + $0x4d0] sm:$0xff]
  %v3844 = vld [vmem:[%s3 + $0x4d8] sm:$0xff]
  %v3845 = vld [vmem:[%s3 + $0x4e0] sm:$0x3]
  %v3846 = vld [vmem:[#allocation2] sm:$0x1]
  %v3848 = vperm.slane %v3846, 0
  %v3851 = vsel %vm1645, %v3688, 0
  %v3854 = vsel %vm1648, %v3845, 0
  %3856 = vmatpush.msra.mxu0 %v3704
  %3857 = vmatpush.msra.mxu0 %v3703
  %3858 = vmatpush.msra.mxu0 %v3702
  %3859 = vmatpush.msra.mxu0 %v3701
  %3860 = vmatpush.msra.mxu0 %v3700
  %3861 = vmatpush.msra.mxu0 %v3699
  %3862 = vmatpush.msra.mxu0 %v3698
  %3863 = vmatpush.msra.mxu0 %v3697
  %3864 = vmatpush.msra.mxu0 %v3696
  %3865 = vmatpush.msra.mxu0 %v3695
  %3866 = vmatpush.msra.mxu0 %v3694
  %3867 = vmatpush.msra.mxu0 %v3693
  %3868 = vmatpush.msra.mxu0 %v3692
  %3869 = vmatpush.msra.mxu0 %v3691
  %3870 = vmatpush.msra.mxu0 %v3690
  %3871 = vmatpush.msra.mxu0 %v3689
  %3872 = vmatmul.f32.gmra.mxu0 %v3679
  %v3873 = vpop.f32.mrf.mxu0
  %v3874 = vadd.f32 %v3848, %v3873
  %3875 = vdwg.mxu0
  %3876 = vmatpush.msra.mxu0 %v3720
  %3877 = vmatpush.msra.mxu0 %v3719
  %3878 = vmatpush.msra.mxu0 %v3718
  %3879 = vmatpush.msra.mxu0 %v3717
  %3880 = vmatpush.msra.mxu0 %v3716
  %3881 = vmatpush.msra.mxu0 %v3715
  %3882 = vmatpush.msra.mxu0 %v3714
  %3883 = vmatpush.msra.mxu0 %v3713
  %3884 = vmatpush.msra.mxu0 %v3712
  %3885 = vmatpush.msra.mxu0 %v3711
  %3886 = vmatpush.msra.mxu0 %v3710
  %3887 = vmatpush.msra.mxu0 %v3709
  %3888 = vmatpush.msra.mxu0 %v3708
  %3889 = vmatpush.msra.mxu0 %v3707
  %3890 = vmatpush.msra.mxu0 %v3706
  %3891 = vmatpush.msra.mxu0 %v3705
  %3892 = vmatmul.f32.gmra.mxu0 %v3680
  %v3893 = vpop.f32.mrf.mxu0
  %v3894 = vadd.f32 %v3874, %v3893
  %3895 = vdwg.mxu0
  %3896 = vmatpush.msra.mxu0 %v3736
  %3897 = vmatpush.msra.mxu0 %v3735
  %3898 = vmatpush.msra.mxu0 %v3734
  %3899 = vmatpush.msra.mxu0 %v3733
  %3900 = vmatpush.msra.mxu0 %v3732
  %3901 = vmatpush.msra.mxu0 %v3731
  %3902 = vmatpush.msra.mxu0 %v3730
  %3903 = vmatpush.msra.mxu0 %v3729
  %3904 = vmatpush.msra.mxu0 %v3728
  %3905 = vmatpush.msra.mxu0 %v3727
  %3906 = vmatpush.msra.mxu0 %v3726
  %3907 = vmatpush.msra.mxu0 %v3725
  %3908 = vmatpush.msra.mxu0 %v3724
  %3909 = vmatpush.msra.mxu0 %v3723
  %3910 = vmatpush.msra.mxu0 %v3722
  %3911 = vmatpush.msra.mxu0 %v3721
  %3912 = vmatmul.f32.gmra.mxu0 %v3681
  %v3913 = vpop.f32.mrf.mxu0
  %v3914 = vadd.f32 %v3894, %v3913
  %3915 = vdwg.mxu0
  %3916 = vmatpush.msra.mxu0 %v3752
  %3917 = vmatpush.msra.mxu0 %v3751
  %3918 = vmatpush.msra.mxu0 %v3750
  %3919 = vmatpush.msra.mxu0 %v3749
  %3920 = vmatpush.msra.mxu0 %v3748
  %3921 = vmatpush.msra.mxu0 %v3747
  %3922 = vmatpush.msra.mxu0 %v3746
  %3923 = vmatpush.msra.mxu0 %v3745
  %3924 = vmatpush.msra.mxu0 %v3744
  %3925 = vmatpush.msra.mxu0 %v3743
  %3926 = vmatpush.msra.mxu0 %v3742
  %3927 = vmatpush.msra.mxu0 %v3741
  %3928 = vmatpush.msra.mxu0 %v3740
  %3929 = vmatpush.msra.mxu0 %v3739
  %3930 = vmatpush.msra.mxu0 %v3738
  %3931 = vmatpush.msra.mxu0 %v3737
  %3932 = vmatmul.f32.gmra.mxu0 %v3682
  %v3933 = vpop.f32.mrf.mxu0
  %v3934 = vadd.f32 %v3914, %v3933
  %3935 = vdwg.mxu0
  %3936 = vmatpush.msra.mxu0 %v3768
  %3937 = vmatpush.msra.mxu0 %v3767
  %3938 = vmatpush.msra.mxu0 %v3766
  %3939 = vmatpush.msra.mxu0 %v3765
  %3940 = vmatpush.msra.mxu0 %v3764
  %3941 = vmatpush.msra.mxu0 %v3763
  %3942 = vmatpush.msra.mxu0 %v3762
  %3943 = vmatpush.msra.mxu0 %v3761
  %3944 = vmatpush.msra.mxu0 %v3760
  %3945 = vmatpush.msra.mxu0 %v3759
  %3946 = vmatpush.msra.mxu0 %v3758
  %3947 = vmatpush.msra.mxu0 %v3757
  %3948 = vmatpush.msra.mxu0 %v3756
  %3949 = vmatpush.msra.mxu0 %v3755
  %3950 = vmatpush.msra.mxu0 %v3754
  %3951 = vmatpush.msra.mxu0 %v3753
  %3952 = vmatmul.f32.gmra.mxu0 %v3683
  %v3953 = vpop.f32.mrf.mxu0
  %v3954 = vadd.f32 %v3934, %v3953
  %3955 = vdwg.mxu0
  %3956 = vmatpush.msra.mxu0 %v3784
  %3957 = vmatpush.msra.mxu0 %v3783
  %3958 = vmatpush.msra.mxu0 %v3782
  %3959 = vmatpush.msra.mxu0 %v3781
  %3960 = vmatpush.msra.mxu0 %v3780
  %3961 = vmatpush.msra.mxu0 %v3779
  %3962 = vmatpush.msra.mxu0 %v3778
  %3963 = vmatpush.msra.mxu0 %v3777
  %3964 = vmatpush.msra.mxu0 %v3776
  %3965 = vmatpush.msra.mxu0 %v3775
  %3966 = vmatpush.msra.mxu0 %v3774
  %3967 = vmatpush.msra.mxu0 %v3773
  %3968 = vmatpush.msra.mxu0 %v3772
  %3969 = vmatpush.msra.mxu0 %v3771
  %3970 = vmatpush.msra.mxu0 %v3770
  %3971 = vmatpush.msra.mxu0 %v3769
  %3972 = vmatmul.f32.gmra.mxu0 %v3684
  %v3973 = vpop.f32.mrf.mxu0
  %v3974 = vadd.f32 %v3954, %v3973
  %3975 = vdwg.mxu0
  %3976 = vmatpush.msra.mxu0 %v3800
  %3977 = vmatpush.msra.mxu0 %v3799
  %3978 = vmatpush.msra.mxu0 %v3798
  %3979 = vmatpush.msra.mxu0 %v3797
  %3980 = vmatpush.msra.mxu0 %v3796
  %3981 = vmatpush.msra.mxu0 %v3795
  %3982 = vmatpush.msra.mxu0 %v3794
  %3983 = vmatpush.msra.mxu0 %v3793
  %3984 = vmatpush.msra.mxu0 %v3792
  %3985 = vmatpush.msra.mxu0 %v3791
  %3986 = vmatpush.msra.mxu0 %v3790
  %3987 = vmatpush.msra.mxu0 %v3789
  %3988 = vmatpush.msra.mxu0 %v3788
  %3989 = vmatpush.msra.mxu0 %v3787
  %3990 = vmatpush.msra.mxu0 %v3786
  %3991 = vmatpush.msra.mxu0 %v3785
  %3992 = vmatmul.f32.gmra.mxu0 %v3685
  %v3993 = vpop.f32.mrf.mxu0
  %v3994 = vadd.f32 %v3974, %v3993
  %3995 = vdwg.mxu0
  %3996 = vmatpush.msra.mxu0 %v3816
  %3997 = vmatpush.msra.mxu0 %v3815
  %3998 = vmatpush.msra.mxu0 %v3814
  %3999 = vmatpush.msra.mxu0 %v3813
  %4000 = vmatpush.msra.mxu0 %v3812
  %4001 = vmatpush.msra.mxu0 %v3811
  %4002 = vmatpush.msra.mxu0 %v3810
  %4003 = vmatpush.msra.mxu0 %v3809
  %4004 = vmatpush.msra.mxu0 %v3808
  %4005 = vmatpush.msra.mxu0 %v3807
  %4006 = vmatpush.msra.mxu0 %v3806
  %4007 = vmatpush.msra.mxu0 %v3805
  %4008 = vmatpush.msra.mxu0 %v3804
  %4009 = vmatpush.msra.mxu0 %v3803
  %4010 = vmatpush.msra.mxu0 %v3802
  %4011 = vmatpush.msra.mxu0 %v3801
  %4012 = vmatmul.f32.gmra.mxu0 %v3686
  %v4013 = vpop.f32.mrf.mxu0
  %v4014 = vadd.f32 %v3994, %v4013
  %4015 = vdwg.mxu0
  %4016 = vmatpush.msra.mxu0 %v3832
  %4017 = vmatpush.msra.mxu0 %v3831
  %4018 = vmatpush.msra.mxu0 %v3830
  %4019 = vmatpush.msra.mxu0 %v3829
  %4020 = vmatpush.msra.mxu0 %v3828
  %4021 = vmatpush.msra.mxu0 %v3827
  %4022 = vmatpush.msra.mxu0 %v3826
  %4023 = vmatpush.msra.mxu0 %v3825
  %4024 = vmatpush.msra.mxu0 %v3824
  %4025 = vmatpush.msra.mxu0 %v3823
  %4026 = vmatpush.msra.mxu0 %v3822
  %4027 = vmatpush.msra.mxu0 %v3821
  %4028 = vmatpush.msra.mxu0 %v3820
  %4029 = vmatpush.msra.mxu0 %v3819
  %4030 = vmatpush.msra.mxu0 %v3818
  %4031 = vmatpush.msra.mxu0 %v3817
  %4032 = vmatmul.f32.gmra.mxu0 %v3687
  %v4033 = vpop.f32.mrf.mxu0
  %v4034 = vadd.f32 %v4014, %v4033
  %4035 = vdwg.mxu0
  %4036 = vmatpush.msra.mxu0 0.0
  %4037 = vmatpush.msra.mxu0 0.0
  %4038 = vmatpush.msra.mxu0 0.0
  %4039 = vmatpush.msra.mxu0 %v3854
  %4040 = vmatpush.msra.mxu0 %v3844
  %4041 = vmatpush.msra.mxu0 %v3843
  %4042 = vmatpush.msra.mxu0 %v3842
  %4043 = vmatpush.msra.mxu0 %v3841
  %4044 = vmatpush.msra.mxu0 %v3840
  %4045 = vmatpush.msra.mxu0 %v3839
  %4046 = vmatpush.msra.mxu0 %v3838
  %4047 = vmatpush.msra.mxu0 %v3837
  %4048 = vmatpush.msra.mxu0 %v3836
  %4049 = vmatpush.msra.mxu0 %v3835
  %4050 = vmatpush.msra.mxu0 %v3834
  %4051 = vmatpush.msra.mxu0 %v3833
  %4052 = vmatmul.f32.gmra.mxu0 %v3851
  %v4053 = vpop.f32.mrf.mxu0
  %v4054 = vadd.f32 %v4034, %v4053
  %4055 = vdwg.mxu0
  %v4056 = vsub.f32 0.0, %v4054
  %v4057 = vmul.f32 %v4056, 1.442695
  %v4058 = vpow.pop %v4057
  %v4059 = vadd.f32 %v4058, 1.0
  %v4060 = vrcp.pop %v4059
  %v4061 = vmul.f32 %v4059, %v4060
  %v4062 = vsub.f32 1.0, %v4061
  %v4063 = vmul.f32 %v4060, %v4062
  %v4064 = vadd.f32 %v4060, %v4063
  %vm4065 = vweird.f32 %v4059
  %vm4066 = vweird.f32 %v4060
  %vm4067 = vmor %vm4065, %vm4066
  %v4068 = vsel %vm4067, %v4060, %v4064
  %v4069 = vand.u32 2147483647, %v4059
  %vm4070 = vcmp.eq.f32.partialorder %v4069, 8.507059e+37
  %v4071 = vand.u32 %v4059, 2147483648
  %v4072 = vor.u32 1.1754944e-38, %v4071
  %v4073 = vsel %vm4070, %v4072, %v4068
  %v4074 = vmul.f32 1.0, %v4073
  %vm4075 = vcmask 1024
  %4076 = vst.msk [vmem:[%s5] sm:$0x3] %vm4075, %v4074
  // Predicated region
  $region22: #{_lambda_.9} parent=0 // pred_check
    _
  $region23: #{_lambda_.9} parent=0 // pred_check_branch
    %4078 = sbr.rel (0) target = $region25
  $region24: #{_lambda_.9} parent=0 // pred_region
    _
  $region25: #{_lambda_.9} parent=0 // pred_fallthru
    _
  // Predicated region
  $region26: #{_lambda_.9} parent=0 // pred_check
    _
  $region27: #{_lambda_.9} parent=0 // pred_check_branch
    %4080 = sbr.rel (0) target = $region29
  $region28: #{_lambda_.9} parent=0 // pred_region
    _
  $region29: #{_lambda_.9} parent=0 // pred_fallthru
    _

</llo_original>
